<compile_context>
chip_gen: v5e
topology: v5e:2x2
jax: 0.10.0
libtpu: 0.0.40
codegen_flags: <defaults>
</compile_context>

<pallas_src>
import functools

import jax
import jax.numpy as jnp
from jax.experimental import pallas as pl
from jax.experimental.pallas import tpu as pltpu

CLIP_VAL = 5.0
FORGET_BIAS = 1.0


def _round_up(n, m):
    return ((n + m - 1) // m) * m


def _sigmoid(z):
    # EUP-friendly sigmoid: tanh runs on the EUP, avoids the VPU divide of the
    # logistic form.  Mathematically identical to 1/(1+exp(-z)).
    return 0.5 * jnp.tanh(0.5 * z) + 0.5


def _gen_seq_kernel(x_ref, h0_ref, wg_ref, b_ref, wrhc_ref, wfc_ref,
                    gen_ref, fac_ref, h_scr, *, gp, u_steps, cdtype):
    """One grid step == a block of `u_steps` timesteps of one batch tile."""
    # Time is the innermost (fastest) grid axis; re-init the carried hidden
    # state at the start of each batch tile's time loop.
    @pl.when(pl.program_id(1) == 0)
    def _():
        h_scr[...] = h0_ref[...]

    h = h_scr[...]                      # (BT, Gp) f32 carried state (vreg-resident)

    # Unrolled timestep loop: amortizes grid-step overhead and lets step t+1's
    # gate matmul overlap step t's EUP tail / factor matmul.
    for tt in range(u_steps):
        x = x_ref[tt]                   # (BT, Ip) compute dtype (bf16 or f32)
        # [x | h] slab; concat done in f32 (always-supported lowering), then a
        # single cast to the MXU compute dtype.
        xh = jnp.concatenate([x.astype(jnp.float32), h], axis=-1).astype(cdtype)

        # One fused gate matmul: [x|h] @ [[Wxr|Wxu|Wxc],[Whr|Whu|0]] + bias.
        g = jnp.dot(xh, wg_ref[...],
                    preferred_element_type=jnp.float32) + b_ref[...]   # (BT, 3Gp)

        r = _sigmoid(g[:, :gp])
        u = _sigmoid(g[:, gp:2 * gp])   # forget_bias already folded into bias
        c = jnp.tanh(g[:, 2 * gp:] +
                     jnp.dot((r * h).astype(cdtype), wrhc_ref[...],
                             preferred_element_type=jnp.float32))

        # h_new = u*h + (1-u)*c, rewritten with one fewer multiply.
        h_new = c + u * (h - c)
        h_new = jnp.clip(h_new, -CLIP_VAL, CLIP_VAL)

        gen_ref[tt] = h_new
        # dropout p == 0.0 -> identity; factor_bias=False -> no bias.
        # TODO(synk): dropout > 0.0 would need pltpu.prng_random_bits-based
        # masking, re-seeded per timestep / grid step.
        fac_ref[tt] = jnp.dot(h_new.astype(cdtype), wfc_ref[...],
                              preferred_element_type=jnp.float32)
        h = h_new

    h_scr[...] = h                      # carry into the next time block


def lfads_generator_sequence(x_seq, h0, params, *, compute_dtype=jnp.bfloat16,
                             max_block_timesteps=16):
    """Runs the LFADS generator cell for a whole sequence in one pallas_call.

    x_seq: (T, B, I), h0: (B, G).
    Returns (generator_states (T, B, G), factor_states (T, B, F)).
    """
    T, B, I = x_seq.shape
    G = h0.shape[1]
    F = params["wfc"].shape[1]

    f32 = jnp.float32
    cdtype = jnp.dtype(compute_dtype)

    # Pad lane dims to 128, batch to 8 -> lane-dense loads/stores (no vst.msk),
    # aligned MXU tiles.  Zero padding is exact: padded weight rows/cols and
    # bias entries are 0, so padded h columns stay identically 0 forever.
    Bp = _round_up(B, 8)
    Ip = _round_up(I, 128)
    Gp = _round_up(G, 128)
    Fp = _round_up(F, 128)

    # Timestep blocking (overhead-bound kernel): U timesteps per grid step;
    # for small T the whole sequence is a single grid step.
    U = T if T <= max_block_timesteps else max_block_timesteps
    Tp = _round_up(T, U)

    # Batch tiling: only split once the padded batch halves are still (8,*)
    # aligned (Bp >= 16).  On v7x the "parallel" batch axis then shards the two
    # independent recurrences across the two TensorCores; at Bp == 8 one tile
    # (one core) is correct and cheapest.
    n_btiles = 2 if (Bp >= 16 and Bp % 16 == 0) else 1
    BT = Bp // n_btiles

    def pad2(a, rows, cols, dtype):
        return jnp.pad(a.astype(dtype),
                       ((0, rows - a.shape[0]), (0, cols - a.shape[1])))

    # x streamed per time block in the compute dtype (halves DMA bytes for bf16).
    x_p = jnp.pad(x_seq.astype(cdtype),
                  ((0, Tp - T), (0, Bp - B), (0, Ip - I)))
    h0_p = pad2(h0, Bp, Gp, f32)                       # recurrent state stays f32

    # Fused gate weights: [x | h] @ [[Wxr|Wxu|Wxc], [Whr|Whu|0]]  (Ip+Gp, 3Gp).
    w_top = jnp.concatenate([pad2(params["wxr"], Ip, Gp, cdtype),
                             pad2(params["wxu"], Ip, Gp, cdtype),
                             pad2(params["wxc"], Ip, Gp, cdtype)], axis=1)
    w_bot = jnp.concatenate([pad2(params["whr"], Gp, Gp, cdtype),
                             pad2(params["whu"], Gp, Gp, cdtype),
                             jnp.zeros((Gp, Gp), cdtype)], axis=1)
    w_gate = jnp.concatenate([w_top, w_bot], axis=0)

    # Bias with forget_bias folded into the update gate, pre-broadcast to the
    # padded batch (kept f32; added to the f32 MXU accumulation).
    b_row = jnp.concatenate([pad2(params["br"], 1, Gp, f32),
                             pad2(params["bu"] + FORGET_BIAS, 1, Gp, f32),
                             pad2(params["bc"], 1, Gp, f32)], axis=1)
    b_bcast = jnp.broadcast_to(b_row, (Bp, 3 * Gp))

    wrhc_p = pad2(params["wrhc"], Gp, Gp, cdtype)
    wfc_p = pad2(params["wfc"], Gp, Fp, cdtype)

    kernel = functools.partial(_gen_seq_kernel, gp=Gp, u_steps=U, cdtype=cdtype)

    grid = (n_btiles, Tp // U)   # (batch tiles [parallel], time blocks [arbitrary])

    in_specs = [
        pl.BlockSpec((U, BT, Ip), lambda b, t: (t, b, 0)),      # x: streamed
        pl.BlockSpec((BT, Gp), lambda b, t: (b, 0)),            # h0
        pl.BlockSpec((Ip + Gp, 3 * Gp), lambda b, t: (0, 0)),   # fused gate W: resident
        pl.BlockSpec((BT, 3 * Gp), lambda b, t: (b, 0)),        # bias (pre-broadcast)
        pl.BlockSpec((Gp, Gp), lambda b, t: (0, 0)),            # Wrhc: resident
        pl.BlockSpec((Gp, Fp), lambda b, t: (0, 0)),            # Wfc: resident
    ]
    out_specs = [
        pl.BlockSpec((U, BT, Gp), lambda b, t: (t, b, 0)),      # generator states
        pl.BlockSpec((U, BT, Fp), lambda b, t: (t, b, 0)),      # factor states
    ]

    gen_p, fac_p = pl.pallas_call(
        kernel,
        out_shape=(jax.ShapeDtypeStruct((Tp, Bp, Gp), f32),
                   jax.ShapeDtypeStruct((Tp, Bp, Fp), f32)),
        grid=grid,
        in_specs=in_specs,
        out_specs=out_specs,
        scratch_shapes=[pltpu.VMEM((BT, Gp), f32)],             # carried hidden state
        compiler_params=pltpu.CompilerParams(
            # batch tiles are independent recurrences -> parallel (2 TCs on v7x);
            # the time axis is a recurrence -> arbitrary (sequential).
            dimension_semantics=("parallel", "arbitrary"),
            # Actual footprint here is < 1 MiB; request a modest budget with
            # headroom instead of the whole machine (64 MiB == all of v7x VMEM).
            vmem_limit_bytes=16 * 1024 * 1024),
    )(x_p, h0_p, w_gate, b_bcast, wrhc_p, wfc_p)

    return gen_p[:T, :B, :G], fac_p[:T, :B, :F]


def lfads_generator_cell(x, h, params, **kwargs):
    """Single-step forward (matches the PyTorch module's forward(input, hidden))."""
    gen_seq, fac_seq = lfads_generator_sequence(x[None], h, params, **kwargs)
    return gen_seq[0], fac_seq[0]


def init_params(key, input_size, generator_size, factor_size):
    """Deterministic synthetic parameters (nn.Linear-style uniform init)."""
    def lin(k, fan_in, shape):
        bound = 1.0 / jnp.sqrt(float(fan_in))
        return jax.random.uniform(k, shape, jnp.float32, -bound, bound)

    ks = jax.random.split(key, 9)
    return {
        # reset / update gates (input weights: no bias, hidden weights: bias)
        "wxr": lin(ks[0], input_size, (input_size, generator_size)),
        "wxu": lin(ks[1], input_size, (input_size, generator_size)),
        "whr": lin(ks[2], generator_size, (generator_size, generator_size)),
        "whu": lin(ks[3], generator_size, (generator_size, generator_size)),
        "br":  lin(ks[4], generator_size, (1, generator_size)),
        "bu":  lin(ks[5], generator_size, (1, generator_size)),
        # candidate state
        "wxc":  lin(ks[6], input_size, (input_size, generator_size)),
        "wrhc": lin(ks[7], generator_size, (generator_size, generator_size)),
        "bc":   lin(ks[8], generator_size, (1, generator_size)),
        # fc_factors (bias=False)
        "wfc": lin(jax.random.fold_in(key, 99), generator_size,
                   (generator_size, factor_size)),
    }


def reference_step(x, h, p):
    """Plain-JAX reference of one cell step (for verification)."""
    r = jax.nn.sigmoid(x @ p["wxr"] + h @ p["whr"] + p["br"])
    u = jax.nn.sigmoid(x @ p["wxu"] + h @ p["whu"] + p["bu"] + FORGET_BIAS)
    c = jnp.tanh(x @ p["wxc"] + (r * h) @ p["wrhc"] + p["bc"])
    h_new = jnp.clip(u * h + (1.0 - u) * c, -CLIP_VAL, CLIP_VAL)
    return h_new, h_new @ p["wfc"]


def reference_sequence(x_seq, h0, p):
    def step(h, x):
        h_new, f = reference_step(x, h, p)
        return h_new, (h_new, f)
    _, (gens, facs) = jax.lax.scan(step, h0, x_seq)
    return gens, facs


if __name__ == "__main__":
    T, batch, input_size, generator_size, factor_size = 16, 8, 32, 64, 32

    key = jax.random.PRNGKey(0)
    kx, kh, kp = jax.random.split(key, 3)
    x_seq = jax.random.normal(kx, (T, batch, input_size), jnp.float32)
    h0 = jax.random.normal(kh, (batch, generator_size), jnp.float32)
    params = init_params(kp, input_size, generator_size, factor_size)

    gen_ref_seq, fac_ref_seq = reference_sequence(x_seq, h0, params)

    # f32 compute path: tight check against the plain-JAX reference.
    gen_f32, fac_f32 = lfads_generator_sequence(x_seq, h0, params,
                                                compute_dtype=jnp.float32)
    gen_f32 = jax.block_until_ready(gen_f32)
    fac_f32 = jax.block_until_ready(fac_f32)
    assert jnp.allclose(gen_f32, gen_ref_seq, atol=1e-3, rtol=1e-3), \
        float(jnp.max(jnp.abs(gen_f32 - gen_ref_seq)))
    assert jnp.allclose(fac_f32, fac_ref_seq, atol=1e-3, rtol=1e-3), \
        float(jnp.max(jnp.abs(fac_f32 - fac_ref_seq)))

    # Default bf16-weight/input path (f32 recurrent state & accumulation):
    # looser tolerance covers the bf16 rounding of weights/x over T=16 steps.
    gen_bf, fac_bf = lfads_generator_sequence(x_seq, h0, params)
    gen_bf = jax.block_until_ready(gen_bf)
    fac_bf = jax.block_until_ready(fac_bf)
    assert jnp.allclose(gen_bf, gen_ref_seq, atol=5e-2, rtol=5e-2), \
        float(jnp.max(jnp.abs(gen_bf - gen_ref_seq)))
    assert jnp.allclose(fac_bf, fac_ref_seq, atol=5e-2, rtol=5e-2), \
        float(jnp.max(jnp.abs(fac_bf - fac_ref_seq)))

    # Single-step path == the original module's forward(input, hidden).
    gen1, fac1 = lfads_generator_cell(x_seq[0], h0, params,
                                      compute_dtype=jnp.float32)
    gen1 = jax.block_until_ready(gen1)
    fac1 = jax.block_until_ready(fac1)
    g1_ref, f1_ref = reference_step(x_seq[0], h0, params)
    assert jnp.allclose(gen1, g1_ref, atol=1e-4, rtol=1e-4), \
        float(jnp.max(jnp.abs(gen1 - g1_ref)))
    assert jnp.allclose(fac1, f1_ref, atol=1e-4, rtol=1e-4), \
        float(jnp.max(jnp.abs(fac1 - f1_ref)))

    print("KERNEL_OK")
</pallas_src>

<mosaic_0001>
module attributes {stable_mosaic.version = 11 : i64} {
  func.func @_gen_seq_kernel(%arg0: i32, %arg1: i32, %arg2: memref<16x8x128xf32, #tpu.memory_space<vmem>>, %arg3: memref<8x128xf32, #tpu.memory_space<vmem>>, %arg4: memref<256x384xf32, #tpu.memory_space<vmem>>, %arg5: memref<8x384xf32, #tpu.memory_space<vmem>>, %arg6: memref<128x128xf32, #tpu.memory_space<vmem>>, %arg7: memref<128x128xf32, #tpu.memory_space<vmem>>, %arg8: memref<16x8x128xf32, #tpu.memory_space<vmem>>, %arg9: memref<16x8x128xf32, #tpu.memory_space<vmem>>, %arg10: memref<8x128xf32, #tpu.memory_space<vmem>>) attributes {dimension_semantics = [#tpu.dimension_semantics<parallel>, #tpu.dimension_semantics<arbitrary>], iteration_bounds = array<i64: 1, 1>, scalar_prefetch = 0 : i64, scratch_operands = 1 : i64, tpu.core_type = #tpu.core_type<tc>, window_params = [{transform_indices = @transform_0, window_bounds = array<i64: 16, 8, 128>}, {transform_indices = @transform_1, window_bounds = array<i64: 8, 128>}, {pipeline_mode = #tpu.pipeline_mode<synchronous>, transform_indices = @transform_2, window_bounds = array<i64: 256, 384>}, {transform_indices = @transform_3, window_bounds = array<i64: 8, 384>}, {pipeline_mode = #tpu.pipeline_mode<synchronous>, transform_indices = @transform_4, window_bounds = array<i64: 128, 128>}, {pipeline_mode = #tpu.pipeline_mode<synchronous>, transform_indices = @transform_5, window_bounds = array<i64: 128, 128>}, {transform_indices = @transform_6, window_bounds = array<i64: 16, 8, 128>}, {transform_indices = @transform_7, window_bounds = array<i64: 16, 8, 128>}]} {
    %c0_i32 = arith.constant 0 : i32
    %0 = arith.cmpi eq, %arg1, %c0_i32 : i32
    %1 = arith.extui %0 : i1 to i32
    %c0_i32_0 = arith.constant 0 : i32
    %2 = arith.cmpi ne, %1, %c0_i32_0 : i32
    scf.if %2 {
      %c0_436 = arith.constant 0 : index
      %c0_437 = arith.constant 0 : index
      %709 = vector.load %arg3[%c0_436, %c0_437] : memref<8x128xf32, #tpu.memory_space<vmem>>, vector<8x128xf32>
      %c0_438 = arith.constant 0 : index
      %c0_439 = arith.constant 0 : index
      %710 = vector.load %arg10[%c0_438, %c0_439] : memref<8x128xf32, #tpu.memory_space<vmem>>, vector<8x128xf32>
      tpu.vector_store %arg10[%c0_438, %c0_439], %709 {strides = array<i32>} : memref<8x128xf32, #tpu.memory_space<vmem>>, vector<8x128xf32>,
    } else {
    }
    %c0 = arith.constant 0 : index
    %c0_1 = arith.constant 0 : index
    %3 = vector.load %arg10[%c0, %c0_1] : memref<8x128xf32, #tpu.memory_space<vmem>>, vector<8x128xf32>
    %c0_2 = arith.constant 0 : index
    %c0_3 = arith.constant 0 : index
    %c0_4 = arith.constant 0 : index
    %4 = vector.load %arg2[%c0_2, %c0_3, %c0_4] : memref<16x8x128xf32, #tpu.memory_space<vmem>>, vector<1x8x128xf32>
    %5 = vector.shape_cast %4 : vector<1x8x128xf32> to vector<8x128xf32>
    %6 = tpu.concatenate %5, %3 in 1 : vector<8x128xf32>, vector<8x128xf32> -> vector<8x256xf32>
    %c0_5 = arith.constant 0 : index
    %c0_6 = arith.constant 0 : index
    %7 = vector.load %arg4[%c0_5, %c0_6] : memref<256x384xf32, #tpu.memory_space<vmem>>, vector<256x384xf32>
    %cst = arith.constant dense<0.000000e+00> : vector<8x384xf32>
    %8 = tpu.matmul %6, %7, %cst {dimension_numbers = #tpu.dot_dimension_numbers<[1], [0], [0], [1], [0, 0, 1, 1], [], []>} : vector<8x256xf32>, vector<256x384xf32>, vector<8x384xf32> -> vector<8x384xf32>
    %c0_7 = arith.constant 0 : index
    %c0_8 = arith.constant 0 : index
    %9 = vector.load %arg5[%c0_7, %c0_8] : memref<8x384xf32, #tpu.memory_space<vmem>>, vector<8x384xf32>
    %10 = arith.addf %8, %9 : vector<8x384xf32>
    %11 = vector.extract_strided_slice %10 {offsets = [0, 0], sizes = [8, 128], strides = [1, 1]} : vector<8x384xf32> to vector<8x128xf32>
    %cst_9 = arith.constant 5.000000e-01 : f32
    %12 = vector.broadcast %cst_9 : f32 to vector<8x128xf32>
    %13 = arith.mulf %12, %11 : vector<8x128xf32>
    %14 = math.tanh %13 : vector<8x128xf32>
    %cst_10 = arith.constant 5.000000e-01 : f32
    %15 = vector.broadcast %cst_10 : f32 to vector<8x128xf32>
    %16 = arith.mulf %15, %14 : vector<8x128xf32>
    %cst_11 = arith.constant 5.000000e-01 : f32
    %17 = vector.broadcast %cst_11 : f32 to vector<8x128xf32>
    %18 = arith.addf %16, %17 : vector<8x128xf32>
    %19 = vector.extract_strided_slice %10 {offsets = [0, 128], sizes = [8, 128], strides = [1, 1]} : vector<8x384xf32> to vector<8x128xf32>
    %cst_12 = arith.constant 5.000000e-01 : f32
    %20 = vector.broadcast %cst_12 : f32 to vector<8x128xf32>
    %21 = arith.mulf %20, %19 : vector<8x128xf32>
    %22 = math.tanh %21 : vector<8x128xf32>
    %cst_13 = arith.constant 5.000000e-01 : f32
    %23 = vector.broadcast %cst_13 : f32 to vector<8x128xf32>
    %24 = arith.mulf %23, %22 : vector<8x128xf32>
    %cst_14 = arith.constant 5.000000e-01 : f32
    %25 = vector.broadcast %cst_14 : f32 to vector<8x128xf32>
    %26 = arith.addf %24, %25 : vector<8x128xf32>
    %27 = vector.extract_strided_slice %10 {offsets = [0, 256], sizes = [8, 128], strides = [1, 1]} : vector<8x384xf32> to vector<8x128xf32>
    %28 = arith.mulf %18, %3 : vector<8x128xf32>
    %c0_15 = arith.constant 0 : index
    %c0_16 = arith.constant 0 : index
    %29 = vector.load %arg6[%c0_15, %c0_16] : memref<128x128xf32, #tpu.memory_space<vmem>>, vector<128x128xf32>
    %cst_17 = arith.constant dense<0.000000e+00> : vector<8x128xf32>
    %30 = tpu.matmul %28, %29, %cst_17 {dimension_numbers = #tpu.dot_dimension_numbers<[1], [0], [0], [1], [0, 0, 1, 1], [], []>} : vector<8x128xf32>, vector<128x128xf32>, vector<8x128xf32> -> vector<8x128xf32>
    %31 = arith.addf %27, %30 : vector<8x128xf32>
    %32 = math.tanh %31 : vector<8x128xf32>
    %33 = arith.subf %3, %32 : vector<8x128xf32>
    %34 = arith.mulf %26, %33 : vector<8x128xf32>
    %35 = arith.addf %32, %34 : vector<8x128xf32>
    %cst_18 = arith.constant -5.000000e+00 : f32
    %cst_19 = arith.constant 5.000000e+00 : f32
    %36 = vector.broadcast %cst_18 : f32 to vector<8x128xf32>
    %37 = arith.maximumf %36, %35 : vector<8x128xf32>
    %38 = vector.broadcast %cst_19 : f32 to vector<8x128xf32>
    %39 = arith.minimumf %38, %37 : vector<8x128xf32>
    %c0_20 = arith.constant 0 : index
    %c0_21 = arith.constant 0 : index
    %c0_22 = arith.constant 0 : index
    %40 = vector.load %arg8[%c0_20, %c0_21, %c0_22] : memref<16x8x128xf32, #tpu.memory_space<vmem>>, vector<1x8x128xf32>
    %41 = vector.shape_cast %40 : vector<1x8x128xf32> to vector<8x128xf32>
    %42 = vector.shape_cast %39 : vector<8x128xf32> to vector<1x8x128xf32>
    tpu.vector_store %arg8[%c0_20, %c0_21, %c0_22], %42 {strides = array<i32>} : memref<16x8x128xf32, #tpu.memory_space<vmem>>, vector<1x8x128xf32>,
    %c0_23 = arith.constant 0 : index
    %c0_24 = arith.constant 0 : index
    %43 = vector.load %arg7[%c0_23, %c0_24] : memref<128x128xf32, #tpu.memory_space<vmem>>, vector<128x128xf32>
    %cst_25 = arith.constant dense<0.000000e+00> : vector<8x128xf32>
    %44 = tpu.matmul %39, %43, %cst_25 {dimension_numbers = #tpu.dot_dimension_numbers<[1], [0], [0], [1], [0, 0, 1, 1], [], []>} : vector<8x128xf32>, vector<128x128xf32>, vector<8x128xf32> -> vector<8x128xf32>
    %c0_26 = arith.constant 0 : index
    %c0_27 = arith.constant 0 : index
    %c0_28 = arith.constant 0 : index
    %45 = vector.load %arg9[%c0_26, %c0_27, %c0_28] : memref<16x8x128xf32, #tpu.memory_space<vmem>>, vector<1x8x128xf32>
    %46 = vector.shape_cast %45 : vector<1x8x128xf32> to vector<8x128xf32>
    %47 = vector.shape_cast %44 : vector<8x128xf32> to vector<1x8x128xf32>
    tpu.vector_store %arg9[%c0_26, %c0_27, %c0_28], %47 {strides = array<i32>} : memref<16x8x128xf32, #tpu.memory_space<vmem>>, vector<1x8x128xf32>,
    %c1 = arith.constant 1 : index
    %c0_29 = arith.constant 0 : index
    %c0_30 = arith.constant 0 : index
    %48 = vector.load %arg2[%c1, %c0_29, %c0_30] : memref<16x8x128xf32, #tpu.memory_space<vmem>>, vector<1x8x128xf32>
    %49 = vector.shape_cast %48 : vector<1x8x128xf32> to vector<8x128xf32>
    %50 = tpu.concatenate %49, %39 in 1 : vector<8x128xf32>, vector<8x128xf32> -> vector<8x256xf32>
    %c0_31 = arith.constant 0 : index
    %c0_32 = arith.constant 0 : index
    %51 = vector.load %arg4[%c0_31, %c0_32] : memref<256x384xf32, #tpu.memory_space<vmem>>, vector<256x384xf32>
    %cst_33 = arith.constant dense<0.000000e+00> : vector<8x384xf32>
    %52 = tpu.matmul %50, %51, %cst_33 {dimension_numbers = #tpu.dot_dimension_numbers<[1], [0], [0], [1], [0, 0, 1, 1], [], []>} : vector<8x256xf32>, vector<256x384xf32>, vector<8x384xf32> -> vector<8x384xf32>
    %c0_34 = arith.constant 0 : index
    %c0_35 = arith.constant 0 : index
    %53 = vector.load %arg5[%c0_34, %c0_35] : memref<8x384xf32, #tpu.memory_space<vmem>>, vector<8x384xf32>
    %54 = arith.addf %52, %53 : vector<8x384xf32>
    %55 = vector.extract_strided_slice %54 {offsets = [0, 0], sizes = [8, 128], strides = [1, 1]} : vector<8x384xf32> to vector<8x128xf32>
    %cst_36 = arith.constant 5.000000e-01 : f32
    %56 = vector.broadcast %cst_36 : f32 to vector<8x128xf32>
    %57 = arith.mulf %56, %55 : vector<8x128xf32>
    %58 = math.tanh %57 : vector<8x128xf32>
    %cst_37 = arith.constant 5.000000e-01 : f32
    %59 = vector.broadcast %cst_37 : f32 to vector<8x128xf32>
    %60 = arith.mulf %59, %58 : vector<8x128xf32>
    %cst_38 = arith.constant 5.000000e-01 : f32
    %61 = vector.broadcast %cst_38 : f32 to vector<8x128xf32>
    %62 = arith.addf %60, %61 : vector<8x128xf32>
    %63 = vector.extract_strided_slice %54 {offsets = [0, 128], sizes = [8, 128], strides = [1, 1]} : vector<8x384xf32> to vector<8x128xf32>
    %cst_39 = arith.constant 5.000000e-01 : f32
    %64 = vector.broadcast %cst_39 : f32 to vector<8x128xf32>
    %65 = arith.mulf %64, %63 : vector<8x128xf32>
    %66 = math.tanh %65 : vector<8x128xf32>
    %cst_40 = arith.constant 5.000000e-01 : f32
    %67 = vector.broadcast %cst_40 : f32 to vector<8x128xf32>
    %68 = arith.mulf %67, %66 : vector<8x128xf32>
    %cst_41 = arith.constant 5.000000e-01 : f32
    %69 = vector.broadcast %cst_41 : f32 to vector<8x128xf32>
    %70 = arith.addf %68, %69 : vector<8x128xf32>
    %71 = vector.extract_strided_slice %54 {offsets = [0, 256], sizes = [8, 128], strides = [1, 1]} : vector<8x384xf32> to vector<8x128xf32>
    %72 = arith.mulf %62, %39 : vector<8x128xf32>
    %c0_42 = arith.constant 0 : index
    %c0_43 = arith.constant 0 : index
    %73 = vector.load %arg6[%c0_42, %c0_43] : memref<128x128xf32, #tpu.memory_space<vmem>>, vector<128x128xf32>
    %cst_44 = arith.constant dense<0.000000e+00> : vector<8x128xf32>
    %74 = tpu.matmul %72, %73, %cst_44 {dimension_numbers = #tpu.dot_dimension_numbers<[1], [0], [0], [1], [0, 0, 1, 1], [], []>} : vector<8x128xf32>, vector<128x128xf32>, vector<8x128xf32> -> vector<8x128xf32>
    %75 = arith.addf %71, %74 : vector<8x128xf32>
    %76 = math.tanh %75 : vector<8x128xf32>
    %77 = arith.subf %39, %76 : vector<8x128xf32>
    %78 = arith.mulf %70, %77 : vector<8x128xf32>
    %79 = arith.addf %76, %78 : vector<8x128xf32>
    %cst_45 = arith.constant -5.000000e+00 : f32
    %cst_46 = arith.constant 5.000000e+00 : f32
    %80 = vector.broadcast %cst_45 : f32 to vector<8x128xf32>
    %81 = arith.maximumf %80, %79 : vector<8x128xf32>
    %82 = vector.broadcast %cst_46 : f32 to vector<8x128xf32>
    %83 = arith.minimumf %82, %81 : vector<8x128xf32>
    %c1_47 = arith.constant 1 : index
    %c0_48 = arith.constant 0 : index
    %c0_49 = arith.constant 0 : index
    %84 = vector.load %arg8[%c1_47, %c0_48, %c0_49] : memref<16x8x128xf32, #tpu.memory_space<vmem>>, vector<1x8x128xf32>
    %85 = vector.shape_cast %84 : vector<1x8x128xf32> to vector<8x128xf32>
    %86 = vector.shape_cast %83 : vector<8x128xf32> to vector<1x8x128xf32>
    tpu.vector_store %arg8[%c1_47, %c0_48, %c0_49], %86 {strides = array<i32>} : memref<16x8x128xf32, #tpu.memory_space<vmem>>, vector<1x8x128xf32>,
    %c0_50 = arith.constant 0 : index
    %c0_51 = arith.constant 0 : index
    %87 = vector.load %arg7[%c0_50, %c0_51] : memref<128x128xf32, #tpu.memory_space<vmem>>, vector<128x128xf32>
    %cst_52 = arith.constant dense<0.000000e+00> : vector<8x128xf32>
    %88 = tpu.matmul %83, %87, %cst_52 {dimension_numbers = #tpu.dot_dimension_numbers<[1], [0], [0], [1], [0, 0, 1, 1], [], []>} : vector<8x128xf32>, vector<128x128xf32>, vector<8x128xf32> -> vector<8x128xf32>
    %c1_53 = arith.constant 1 : index
    %c0_54 = arith.constant 0 : index
    %c0_55 = arith.constant 0 : index
    %89 = vector.load %arg9[%c1_53, %c0_54, %c0_55] : memref<16x8x128xf32, #tpu.memory_space<vmem>>, vector<1x8x128xf32>
    %90 = vector.shape_cast %89 : vector<1x8x128xf32> to vector<8x128xf32>
    %91 = vector.shape_cast %88 : vector<8x128xf32> to vector<1x8x128xf32>
    tpu.vector_store %arg9[%c1_53, %c0_54, %c0_55], %91 {strides = array<i32>} : memref<16x8x128xf32, #tpu.memory_space<vmem>>, vector<1x8x128xf32>,
    %c2 = arith.constant 2 : index
    %c0_56 = arith.constant 0 : index
    %c0_57 = arith.constant 0 : index
    %92 = vector.load %arg2[%c2, %c0_56, %c0_57] : memref<16x8x128xf32, #tpu.memory_space<vmem>>, vector<1x8x128xf32>
    %93 = vector.shape_cast %92 : vector<1x8x128xf32> to vector<8x128xf32>
    %94 = tpu.concatenate %93, %83 in 1 : vector<8x128xf32>, vector<8x128xf32> -> vector<8x256xf32>
    %c0_58 = arith.constant 0 : index
    %c0_59 = arith.constant 0 : index
    %95 = vector.load %arg4[%c0_58, %c0_59] : memref<256x384xf32, #tpu.memory_space<vmem>>, vector<256x384xf32>
    %cst_60 = arith.constant dense<0.000000e+00> : vector<8x384xf32>
    %96 = tpu.matmul %94, %95, %cst_60 {dimension_numbers = #tpu.dot_dimension_numbers<[1], [0], [0], [1], [0, 0, 1, 1], [], []>} : vector<8x256xf32>, vector<256x384xf32>, vector<8x384xf32> -> vector<8x384xf32>
    %c0_61 = arith.constant 0 : index
    %c0_62 = arith.constant 0 : index
    %97 = vector.load %arg5[%c0_61, %c0_62] : memref<8x384xf32, #tpu.memory_space<vmem>>, vector<8x384xf32>
    %98 = arith.addf %96, %97 : vector<8x384xf32>
    %99 = vector.extract_strided_slice %98 {offsets = [0, 0], sizes = [8, 128], strides = [1, 1]} : vector<8x384xf32> to vector<8x128xf32>
    %cst_63 = arith.constant 5.000000e-01 : f32
    %100 = vector.broadcast %cst_63 : f32 to vector<8x128xf32>
    %101 = arith.mulf %100, %99 : vector<8x128xf32>
    %102 = math.tanh %101 : vector<8x128xf32>
    %cst_64 = arith.constant 5.000000e-01 : f32
    %103 = vector.broadcast %cst_64 : f32 to vector<8x128xf32>
    %104 = arith.mulf %103, %102 : vector<8x128xf32>
    %cst_65 = arith.constant 5.000000e-01 : f32
    %105 = vector.broadcast %cst_65 : f32 to vector<8x128xf32>
    %106 = arith.addf %104, %105 : vector<8x128xf32>
    %107 = vector.extract_strided_slice %98 {offsets = [0, 128], sizes = [8, 128], strides = [1, 1]} : vector<8x384xf32> to vector<8x128xf32>
    %cst_66 = arith.constant 5.000000e-01 : f32
    %108 = vector.broadcast %cst_66 : f32 to vector<8x128xf32>
    %109 = arith.mulf %108, %107 : vector<8x128xf32>
    %110 = math.tanh %109 : vector<8x128xf32>
    %cst_67 = arith.constant 5.000000e-01 : f32
    %111 = vector.broadcast %cst_67 : f32 to vector<8x128xf32>
    %112 = arith.mulf %111, %110 : vector<8x128xf32>
    %cst_68 = arith.constant 5.000000e-01 : f32
    %113 = vector.broadcast %cst_68 : f32 to vector<8x128xf32>
    %114 = arith.addf %112, %113 : vector<8x128xf32>
    %115 = vector.extract_strided_slice %98 {offsets = [0, 256], sizes = [8, 128], strides = [1, 1]} : vector<8x384xf32> to vector<8x128xf32>
    %116 = arith.mulf %106, %83 : vector<8x128xf32>
    %c0_69 = arith.constant 0 : index
    %c0_70 = arith.constant 0 : index
    %117 = vector.load %arg6[%c0_69, %c0_70] : memref<128x128xf32, #tpu.memory_space<vmem>>, vector<128x128xf32>
    %cst_71 = arith.constant dense<0.000000e+00> : vector<8x128xf32>
    %118 = tpu.matmul %116, %117, %cst_71 {dimension_numbers = #tpu.dot_dimension_numbers<[1], [0], [0], [1], [0, 0, 1, 1], [], []>} : vector<8x128xf32>, vector<128x128xf32>, vector<8x128xf32> -> vector<8x128xf32>
    %119 = arith.addf %115, %118 : vector<8x128xf32>
    %120 = math.tanh %119 : vector<8x128xf32>
    %121 = arith.subf %83, %120 : vector<8x128xf32>
    %122 = arith.mulf %114, %121 : vector<8x128xf32>
    %123 = arith.addf %120, %122 : vector<8x128xf32>
    %cst_72 = arith.constant -5.000000e+00 : f32
    %cst_73 = arith.constant 5.000000e+00 : f32
    %124 = vector.broadcast %cst_72 : f32 to vector<8x128xf32>
    %125 = arith.maximumf %124, %123 : vector<8x128xf32>
    %126 = vector.broadcast %cst_73 : f32 to vector<8x128xf32>
    %127 = arith.minimumf %126, %125 : vector<8x128xf32>
    %c2_74 = arith.constant 2 : index
    %c0_75 = arith.constant 0 : index
    %c0_76 = arith.constant 0 : index
    %128 = vector.load %arg8[%c2_74, %c0_75, %c0_76] : memref<16x8x128xf32, #tpu.memory_space<vmem>>, vector<1x8x128xf32>
    %129 = vector.shape_cast %128 : vector<1x8x128xf32> to vector<8x128xf32>
    %130 = vector.shape_cast %127 : vector<8x128xf32> to vector<1x8x128xf32>
    tpu.vector_store %arg8[%c2_74, %c0_75, %c0_76], %130 {strides = array<i32>} : memref<16x8x128xf32, #tpu.memory_space<vmem>>, vector<1x8x128xf32>,
    %c0_77 = arith.constant 0 : index
    %c0_78 = arith.constant 0 : index
    %131 = vector.load %arg7[%c0_77, %c0_78] : memref<128x128xf32, #tpu.memory_space<vmem>>, vector<128x128xf32>
    %cst_79 = arith.constant dense<0.000000e+00> : vector<8x128xf32>
    %132 = tpu.matmul %127, %131, %cst_79 {dimension_numbers = #tpu.dot_dimension_numbers<[1], [0], [0], [1], [0, 0, 1, 1], [], []>} : vector<8x128xf32>, vector<128x128xf32>, vector<8x128xf32> -> vector<8x128xf32>
    %c2_80 = arith.constant 2 : index
    %c0_81 = arith.constant 0 : index
    %c0_82 = arith.constant 0 : index
    %133 = vector.load %arg9[%c2_80, %c0_81, %c0_82] : memref<16x8x128xf32, #tpu.memory_space<vmem>>, vector<1x8x128xf32>
    %134 = vector.shape_cast %133 : vector<1x8x128xf32> to vector<8x128xf32>
    %135 = vector.shape_cast %132 : vector<8x128xf32> to vector<1x8x128xf32>
    tpu.vector_store %arg9[%c2_80, %c0_81, %c0_82], %135 {strides = array<i32>} : memref<16x8x128xf32, #tpu.memory_space<vmem>>, vector<1x8x128xf32>,
    %c3 = arith.constant 3 : index
    %c0_83 = arith.constant 0 : index
    %c0_84 = arith.constant 0 : index
    %136 = vector.load %arg2[%c3, %c0_83, %c0_84] : memref<16x8x128xf32, #tpu.memory_space<vmem>>, vector<1x8x128xf32>
    %137 = vector.shape_cast %136 : vector<1x8x128xf32> to vector<8x128xf32>
    %138 = tpu.concatenate %137, %127 in 1 : vector<8x128xf32>, vector<8x128xf32> -> vector<8x256xf32>
    %c0_85 = arith.constant 0 : index
    %c0_86 = arith.constant 0 : index
    %139 = vector.load %arg4[%c0_85, %c0_86] : memref<256x384xf32, #tpu.memory_space<vmem>>, vector<256x384xf32>
    %cst_87 = arith.constant dense<0.000000e+00> : vector<8x384xf32>
    %140 = tpu.matmul %138, %139, %cst_87 {dimension_numbers = #tpu.dot_dimension_numbers<[1], [0], [0], [1], [0, 0, 1, 1], [], []>} : vector<8x256xf32>, vector<256x384xf32>, vector<8x384xf32> -> vector<8x384xf32>
    %c0_88 = arith.constant 0 : index
    %c0_89 = arith.constant 0 : index
    %141 = vector.load %arg5[%c0_88, %c0_89] : memref<8x384xf32, #tpu.memory_space<vmem>>, vector<8x384xf32>
    %142 = arith.addf %140, %141 : vector<8x384xf32>
    %143 = vector.extract_strided_slice %142 {offsets = [0, 0], sizes = [8, 128], strides = [1, 1]} : vector<8x384xf32> to vector<8x128xf32>
    %cst_90 = arith.constant 5.000000e-01 : f32
    %144 = vector.broadcast %cst_90 : f32 to vector<8x128xf32>
    %145 = arith.mulf %144, %143 : vector<8x128xf32>
    %146 = math.tanh %145 : vector<8x128xf32>
    %cst_91 = arith.constant 5.000000e-01 : f32
    %147 = vector.broadcast %cst_91 : f32 to vector<8x128xf32>
    %148 = arith.mulf %147, %146 : vector<8x128xf32>
    %cst_92 = arith.constant 5.000000e-01 : f32
    %149 = vector.broadcast %cst_92 : f32 to vector<8x128xf32>
    %150 = arith.addf %148, %149 : vector<8x128xf32>
    %151 = vector.extract_strided_slice %142 {offsets = [0, 128], sizes = [8, 128], strides = [1, 1]} : vector<8x384xf32> to vector<8x128xf32>
    %cst_93 = arith.constant 5.000000e-01 : f32
    %152 = vector.broadcast %cst_93 : f32 to vector<8x128xf32>
    %153 = arith.mulf %152, %151 : vector<8x128xf32>
    %154 = math.tanh %153 : vector<8x128xf32>
    %cst_94 = arith.constant 5.000000e-01 : f32
    %155 = vector.broadcast %cst_94 : f32 to vector<8x128xf32>
    %156 = arith.mulf %155, %154 : vector<8x128xf32>
    %cst_95 = arith.constant 5.000000e-01 : f32
    %157 = vector.broadcast %cst_95 : f32 to vector<8x128xf32>
    %158 = arith.addf %156, %157 : vector<8x128xf32>
    %159 = vector.extract_strided_slice %142 {offsets = [0, 256], sizes = [8, 128], strides = [1, 1]} : vector<8x384xf32> to vector<8x128xf32>
    %160 = arith.mulf %150, %127 : vector<8x128xf32>
    %c0_96 = arith.constant 0 : index
    %c0_97 = arith.constant 0 : index
    %161 = vector.load %arg6[%c0_96, %c0_97] : memref<128x128xf32, #tpu.memory_space<vmem>>, vector<128x128xf32>
    %cst_98 = arith.constant dense<0.000000e+00> : vector<8x128xf32>
    %162 = tpu.matmul %160, %161, %cst_98 {dimension_numbers = #tpu.dot_dimension_numbers<[1], [0], [0], [1], [0, 0, 1, 1], [], []>} : vector<8x128xf32>, vector<128x128xf32>, vector<8x128xf32> -> vector<8x128xf32>
    %163 = arith.addf %159, %162 : vector<8x128xf32>
    %164 = math.tanh %163 : vector<8x128xf32>
    %165 = arith.subf %127, %164 : vector<8x128xf32>
    %166 = arith.mulf %158, %165 : vector<8x128xf32>
    %167 = arith.addf %164, %166 : vector<8x128xf32>
    %cst_99 = arith.constant -5.000000e+00 : f32
    %cst_100 = arith.constant 5.000000e+00 : f32
    %168 = vector.broadcast %cst_99 : f32 to vector<8x128xf32>
    %169 = arith.maximumf %168, %167 : vector<8x128xf32>
    %170 = vector.broadcast %cst_100 : f32 to vector<8x128xf32>
    %171 = arith.minimumf %170, %169 : vector<8x128xf32>
    %c3_101 = arith.constant 3 : index
    %c0_102 = arith.constant 0 : index
    %c0_103 = arith.constant 0 : index
    %172 = vector.load %arg8[%c3_101, %c0_102, %c0_103] : memref<16x8x128xf32, #tpu.memory_space<vmem>>, vector<1x8x128xf32>
    %173 = vector.shape_cast %172 : vector<1x8x128xf32> to vector<8x128xf32>
    %174 = vector.shape_cast %171 : vector<8x128xf32> to vector<1x8x128xf32>
    tpu.vector_store %arg8[%c3_101, %c0_102, %c0_103], %174 {strides = array<i32>} : memref<16x8x128xf32, #tpu.memory_space<vmem>>, vector<1x8x128xf32>,
    %c0_104 = arith.constant 0 : index
    %c0_105 = arith.constant 0 : index
    %175 = vector.load %arg7[%c0_104, %c0_105] : memref<128x128xf32, #tpu.memory_space<vmem>>, vector<128x128xf32>
    %cst_106 = arith.constant dense<0.000000e+00> : vector<8x128xf32>
    %176 = tpu.matmul %171, %175, %cst_106 {dimension_numbers = #tpu.dot_dimension_numbers<[1], [0], [0], [1], [0, 0, 1, 1], [], []>} : vector<8x128xf32>, vector<128x128xf32>, vector<8x128xf32> -> vector<8x128xf32>
    %c3_107 = arith.constant 3 : index
    %c0_108 = arith.constant 0 : index
    %c0_109 = arith.constant 0 : index
    %177 = vector.load %arg9[%c3_107, %c0_108, %c0_109] : memref<16x8x128xf32, #tpu.memory_space<vmem>>, vector<1x8x128xf32>
    %178 = vector.shape_cast %177 : vector<1x8x128xf32> to vector<8x128xf32>
    %179 = vector.shape_cast %176 : vector<8x128xf32> to vector<1x8x128xf32>
    tpu.vector_store %arg9[%c3_107, %c0_108, %c0_109], %179 {strides = array<i32>} : memref<16x8x128xf32, #tpu.memory_space<vmem>>, vector<1x8x128xf32>,
    %c4 = arith.constant 4 : index
    %c0_110 = arith.constant 0 : index
    %c0_111 = arith.constant 0 : index
    %180 = vector.load %arg2[%c4, %c0_110, %c0_111] : memref<16x8x128xf32, #tpu.memory_space<vmem>>, vector<1x8x128xf32>
    %181 = vector.shape_cast %180 : vector<1x8x128xf32> to vector<8x128xf32>
    %182 = tpu.concatenate %181, %171 in 1 : vector<8x128xf32>, vector<8x128xf32> -> vector<8x256xf32>
    %c0_112 = arith.constant 0 : index
    %c0_113 = arith.constant 0 : index
    %183 = vector.load %arg4[%c0_112, %c0_113] : memref<256x384xf32, #tpu.memory_space<vmem>>, vector<256x384xf32>
    %cst_114 = arith.constant dense<0.000000e+00> : vector<8x384xf32>
    %184 = tpu.matmul %182, %183, %cst_114 {dimension_numbers = #tpu.dot_dimension_numbers<[1], [0], [0], [1], [0, 0, 1, 1], [], []>} : vector<8x256xf32>, vector<256x384xf32>, vector<8x384xf32> -> vector<8x384xf32>
    %c0_115 = arith.constant 0 : index
    %c0_116 = arith.constant 0 : index
    %185 = vector.load %arg5[%c0_115, %c0_116] : memref<8x384xf32, #tpu.memory_space<vmem>>, vector<8x384xf32>
    %186 = arith.addf %184, %185 : vector<8x384xf32>
    %187 = vector.extract_strided_slice %186 {offsets = [0, 0], sizes = [8, 128], strides = [1, 1]} : vector<8x384xf32> to vector<8x128xf32>
    %cst_117 = arith.constant 5.000000e-01 : f32
    %188 = vector.broadcast %cst_117 : f32 to vector<8x128xf32>
    %189 = arith.mulf %188, %187 : vector<8x128xf32>
    %190 = math.tanh %189 : vector<8x128xf32>
    %cst_118 = arith.constant 5.000000e-01 : f32
    %191 = vector.broadcast %cst_118 : f32 to vector<8x128xf32>
    %192 = arith.mulf %191, %190 : vector<8x128xf32>
    %cst_119 = arith.constant 5.000000e-01 : f32
    %193 = vector.broadcast %cst_119 : f32 to vector<8x128xf32>
    %194 = arith.addf %192, %193 : vector<8x128xf32>
    %195 = vector.extract_strided_slice %186 {offsets = [0, 128], sizes = [8, 128], strides = [1, 1]} : vector<8x384xf32> to vector<8x128xf32>
    %cst_120 = arith.constant 5.000000e-01 : f32
    %196 = vector.broadcast %cst_120 : f32 to vector<8x128xf32>
    %197 = arith.mulf %196, %195 : vector<8x128xf32>
    %198 = math.tanh %197 : vector<8x128xf32>
    %cst_121 = arith.constant 5.000000e-01 : f32
    %199 = vector.broadcast %cst_121 : f32 to vector<8x128xf32>
    %200 = arith.mulf %199, %198 : vector<8x128xf32>
    %cst_122 = arith.constant 5.000000e-01 : f32
    %201 = vector.broadcast %cst_122 : f32 to vector<8x128xf32>
    %202 = arith.addf %200, %201 : vector<8x128xf32>
    %203 = vector.extract_strided_slice %186 {offsets = [0, 256], sizes = [8, 128], strides = [1, 1]} : vector<8x384xf32> to vector<8x128xf32>
    %204 = arith.mulf %194, %171 : vector<8x128xf32>
    %c0_123 = arith.constant 0 : index
    %c0_124 = arith.constant 0 : index
    %205 = vector.load %arg6[%c0_123, %c0_124] : memref<128x128xf32, #tpu.memory_space<vmem>>, vector<128x128xf32>
    %cst_125 = arith.constant dense<0.000000e+00> : vector<8x128xf32>
    %206 = tpu.matmul %204, %205, %cst_125 {dimension_numbers = #tpu.dot_dimension_numbers<[1], [0], [0], [1], [0, 0, 1, 1], [], []>} : vector<8x128xf32>, vector<128x128xf32>, vector<8x128xf32> -> vector<8x128xf32>
    %207 = arith.addf %203, %206 : vector<8x128xf32>
    %208 = math.tanh %207 : vector<8x128xf32>
    %209 = arith.subf %171, %208 : vector<8x128xf32>
    %210 = arith.mulf %202, %209 : vector<8x128xf32>
    %211 = arith.addf %208, %210 : vector<8x128xf32>
    %cst_126 = arith.constant -5.000000e+00 : f32
    %cst_127 = arith.constant 5.000000e+00 : f32
    %212 = vector.broadcast %cst_126 : f32 to vector<8x128xf32>
    %213 = arith.maximumf %212, %211 : vector<8x128xf32>
    %214 = vector.broadcast %cst_127 : f32 to vector<8x128xf32>
    %215 = arith.minimumf %214, %213 : vector<8x128xf32>
    %c4_128 = arith.constant 4 : index
    %c0_129 = arith.constant 0 : index
    %c0_130 = arith.constant 0 : index
    %216 = vector.load %arg8[%c4_128, %c0_129, %c0_130] : memref<16x8x128xf32, #tpu.memory_space<vmem>>, vector<1x8x128xf32>
    %217 = vector.shape_cast %216 : vector<1x8x128xf32> to vector<8x128xf32>
    %218 = vector.shape_cast %215 : vector<8x128xf32> to vector<1x8x128xf32>
    tpu.vector_store %arg8[%c4_128, %c0_129, %c0_130], %218 {strides = array<i32>} : memref<16x8x128xf32, #tpu.memory_space<vmem>>, vector<1x8x128xf32>,
    %c0_131 = arith.constant 0 : index
    %c0_132 = arith.constant 0 : index
    %219 = vector.load %arg7[%c0_131, %c0_132] : memref<128x128xf32, #tpu.memory_space<vmem>>, vector<128x128xf32>
    %cst_133 = arith.constant dense<0.000000e+00> : vector<8x128xf32>
    %220 = tpu.matmul %215, %219, %cst_133 {dimension_numbers = #tpu.dot_dimension_numbers<[1], [0], [0], [1], [0, 0, 1, 1], [], []>} : vector<8x128xf32>, vector<128x128xf32>, vector<8x128xf32> -> vector<8x128xf32>
    %c4_134 = arith.constant 4 : index
    %c0_135 = arith.constant 0 : index
    %c0_136 = arith.constant 0 : index
    %221 = vector.load %arg9[%c4_134, %c0_135, %c0_136] : memref<16x8x128xf32, #tpu.memory_space<vmem>>, vector<1x8x128xf32>
    %222 = vector.shape_cast %221 : vector<1x8x128xf32> to vector<8x128xf32>
    %223 = vector.shape_cast %220 : vector<8x128xf32> to vector<1x8x128xf32>
    tpu.vector_store %arg9[%c4_134, %c0_135, %c0_136], %223 {strides = array<i32>} : memref<16x8x128xf32, #tpu.memory_space<vmem>>, vector<1x8x128xf32>,
    %c5 = arith.constant 5 : index
    %c0_137 = arith.constant 0 : index
    %c0_138 = arith.constant 0 : index
    %224 = vector.load %arg2[%c5, %c0_137, %c0_138] : memref<16x8x128xf32, #tpu.memory_space<vmem>>, vector<1x8x128xf32>
    %225 = vector.shape_cast %224 : vector<1x8x128xf32> to vector<8x128xf32>
    %226 = tpu.concatenate %225, %215 in 1 : vector<8x128xf32>, vector<8x128xf32> -> vector<8x256xf32>
    %c0_139 = arith.constant 0 : index
    %c0_140 = arith.constant 0 : index
    %227 = vector.load %arg4[%c0_139, %c0_140] : memref<256x384xf32, #tpu.memory_space<vmem>>, vector<256x384xf32>
    %cst_141 = arith.constant dense<0.000000e+00> : vector<8x384xf32>
    %228 = tpu.matmul %226, %227, %cst_141 {dimension_numbers = #tpu.dot_dimension_numbers<[1], [0], [0], [1], [0, 0, 1, 1], [], []>} : vector<8x256xf32>, vector<256x384xf32>, vector<8x384xf32> -> vector<8x384xf32>
    %c0_142 = arith.constant 0 : index
    %c0_143 = arith.constant 0 : index
    %229 = vector.load %arg5[%c0_142, %c0_143] : memref<8x384xf32, #tpu.memory_space<vmem>>, vector<8x384xf32>
    %230 = arith.addf %228, %229 : vector<8x384xf32>
    %231 = vector.extract_strided_slice %230 {offsets = [0, 0], sizes = [8, 128], strides = [1, 1]} : vector<8x384xf32> to vector<8x128xf32>
    %cst_144 = arith.constant 5.000000e-01 : f32
    %232 = vector.broadcast %cst_144 : f32 to vector<8x128xf32>
    %233 = arith.mulf %232, %231 : vector<8x128xf32>
    %234 = math.tanh %233 : vector<8x128xf32>
    %cst_145 = arith.constant 5.000000e-01 : f32
    %235 = vector.broadcast %cst_145 : f32 to vector<8x128xf32>
    %236 = arith.mulf %235, %234 : vector<8x128xf32>
    %cst_146 = arith.constant 5.000000e-01 : f32
    %237 = vector.broadcast %cst_146 : f32 to vector<8x128xf32>
    %238 = arith.addf %236, %237 : vector<8x128xf32>
    %239 = vector.extract_strided_slice %230 {offsets = [0, 128], sizes = [8, 128], strides = [1, 1]} : vector<8x384xf32> to vector<8x128xf32>
    %cst_147 = arith.constant 5.000000e-01 : f32
    %240 = vector.broadcast %cst_147 : f32 to vector<8x128xf32>
    %241 = arith.mulf %240, %239 : vector<8x128xf32>
    %242 = math.tanh %241 : vector<8x128xf32>
    %cst_148 = arith.constant 5.000000e-01 : f32
    %243 = vector.broadcast %cst_148 : f32 to vector<8x128xf32>
    %244 = arith.mulf %243, %242 : vector<8x128xf32>
    %cst_149 = arith.constant 5.000000e-01 : f32
    %245 = vector.broadcast %cst_149 : f32 to vector<8x128xf32>
    %246 = arith.addf %244, %245 : vector<8x128xf32>
    %247 = vector.extract_strided_slice %230 {offsets = [0, 256], sizes = [8, 128], strides = [1, 1]} : vector<8x384xf32> to vector<8x128xf32>
    %248 = arith.mulf %238, %215 : vector<8x128xf32>
    %c0_150 = arith.constant 0 : index
    %c0_151 = arith.constant 0 : index
    %249 = vector.load %arg6[%c0_150, %c0_151] : memref<128x128xf32, #tpu.memory_space<vmem>>, vector<128x128xf32>
    %cst_152 = arith.constant dense<0.000000e+00> : vector<8x128xf32>
    %250 = tpu.matmul %248, %249, %cst_152 {dimension_numbers = #tpu.dot_dimension_numbers<[1], [0], [0], [1], [0, 0, 1, 1], [], []>} : vector<8x128xf32>, vector<128x128xf32>, vector<8x128xf32> -> vector<8x128xf32>
    %251 = arith.addf %247, %250 : vector<8x128xf32>
    %252 = math.tanh %251 : vector<8x128xf32>
    %253 = arith.subf %215, %252 : vector<8x128xf32>
    %254 = arith.mulf %246, %253 : vector<8x128xf32>
    %255 = arith.addf %252, %254 : vector<8x128xf32>
    %cst_153 = arith.constant -5.000000e+00 : f32
    %cst_154 = arith.constant 5.000000e+00 : f32
    %256 = vector.broadcast %cst_153 : f32 to vector<8x128xf32>
    %257 = arith.maximumf %256, %255 : vector<8x128xf32>
    %258 = vector.broadcast %cst_154 : f32 to vector<8x128xf32>
    %259 = arith.minimumf %258, %257 : vector<8x128xf32>
    %c5_155 = arith.constant 5 : index
    %c0_156 = arith.constant 0 : index
    %c0_157 = arith.constant 0 : index
    %260 = vector.load %arg8[%c5_155, %c0_156, %c0_157] : memref<16x8x128xf32, #tpu.memory_space<vmem>>, vector<1x8x128xf32>
    %261 = vector.shape_cast %260 : vector<1x8x128xf32> to vector<8x128xf32>
    %262 = vector.shape_cast %259 : vector<8x128xf32> to vector<1x8x128xf32>
    tpu.vector_store %arg8[%c5_155, %c0_156, %c0_157], %262 {strides = array<i32>} : memref<16x8x128xf32, #tpu.memory_space<vmem>>, vector<1x8x128xf32>,
    %c0_158 = arith.constant 0 : index
    %c0_159 = arith.constant 0 : index
    %263 = vector.load %arg7[%c0_158, %c0_159] : memref<128x128xf32, #tpu.memory_space<vmem>>, vector<128x128xf32>
    %cst_160 = arith.constant dense<0.000000e+00> : vector<8x128xf32>
    %264 = tpu.matmul %259, %263, %cst_160 {dimension_numbers = #tpu.dot_dimension_numbers<[1], [0], [0], [1], [0, 0, 1, 1], [], []>} : vector<8x128xf32>, vector<128x128xf32>, vector<8x128xf32> -> vector<8x128xf32>
    %c5_161 = arith.constant 5 : index
    %c0_162 = arith.constant 0 : index
    %c0_163 = arith.constant 0 : index
    %265 = vector.load %arg9[%c5_161, %c0_162, %c0_163] : memref<16x8x128xf32, #tpu.memory_space<vmem>>, vector<1x8x128xf32>
    %266 = vector.shape_cast %265 : vector<1x8x128xf32> to vector<8x128xf32>
    %267 = vector.shape_cast %264 : vector<8x128xf32> to vector<1x8x128xf32>
    tpu.vector_store %arg9[%c5_161, %c0_162, %c0_163], %267 {strides = array<i32>} : memref<16x8x128xf32, #tpu.memory_space<vmem>>, vector<1x8x128xf32>,
    %c6 = arith.constant 6 : index
    %c0_164 = arith.constant 0 : index
    %c0_165 = arith.constant 0 : index
    %268 = vector.load %arg2[%c6, %c0_164, %c0_165] : memref<16x8x128xf32, #tpu.memory_space<vmem>>, vector<1x8x128xf32>
    %269 = vector.shape_cast %268 : vector<1x8x128xf32> to vector<8x128xf32>
    %270 = tpu.concatenate %269, %259 in 1 : vector<8x128xf32>, vector<8x128xf32> -> vector<8x256xf32>
    %c0_166 = arith.constant 0 : index
    %c0_167 = arith.constant 0 : index
    %271 = vector.load %arg4[%c0_166, %c0_167] : memref<256x384xf32, #tpu.memory_space<vmem>>, vector<256x384xf32>
    %cst_168 = arith.constant dense<0.000000e+00> : vector<8x384xf32>
    %272 = tpu.matmul %270, %271, %cst_168 {dimension_numbers = #tpu.dot_dimension_numbers<[1], [0], [0], [1], [0, 0, 1, 1], [], []>} : vector<8x256xf32>, vector<256x384xf32>, vector<8x384xf32> -> vector<8x384xf32>
    %c0_169 = arith.constant 0 : index
    %c0_170 = arith.constant 0 : index
    %273 = vector.load %arg5[%c0_169, %c0_170] : memref<8x384xf32, #tpu.memory_space<vmem>>, vector<8x384xf32>
    %274 = arith.addf %272, %273 : vector<8x384xf32>
    %275 = vector.extract_strided_slice %274 {offsets = [0, 0], sizes = [8, 128], strides = [1, 1]} : vector<8x384xf32> to vector<8x128xf32>
    %cst_171 = arith.constant 5.000000e-01 : f32
    %276 = vector.broadcast %cst_171 : f32 to vector<8x128xf32>
    %277 = arith.mulf %276, %275 : vector<8x128xf32>
    %278 = math.tanh %277 : vector<8x128xf32>
    %cst_172 = arith.constant 5.000000e-01 : f32
    %279 = vector.broadcast %cst_172 : f32 to vector<8x128xf32>
    %280 = arith.mulf %279, %278 : vector<8x128xf32>
    %cst_173 = arith.constant 5.000000e-01 : f32
    %281 = vector.broadcast %cst_173 : f32 to vector<8x128xf32>
    %282 = arith.addf %280, %281 : vector<8x128xf32>
    %283 = vector.extract_strided_slice %274 {offsets = [0, 128], sizes = [8, 128], strides = [1, 1]} : vector<8x384xf32> to vector<8x128xf32>
    %cst_174 = arith.constant 5.000000e-01 : f32
    %284 = vector.broadcast %cst_174 : f32 to vector<8x128xf32>
    %285 = arith.mulf %284, %283 : vector<8x128xf32>
    %286 = math.tanh %285 : vector<8x128xf32>
    %cst_175 = arith.constant 5.000000e-01 : f32
    %287 = vector.broadcast %cst_175 : f32 to vector<8x128xf32>
    %288 = arith.mulf %287, %286 : vector<8x128xf32>
    %cst_176 = arith.constant 5.000000e-01 : f32
    %289 = vector.broadcast %cst_176 : f32 to vector<8x128xf32>
    %290 = arith.addf %288, %289 : vector<8x128xf32>
    %291 = vector.extract_strided_slice %274 {offsets = [0, 256], sizes = [8, 128], strides = [1, 1]} : vector<8x384xf32> to vector<8x128xf32>
    %292 = arith.mulf %282, %259 : vector<8x128xf32>
    %c0_177 = arith.constant 0 : index
    %c0_178 = arith.constant 0 : index
    %293 = vector.load %arg6[%c0_177, %c0_178] : memref<128x128xf32, #tpu.memory_space<vmem>>, vector<128x128xf32>
    %cst_179 = arith.constant dense<0.000000e+00> : vector<8x128xf32>
    %294 = tpu.matmul %292, %293, %cst_179 {dimension_numbers = #tpu.dot_dimension_numbers<[1], [0], [0], [1], [0, 0, 1, 1], [], []>} : vector<8x128xf32>, vector<128x128xf32>, vector<8x128xf32> -> vector<8x128xf32>
    %295 = arith.addf %291, %294 : vector<8x128xf32>
    %296 = math.tanh %295 : vector<8x128xf32>
    %297 = arith.subf %259, %296 : vector<8x128xf32>
    %298 = arith.mulf %290, %297 : vector<8x128xf32>
    %299 = arith.addf %296, %298 : vector<8x128xf32>
    %cst_180 = arith.constant -5.000000e+00 : f32
    %cst_181 = arith.constant 5.000000e+00 : f32
    %300 = vector.broadcast %cst_180 : f32 to vector<8x128xf32>
    %301 = arith.maximumf %300, %299 : vector<8x128xf32>
    %302 = vector.broadcast %cst_181 : f32 to vector<8x128xf32>
    %303 = arith.minimumf %302, %301 : vector<8x128xf32>
    %c6_182 = arith.constant 6 : index
    %c0_183 = arith.constant 0 : index
    %c0_184 = arith.constant 0 : index
    %304 = vector.load %arg8[%c6_182, %c0_183, %c0_184] : memref<16x8x128xf32, #tpu.memory_space<vmem>>, vector<1x8x128xf32>
    %305 = vector.shape_cast %304 : vector<1x8x128xf32> to vector<8x128xf32>
    %306 = vector.shape_cast %303 : vector<8x128xf32> to vector<1x8x128xf32>
    tpu.vector_store %arg8[%c6_182, %c0_183, %c0_184], %306 {strides = array<i32>} : memref<16x8x128xf32, #tpu.memory_space<vmem>>, vector<1x8x128xf32>,
    %c0_185 = arith.constant 0 : index
    %c0_186 = arith.constant 0 : index
    %307 = vector.load %arg7[%c0_185, %c0_186] : memref<128x128xf32, #tpu.memory_space<vmem>>, vector<128x128xf32>
    %cst_187 = arith.constant dense<0.000000e+00> : vector<8x128xf32>
    %308 = tpu.matmul %303, %307, %cst_187 {dimension_numbers = #tpu.dot_dimension_numbers<[1], [0], [0], [1], [0, 0, 1, 1], [], []>} : vector<8x128xf32>, vector<128x128xf32>, vector<8x128xf32> -> vector<8x128xf32>
    %c6_188 = arith.constant 6 : index
    %c0_189 = arith.constant 0 : index
    %c0_190 = arith.constant 0 : index
    %309 = vector.load %arg9[%c6_188, %c0_189, %c0_190] : memref<16x8x128xf32, #tpu.memory_space<vmem>>, vector<1x8x128xf32>
    %310 = vector.shape_cast %309 : vector<1x8x128xf32> to vector<8x128xf32>
    %311 = vector.shape_cast %308 : vector<8x128xf32> to vector<1x8x128xf32>
    tpu.vector_store %arg9[%c6_188, %c0_189, %c0_190], %311 {strides = array<i32>} : memref<16x8x128xf32, #tpu.memory_space<vmem>>, vector<1x8x128xf32>,
    %c7 = arith.constant 7 : index
    %c0_191 = arith.constant 0 : index
    %c0_192 = arith.constant 0 : index
    %312 = vector.load %arg2[%c7, %c0_191, %c0_192] : memref<16x8x128xf32, #tpu.memory_space<vmem>>, vector<1x8x128xf32>
    %313 = vector.shape_cast %312 : vector<1x8x128xf32> to vector<8x128xf32>
    %314 = tpu.concatenate %313, %303 in 1 : vector<8x128xf32>, vector<8x128xf32> -> vector<8x256xf32>
    %c0_193 = arith.constant 0 : index
    %c0_194 = arith.constant 0 : index
    %315 = vector.load %arg4[%c0_193, %c0_194] : memref<256x384xf32, #tpu.memory_space<vmem>>, vector<256x384xf32>
    %cst_195 = arith.constant dense<0.000000e+00> : vector<8x384xf32>
    %316 = tpu.matmul %314, %315, %cst_195 {dimension_numbers = #tpu.dot_dimension_numbers<[1], [0], [0], [1], [0, 0, 1, 1], [], []>} : vector<8x256xf32>, vector<256x384xf32>, vector<8x384xf32> -> vector<8x384xf32>
    %c0_196 = arith.constant 0 : index
    %c0_197 = arith.constant 0 : index
    %317 = vector.load %arg5[%c0_196, %c0_197] : memref<8x384xf32, #tpu.memory_space<vmem>>, vector<8x384xf32>
    %318 = arith.addf %316, %317 : vector<8x384xf32>
    %319 = vector.extract_strided_slice %318 {offsets = [0, 0], sizes = [8, 128], strides = [1, 1]} : vector<8x384xf32> to vector<8x128xf32>
    %cst_198 = arith.constant 5.000000e-01 : f32
    %320 = vector.broadcast %cst_198 : f32 to vector<8x128xf32>
    %321 = arith.mulf %320, %319 : vector<8x128xf32>
    %322 = math.tanh %321 : vector<8x128xf32>
    %cst_199 = arith.constant 5.000000e-01 : f32
    %323 = vector.broadcast %cst_199 : f32 to vector<8x128xf32>
    %324 = arith.mulf %323, %322 : vector<8x128xf32>
    %cst_200 = arith.constant 5.000000e-01 : f32
    %325 = vector.broadcast %cst_200 : f32 to vector<8x128xf32>
    %326 = arith.addf %324, %325 : vector<8x128xf32>
    %327 = vector.extract_strided_slice %318 {offsets = [0, 128], sizes = [8, 128], strides = [1, 1]} : vector<8x384xf32> to vector<8x128xf32>
    %cst_201 = arith.constant 5.000000e-01 : f32
    %328 = vector.broadcast %cst_201 : f32 to vector<8x128xf32>
    %329 = arith.mulf %328, %327 : vector<8x128xf32>
    %330 = math.tanh %329 : vector<8x128xf32>
    %cst_202 = arith.constant 5.000000e-01 : f32
    %331 = vector.broadcast %cst_202 : f32 to vector<8x128xf32>
    %332 = arith.mulf %331, %330 : vector<8x128xf32>
    %cst_203 = arith.constant 5.000000e-01 : f32
    %333 = vector.broadcast %cst_203 : f32 to vector<8x128xf32>
    %334 = arith.addf %332, %333 : vector<8x128xf32>
    %335 = vector.extract_strided_slice %318 {offsets = [0, 256], sizes = [8, 128], strides = [1, 1]} : vector<8x384xf32> to vector<8x128xf32>
    %336 = arith.mulf %326, %303 : vector<8x128xf32>
    %c0_204 = arith.constant 0 : index
    %c0_205 = arith.constant 0 : index
    %337 = vector.load %arg6[%c0_204, %c0_205] : memref<128x128xf32, #tpu.memory_space<vmem>>, vector<128x128xf32>
    %cst_206 = arith.constant dense<0.000000e+00> : vector<8x128xf32>
    %338 = tpu.matmul %336, %337, %cst_206 {dimension_numbers = #tpu.dot_dimension_numbers<[1], [0], [0], [1], [0, 0, 1, 1], [], []>} : vector<8x128xf32>, vector<128x128xf32>, vector<8x128xf32> -> vector<8x128xf32>
    %339 = arith.addf %335, %338 : vector<8x128xf32>
    %340 = math.tanh %339 : vector<8x128xf32>
    %341 = arith.subf %303, %340 : vector<8x128xf32>
    %342 = arith.mulf %334, %341 : vector<8x128xf32>
    %343 = arith.addf %340, %342 : vector<8x128xf32>
    %cst_207 = arith.constant -5.000000e+00 : f32
    %cst_208 = arith.constant 5.000000e+00 : f32
    %344 = vector.broadcast %cst_207 : f32 to vector<8x128xf32>
    %345 = arith.maximumf %344, %343 : vector<8x128xf32>
    %346 = vector.broadcast %cst_208 : f32 to vector<8x128xf32>
    %347 = arith.minimumf %346, %345 : vector<8x128xf32>
    %c7_209 = arith.constant 7 : index
    %c0_210 = arith.constant 0 : index
    %c0_211 = arith.constant 0 : index
    %348 = vector.load %arg8[%c7_209, %c0_210, %c0_211] : memref<16x8x128xf32, #tpu.memory_space<vmem>>, vector<1x8x128xf32>
    %349 = vector.shape_cast %348 : vector<1x8x128xf32> to vector<8x128xf32>
    %350 = vector.shape_cast %347 : vector<8x128xf32> to vector<1x8x128xf32>
    tpu.vector_store %arg8[%c7_209, %c0_210, %c0_211], %350 {strides = array<i32>} : memref<16x8x128xf32, #tpu.memory_space<vmem>>, vector<1x8x128xf32>,
    %c0_212 = arith.constant 0 : index
    %c0_213 = arith.constant 0 : index
    %351 = vector.load %arg7[%c0_212, %c0_213] : memref<128x128xf32, #tpu.memory_space<vmem>>, vector<128x128xf32>
    %cst_214 = arith.constant dense<0.000000e+00> : vector<8x128xf32>
    %352 = tpu.matmul %347, %351, %cst_214 {dimension_numbers = #tpu.dot_dimension_numbers<[1], [0], [0], [1], [0, 0, 1, 1], [], []>} : vector<8x128xf32>, vector<128x128xf32>, vector<8x128xf32> -> vector<8x128xf32>
    %c7_215 = arith.constant 7 : index
    %c0_216 = arith.constant 0 : index
    %c0_217 = arith.constant 0 : index
    %353 = vector.load %arg9[%c7_215, %c0_216, %c0_217] : memref<16x8x128xf32, #tpu.memory_space<vmem>>, vector<1x8x128xf32>
    %354 = vector.shape_cast %353 : vector<1x8x128xf32> to vector<8x128xf32>
    %355 = vector.shape_cast %352 : vector<8x128xf32> to vector<1x8x128xf32>
    tpu.vector_store %arg9[%c7_215, %c0_216, %c0_217], %355 {strides = array<i32>} : memref<16x8x128xf32, #tpu.memory_space<vmem>>, vector<1x8x128xf32>,
    %c8 = arith.constant 8 : index
    %c0_218 = arith.constant 0 : index
    %c0_219 = arith.constant 0 : index
    %356 = vector.load %arg2[%c8, %c0_218, %c0_219] : memref<16x8x128xf32, #tpu.memory_space<vmem>>, vector<1x8x128xf32>
    %357 = vector.shape_cast %356 : vector<1x8x128xf32> to vector<8x128xf32>
    %358 = tpu.concatenate %357, %347 in 1 : vector<8x128xf32>, vector<8x128xf32> -> vector<8x256xf32>
    %c0_220 = arith.constant 0 : index
    %c0_221 = arith.constant 0 : index
    %359 = vector.load %arg4[%c0_220, %c0_221] : memref<256x384xf32, #tpu.memory_space<vmem>>, vector<256x384xf32>
    %cst_222 = arith.constant dense<0.000000e+00> : vector<8x384xf32>
    %360 = tpu.matmul %358, %359, %cst_222 {dimension_numbers = #tpu.dot_dimension_numbers<[1], [0], [0], [1], [0, 0, 1, 1], [], []>} : vector<8x256xf32>, vector<256x384xf32>, vector<8x384xf32> -> vector<8x384xf32>
    %c0_223 = arith.constant 0 : index
    %c0_224 = arith.constant 0 : index
    %361 = vector.load %arg5[%c0_223, %c0_224] : memref<8x384xf32, #tpu.memory_space<vmem>>, vector<8x384xf32>
    %362 = arith.addf %360, %361 : vector<8x384xf32>
    %363 = vector.extract_strided_slice %362 {offsets = [0, 0], sizes = [8, 128], strides = [1, 1]} : vector<8x384xf32> to vector<8x128xf32>
    %cst_225 = arith.constant 5.000000e-01 : f32
    %364 = vector.broadcast %cst_225 : f32 to vector<8x128xf32>
    %365 = arith.mulf %364, %363 : vector<8x128xf32>
    %366 = math.tanh %365 : vector<8x128xf32>
    %cst_226 = arith.constant 5.000000e-01 : f32
    %367 = vector.broadcast %cst_226 : f32 to vector<8x128xf32>
    %368 = arith.mulf %367, %366 : vector<8x128xf32>
    %cst_227 = arith.constant 5.000000e-01 : f32
    %369 = vector.broadcast %cst_227 : f32 to vector<8x128xf32>
    %370 = arith.addf %368, %369 : vector<8x128xf32>
    %371 = vector.extract_strided_slice %362 {offsets = [0, 128], sizes = [8, 128], strides = [1, 1]} : vector<8x384xf32> to vector<8x128xf32>
    %cst_228 = arith.constant 5.000000e-01 : f32
    %372 = vector.broadcast %cst_228 : f32 to vector<8x128xf32>
    %373 = arith.mulf %372, %371 : vector<8x128xf32>
    %374 = math.tanh %373 : vector<8x128xf32>
    %cst_229 = arith.constant 5.000000e-01 : f32
    %375 = vector.broadcast %cst_229 : f32 to vector<8x128xf32>
    %376 = arith.mulf %375, %374 : vector<8x128xf32>
    %cst_230 = arith.constant 5.000000e-01 : f32
    %377 = vector.broadcast %cst_230 : f32 to vector<8x128xf32>
    %378 = arith.addf %376, %377 : vector<8x128xf32>
    %379 = vector.extract_strided_slice %362 {offsets = [0, 256], sizes = [8, 128], strides = [1, 1]} : vector<8x384xf32> to vector<8x128xf32>
    %380 = arith.mulf %370, %347 : vector<8x128xf32>
    %c0_231 = arith.constant 0 : index
    %c0_232 = arith.constant 0 : index
    %381 = vector.load %arg6[%c0_231, %c0_232] : memref<128x128xf32, #tpu.memory_space<vmem>>, vector<128x128xf32>
    %cst_233 = arith.constant dense<0.000000e+00> : vector<8x128xf32>
    %382 = tpu.matmul %380, %381, %cst_233 {dimension_numbers = #tpu.dot_dimension_numbers<[1], [0], [0], [1], [0, 0, 1, 1], [], []>} : vector<8x128xf32>, vector<128x128xf32>, vector<8x128xf32> -> vector<8x128xf32>
    %383 = arith.addf %379, %382 : vector<8x128xf32>
    %384 = math.tanh %383 : vector<8x128xf32>
    %385 = arith.subf %347, %384 : vector<8x128xf32>
    %386 = arith.mulf %378, %385 : vector<8x128xf32>
    %387 = arith.addf %384, %386 : vector<8x128xf32>
    %cst_234 = arith.constant -5.000000e+00 : f32
    %cst_235 = arith.constant 5.000000e+00 : f32
    %388 = vector.broadcast %cst_234 : f32 to vector<8x128xf32>
    %389 = arith.maximumf %388, %387 : vector<8x128xf32>
    %390 = vector.broadcast %cst_235 : f32 to vector<8x128xf32>
    %391 = arith.minimumf %390, %389 : vector<8x128xf32>
    %c8_236 = arith.constant 8 : index
    %c0_237 = arith.constant 0 : index
    %c0_238 = arith.constant 0 : index
    %392 = vector.load %arg8[%c8_236, %c0_237, %c0_238] : memref<16x8x128xf32, #tpu.memory_space<vmem>>, vector<1x8x128xf32>
    %393 = vector.shape_cast %392 : vector<1x8x128xf32> to vector<8x128xf32>
    %394 = vector.shape_cast %391 : vector<8x128xf32> to vector<1x8x128xf32>
    tpu.vector_store %arg8[%c8_236, %c0_237, %c0_238], %394 {strides = array<i32>} : memref<16x8x128xf32, #tpu.memory_space<vmem>>, vector<1x8x128xf32>,
    %c0_239 = arith.constant 0 : index
    %c0_240 = arith.constant 0 : index
    %395 = vector.load %arg7[%c0_239, %c0_240] : memref<128x128xf32, #tpu.memory_space<vmem>>, vector<128x128xf32>
    %cst_241 = arith.constant dense<0.000000e+00> : vector<8x128xf32>
    %396 = tpu.matmul %391, %395, %cst_241 {dimension_numbers = #tpu.dot_dimension_numbers<[1], [0], [0], [1], [0, 0, 1, 1], [], []>} : vector<8x128xf32>, vector<128x128xf32>, vector<8x128xf32> -> vector<8x128xf32>
    %c8_242 = arith.constant 8 : index
    %c0_243 = arith.constant 0 : index
    %c0_244 = arith.constant 0 : index
    %397 = vector.load %arg9[%c8_242, %c0_243, %c0_244] : memref<16x8x128xf32, #tpu.memory_space<vmem>>, vector<1x8x128xf32>
    %398 = vector.shape_cast %397 : vector<1x8x128xf32> to vector<8x128xf32>
    %399 = vector.shape_cast %396 : vector<8x128xf32> to vector<1x8x128xf32>
    tpu.vector_store %arg9[%c8_242, %c0_243, %c0_244], %399 {strides = array<i32>} : memref<16x8x128xf32, #tpu.memory_space<vmem>>, vector<1x8x128xf32>,
    %c9 = arith.constant 9 : index
    %c0_245 = arith.constant 0 : index
    %c0_246 = arith.constant 0 : index
    %400 = vector.load %arg2[%c9, %c0_245, %c0_246] : memref<16x8x128xf32, #tpu.memory_space<vmem>>, vector<1x8x128xf32>
    %401 = vector.shape_cast %400 : vector<1x8x128xf32> to vector<8x128xf32>
    %402 = tpu.concatenate %401, %391 in 1 : vector<8x128xf32>, vector<8x128xf32> -> vector<8x256xf32>
    %c0_247 = arith.constant 0 : index
    %c0_248 = arith.constant 0 : index
    %403 = vector.load %arg4[%c0_247, %c0_248] : memref<256x384xf32, #tpu.memory_space<vmem>>, vector<256x384xf32>
    %cst_249 = arith.constant dense<0.000000e+00> : vector<8x384xf32>
    %404 = tpu.matmul %402, %403, %cst_249 {dimension_numbers = #tpu.dot_dimension_numbers<[1], [0], [0], [1], [0, 0, 1, 1], [], []>} : vector<8x256xf32>, vector<256x384xf32>, vector<8x384xf32> -> vector<8x384xf32>
    %c0_250 = arith.constant 0 : index
    %c0_251 = arith.constant 0 : index
    %405 = vector.load %arg5[%c0_250, %c0_251] : memref<8x384xf32, #tpu.memory_space<vmem>>, vector<8x384xf32>
    %406 = arith.addf %404, %405 : vector<8x384xf32>
    %407 = vector.extract_strided_slice %406 {offsets = [0, 0], sizes = [8, 128], strides = [1, 1]} : vector<8x384xf32> to vector<8x128xf32>
    %cst_252 = arith.constant 5.000000e-01 : f32
    %408 = vector.broadcast %cst_252 : f32 to vector<8x128xf32>
    %409 = arith.mulf %408, %407 : vector<8x128xf32>
    %410 = math.tanh %409 : vector<8x128xf32>
    %cst_253 = arith.constant 5.000000e-01 : f32
    %411 = vector.broadcast %cst_253 : f32 to vector<8x128xf32>
    %412 = arith.mulf %411, %410 : vector<8x128xf32>
    %cst_254 = arith.constant 5.000000e-01 : f32
    %413 = vector.broadcast %cst_254 : f32 to vector<8x128xf32>
    %414 = arith.addf %412, %413 : vector<8x128xf32>
    %415 = vector.extract_strided_slice %406 {offsets = [0, 128], sizes = [8, 128], strides = [1, 1]} : vector<8x384xf32> to vector<8x128xf32>
    %cst_255 = arith.constant 5.000000e-01 : f32
    %416 = vector.broadcast %cst_255 : f32 to vector<8x128xf32>
    %417 = arith.mulf %416, %415 : vector<8x128xf32>
    %418 = math.tanh %417 : vector<8x128xf32>
    %cst_256 = arith.constant 5.000000e-01 : f32
    %419 = vector.broadcast %cst_256 : f32 to vector<8x128xf32>
    %420 = arith.mulf %419, %418 : vector<8x128xf32>
    %cst_257 = arith.constant 5.000000e-01 : f32
    %421 = vector.broadcast %cst_257 : f32 to vector<8x128xf32>
    %422 = arith.addf %420, %421 : vector<8x128xf32>
    %423 = vector.extract_strided_slice %406 {offsets = [0, 256], sizes = [8, 128], strides = [1, 1]} : vector<8x384xf32> to vector<8x128xf32>
    %424 = arith.mulf %414, %391 : vector<8x128xf32>
    %c0_258 = arith.constant 0 : index
    %c0_259 = arith.constant 0 : index
    %425 = vector.load %arg6[%c0_258, %c0_259] : memref<128x128xf32, #tpu.memory_space<vmem>>, vector<128x128xf32>
    %cst_260 = arith.constant dense<0.000000e+00> : vector<8x128xf32>
    %426 = tpu.matmul %424, %425, %cst_260 {dimension_numbers = #tpu.dot_dimension_numbers<[1], [0], [0], [1], [0, 0, 1, 1], [], []>} : vector<8x128xf32>, vector<128x128xf32>, vector<8x128xf32> -> vector<8x128xf32>
    %427 = arith.addf %423, %426 : vector<8x128xf32>
    %428 = math.tanh %427 : vector<8x128xf32>
    %429 = arith.subf %391, %428 : vector<8x128xf32>
    %430 = arith.mulf %422, %429 : vector<8x128xf32>
    %431 = arith.addf %428, %430 : vector<8x128xf32>
    %cst_261 = arith.constant -5.000000e+00 : f32
    %cst_262 = arith.constant 5.000000e+00 : f32
    %432 = vector.broadcast %cst_261 : f32 to vector<8x128xf32>
    %433 = arith.maximumf %432, %431 : vector<8x128xf32>
    %434 = vector.broadcast %cst_262 : f32 to vector<8x128xf32>
    %435 = arith.minimumf %434, %433 : vector<8x128xf32>
    %c9_263 = arith.constant 9 : index
    %c0_264 = arith.constant 0 : index
    %c0_265 = arith.constant 0 : index
    %436 = vector.load %arg8[%c9_263, %c0_264, %c0_265] : memref<16x8x128xf32, #tpu.memory_space<vmem>>, vector<1x8x128xf32>
    %437 = vector.shape_cast %436 : vector<1x8x128xf32> to vector<8x128xf32>
    %438 = vector.shape_cast %435 : vector<8x128xf32> to vector<1x8x128xf32>
    tpu.vector_store %arg8[%c9_263, %c0_264, %c0_265], %438 {strides = array<i32>} : memref<16x8x128xf32, #tpu.memory_space<vmem>>, vector<1x8x128xf32>,
    %c0_266 = arith.constant 0 : index
    %c0_267 = arith.constant 0 : index
    %439 = vector.load %arg7[%c0_266, %c0_267] : memref<128x128xf32, #tpu.memory_space<vmem>>, vector<128x128xf32>
    %cst_268 = arith.constant dense<0.000000e+00> : vector<8x128xf32>
    %440 = tpu.matmul %435, %439, %cst_268 {dimension_numbers = #tpu.dot_dimension_numbers<[1], [0], [0], [1], [0, 0, 1, 1], [], []>} : vector<8x128xf32>, vector<128x128xf32>, vector<8x128xf32> -> vector<8x128xf32>
    %c9_269 = arith.constant 9 : index
    %c0_270 = arith.constant 0 : index
    %c0_271 = arith.constant 0 : index
    %441 = vector.load %arg9[%c9_269, %c0_270, %c0_271] : memref<16x8x128xf32, #tpu.memory_space<vmem>>, vector<1x8x128xf32>
    %442 = vector.shape_cast %441 : vector<1x8x128xf32> to vector<8x128xf32>
    %443 = vector.shape_cast %440 : vector<8x128xf32> to vector<1x8x128xf32>
    tpu.vector_store %arg9[%c9_269, %c0_270, %c0_271], %443 {strides = array<i32>} : memref<16x8x128xf32, #tpu.memory_space<vmem>>, vector<1x8x128xf32>,
    %c10 = arith.constant 10 : index
    %c0_272 = arith.constant 0 : index
    %c0_273 = arith.constant 0 : index
    %444 = vector.load %arg2[%c10, %c0_272, %c0_273] : memref<16x8x128xf32, #tpu.memory_space<vmem>>, vector<1x8x128xf32>
    %445 = vector.shape_cast %444 : vector<1x8x128xf32> to vector<8x128xf32>
    %446 = tpu.concatenate %445, %435 in 1 : vector<8x128xf32>, vector<8x128xf32> -> vector<8x256xf32>
    %c0_274 = arith.constant 0 : index
    %c0_275 = arith.constant 0 : index
    %447 = vector.load %arg4[%c0_274, %c0_275] : memref<256x384xf32, #tpu.memory_space<vmem>>, vector<256x384xf32>
    %cst_276 = arith.constant dense<0.000000e+00> : vector<8x384xf32>
    %448 = tpu.matmul %446, %447, %cst_276 {dimension_numbers = #tpu.dot_dimension_numbers<[1], [0], [0], [1], [0, 0, 1, 1], [], []>} : vector<8x256xf32>, vector<256x384xf32>, vector<8x384xf32> -> vector<8x384xf32>
    %c0_277 = arith.constant 0 : index
    %c0_278 = arith.constant 0 : index
    %449 = vector.load %arg5[%c0_277, %c0_278] : memref<8x384xf32, #tpu.memory_space<vmem>>, vector<8x384xf32>
    %450 = arith.addf %448, %449 : vector<8x384xf32>
    %451 = vector.extract_strided_slice %450 {offsets = [0, 0], sizes = [8, 128], strides = [1, 1]} : vector<8x384xf32> to vector<8x128xf32>
    %cst_279 = arith.constant 5.000000e-01 : f32
    %452 = vector.broadcast %cst_279 : f32 to vector<8x128xf32>
    %453 = arith.mulf %452, %451 : vector<8x128xf32>
    %454 = math.tanh %453 : vector<8x128xf32>
    %cst_280 = arith.constant 5.000000e-01 : f32
    %455 = vector.broadcast %cst_280 : f32 to vector<8x128xf32>
    %456 = arith.mulf %455, %454 : vector<8x128xf32>
    %cst_281 = arith.constant 5.000000e-01 : f32
    %457 = vector.broadcast %cst_281 : f32 to vector<8x128xf32>
    %458 = arith.addf %456, %457 : vector<8x128xf32>
    %459 = vector.extract_strided_slice %450 {offsets = [0, 128], sizes = [8, 128], strides = [1, 1]} : vector<8x384xf32> to vector<8x128xf32>
    %cst_282 = arith.constant 5.000000e-01 : f32
    %460 = vector.broadcast %cst_282 : f32 to vector<8x128xf32>
    %461 = arith.mulf %460, %459 : vector<8x128xf32>
    %462 = math.tanh %461 : vector<8x128xf32>
    %cst_283 = arith.constant 5.000000e-01 : f32
    %463 = vector.broadcast %cst_283 : f32 to vector<8x128xf32>
    %464 = arith.mulf %463, %462 : vector<8x128xf32>
    %cst_284 = arith.constant 5.000000e-01 : f32
    %465 = vector.broadcast %cst_284 : f32 to vector<8x128xf32>
    %466 = arith.addf %464, %465 : vector<8x128xf32>
    %467 = vector.extract_strided_slice %450 {offsets = [0, 256], sizes = [8, 128], strides = [1, 1]} : vector<8x384xf32> to vector<8x128xf32>
    %468 = arith.mulf %458, %435 : vector<8x128xf32>
    %c0_285 = arith.constant 0 : index
    %c0_286 = arith.constant 0 : index
    %469 = vector.load %arg6[%c0_285, %c0_286] : memref<128x128xf32, #tpu.memory_space<vmem>>, vector<128x128xf32>
    %cst_287 = arith.constant dense<0.000000e+00> : vector<8x128xf32>
    %470 = tpu.matmul %468, %469, %cst_287 {dimension_numbers = #tpu.dot_dimension_numbers<[1], [0], [0], [1], [0, 0, 1, 1], [], []>} : vector<8x128xf32>, vector<128x128xf32>, vector<8x128xf32> -> vector<8x128xf32>
    %471 = arith.addf %467, %470 : vector<8x128xf32>
    %472 = math.tanh %471 : vector<8x128xf32>
    %473 = arith.subf %435, %472 : vector<8x128xf32>
    %474 = arith.mulf %466, %473 : vector<8x128xf32>
    %475 = arith.addf %472, %474 : vector<8x128xf32>
    %cst_288 = arith.constant -5.000000e+00 : f32
    %cst_289 = arith.constant 5.000000e+00 : f32
    %476 = vector.broadcast %cst_288 : f32 to vector<8x128xf32>
    %477 = arith.maximumf %476, %475 : vector<8x128xf32>
    %478 = vector.broadcast %cst_289 : f32 to vector<8x128xf32>
    %479 = arith.minimumf %478, %477 : vector<8x128xf32>
    %c10_290 = arith.constant 10 : index
    %c0_291 = arith.constant 0 : index
    %c0_292 = arith.constant 0 : index
    %480 = vector.load %arg8[%c10_290, %c0_291, %c0_292] : memref<16x8x128xf32, #tpu.memory_space<vmem>>, vector<1x8x128xf32>
    %481 = vector.shape_cast %480 : vector<1x8x128xf32> to vector<8x128xf32>
    %482 = vector.shape_cast %479 : vector<8x128xf32> to vector<1x8x128xf32>
    tpu.vector_store %arg8[%c10_290, %c0_291, %c0_292], %482 {strides = array<i32>} : memref<16x8x128xf32, #tpu.memory_space<vmem>>, vector<1x8x128xf32>,
    %c0_293 = arith.constant 0 : index
    %c0_294 = arith.constant 0 : index
    %483 = vector.load %arg7[%c0_293, %c0_294] : memref<128x128xf32, #tpu.memory_space<vmem>>, vector<128x128xf32>
    %cst_295 = arith.constant dense<0.000000e+00> : vector<8x128xf32>
    %484 = tpu.matmul %479, %483, %cst_295 {dimension_numbers = #tpu.dot_dimension_numbers<[1], [0], [0], [1], [0, 0, 1, 1], [], []>} : vector<8x128xf32>, vector<128x128xf32>, vector<8x128xf32> -> vector<8x128xf32>
    %c10_296 = arith.constant 10 : index
    %c0_297 = arith.constant 0 : index
    %c0_298 = arith.constant 0 : index
    %485 = vector.load %arg9[%c10_296, %c0_297, %c0_298] : memref<16x8x128xf32, #tpu.memory_space<vmem>>, vector<1x8x128xf32>
    %486 = vector.shape_cast %485 : vector<1x8x128xf32> to vector<8x128xf32>
    %487 = vector.shape_cast %484 : vector<8x128xf32> to vector<1x8x128xf32>
    tpu.vector_store %arg9[%c10_296, %c0_297, %c0_298], %487 {strides = array<i32>} : memref<16x8x128xf32, #tpu.memory_space<vmem>>, vector<1x8x128xf32>,
    %c11 = arith.constant 11 : index
    %c0_299 = arith.constant 0 : index
    %c0_300 = arith.constant 0 : index
    %488 = vector.load %arg2[%c11, %c0_299, %c0_300] : memref<16x8x128xf32, #tpu.memory_space<vmem>>, vector<1x8x128xf32>
    %489 = vector.shape_cast %488 : vector<1x8x128xf32> to vector<8x128xf32>
    %490 = tpu.concatenate %489, %479 in 1 : vector<8x128xf32>, vector<8x128xf32> -> vector<8x256xf32>
    %c0_301 = arith.constant 0 : index
    %c0_302 = arith.constant 0 : index
    %491 = vector.load %arg4[%c0_301, %c0_302] : memref<256x384xf32, #tpu.memory_space<vmem>>, vector<256x384xf32>
    %cst_303 = arith.constant dense<0.000000e+00> : vector<8x384xf32>
    %492 = tpu.matmul %490, %491, %cst_303 {dimension_numbers = #tpu.dot_dimension_numbers<[1], [0], [0], [1], [0, 0, 1, 1], [], []>} : vector<8x256xf32>, vector<256x384xf32>, vector<8x384xf32> -> vector<8x384xf32>
    %c0_304 = arith.constant 0 : index
    %c0_305 = arith.constant 0 : index
    %493 = vector.load %arg5[%c0_304, %c0_305] : memref<8x384xf32, #tpu.memory_space<vmem>>, vector<8x384xf32>
    %494 = arith.addf %492, %493 : vector<8x384xf32>
    %495 = vector.extract_strided_slice %494 {offsets = [0, 0], sizes = [8, 128], strides = [1, 1]} : vector<8x384xf32> to vector<8x128xf32>
    %cst_306 = arith.constant 5.000000e-01 : f32
    %496 = vector.broadcast %cst_306 : f32 to vector<8x128xf32>
    %497 = arith.mulf %496, %495 : vector<8x128xf32>
    %498 = math.tanh %497 : vector<8x128xf32>
    %cst_307 = arith.constant 5.000000e-01 : f32
    %499 = vector.broadcast %cst_307 : f32 to vector<8x128xf32>
    %500 = arith.mulf %499, %498 : vector<8x128xf32>
    %cst_308 = arith.constant 5.000000e-01 : f32
    %501 = vector.broadcast %cst_308 : f32 to vector<8x128xf32>
    %502 = arith.addf %500, %501 : vector<8x128xf32>
    %503 = vector.extract_strided_slice %494 {offsets = [0, 128], sizes = [8, 128], strides = [1, 1]} : vector<8x384xf32> to vector<8x128xf32>
    %cst_309 = arith.constant 5.000000e-01 : f32
    %504 = vector.broadcast %cst_309 : f32 to vector<8x128xf32>
    %505 = arith.mulf %504, %503 : vector<8x128xf32>
    %506 = math.tanh %505 : vector<8x128xf32>
    %cst_310 = arith.constant 5.000000e-01 : f32
    %507 = vector.broadcast %cst_310 : f32 to vector<8x128xf32>
    %508 = arith.mulf %507, %506 : vector<8x128xf32>
    %cst_311 = arith.constant 5.000000e-01 : f32
    %509 = vector.broadcast %cst_311 : f32 to vector<8x128xf32>
    %510 = arith.addf %508, %509 : vector<8x128xf32>
    %511 = vector.extract_strided_slice %494 {offsets = [0, 256], sizes = [8, 128], strides = [1, 1]} : vector<8x384xf32> to vector<8x128xf32>
    %512 = arith.mulf %502, %479 : vector<8x128xf32>
    %c0_312 = arith.constant 0 : index
    %c0_313 = arith.constant 0 : index
    %513 = vector.load %arg6[%c0_312, %c0_313] : memref<128x128xf32, #tpu.memory_space<vmem>>, vector<128x128xf32>
    %cst_314 = arith.constant dense<0.000000e+00> : vector<8x128xf32>
    %514 = tpu.matmul %512, %513, %cst_314 {dimension_numbers = #tpu.dot_dimension_numbers<[1], [0], [0], [1], [0, 0, 1, 1], [], []>} : vector<8x128xf32>, vector<128x128xf32>, vector<8x128xf32> -> vector<8x128xf32>
    %515 = arith.addf %511, %514 : vector<8x128xf32>
    %516 = math.tanh %515 : vector<8x128xf32>
    %517 = arith.subf %479, %516 : vector<8x128xf32>
    %518 = arith.mulf %510, %517 : vector<8x128xf32>
    %519 = arith.addf %516, %518 : vector<8x128xf32>
    %cst_315 = arith.constant -5.000000e+00 : f32
    %cst_316 = arith.constant 5.000000e+00 : f32
    %520 = vector.broadcast %cst_315 : f32 to vector<8x128xf32>
    %521 = arith.maximumf %520, %519 : vector<8x128xf32>
    %522 = vector.broadcast %cst_316 : f32 to vector<8x128xf32>
    %523 = arith.minimumf %522, %521 : vector<8x128xf32>
    %c11_317 = arith.constant 11 : index
    %c0_318 = arith.constant 0 : index
    %c0_319 = arith.constant 0 : index
    %524 = vector.load %arg8[%c11_317, %c0_318, %c0_319] : memref<16x8x128xf32, #tpu.memory_space<vmem>>, vector<1x8x128xf32>
    %525 = vector.shape_cast %524 : vector<1x8x128xf32> to vector<8x128xf32>
    %526 = vector.shape_cast %523 : vector<8x128xf32> to vector<1x8x128xf32>
    tpu.vector_store %arg8[%c11_317, %c0_318, %c0_319], %526 {strides = array<i32>} : memref<16x8x128xf32, #tpu.memory_space<vmem>>, vector<1x8x128xf32>,
    %c0_320 = arith.constant 0 : index
    %c0_321 = arith.constant 0 : index
    %527 = vector.load %arg7[%c0_320, %c0_321] : memref<128x128xf32, #tpu.memory_space<vmem>>, vector<128x128xf32>
    %cst_322 = arith.constant dense<0.000000e+00> : vector<8x128xf32>
    %528 = tpu.matmul %523, %527, %cst_322 {dimension_numbers = #tpu.dot_dimension_numbers<[1], [0], [0], [1], [0, 0, 1, 1], [], []>} : vector<8x128xf32>, vector<128x128xf32>, vector<8x128xf32> -> vector<8x128xf32>
    %c11_323 = arith.constant 11 : index
    %c0_324 = arith.constant 0 : index
    %c0_325 = arith.constant 0 : index
    %529 = vector.load %arg9[%c11_323, %c0_324, %c0_325] : memref<16x8x128xf32, #tpu.memory_space<vmem>>, vector<1x8x128xf32>
    %530 = vector.shape_cast %529 : vector<1x8x128xf32> to vector<8x128xf32>
    %531 = vector.shape_cast %528 : vector<8x128xf32> to vector<1x8x128xf32>
    tpu.vector_store %arg9[%c11_323, %c0_324, %c0_325], %531 {strides = array<i32>} : memref<16x8x128xf32, #tpu.memory_space<vmem>>, vector<1x8x128xf32>,
    %c12 = arith.constant 12 : index
    %c0_326 = arith.constant 0 : index
    %c0_327 = arith.constant 0 : index
    %532 = vector.load %arg2[%c12, %c0_326, %c0_327] : memref<16x8x128xf32, #tpu.memory_space<vmem>>, vector<1x8x128xf32>
    %533 = vector.shape_cast %532 : vector<1x8x128xf32> to vector<8x128xf32>
    %534 = tpu.concatenate %533, %523 in 1 : vector<8x128xf32>, vector<8x128xf32> -> vector<8x256xf32>
    %c0_328 = arith.constant 0 : index
    %c0_329 = arith.constant 0 : index
    %535 = vector.load %arg4[%c0_328, %c0_329] : memref<256x384xf32, #tpu.memory_space<vmem>>, vector<256x384xf32>
    %cst_330 = arith.constant dense<0.000000e+00> : vector<8x384xf32>
    %536 = tpu.matmul %534, %535, %cst_330 {dimension_numbers = #tpu.dot_dimension_numbers<[1], [0], [0], [1], [0, 0, 1, 1], [], []>} : vector<8x256xf32>, vector<256x384xf32>, vector<8x384xf32> -> vector<8x384xf32>
    %c0_331 = arith.constant 0 : index
    %c0_332 = arith.constant 0 : index
    %537 = vector.load %arg5[%c0_331, %c0_332] : memref<8x384xf32, #tpu.memory_space<vmem>>, vector<8x384xf32>
    %538 = arith.addf %536, %537 : vector<8x384xf32>
    %539 = vector.extract_strided_slice %538 {offsets = [0, 0], sizes = [8, 128], strides = [1, 1]} : vector<8x384xf32> to vector<8x128xf32>
    %cst_333 = arith.constant 5.000000e-01 : f32
    %540 = vector.broadcast %cst_333 : f32 to vector<8x128xf32>
    %541 = arith.mulf %540, %539 : vector<8x128xf32>
    %542 = math.tanh %541 : vector<8x128xf32>
    %cst_334 = arith.constant 5.000000e-01 : f32
    %543 = vector.broadcast %cst_334 : f32 to vector<8x128xf32>
    %544 = arith.mulf %543, %542 : vector<8x128xf32>
    %cst_335 = arith.constant 5.000000e-01 : f32
    %545 = vector.broadcast %cst_335 : f32 to vector<8x128xf32>
    %546 = arith.addf %544, %545 : vector<8x128xf32>
    %547 = vector.extract_strided_slice %538 {offsets = [0, 128], sizes = [8, 128], strides = [1, 1]} : vector<8x384xf32> to vector<8x128xf32>
    %cst_336 = arith.constant 5.000000e-01 : f32
    %548 = vector.broadcast %cst_336 : f32 to vector<8x128xf32>
    %549 = arith.mulf %548, %547 : vector<8x128xf32>
    %550 = math.tanh %549 : vector<8x128xf32>
    %cst_337 = arith.constant 5.000000e-01 : f32
    %551 = vector.broadcast %cst_337 : f32 to vector<8x128xf32>
    %552 = arith.mulf %551, %550 : vector<8x128xf32>
    %cst_338 = arith.constant 5.000000e-01 : f32
    %553 = vector.broadcast %cst_338 : f32 to vector<8x128xf32>
    %554 = arith.addf %552, %553 : vector<8x128xf32>
    %555 = vector.extract_strided_slice %538 {offsets = [0, 256], sizes = [8, 128], strides = [1, 1]} : vector<8x384xf32> to vector<8x128xf32>
    %556 = arith.mulf %546, %523 : vector<8x128xf32>
    %c0_339 = arith.constant 0 : index
    %c0_340 = arith.constant 0 : index
    %557 = vector.load %arg6[%c0_339, %c0_340] : memref<128x128xf32, #tpu.memory_space<vmem>>, vector<128x128xf32>
    %cst_341 = arith.constant dense<0.000000e+00> : vector<8x128xf32>
    %558 = tpu.matmul %556, %557, %cst_341 {dimension_numbers = #tpu.dot_dimension_numbers<[1], [0], [0], [1], [0, 0, 1, 1], [], []>} : vector<8x128xf32>, vector<128x128xf32>, vector<8x128xf32> -> vector<8x128xf32>
    %559 = arith.addf %555, %558 : vector<8x128xf32>
    %560 = math.tanh %559 : vector<8x128xf32>
    %561 = arith.subf %523, %560 : vector<8x128xf32>
    %562 = arith.mulf %554, %561 : vector<8x128xf32>
    %563 = arith.addf %560, %562 : vector<8x128xf32>
    %cst_342 = arith.constant -5.000000e+00 : f32
    %cst_343 = arith.constant 5.000000e+00 : f32
    %564 = vector.broadcast %cst_342 : f32 to vector<8x128xf32>
    %565 = arith.maximumf %564, %563 : vector<8x128xf32>
    %566 = vector.broadcast %cst_343 : f32 to vector<8x128xf32>
    %567 = arith.minimumf %566, %565 : vector<8x128xf32>
    %c12_344 = arith.constant 12 : index
    %c0_345 = arith.constant 0 : index
    %c0_346 = arith.constant 0 : index
    %568 = vector.load %arg8[%c12_344, %c0_345, %c0_346] : memref<16x8x128xf32, #tpu.memory_space<vmem>>, vector<1x8x128xf32>
    %569 = vector.shape_cast %568 : vector<1x8x128xf32> to vector<8x128xf32>
    %570 = vector.shape_cast %567 : vector<8x128xf32> to vector<1x8x128xf32>
    tpu.vector_store %arg8[%c12_344, %c0_345, %c0_346], %570 {strides = array<i32>} : memref<16x8x128xf32, #tpu.memory_space<vmem>>, vector<1x8x128xf32>,
    %c0_347 = arith.constant 0 : index
    %c0_348 = arith.constant 0 : index
    %571 = vector.load %arg7[%c0_347, %c0_348] : memref<128x128xf32, #tpu.memory_space<vmem>>, vector<128x128xf32>
    %cst_349 = arith.constant dense<0.000000e+00> : vector<8x128xf32>
    %572 = tpu.matmul %567, %571, %cst_349 {dimension_numbers = #tpu.dot_dimension_numbers<[1], [0], [0], [1], [0, 0, 1, 1], [], []>} : vector<8x128xf32>, vector<128x128xf32>, vector<8x128xf32> -> vector<8x128xf32>
    %c12_350 = arith.constant 12 : index
    %c0_351 = arith.constant 0 : index
    %c0_352 = arith.constant 0 : index
    %573 = vector.load %arg9[%c12_350, %c0_351, %c0_352] : memref<16x8x128xf32, #tpu.memory_space<vmem>>, vector<1x8x128xf32>
    %574 = vector.shape_cast %573 : vector<1x8x128xf32> to vector<8x128xf32>
    %575 = vector.shape_cast %572 : vector<8x128xf32> to vector<1x8x128xf32>
    tpu.vector_store %arg9[%c12_350, %c0_351, %c0_352], %575 {strides = array<i32>} : memref<16x8x128xf32, #tpu.memory_space<vmem>>, vector<1x8x128xf32>,
    %c13 = arith.constant 13 : index
    %c0_353 = arith.constant 0 : index
    %c0_354 = arith.constant 0 : index
    %576 = vector.load %arg2[%c13, %c0_353, %c0_354] : memref<16x8x128xf32, #tpu.memory_space<vmem>>, vector<1x8x128xf32>
    %577 = vector.shape_cast %576 : vector<1x8x128xf32> to vector<8x128xf32>
    %578 = tpu.concatenate %577, %567 in 1 : vector<8x128xf32>, vector<8x128xf32> -> vector<8x256xf32>
    %c0_355 = arith.constant 0 : index
    %c0_356 = arith.constant 0 : index
    %579 = vector.load %arg4[%c0_355, %c0_356] : memref<256x384xf32, #tpu.memory_space<vmem>>, vector<256x384xf32>
    %cst_357 = arith.constant dense<0.000000e+00> : vector<8x384xf32>
    %580 = tpu.matmul %578, %579, %cst_357 {dimension_numbers = #tpu.dot_dimension_numbers<[1], [0], [0], [1], [0, 0, 1, 1], [], []>} : vector<8x256xf32>, vector<256x384xf32>, vector<8x384xf32> -> vector<8x384xf32>
    %c0_358 = arith.constant 0 : index
    %c0_359 = arith.constant 0 : index
    %581 = vector.load %arg5[%c0_358, %c0_359] : memref<8x384xf32, #tpu.memory_space<vmem>>, vector<8x384xf32>
    %582 = arith.addf %580, %581 : vector<8x384xf32>
    %583 = vector.extract_strided_slice %582 {offsets = [0, 0], sizes = [8, 128], strides = [1, 1]} : vector<8x384xf32> to vector<8x128xf32>
    %cst_360 = arith.constant 5.000000e-01 : f32
    %584 = vector.broadcast %cst_360 : f32 to vector<8x128xf32>
    %585 = arith.mulf %584, %583 : vector<8x128xf32>
    %586 = math.tanh %585 : vector<8x128xf32>
    %cst_361 = arith.constant 5.000000e-01 : f32
    %587 = vector.broadcast %cst_361 : f32 to vector<8x128xf32>
    %588 = arith.mulf %587, %586 : vector<8x128xf32>
    %cst_362 = arith.constant 5.000000e-01 : f32
    %589 = vector.broadcast %cst_362 : f32 to vector<8x128xf32>
    %590 = arith.addf %588, %589 : vector<8x128xf32>
    %591 = vector.extract_strided_slice %582 {offsets = [0, 128], sizes = [8, 128], strides = [1, 1]} : vector<8x384xf32> to vector<8x128xf32>
    %cst_363 = arith.constant 5.000000e-01 : f32
    %592 = vector.broadcast %cst_363 : f32 to vector<8x128xf32>
    %593 = arith.mulf %592, %591 : vector<8x128xf32>
    %594 = math.tanh %593 : vector<8x128xf32>
    %cst_364 = arith.constant 5.000000e-01 : f32
    %595 = vector.broadcast %cst_364 : f32 to vector<8x128xf32>
    %596 = arith.mulf %595, %594 : vector<8x128xf32>
    %cst_365 = arith.constant 5.000000e-01 : f32
    %597 = vector.broadcast %cst_365 : f32 to vector<8x128xf32>
    %598 = arith.addf %596, %597 : vector<8x128xf32>
    %599 = vector.extract_strided_slice %582 {offsets = [0, 256], sizes = [8, 128], strides = [1, 1]} : vector<8x384xf32> to vector<8x128xf32>
    %600 = arith.mulf %590, %567 : vector<8x128xf32>
    %c0_366 = arith.constant 0 : index
    %c0_367 = arith.constant 0 : index
    %601 = vector.load %arg6[%c0_366, %c0_367] : memref<128x128xf32, #tpu.memory_space<vmem>>, vector<128x128xf32>
    %cst_368 = arith.constant dense<0.000000e+00> : vector<8x128xf32>
    %602 = tpu.matmul %600, %601, %cst_368 {dimension_numbers = #tpu.dot_dimension_numbers<[1], [0], [0], [1], [0, 0, 1, 1], [], []>} : vector<8x128xf32>, vector<128x128xf32>, vector<8x128xf32> -> vector<8x128xf32>
    %603 = arith.addf %599, %602 : vector<8x128xf32>
    %604 = math.tanh %603 : vector<8x128xf32>
    %605 = arith.subf %567, %604 : vector<8x128xf32>
    %606 = arith.mulf %598, %605 : vector<8x128xf32>
    %607 = arith.addf %604, %606 : vector<8x128xf32>
    %cst_369 = arith.constant -5.000000e+00 : f32
    %cst_370 = arith.constant 5.000000e+00 : f32
    %608 = vector.broadcast %cst_369 : f32 to vector<8x128xf32>
    %609 = arith.maximumf %608, %607 : vector<8x128xf32>
    %610 = vector.broadcast %cst_370 : f32 to vector<8x128xf32>
    %611 = arith.minimumf %610, %609 : vector<8x128xf32>
    %c13_371 = arith.constant 13 : index
    %c0_372 = arith.constant 0 : index
    %c0_373 = arith.constant 0 : index
    %612 = vector.load %arg8[%c13_371, %c0_372, %c0_373] : memref<16x8x128xf32, #tpu.memory_space<vmem>>, vector<1x8x128xf32>
    %613 = vector.shape_cast %612 : vector<1x8x128xf32> to vector<8x128xf32>
    %614 = vector.shape_cast %611 : vector<8x128xf32> to vector<1x8x128xf32>
    tpu.vector_store %arg8[%c13_371, %c0_372, %c0_373], %614 {strides = array<i32>} : memref<16x8x128xf32, #tpu.memory_space<vmem>>, vector<1x8x128xf32>,
    %c0_374 = arith.constant 0 : index
    %c0_375 = arith.constant 0 : index
    %615 = vector.load %arg7[%c0_374, %c0_375] : memref<128x128xf32, #tpu.memory_space<vmem>>, vector<128x128xf32>
    %cst_376 = arith.constant dense<0.000000e+00> : vector<8x128xf32>
    %616 = tpu.matmul %611, %615, %cst_376 {dimension_numbers = #tpu.dot_dimension_numbers<[1], [0], [0], [1], [0, 0, 1, 1], [], []>} : vector<8x128xf32>, vector<128x128xf32>, vector<8x128xf32> -> vector<8x128xf32>
    %c13_377 = arith.constant 13 : index
    %c0_378 = arith.constant 0 : index
    %c0_379 = arith.constant 0 : index
    %617 = vector.load %arg9[%c13_377, %c0_378, %c0_379] : memref<16x8x128xf32, #tpu.memory_space<vmem>>, vector<1x8x128xf32>
    %618 = vector.shape_cast %617 : vector<1x8x128xf32> to vector<8x128xf32>
    %619 = vector.shape_cast %616 : vector<8x128xf32> to vector<1x8x128xf32>
    tpu.vector_store %arg9[%c13_377, %c0_378, %c0_379], %619 {strides = array<i32>} : memref<16x8x128xf32, #tpu.memory_space<vmem>>, vector<1x8x128xf32>,
    %c14 = arith.constant 14 : index
    %c0_380 = arith.constant 0 : index
    %c0_381 = arith.constant 0 : index
    %620 = vector.load %arg2[%c14, %c0_380, %c0_381] : memref<16x8x128xf32, #tpu.memory_space<vmem>>, vector<1x8x128xf32>
    %621 = vector.shape_cast %620 : vector<1x8x128xf32> to vector<8x128xf32>
    %622 = tpu.concatenate %621, %611 in 1 : vector<8x128xf32>, vector<8x128xf32> -> vector<8x256xf32>
    %c0_382 = arith.constant 0 : index
    %c0_383 = arith.constant 0 : index
    %623 = vector.load %arg4[%c0_382, %c0_383] : memref<256x384xf32, #tpu.memory_space<vmem>>, vector<256x384xf32>
    %cst_384 = arith.constant dense<0.000000e+00> : vector<8x384xf32>
    %624 = tpu.matmul %622, %623, %cst_384 {dimension_numbers = #tpu.dot_dimension_numbers<[1], [0], [0], [1], [0, 0, 1, 1], [], []>} : vector<8x256xf32>, vector<256x384xf32>, vector<8x384xf32> -> vector<8x384xf32>
    %c0_385 = arith.constant 0 : index
    %c0_386 = arith.constant 0 : index
    %625 = vector.load %arg5[%c0_385, %c0_386] : memref<8x384xf32, #tpu.memory_space<vmem>>, vector<8x384xf32>
    %626 = arith.addf %624, %625 : vector<8x384xf32>
    %627 = vector.extract_strided_slice %626 {offsets = [0, 0], sizes = [8, 128], strides = [1, 1]} : vector<8x384xf32> to vector<8x128xf32>
    %cst_387 = arith.constant 5.000000e-01 : f32
    %628 = vector.broadcast %cst_387 : f32 to vector<8x128xf32>
    %629 = arith.mulf %628, %627 : vector<8x128xf32>
    %630 = math.tanh %629 : vector<8x128xf32>
    %cst_388 = arith.constant 5.000000e-01 : f32
    %631 = vector.broadcast %cst_388 : f32 to vector<8x128xf32>
    %632 = arith.mulf %631, %630 : vector<8x128xf32>
    %cst_389 = arith.constant 5.000000e-01 : f32
    %633 = vector.broadcast %cst_389 : f32 to vector<8x128xf32>
    %634 = arith.addf %632, %633 : vector<8x128xf32>
    %635 = vector.extract_strided_slice %626 {offsets = [0, 128], sizes = [8, 128], strides = [1, 1]} : vector<8x384xf32> to vector<8x128xf32>
    %cst_390 = arith.constant 5.000000e-01 : f32
    %636 = vector.broadcast %cst_390 : f32 to vector<8x128xf32>
    %637 = arith.mulf %636, %635 : vector<8x128xf32>
    %638 = math.tanh %637 : vector<8x128xf32>
    %cst_391 = arith.constant 5.000000e-01 : f32
    %639 = vector.broadcast %cst_391 : f32 to vector<8x128xf32>
    %640 = arith.mulf %639, %638 : vector<8x128xf32>
    %cst_392 = arith.constant 5.000000e-01 : f32
    %641 = vector.broadcast %cst_392 : f32 to vector<8x128xf32>
    %642 = arith.addf %640, %641 : vector<8x128xf32>
    %643 = vector.extract_strided_slice %626 {offsets = [0, 256], sizes = [8, 128], strides = [1, 1]} : vector<8x384xf32> to vector<8x128xf32>
    %644 = arith.mulf %634, %611 : vector<8x128xf32>
    %c0_393 = arith.constant 0 : index
    %c0_394 = arith.constant 0 : index
    %645 = vector.load %arg6[%c0_393, %c0_394] : memref<128x128xf32, #tpu.memory_space<vmem>>, vector<128x128xf32>
    %cst_395 = arith.constant dense<0.000000e+00> : vector<8x128xf32>
    %646 = tpu.matmul %644, %645, %cst_395 {dimension_numbers = #tpu.dot_dimension_numbers<[1], [0], [0], [1], [0, 0, 1, 1], [], []>} : vector<8x128xf32>, vector<128x128xf32>, vector<8x128xf32> -> vector<8x128xf32>
    %647 = arith.addf %643, %646 : vector<8x128xf32>
    %648 = math.tanh %647 : vector<8x128xf32>
    %649 = arith.subf %611, %648 : vector<8x128xf32>
    %650 = arith.mulf %642, %649 : vector<8x128xf32>
    %651 = arith.addf %648, %650 : vector<8x128xf32>
    %cst_396 = arith.constant -5.000000e+00 : f32
    %cst_397 = arith.constant 5.000000e+00 : f32
    %652 = vector.broadcast %cst_396 : f32 to vector<8x128xf32>
    %653 = arith.maximumf %652, %651 : vector<8x128xf32>
    %654 = vector.broadcast %cst_397 : f32 to vector<8x128xf32>
    %655 = arith.minimumf %654, %653 : vector<8x128xf32>
    %c14_398 = arith.constant 14 : index
    %c0_399 = arith.constant 0 : index
    %c0_400 = arith.constant 0 : index
    %656 = vector.load %arg8[%c14_398, %c0_399, %c0_400] : memref<16x8x128xf32, #tpu.memory_space<vmem>>, vector<1x8x128xf32>
    %657 = vector.shape_cast %656 : vector<1x8x128xf32> to vector<8x128xf32>
    %658 = vector.shape_cast %655 : vector<8x128xf32> to vector<1x8x128xf32>
    tpu.vector_store %arg8[%c14_398, %c0_399, %c0_400], %658 {strides = array<i32>} : memref<16x8x128xf32, #tpu.memory_space<vmem>>, vector<1x8x128xf32>,
    %c0_401 = arith.constant 0 : index
    %c0_402 = arith.constant 0 : index
    %659 = vector.load %arg7[%c0_401, %c0_402] : memref<128x128xf32, #tpu.memory_space<vmem>>, vector<128x128xf32>
    %cst_403 = arith.constant dense<0.000000e+00> : vector<8x128xf32>
    %660 = tpu.matmul %655, %659, %cst_403 {dimension_numbers = #tpu.dot_dimension_numbers<[1], [0], [0], [1], [0, 0, 1, 1], [], []>} : vector<8x128xf32>, vector<128x128xf32>, vector<8x128xf32> -> vector<8x128xf32>
    %c14_404 = arith.constant 14 : index
    %c0_405 = arith.constant 0 : index
    %c0_406 = arith.constant 0 : index
    %661 = vector.load %arg9[%c14_404, %c0_405, %c0_406] : memref<16x8x128xf32, #tpu.memory_space<vmem>>, vector<1x8x128xf32>
    %662 = vector.shape_cast %661 : vector<1x8x128xf32> to vector<8x128xf32>
    %663 = vector.shape_cast %660 : vector<8x128xf32> to vector<1x8x128xf32>
    tpu.vector_store %arg9[%c14_404, %c0_405, %c0_406], %663 {strides = array<i32>} : memref<16x8x128xf32, #tpu.memory_space<vmem>>, vector<1x8x128xf32>,
    %c15 = arith.constant 15 : index
    %c0_407 = arith.constant 0 : index
    %c0_408 = arith.constant 0 : index
    %664 = vector.load %arg2[%c15, %c0_407, %c0_408] : memref<16x8x128xf32, #tpu.memory_space<vmem>>, vector<1x8x128xf32>
    %665 = vector.shape_cast %664 : vector<1x8x128xf32> to vector<8x128xf32>
    %666 = tpu.concatenate %665, %655 in 1 : vector<8x128xf32>, vector<8x128xf32> -> vector<8x256xf32>
    %c0_409 = arith.constant 0 : index
    %c0_410 = arith.constant 0 : index
    %667 = vector.load %arg4[%c0_409, %c0_410] : memref<256x384xf32, #tpu.memory_space<vmem>>, vector<256x384xf32>
    %cst_411 = arith.constant dense<0.000000e+00> : vector<8x384xf32>
    %668 = tpu.matmul %666, %667, %cst_411 {dimension_numbers = #tpu.dot_dimension_numbers<[1], [0], [0], [1], [0, 0, 1, 1], [], []>} : vector<8x256xf32>, vector<256x384xf32>, vector<8x384xf32> -> vector<8x384xf32>
    %c0_412 = arith.constant 0 : index
    %c0_413 = arith.constant 0 : index
    %669 = vector.load %arg5[%c0_412, %c0_413] : memref<8x384xf32, #tpu.memory_space<vmem>>, vector<8x384xf32>
    %670 = arith.addf %668, %669 : vector<8x384xf32>
    %671 = vector.extract_strided_slice %670 {offsets = [0, 0], sizes = [8, 128], strides = [1, 1]} : vector<8x384xf32> to vector<8x128xf32>
    %cst_414 = arith.constant 5.000000e-01 : f32
    %672 = vector.broadcast %cst_414 : f32 to vector<8x128xf32>
    %673 = arith.mulf %672, %671 : vector<8x128xf32>
    %674 = math.tanh %673 : vector<8x128xf32>
    %cst_415 = arith.constant 5.000000e-01 : f32
    %675 = vector.broadcast %cst_415 : f32 to vector<8x128xf32>
    %676 = arith.mulf %675, %674 : vector<8x128xf32>
    %cst_416 = arith.constant 5.000000e-01 : f32
    %677 = vector.broadcast %cst_416 : f32 to vector<8x128xf32>
    %678 = arith.addf %676, %677 : vector<8x128xf32>
    %679 = vector.extract_strided_slice %670 {offsets = [0, 128], sizes = [8, 128], strides = [1, 1]} : vector<8x384xf32> to vector<8x128xf32>
    %cst_417 = arith.constant 5.000000e-01 : f32
    %680 = vector.broadcast %cst_417 : f32 to vector<8x128xf32>
    %681 = arith.mulf %680, %679 : vector<8x128xf32>
    %682 = math.tanh %681 : vector<8x128xf32>
    %cst_418 = arith.constant 5.000000e-01 : f32
    %683 = vector.broadcast %cst_418 : f32 to vector<8x128xf32>
    %684 = arith.mulf %683, %682 : vector<8x128xf32>
    %cst_419 = arith.constant 5.000000e-01 : f32
    %685 = vector.broadcast %cst_419 : f32 to vector<8x128xf32>
    %686 = arith.addf %684, %685 : vector<8x128xf32>
    %687 = vector.extract_strided_slice %670 {offsets = [0, 256], sizes = [8, 128], strides = [1, 1]} : vector<8x384xf32> to vector<8x128xf32>
    %688 = arith.mulf %678, %655 : vector<8x128xf32>
    %c0_420 = arith.constant 0 : index
    %c0_421 = arith.constant 0 : index
    %689 = vector.load %arg6[%c0_420, %c0_421] : memref<128x128xf32, #tpu.memory_space<vmem>>, vector<128x128xf32>
    %cst_422 = arith.constant dense<0.000000e+00> : vector<8x128xf32>
    %690 = tpu.matmul %688, %689, %cst_422 {dimension_numbers = #tpu.dot_dimension_numbers<[1], [0], [0], [1], [0, 0, 1, 1], [], []>} : vector<8x128xf32>, vector<128x128xf32>, vector<8x128xf32> -> vector<8x128xf32>
    %691 = arith.addf %687, %690 : vector<8x128xf32>
    %692 = math.tanh %691 : vector<8x128xf32>
    %693 = arith.subf %655, %692 : vector<8x128xf32>
    %694 = arith.mulf %686, %693 : vector<8x128xf32>
    %695 = arith.addf %692, %694 : vector<8x128xf32>
    %cst_423 = arith.constant -5.000000e+00 : f32
    %cst_424 = arith.constant 5.000000e+00 : f32
    %696 = vector.broadcast %cst_423 : f32 to vector<8x128xf32>
    %697 = arith.maximumf %696, %695 : vector<8x128xf32>
    %698 = vector.broadcast %cst_424 : f32 to vector<8x128xf32>
    %699 = arith.minimumf %698, %697 : vector<8x128xf32>
    %c15_425 = arith.constant 15 : index
    %c0_426 = arith.constant 0 : index
    %c0_427 = arith.constant 0 : index
    %700 = vector.load %arg8[%c15_425, %c0_426, %c0_427] : memref<16x8x128xf32, #tpu.memory_space<vmem>>, vector<1x8x128xf32>
    %701 = vector.shape_cast %700 : vector<1x8x128xf32> to vector<8x128xf32>
    %702 = vector.shape_cast %699 : vector<8x128xf32> to vector<1x8x128xf32>
    tpu.vector_store %arg8[%c15_425, %c0_426, %c0_427], %702 {strides = array<i32>} : memref<16x8x128xf32, #tpu.memory_space<vmem>>, vector<1x8x128xf32>,
    %c0_428 = arith.constant 0 : index
    %c0_429 = arith.constant 0 : index
    %703 = vector.load %arg7[%c0_428, %c0_429] : memref<128x128xf32, #tpu.memory_space<vmem>>, vector<128x128xf32>
    %cst_430 = arith.constant dense<0.000000e+00> : vector<8x128xf32>
    %704 = tpu.matmul %699, %703, %cst_430 {dimension_numbers = #tpu.dot_dimension_numbers<[1], [0], [0], [1], [0, 0, 1, 1], [], []>} : vector<8x128xf32>, vector<128x128xf32>, vector<8x128xf32> -> vector<8x128xf32>
    %c15_431 = arith.constant 15 : index
    %c0_432 = arith.constant 0 : index
    %c0_433 = arith.constant 0 : index
    %705 = vector.load %arg9[%c15_431, %c0_432, %c0_433] : memref<16x8x128xf32, #tpu.memory_space<vmem>>, vector<1x8x128xf32>
    %706 = vector.shape_cast %705 : vector<1x8x128xf32> to vector<8x128xf32>
    %707 = vector.shape_cast %704 : vector<8x128xf32> to vector<1x8x128xf32>
    tpu.vector_store %arg9[%c15_431, %c0_432, %c0_433], %707 {strides = array<i32>} : memref<16x8x128xf32, #tpu.memory_space<vmem>>, vector<1x8x128xf32>,
    %c0_434 = arith.constant 0 : index
    %c0_435 = arith.constant 0 : index
    %708 = vector.load %arg10[%c0_434, %c0_435] : memref<8x128xf32, #tpu.memory_space<vmem>>, vector<8x128xf32>
    tpu.vector_store %arg10[%c0_434, %c0_435], %699 {strides = array<i32>} : memref<8x128xf32, #tpu.memory_space<vmem>>, vector<8x128xf32>,
    return
  }
  func.func @transform_0(%arg0: i32, %arg1: i32) -> (i32, i32, i32) {
    %c0_i32 = arith.constant 0 : i32
    %c0_i32_0 = arith.constant 0 : i32
    return %arg1, %arg0, %c0_i32 : i32, i32, i32
  }
  func.func @transform_1(%arg0: i32, %arg1: i32) -> (i32, i32) {
    %c0_i32 = arith.constant 0 : i32
    %c0_i32_0 = arith.constant 0 : i32
    return %arg0, %c0_i32 : i32, i32
  }
  func.func @transform_2(%arg0: i32, %arg1: i32) -> (i32, i32) {
    %c0_i32 = arith.constant 0 : i32
    %c0_i32_0 = arith.constant 0 : i32
    %c0_i32_1 = arith.constant 0 : i32
    return %c0_i32, %c0_i32_0 : i32, i32
  }
  func.func @transform_3(%arg0: i32, %arg1: i32) -> (i32, i32) {
    %c0_i32 = arith.constant 0 : i32
    %c0_i32_0 = arith.constant 0 : i32
    return %arg0, %c0_i32 : i32, i32
  }
  func.func @transform_4(%arg0: i32, %arg1: i32) -> (i32, i32) {
    %c0_i32 = arith.constant 0 : i32
    %c0_i32_0 = arith.constant 0 : i32
    %c0_i32_1 = arith.constant 0 : i32
    return %c0_i32, %c0_i32_0 : i32, i32
  }
  func.func @transform_5(%arg0: i32, %arg1: i32) -> (i32, i32) {
    %c0_i32 = arith.constant 0 : i32
    %c0_i32_0 = arith.constant 0 : i32
    %c0_i32_1 = arith.constant 0 : i32
    return %c0_i32, %c0_i32_0 : i32, i32
  }
  func.func @transform_6(%arg0: i32, %arg1: i32) -> (i32, i32, i32) {
    %c0_i32 = arith.constant 0 : i32
    %c0_i32_0 = arith.constant 0 : i32
    return %arg1, %arg0, %c0_i32 : i32, i32, i32
  }
  func.func @transform_7(%arg0: i32, %arg1: i32) -> (i32, i32, i32) {
    %c0_i32 = arith.constant 0 : i32
    %c0_i32_0 = arith.constant 0 : i32
    return %arg1, %arg0, %c0_i32 : i32, i32, i32
  }
}

</mosaic_0001>

<llo_original>
// kernel: tpu_custom_call.1
$region0: #{tpu_custom_call.1}
  #allocation0 [shape = 'u32[]', space=smem, size = 0x4, offset = 0x4, fixed_abs, tag = 'smem constant byte address 0x4 - core index']
  #allocation1 [shape = 'u32[72,128]{1,0:T(1,128)}', space=vmem, size = 0x9000, scoped, tag = 'internal scratch']
  #allocation2 [shape = 'f32[8,128]{1,0:T(8,128)}', space=vmem, size = 0x1000, scoped, tag = 'scratch operand']
  %s0 = inlined_call_operand.hbm [shape: f32[16,8,128], index: 0, kind: input, shape index: {}]
  %s1 = inlined_call_operand.hbm [shape: f32[8,128], index: 1, kind: input, shape index: {}]
  %s2 = inlined_call_operand.hbm [shape: f32[256,384], index: 2, kind: input, shape index: {}]
  %s3 = inlined_call_operand.hbm [shape: f32[8,384], index: 3, kind: input, shape index: {}]
  %s4 = inlined_call_operand.hbm [shape: f32[128,128], index: 4, kind: input, shape index: {}]
  %s5 = inlined_call_operand.hbm [shape: f32[128,128], index: 5, kind: input, shape index: {}]
  %s6 = inlined_call_operand.hbm [shape: f32[16,8,128], index: 6, kind: output, shape index: {0}]
  %s7 = inlined_call_operand.hbm [shape: f32[16,8,128], index: 7, kind: output, shape index: {1}]
  %8 = xla_tuple %s6, %s7
  %s9 = sld [smem:[#allocation0]]
  $region70: #{tpu_custom_call.1} parent=0
    _
  %s11 = ssub.s32 1, %s9
  %s12 = scalar_select 0, %s11, %s9
  $region1: #{tpu_custom_call.1} parent=0
    #allocation3 [shape = 'u8[65536]{0}', space=vmem, size = 0x10000, scoped, tag = 'input window, operand 0, single buffered']
    #allocation4 [shape = 's32[1]{0}', space=sflag, size = 0x4, scoped, tag = 'scoped memory for tpu_custom_call.1']
    #allocation5 [shape = 's32[1]{0}', space=sflag, size = 0x4, scoped, tag = 'scoped memory for tpu_custom_call.1']
    #allocation6 [shape = 'u8[4096]{0}', space=vmem, size = 0x1000, scoped, tag = 'input window, operand 1, single buffered']
    #allocation7 [shape = 's32[1]{0}', space=sflag, size = 0x4, scoped, tag = 'scoped memory for tpu_custom_call.1']
    #allocation8 [shape = 'u8[393216]{0}', space=vmem, size = 0x60000, scoped, tag = 'input window, operand 2, single buffered']
    #allocation9 [shape = 'u8[12288]{0}', space=vmem, size = 0x3000, scoped, tag = 'input window, operand 3, single buffered']
    #allocation10 [shape = 's32[1]{0}', space=sflag, size = 0x4, scoped, tag = 'scoped memory for tpu_custom_call.1']
    #allocation11 [shape = 'u8[65536]{0}', space=vmem, size = 0x10000, scoped, tag = 'input window, operand 4, single buffered']
    #allocation12 [shape = 'u8[65536]{0}', space=vmem, size = 0x10000, scoped, tag = 'input window, operand 5, single buffered']
    #allocation13 [shape = 's32[1]{0}', space=sflag, size = 0x4, scoped, tag = 'scoped memory for tpu_custom_call.1']
    #allocation14 [shape = 'u8[65536]{0}', space=vmem, size = 0x10000, scoped, tag = 'output window, operand 0, single buffered']
    #allocation15 [shape = 'u8[65536]{0}', space=vmem, size = 0x10000, scoped, tag = 'output window, operand 1, single buffered']
    #allocation16 [shape = 's32[1]{0}', space=sflag, size = 0x4, scoped, tag = 'scoped memory for tpu_custom_call.1']
    %13 = vsyncpa [#allocation4], 0
    %14 = vsyncpa [#allocation7], 0
    %15 = vsyncpa [#allocation10], 0
    %16 = vsyncpa [#allocation13], 0
    %17 = vsyncpa [#allocation5], 0
    %18 = vsyncpa [#allocation16], 0
    // Predicated region
    $region2: #{tpu_custom_call.1} parent=1 // pred_check
      _
    $region3: #{tpu_custom_call.1} parent=1 // pred_check_branch
      %20 = sbr.rel (0) target = $region5
    $region4: #{tpu_custom_call.1} parent=1 // pred_region
      %22 = vsyncadd [#allocation4], 0
      %s23 = sshll.u32 %s0, 4
      %s24 = int_to_ptr.hbm [resolvable:$true] %s23
      %s25 = sshll.u32 [#allocation3], 4
      %s26 = int_to_ptr.vmem [resolvable:$true] %s25
      %31 = dma.hbm_to_vmem [thread:$0]  %s24, 2048, %s26, [#allocation4], 128, 128, 8
    $region5: #{tpu_custom_call.1} parent=1 // pred_fallthru
      _
    // Predicated region
    $region6: #{tpu_custom_call.1} parent=1 // pred_check
      _
    $region7: #{tpu_custom_call.1} parent=1 // pred_check_branch
      %33 = sbr.rel (0) target = $region9
    $region8: #{tpu_custom_call.1} parent=1 // pred_region
      %35 = vsyncadd [#allocation7], 0
      %s37 = sshll.u32 %s1, 4
      %s38 = int_to_ptr.hbm [resolvable:$true] %s37
      %s39 = sshll.u32 [#allocation6], 4
      %s40 = int_to_ptr.vmem [resolvable:$true] %s39
      %42 = dma.hbm_to_vmem [thread:$0]  %s38, 128, %s40, [#allocation7]
    $region9: #{tpu_custom_call.1} parent=1 // pred_fallthru
      _
    // Predicated region
    $region10: #{tpu_custom_call.1} parent=1 // pred_check
      _
    $region11: #{tpu_custom_call.1} parent=1 // pred_check_branch
      %44 = sbr.rel (0) target = $region13
    $region12: #{tpu_custom_call.1} parent=1 // pred_region
      %46 = vsyncadd [#allocation7], 0
      %s47 = sshll.u32 %s2, 4
      %s48 = int_to_ptr.hbm [resolvable:$true] %s47
      %s49 = sshll.u32 [#allocation8], 4
      %s50 = int_to_ptr.vmem [resolvable:$true] %s49
      %55 = dma.hbm_to_vmem [thread:$0]  %s48, 12288, %s50, [#allocation7], 384, 384, 24
    $region13: #{tpu_custom_call.1} parent=1 // pred_fallthru
      _
    // Predicated region
    $region14: #{tpu_custom_call.1} parent=1 // pred_check
      _
    $region15: #{tpu_custom_call.1} parent=1 // pred_check_branch
      %57 = sbr.rel (0) target = $region17
    $region16: #{tpu_custom_call.1} parent=1 // pred_region
      %59 = vsyncadd [#allocation10], 0
      %s61 = sshll.u32 %s3, 4
      %s62 = int_to_ptr.hbm [resolvable:$true] %s61
      %s63 = sshll.u32 [#allocation9], 4
      %s64 = int_to_ptr.vmem [resolvable:$true] %s63
      %66 = dma.hbm_to_vmem [thread:$0]  %s62, 384, %s64, [#allocation10]
    $region17: #{tpu_custom_call.1} parent=1 // pred_fallthru
      _
    // Predicated region
    $region18: #{tpu_custom_call.1} parent=1 // pred_check
      _
    $region19: #{tpu_custom_call.1} parent=1 // pred_check_branch
      %68 = sbr.rel (0) target = $region21
    $region20: #{tpu_custom_call.1} parent=1 // pred_region
      %70 = vsyncadd [#allocation10], 0
      %s71 = sshll.u32 %s4, 4
      %s72 = int_to_ptr.hbm [resolvable:$true] %s71
      %s73 = sshll.u32 [#allocation11], 4
      %s74 = int_to_ptr.vmem [resolvable:$true] %s73
      %79 = dma.hbm_to_vmem [thread:$0]  %s72, 2048, %s74, [#allocation10], 128, 128, 8
    $region21: #{tpu_custom_call.1} parent=1 // pred_fallthru
      _
    // Predicated region
    $region22: #{tpu_custom_call.1} parent=1 // pred_check
      _
    $region23: #{tpu_custom_call.1} parent=1 // pred_check_branch
      %81 = sbr.rel (0) target = $region25
    $region24: #{tpu_custom_call.1} parent=1 // pred_region
      %83 = vsyncadd [#allocation13], 0
      %s84 = sshll.u32 %s5, 4
      %s85 = int_to_ptr.hbm [resolvable:$true] %s84
      %s86 = sshll.u32 [#allocation12], 4
      %s87 = int_to_ptr.vmem [resolvable:$true] %s86
      %92 = dma.hbm_to_vmem [thread:$0]  %s85, 2048, %s87, [#allocation13], 128, 128, 8
    $region25: #{tpu_custom_call.1} parent=1 // pred_fallthru
      _
    // Predicated region
    $region26: #{tpu_custom_call.1} parent=1 // pred_check
      _
    $region27: #{tpu_custom_call.1} parent=1 // pred_check_branch
      %94 = sbr.rel (0) target = $region29
    $region28: #{tpu_custom_call.1} parent=1 // pred_region
      %96 = dma.done [#allocation4], 2048
    $region29: #{tpu_custom_call.1} parent=1 // pred_fallthru
      _
    // Predicated region
    $region30: #{tpu_custom_call.1} parent=1 // pred_check
      _
    $region31: #{tpu_custom_call.1} parent=1 // pred_check_branch
      %98 = sbr.rel (0) target = $region33
    $region32: #{tpu_custom_call.1} parent=1 // pred_region
      %100 = dma.done [#allocation7], 128
    $region33: #{tpu_custom_call.1} parent=1 // pred_fallthru
      _
    // Predicated region
    $region34: #{tpu_custom_call.1} parent=1 // pred_check
      _
    $region35: #{tpu_custom_call.1} parent=1 // pred_check_branch
      %102 = sbr.rel (0) target = $region37
    $region36: #{tpu_custom_call.1} parent=1 // pred_region
      %104 = dma.done [#allocation7], 12288
    $region37: #{tpu_custom_call.1} parent=1 // pred_fallthru
      _
    // Predicated region
    $region38: #{tpu_custom_call.1} parent=1 // pred_check
      _
    $region39: #{tpu_custom_call.1} parent=1 // pred_check_branch
      %106 = sbr.rel (0) target = $region41
    $region40: #{tpu_custom_call.1} parent=1 // pred_region
      %108 = dma.done [#allocation10], 384
    $region41: #{tpu_custom_call.1} parent=1 // pred_fallthru
      _
    // Predicated region
    $region42: #{tpu_custom_call.1} parent=1 // pred_check
      _
    $region43: #{tpu_custom_call.1} parent=1 // pred_check_branch
      %110 = sbr.rel (0) target = $region45
    $region44: #{tpu_custom_call.1} parent=1 // pred_region
      %112 = dma.done [#allocation10], 2048
    $region45: #{tpu_custom_call.1} parent=1 // pred_fallthru
      _
    // Predicated region
    $region46: #{tpu_custom_call.1} parent=1 // pred_check
      _
    $region47: #{tpu_custom_call.1} parent=1 // pred_check_branch
      %114 = sbr.rel (0) target = $region49
    $region48: #{tpu_custom_call.1} parent=1 // pred_region
      %116 = dma.done [#allocation13], 2048
    $region49: #{tpu_custom_call.1} parent=1 // pred_fallthru
      _
    %p117 = scmp.eq.s32.totalorder 0, 0
    // Predicated region
    $region50: #{tpu_custom_call.1} parent=1 // pred_check
      %p118 = pneg %p117
    $region51: #{tpu_custom_call.1} parent=1 // pred_check_branch
      %120 = sbr.rel (%p118) target = $region53
    $region52: #{tpu_custom_call.1} parent=1 // pred_region
      %v121 = vld [vmem:[#allocation6] sm:$0xff]
      %122 = vst [vmem:[#allocation2] sm:$0xff] %v121
    $region53: #{tpu_custom_call.1} parent=1 // pred_fallthru
      _
    %v123 = vld [vmem:[#allocation2] sm:$0xff]
    %v124 = vld [vmem:[#allocation3] sm:$0xff]
    %v125 = vld [vmem:[#allocation8] sm:$0xff]
    %v126 = vld [vmem:[#allocation8 + $0x8] sm:$0xff]
    %v127 = vld [vmem:[#allocation8 + $0x10] sm:$0xff]
    %v128 = vld [vmem:[#allocation8 + $0x18] sm:$0xff]
    %v129 = vld [vmem:[#allocation8 + $0x20] sm:$0xff]
    %v130 = vld [vmem:[#allocation8 + $0x28] sm:$0xff]
    %v131 = vld [vmem:[#allocation8 + $0x30] sm:$0xff]
    %v132 = vld [vmem:[#allocation8 + $0x38] sm:$0xff]
    %v133 = vld [vmem:[#allocation8 + $0x40] sm:$0xff]
    %v134 = vld [vmem:[#allocation8 + $0x48] sm:$0xff]
    %v135 = vld [vmem:[#allocation8 + $0x50] sm:$0xff]
    %v136 = vld [vmem:[#allocation8 + $0x58] sm:$0xff]
    %v137 = vld [vmem:[#allocation8 + $0x60] sm:$0xff]
    %v138 = vld [vmem:[#allocation8 + $0x68] sm:$0xff]
    %v139 = vld [vmem:[#allocation8 + $0x70] sm:$0xff]
    %v140 = vld [vmem:[#allocation8 + $0x78] sm:$0xff]
    %v141 = vld [vmem:[#allocation8 + $0x80] sm:$0xff]
    %v142 = vld [vmem:[#allocation8 + $0x88] sm:$0xff]
    %v143 = vld [vmem:[#allocation8 + $0x90] sm:$0xff]
    %v144 = vld [vmem:[#allocation8 + $0x98] sm:$0xff]
    %v145 = vld [vmem:[#allocation8 + $0xa0] sm:$0xff]
    %v146 = vld [vmem:[#allocation8 + $0xa8] sm:$0xff]
    %v147 = vld [vmem:[#allocation8 + $0xb0] sm:$0xff]
    %v148 = vld [vmem:[#allocation8 + $0xb8] sm:$0xff]
    %v149 = vld [vmem:[#allocation8 + $0xc0] sm:$0xff]
    %v150 = vld [vmem:[#allocation8 + $0xc8] sm:$0xff]
    %v151 = vld [vmem:[#allocation8 + $0xd0] sm:$0xff]
    %v152 = vld [vmem:[#allocation8 + $0xd8] sm:$0xff]
    %v153 = vld [vmem:[#allocation8 + $0xe0] sm:$0xff]
    %v154 = vld [vmem:[#allocation8 + $0xe8] sm:$0xff]
    %v155 = vld [vmem:[#allocation8 + $0xf0] sm:$0xff]
    %v156 = vld [vmem:[#allocation8 + $0xf8] sm:$0xff]
    %v157 = vld [vmem:[#allocation8 + $0x100] sm:$0xff]
    %v158 = vld [vmem:[#allocation8 + $0x108] sm:$0xff]
    %v159 = vld [vmem:[#allocation8 + $0x110] sm:$0xff]
    %v160 = vld [vmem:[#allocation8 + $0x118] sm:$0xff]
    %v161 = vld [vmem:[#allocation8 + $0x120] sm:$0xff]
    %v162 = vld [vmem:[#allocation8 + $0x128] sm:$0xff]
    %v163 = vld [vmem:[#allocation8 + $0x130] sm:$0xff]
    %v164 = vld [vmem:[#allocation8 + $0x138] sm:$0xff]
    %v165 = vld [vmem:[#allocation8 + $0x140] sm:$0xff]
    %v166 = vld [vmem:[#allocation8 + $0x148] sm:$0xff]
    %v167 = vld [vmem:[#allocation8 + $0x150] sm:$0xff]
    %v168 = vld [vmem:[#allocation8 + $0x158] sm:$0xff]
    %v169 = vld [vmem:[#allocation8 + $0x160] sm:$0xff]
    %v170 = vld [vmem:[#allocation8 + $0x168] sm:$0xff]
    %v171 = vld [vmem:[#allocation8 + $0x170] sm:$0xff]
    %v172 = vld [vmem:[#allocation8 + $0x178] sm:$0xff]
    %v173 = vld [vmem:[#allocation8 + $0x180] sm:$0xff]
    %v174 = vld [vmem:[#allocation8 + $0x188] sm:$0xff]
    %v175 = vld [vmem:[#allocation8 + $0x190] sm:$0xff]
    %v176 = vld [vmem:[#allocation8 + $0x198] sm:$0xff]
    %v177 = vld [vmem:[#allocation8 + $0x1a0] sm:$0xff]
    %v178 = vld [vmem:[#allocation8 + $0x1a8] sm:$0xff]
    %v179 = vld [vmem:[#allocation8 + $0x1b0] sm:$0xff]
    %v180 = vld [vmem:[#allocation8 + $0x1b8] sm:$0xff]
    %v181 = vld [vmem:[#allocation8 + $0x1c0] sm:$0xff]
    %v182 = vld [vmem:[#allocation8 + $0x1c8] sm:$0xff]
    %v183 = vld [vmem:[#allocation8 + $0x1d0] sm:$0xff]
    %v184 = vld [vmem:[#allocation8 + $0x1d8] sm:$0xff]
    %v185 = vld [vmem:[#allocation8 + $0x1e0] sm:$0xff]
    %v186 = vld [vmem:[#allocation8 + $0x1e8] sm:$0xff]
    %v187 = vld [vmem:[#allocation8 + $0x1f0] sm:$0xff]
    %v188 = vld [vmem:[#allocation8 + $0x1f8] sm:$0xff]
    %v189 = vld [vmem:[#allocation8 + $0x200] sm:$0xff]
    %v190 = vld [vmem:[#allocation8 + $0x208] sm:$0xff]
    %v191 = vld [vmem:[#allocation8 + $0x210] sm:$0xff]
    %v192 = vld [vmem:[#allocation8 + $0x218] sm:$0xff]
    %v193 = vld [vmem:[#allocation8 + $0x220] sm:$0xff]
    %v194 = vld [vmem:[#allocation8 + $0x228] sm:$0xff]
    %v195 = vld [vmem:[#allocation8 + $0x230] sm:$0xff]
    %v196 = vld [vmem:[#allocation8 + $0x238] sm:$0xff]
    %v197 = vld [vmem:[#allocation8 + $0x240] sm:$0xff]
    %v198 = vld [vmem:[#allocation8 + $0x248] sm:$0xff]
    %v199 = vld [vmem:[#allocation8 + $0x250] sm:$0xff]
    %v200 = vld [vmem:[#allocation8 + $0x258] sm:$0xff]
    %v201 = vld [vmem:[#allocation8 + $0x260] sm:$0xff]
    %v202 = vld [vmem:[#allocation8 + $0x268] sm:$0xff]
    %v203 = vld [vmem:[#allocation8 + $0x270] sm:$0xff]
    %v204 = vld [vmem:[#allocation8 + $0x278] sm:$0xff]
    %v205 = vld [vmem:[#allocation8 + $0x280] sm:$0xff]
    %v206 = vld [vmem:[#allocation8 + $0x288] sm:$0xff]
    %v207 = vld [vmem:[#allocation8 + $0x290] sm:$0xff]
    %v208 = vld [vmem:[#allocation8 + $0x298] sm:$0xff]
    %v209 = vld [vmem:[#allocation8 + $0x2a0] sm:$0xff]
    %v210 = vld [vmem:[#allocation8 + $0x2a8] sm:$0xff]
    %v211 = vld [vmem:[#allocation8 + $0x2b0] sm:$0xff]
    %v212 = vld [vmem:[#allocation8 + $0x2b8] sm:$0xff]
    %v213 = vld [vmem:[#allocation8 + $0x2c0] sm:$0xff]
    %v214 = vld [vmem:[#allocation8 + $0x2c8] sm:$0xff]
    %v215 = vld [vmem:[#allocation8 + $0x2d0] sm:$0xff]
    %v216 = vld [vmem:[#allocation8 + $0x2d8] sm:$0xff]
    %v217 = vld [vmem:[#allocation8 + $0x2e0] sm:$0xff]
    %v218 = vld [vmem:[#allocation8 + $0x2e8] sm:$0xff]
    %v219 = vld [vmem:[#allocation8 + $0x2f0] sm:$0xff]
    %v220 = vld [vmem:[#allocation8 + $0x2f8] sm:$0xff]
    %v221 = vld [vmem:[#allocation9] sm:$0xff]
    %v222 = vld [vmem:[#allocation9 + $0x8] sm:$0xff]
    %v223 = vld [vmem:[#allocation9 + $0x10] sm:$0xff]
    %224 = vmatpush.msra.mxu0 %v170
    %225 = vmatpush.msra.mxu0 %v167
    %226 = vmatpush.msra.mxu0 %v164
    %227 = vmatpush.msra.mxu0 %v161
    %228 = vmatpush.msra.mxu0 %v158
    %229 = vmatpush.msra.mxu0 %v155
    %230 = vmatpush.msra.mxu0 %v152
    %231 = vmatpush.msra.mxu0 %v149
    %232 = vmatpush.msra.mxu0 %v146
    %233 = vmatpush.msra.mxu0 %v143
    %234 = vmatpush.msra.mxu0 %v140
    %235 = vmatpush.msra.mxu0 %v137
    %236 = vmatpush.msra.mxu0 %v134
    %237 = vmatpush.msra.mxu0 %v131
    %238 = vmatpush.msra.mxu0 %v128
    %239 = vmatpush.msra.mxu0 %v125
    %240 = vmatmul.f32.gmra.mxu0 %v124
    %v241 = vpop.f32.mrf.mxu0
    %v242 = vadd.f32 %v221, %v241
    %243 = vdwg.mxu0
    %244 = vmatpush.msra.mxu0 %v218
    %245 = vmatpush.msra.mxu0 %v215
    %246 = vmatpush.msra.mxu0 %v212
    %247 = vmatpush.msra.mxu0 %v209
    %248 = vmatpush.msra.mxu0 %v206
    %249 = vmatpush.msra.mxu0 %v203
    %250 = vmatpush.msra.mxu0 %v200
    %251 = vmatpush.msra.mxu0 %v197
    %252 = vmatpush.msra.mxu0 %v194
    %253 = vmatpush.msra.mxu0 %v191
    %254 = vmatpush.msra.mxu0 %v188
    %255 = vmatpush.msra.mxu0 %v185
    %256 = vmatpush.msra.mxu0 %v182
    %257 = vmatpush.msra.mxu0 %v179
    %258 = vmatpush.msra.mxu0 %v176
    %259 = vmatpush.msra.mxu0 %v173
    %260 = vmatmul.f32.gmra.mxu0 %v123
    %v261 = vpop.f32.mrf.mxu0
    %v262 = vadd.f32 %v242, %v261
    %263 = vdwg.mxu0
    %264 = vmatpush.msra.mxu0 %v171
    %265 = vmatpush.msra.mxu0 %v168
    %266 = vmatpush.msra.mxu0 %v165
    %267 = vmatpush.msra.mxu0 %v162
    %268 = vmatpush.msra.mxu0 %v159
    %269 = vmatpush.msra.mxu0 %v156
    %270 = vmatpush.msra.mxu0 %v153
    %271 = vmatpush.msra.mxu0 %v150
    %272 = vmatpush.msra.mxu0 %v147
    %273 = vmatpush.msra.mxu0 %v144
    %274 = vmatpush.msra.mxu0 %v141
    %275 = vmatpush.msra.mxu0 %v138
    %276 = vmatpush.msra.mxu0 %v135
    %277 = vmatpush.msra.mxu0 %v132
    %278 = vmatpush.msra.mxu0 %v129
    %279 = vmatpush.msra.mxu0 %v126
    %280 = vmatmul.f32.gmra.mxu0 %v124
    %v281 = vpop.f32.mrf.mxu0
    %v282 = vadd.f32 %v222, %v281
    %283 = vdwg.mxu0
    %284 = vmatpush.msra.mxu0 %v219
    %285 = vmatpush.msra.mxu0 %v216
    %286 = vmatpush.msra.mxu0 %v213
    %287 = vmatpush.msra.mxu0 %v210
    %288 = vmatpush.msra.mxu0 %v207
    %289 = vmatpush.msra.mxu0 %v204
    %290 = vmatpush.msra.mxu0 %v201
    %291 = vmatpush.msra.mxu0 %v198
    %292 = vmatpush.msra.mxu0 %v195
    %293 = vmatpush.msra.mxu0 %v192
    %294 = vmatpush.msra.mxu0 %v189
    %295 = vmatpush.msra.mxu0 %v186
    %296 = vmatpush.msra.mxu0 %v183
    %297 = vmatpush.msra.mxu0 %v180
    %298 = vmatpush.msra.mxu0 %v177
    %299 = vmatpush.msra.mxu0 %v174
    %300 = vmatmul.f32.gmra.mxu0 %v123
    %v301 = vpop.f32.mrf.mxu0
    %v302 = vadd.f32 %v282, %v301
    %303 = vdwg.mxu0
    %304 = vmatpush.msra.mxu0 %v172
    %305 = vmatpush.msra.mxu0 %v169
    %306 = vmatpush.msra.mxu0 %v166
    %307 = vmatpush.msra.mxu0 %v163
    %308 = vmatpush.msra.mxu0 %v160
    %309 = vmatpush.msra.mxu0 %v157
    %310 = vmatpush.msra.mxu0 %v154
    %311 = vmatpush.msra.mxu0 %v151
    %312 = vmatpush.msra.mxu0 %v148
    %313 = vmatpush.msra.mxu0 %v145
    %314 = vmatpush.msra.mxu0 %v142
    %315 = vmatpush.msra.mxu0 %v139
    %316 = vmatpush.msra.mxu0 %v136
    %317 = vmatpush.msra.mxu0 %v133
    %318 = vmatpush.msra.mxu0 %v130
    %319 = vmatpush.msra.mxu0 %v127
    %320 = vmatmul.f32.gmra.mxu0 %v124
    %v321 = vpop.f32.mrf.mxu0
    %v322 = vadd.f32 %v223, %v321
    %323 = vdwg.mxu0
    %324 = vmatpush.msra.mxu0 %v220
    %325 = vmatpush.msra.mxu0 %v217
    %326 = vmatpush.msra.mxu0 %v214
    %327 = vmatpush.msra.mxu0 %v211
    %328 = vmatpush.msra.mxu0 %v208
    %329 = vmatpush.msra.mxu0 %v205
    %330 = vmatpush.msra.mxu0 %v202
    %331 = vmatpush.msra.mxu0 %v199
    %332 = vmatpush.msra.mxu0 %v196
    %333 = vmatpush.msra.mxu0 %v193
    %334 = vmatpush.msra.mxu0 %v190
    %335 = vmatpush.msra.mxu0 %v187
    %336 = vmatpush.msra.mxu0 %v184
    %337 = vmatpush.msra.mxu0 %v181
    %338 = vmatpush.msra.mxu0 %v178
    %339 = vmatpush.msra.mxu0 %v175
    %340 = vmatmul.f32.gmra.mxu0 %v123
    %v341 = vpop.f32.mrf.mxu0
    %v342 = vadd.f32 %v322, %v341
    %343 = vdwg.mxu0
    %v344 = vmul.f32 %v262, 0.5
    %v345 = vtanh.pop %v344
    %v346 = vmul.f32 %v345, 0.5
    %v347 = vadd.f32 %v346, 0.5
    %v348 = vmul.f32 %v302, 0.5
    %v349 = vtanh.pop %v348
    %v350 = vmul.f32 %v349, 0.5
    %v351 = vadd.f32 %v350, 0.5
    %v352 = vmul.f32 %v347, %v123
    %v353 = vld [vmem:[#allocation11] sm:$0xff]
    %v354 = vld [vmem:[#allocation11 + $0x8] sm:$0xff]
    %v355 = vld [vmem:[#allocation11 + $0x10] sm:$0xff]
    %v356 = vld [vmem:[#allocation11 + $0x18] sm:$0xff]
    %v357 = vld [vmem:[#allocation11 + $0x20] sm:$0xff]
    %v358 = vld [vmem:[#allocation11 + $0x28] sm:$0xff]
    %v359 = vld [vmem:[#allocation11 + $0x30] sm:$0xff]
    %v360 = vld [vmem:[#allocation11 + $0x38] sm:$0xff]
    %v361 = vld [vmem:[#allocation11 + $0x40] sm:$0xff]
    %v362 = vld [vmem:[#allocation11 + $0x48] sm:$0xff]
    %v363 = vld [vmem:[#allocation11 + $0x50] sm:$0xff]
    %v364 = vld [vmem:[#allocation11 + $0x58] sm:$0xff]
    %v365 = vld [vmem:[#allocation11 + $0x60] sm:$0xff]
    %v366 = vld [vmem:[#allocation11 + $0x68] sm:$0xff]
    %v367 = vld [vmem:[#allocation11 + $0x70] sm:$0xff]
    %v368 = vld [vmem:[#allocation11 + $0x78] sm:$0xff]
    %369 = vmatpush.msra.mxu0 %v368
    %370 = vmatpush.msra.mxu0 %v367
    %371 = vmatpush.msra.mxu0 %v366
    %372 = vmatpush.msra.mxu0 %v365
    %373 = vmatpush.msra.mxu0 %v364
    %374 = vmatpush.msra.mxu0 %v363
    %375 = vmatpush.msra.mxu0 %v362
    %376 = vmatpush.msra.mxu0 %v361
    %377 = vmatpush.msra.mxu0 %v360
    %378 = vmatpush.msra.mxu0 %v359
    %379 = vmatpush.msra.mxu0 %v358
    %380 = vmatpush.msra.mxu0 %v357
    %381 = vmatpush.msra.mxu0 %v356
    %382 = vmatpush.msra.mxu0 %v355
    %383 = vmatpush.msra.mxu0 %v354
    %384 = vmatpush.msra.mxu0 %v353
    %385 = vmatmul.f32.gmra.mxu0 %v352
    %v386 = vpop.f32.mrf.mxu0
    %v387 = vadd.f32 0.0, %v386
    %388 = vdwg.mxu0
    %v389 = vadd.f32 %v342, %v387
    %v390 = vtanh.pop %v389
    %v391 = vsub.f32 %v123, %v390
    %v392 = vmul.f32 %v351, %v391
    %v393 = vadd.f32 %v390, %v392
    %v394 = vmax.f32 %v393, -5.0
    %v395 = vmin.f32 %v394, 5.0
    %396 = vst [vmem:[#allocation14] sm:$0xff] %v395
    %v397 = vld [vmem:[#allocation12] sm:$0xff]
    %v398 = vld [vmem:[#allocation12 + $0x8] sm:$0xff]
    %v399 = vld [vmem:[#allocation12 + $0x10] sm:$0xff]
    %v400 = vld [vmem:[#allocation12 + $0x18] sm:$0xff]
    %v401 = vld [vmem:[#allocation12 + $0x20] sm:$0xff]
    %v402 = vld [vmem:[#allocation12 + $0x28] sm:$0xff]
    %v403 = vld [vmem:[#allocation12 + $0x30] sm:$0xff]
    %v404 = vld [vmem:[#allocation12 + $0x38] sm:$0xff]
    %v405 = vld [vmem:[#allocation12 + $0x40] sm:$0xff]
    %v406 = vld [vmem:[#allocation12 + $0x48] sm:$0xff]
    %v407 = vld [vmem:[#allocation12 + $0x50] sm:$0xff]
    %v408 = vld [vmem:[#allocation12 + $0x58] sm:$0xff]
    %v409 = vld [vmem:[#allocation12 + $0x60] sm:$0xff]
    %v410 = vld [vmem:[#allocation12 + $0x68] sm:$0xff]
    %v411 = vld [vmem:[#allocation12 + $0x70] sm:$0xff]
    %v412 = vld [vmem:[#allocation12 + $0x78] sm:$0xff]
    %413 = vmatpush.msra.mxu0 %v412
    %414 = vmatpush.msra.mxu0 %v411
    %415 = vmatpush.msra.mxu0 %v410
    %416 = vmatpush.msra.mxu0 %v409
    %417 = vmatpush.msra.mxu0 %v408
    %418 = vmatpush.msra.mxu0 %v407
    %419 = vmatpush.msra.mxu0 %v406
    %420 = vmatpush.msra.mxu0 %v405
    %421 = vmatpush.msra.mxu0 %v404
    %422 = vmatpush.msra.mxu0 %v403
    %423 = vmatpush.msra.mxu0 %v402
    %424 = vmatpush.msra.mxu0 %v401
    %425 = vmatpush.msra.mxu0 %v400
    %426 = vmatpush.msra.mxu0 %v399
    %427 = vmatpush.msra.mxu0 %v398
    %428 = vmatpush.msra.mxu0 %v397
    %429 = vmatmul.f32.gmra.mxu0 %v395
    %v430 = vpop.f32.mrf.mxu0
    %v431 = vadd.f32 0.0, %v430
    %432 = vdwg.mxu0
    %433 = vst [vmem:[#allocation15] sm:$0xff] %v431
    %s434 = scalar_lea.vmem [#allocation3], 8
    %v435 = vld [vmem:[%s434] sm:$0xff]
    %v436 = vld [vmem:[#allocation8] sm:$0xff]
    %v437 = vld [vmem:[#allocation8 + $0x8] sm:$0xff]
    %v438 = vld [vmem:[#allocation8 + $0x10] sm:$0xff]
    %v439 = vld [vmem:[#allocation8 + $0x18] sm:$0xff]
    %v440 = vld [vmem:[#allocation8 + $0x20] sm:$0xff]
    %v441 = vld [vmem:[#allocation8 + $0x28] sm:$0xff]
    %v442 = vld [vmem:[#allocation8 + $0x30] sm:$0xff]
    %v443 = vld [vmem:[#allocation8 + $0x38] sm:$0xff]
    %v444 = vld [vmem:[#allocation8 + $0x40] sm:$0xff]
    %v445 = vld [vmem:[#allocation8 + $0x48] sm:$0xff]
    %v446 = vld [vmem:[#allocation8 + $0x50] sm:$0xff]
    %v447 = vld [vmem:[#allocation8 + $0x58] sm:$0xff]
    %v448 = vld [vmem:[#allocation8 + $0x60] sm:$0xff]
    %v449 = vld [vmem:[#allocation8 + $0x68] sm:$0xff]
    %v450 = vld [vmem:[#allocation8 + $0x70] sm:$0xff]
    %v451 = vld [vmem:[#allocation8 + $0x78] sm:$0xff]
    %v452 = vld [vmem:[#allocation8 + $0x80] sm:$0xff]
    %v453 = vld [vmem:[#allocation8 + $0x88] sm:$0xff]
    %v454 = vld [vmem:[#allocation8 + $0x90] sm:$0xff]
    %v455 = vld [vmem:[#allocation8 + $0x98] sm:$0xff]
    %v456 = vld [vmem:[#allocation8 + $0xa0] sm:$0xff]
    %v457 = vld [vmem:[#allocation8 + $0xa8] sm:$0xff]
    %v458 = vld [vmem:[#allocation8 + $0xb0] sm:$0xff]
    %v459 = vld [vmem:[#allocation8 + $0xb8] sm:$0xff]
    %v460 = vld [vmem:[#allocation8 + $0xc0] sm:$0xff]
    %v461 = vld [vmem:[#allocation8 + $0xc8] sm:$0xff]
    %v462 = vld [vmem:[#allocation8 + $0xd0] sm:$0xff]
    %v463 = vld [vmem:[#allocation8 + $0xd8] sm:$0xff]
    %v464 = vld [vmem:[#allocation8 + $0xe0] sm:$0xff]
    %v465 = vld [vmem:[#allocation8 + $0xe8] sm:$0xff]
    %v466 = vld [vmem:[#allocation8 + $0xf0] sm:$0xff]
    %v467 = vld [vmem:[#allocation8 + $0xf8] sm:$0xff]
    %v468 = vld [vmem:[#allocation8 + $0x100] sm:$0xff]
    %v469 = vld [vmem:[#allocation8 + $0x108] sm:$0xff]
    %v470 = vld [vmem:[#allocation8 + $0x110] sm:$0xff]
    %v471 = vld [vmem:[#allocation8 + $0x118] sm:$0xff]
    %v472 = vld [vmem:[#allocation8 + $0x120] sm:$0xff]
    %v473 = vld [vmem:[#allocation8 + $0x128] sm:$0xff]
    %v474 = vld [vmem:[#allocation8 + $0x130] sm:$0xff]
    %v475 = vld [vmem:[#allocation8 + $0x138] sm:$0xff]
    %v476 = vld [vmem:[#allocation8 + $0x140] sm:$0xff]
    %v477 = vld [vmem:[#allocation8 + $0x148] sm:$0xff]
    %v478 = vld [vmem:[#allocation8 + $0x150] sm:$0xff]
    %v479 = vld [vmem:[#allocation8 + $0x158] sm:$0xff]
    %v480 = vld [vmem:[#allocation8 + $0x160] sm:$0xff]
    %v481 = vld [vmem:[#allocation8 + $0x168] sm:$0xff]
    %v482 = vld [vmem:[#allocation8 + $0x170] sm:$0xff]
    %v483 = vld [vmem:[#allocation8 + $0x178] sm:$0xff]
    %v484 = vld [vmem:[#allocation8 + $0x180] sm:$0xff]
    %v485 = vld [vmem:[#allocation8 + $0x188] sm:$0xff]
    %v486 = vld [vmem:[#allocation8 + $0x190] sm:$0xff]
    %v487 = vld [vmem:[#allocation8 + $0x198] sm:$0xff]
    %v488 = vld [vmem:[#allocation8 + $0x1a0] sm:$0xff]
    %v489 = vld [vmem:[#allocation8 + $0x1a8] sm:$0xff]
    %v490 = vld [vmem:[#allocation8 + $0x1b0] sm:$0xff]
    %v491 = vld [vmem:[#allocation8 + $0x1b8] sm:$0xff]
    %v492 = vld [vmem:[#allocation8 + $0x1c0] sm:$0xff]
    %v493 = vld [vmem:[#allocation8 + $0x1c8] sm:$0xff]
    %v494 = vld [vmem:[#allocation8 + $0x1d0] sm:$0xff]
    %v495 = vld [vmem:[#allocation8 + $0x1d8] sm:$0xff]
    %v496 = vld [vmem:[#allocation8 + $0x1e0] sm:$0xff]
    %v497 = vld [vmem:[#allocation8 + $0x1e8] sm:$0xff]
    %v498 = vld [vmem:[#allocation8 + $0x1f0] sm:$0xff]
    %v499 = vld [vmem:[#allocation8 + $0x1f8] sm:$0xff]
    %v500 = vld [vmem:[#allocation8 + $0x200] sm:$0xff]
    %v501 = vld [vmem:[#allocation8 + $0x208] sm:$0xff]
    %v502 = vld [vmem:[#allocation8 + $0x210] sm:$0xff]
    %v503 = vld [vmem:[#allocation8 + $0x218] sm:$0xff]
    %v504 = vld [vmem:[#allocation8 + $0x220] sm:$0xff]
    %v505 = vld [vmem:[#allocation8 + $0x228] sm:$0xff]
    %v506 = vld [vmem:[#allocation8 + $0x230] sm:$0xff]
    %v507 = vld [vmem:[#allocation8 + $0x238] sm:$0xff]
    %v508 = vld [vmem:[#allocation8 + $0x240] sm:$0xff]
    %v509 = vld [vmem:[#allocation8 + $0x248] sm:$0xff]
    %v510 = vld [vmem:[#allocation8 + $0x250] sm:$0xff]
    %v511 = vld [vmem:[#allocation8 + $0x258] sm:$0xff]
    %v512 = vld [vmem:[#allocation8 + $0x260] sm:$0xff]
    %v513 = vld [vmem:[#allocation8 + $0x268] sm:$0xff]
    %v514 = vld [vmem:[#allocation8 + $0x270] sm:$0xff]
    %v515 = vld [vmem:[#allocation8 + $0x278] sm:$0xff]
    %v516 = vld [vmem:[#allocation8 + $0x280] sm:$0xff]
    %v517 = vld [vmem:[#allocation8 + $0x288] sm:$0xff]
    %v518 = vld [vmem:[#allocation8 + $0x290] sm:$0xff]
    %v519 = vld [vmem:[#allocation8 + $0x298] sm:$0xff]
    %v520 = vld [vmem:[#allocation8 + $0x2a0] sm:$0xff]
    %v521 = vld [vmem:[#allocation8 + $0x2a8] sm:$0xff]
    %v522 = vld [vmem:[#allocation8 + $0x2b0] sm:$0xff]
    %v523 = vld [vmem:[#allocation8 + $0x2b8] sm:$0xff]
    %v524 = vld [vmem:[#allocation8 + $0x2c0] sm:$0xff]
    %v525 = vld [vmem:[#allocation8 + $0x2c8] sm:$0xff]
    %v526 = vld [vmem:[#allocation8 + $0x2d0] sm:$0xff]
    %v527 = vld [vmem:[#allocation8 + $0x2d8] sm:$0xff]
    %v528 = vld [vmem:[#allocation8 + $0x2e0] sm:$0xff]
    %v529 = vld [vmem:[#allocation8 + $0x2e8] sm:$0xff]
    %v530 = vld [vmem:[#allocation8 + $0x2f0] sm:$0xff]
    %v531 = vld [vmem:[#allocation8 + $0x2f8] sm:$0xff]
    %v532 = vld [vmem:[#allocation9] sm:$0xff]
    %v533 = vld [vmem:[#allocation9 + $0x8] sm:$0xff]
    %v534 = vld [vmem:[#allocation9 + $0x10] sm:$0xff]
    %535 = vmatpush.msra.mxu0 %v481
    %536 = vmatpush.msra.mxu0 %v478
    %537 = vmatpush.msra.mxu0 %v475
    %538 = vmatpush.msra.mxu0 %v472
    %539 = vmatpush.msra.mxu0 %v469
    %540 = vmatpush.msra.mxu0 %v466
    %541 = vmatpush.msra.mxu0 %v463
    %542 = vmatpush.msra.mxu0 %v460
    %543 = vmatpush.msra.mxu0 %v457
    %544 = vmatpush.msra.mxu0 %v454
    %545 = vmatpush.msra.mxu0 %v451
    %546 = vmatpush.msra.mxu0 %v448
    %547 = vmatpush.msra.mxu0 %v445
    %548 = vmatpush.msra.mxu0 %v442
    %549 = vmatpush.msra.mxu0 %v439
    %550 = vmatpush.msra.mxu0 %v436
    %551 = vmatmul.f32.gmra.mxu0 %v435
    %v552 = vpop.f32.mrf.mxu0
    %v553 = vadd.f32 %v532, %v552
    %554 = vdwg.mxu0
    %555 = vmatpush.msra.mxu0 %v529
    %556 = vmatpush.msra.mxu0 %v526
    %557 = vmatpush.msra.mxu0 %v523
    %558 = vmatpush.msra.mxu0 %v520
    %559 = vmatpush.msra.mxu0 %v517
    %560 = vmatpush.msra.mxu0 %v514
    %561 = vmatpush.msra.mxu0 %v511
    %562 = vmatpush.msra.mxu0 %v508
    %563 = vmatpush.msra.mxu0 %v505
    %564 = vmatpush.msra.mxu0 %v502
    %565 = vmatpush.msra.mxu0 %v499
    %566 = vmatpush.msra.mxu0 %v496
    %567 = vmatpush.msra.mxu0 %v493
    %568 = vmatpush.msra.mxu0 %v490
    %569 = vmatpush.msra.mxu0 %v487
    %570 = vmatpush.msra.mxu0 %v484
    %571 = vmatmul.f32.gmra.mxu0 %v395
    %v572 = vpop.f32.mrf.mxu0
    %v573 = vadd.f32 %v553, %v572
    %574 = vdwg.mxu0
    %575 = vmatpush.msra.mxu0 %v482
    %576 = vmatpush.msra.mxu0 %v479
    %577 = vmatpush.msra.mxu0 %v476
    %578 = vmatpush.msra.mxu0 %v473
    %579 = vmatpush.msra.mxu0 %v470
    %580 = vmatpush.msra.mxu0 %v467
    %581 = vmatpush.msra.mxu0 %v464
    %582 = vmatpush.msra.mxu0 %v461
    %583 = vmatpush.msra.mxu0 %v458
    %584 = vmatpush.msra.mxu0 %v455
    %585 = vmatpush.msra.mxu0 %v452
    %586 = vmatpush.msra.mxu0 %v449
    %587 = vmatpush.msra.mxu0 %v446
    %588 = vmatpush.msra.mxu0 %v443
    %589 = vmatpush.msra.mxu0 %v440
    %590 = vmatpush.msra.mxu0 %v437
    %591 = vmatmul.f32.gmra.mxu0 %v435
    %v592 = vpop.f32.mrf.mxu0
    %v593 = vadd.f32 %v533, %v592
    %594 = vdwg.mxu0
    %595 = vmatpush.msra.mxu0 %v530
    %596 = vmatpush.msra.mxu0 %v527
    %597 = vmatpush.msra.mxu0 %v524
    %598 = vmatpush.msra.mxu0 %v521
    %599 = vmatpush.msra.mxu0 %v518
    %600 = vmatpush.msra.mxu0 %v515
    %601 = vmatpush.msra.mxu0 %v512
    %602 = vmatpush.msra.mxu0 %v509
    %603 = vmatpush.msra.mxu0 %v506
    %604 = vmatpush.msra.mxu0 %v503
    %605 = vmatpush.msra.mxu0 %v500
    %606 = vmatpush.msra.mxu0 %v497
    %607 = vmatpush.msra.mxu0 %v494
    %608 = vmatpush.msra.mxu0 %v491
    %609 = vmatpush.msra.mxu0 %v488
    %610 = vmatpush.msra.mxu0 %v485
    %611 = vmatmul.f32.gmra.mxu0 %v395
    %v612 = vpop.f32.mrf.mxu0
    %v613 = vadd.f32 %v593, %v612
    %614 = vdwg.mxu0
    %615 = vmatpush.msra.mxu0 %v483
    %616 = vmatpush.msra.mxu0 %v480
    %617 = vmatpush.msra.mxu0 %v477
    %618 = vmatpush.msra.mxu0 %v474
    %619 = vmatpush.msra.mxu0 %v471
    %620 = vmatpush.msra.mxu0 %v468
    %621 = vmatpush.msra.mxu0 %v465
    %622 = vmatpush.msra.mxu0 %v462
    %623 = vmatpush.msra.mxu0 %v459
    %624 = vmatpush.msra.mxu0 %v456
    %625 = vmatpush.msra.mxu0 %v453
    %626 = vmatpush.msra.mxu0 %v450
    %627 = vmatpush.msra.mxu0 %v447
    %628 = vmatpush.msra.mxu0 %v444
    %629 = vmatpush.msra.mxu0 %v441
    %630 = vmatpush.msra.mxu0 %v438
    %631 = vmatmul.f32.gmra.mxu0 %v435
    %v632 = vpop.f32.mrf.mxu0
    %v633 = vadd.f32 %v534, %v632
    %634 = vdwg.mxu0
    %635 = vmatpush.msra.mxu0 %v531
    %636 = vmatpush.msra.mxu0 %v528
    %637 = vmatpush.msra.mxu0 %v525
    %638 = vmatpush.msra.mxu0 %v522
    %639 = vmatpush.msra.mxu0 %v519
    %640 = vmatpush.msra.mxu0 %v516
    %641 = vmatpush.msra.mxu0 %v513
    %642 = vmatpush.msra.mxu0 %v510
    %643 = vmatpush.msra.mxu0 %v507
    %644 = vmatpush.msra.mxu0 %v504
    %645 = vmatpush.msra.mxu0 %v501
    %646 = vmatpush.msra.mxu0 %v498
    %647 = vmatpush.msra.mxu0 %v495
    %648 = vmatpush.msra.mxu0 %v492
    %649 = vmatpush.msra.mxu0 %v489
    %650 = vmatpush.msra.mxu0 %v486
    %651 = vmatmul.f32.gmra.mxu0 %v395
    %v652 = vpop.f32.mrf.mxu0
    %v653 = vadd.f32 %v633, %v652
    %654 = vdwg.mxu0
    %v655 = vmul.f32 %v573, 0.5
    %v656 = vtanh.pop %v655
    %v657 = vmul.f32 %v656, 0.5
    %v658 = vadd.f32 %v657, 0.5
    %v659 = vmul.f32 %v613, 0.5
    %v660 = vtanh.pop %v659
    %v661 = vmul.f32 %v660, 0.5
    %v662 = vadd.f32 %v661, 0.5
    %v663 = vmul.f32 %v658, %v395
    %v664 = vld [vmem:[#allocation11] sm:$0xff]
    %v665 = vld [vmem:[#allocation11 + $0x8] sm:$0xff]
    %v666 = vld [vmem:[#allocation11 + $0x10] sm:$0xff]
    %v667 = vld [vmem:[#allocation11 + $0x18] sm:$0xff]
    %v668 = vld [vmem:[#allocation11 + $0x20] sm:$0xff]
    %v669 = vld [vmem:[#allocation11 + $0x28] sm:$0xff]
    %v670 = vld [vmem:[#allocation11 + $0x30] sm:$0xff]
    %v671 = vld [vmem:[#allocation11 + $0x38] sm:$0xff]
    %v672 = vld [vmem:[#allocation11 + $0x40] sm:$0xff]
    %v673 = vld [vmem:[#allocation11 + $0x48] sm:$0xff]
    %v674 = vld [vmem:[#allocation11 + $0x50] sm:$0xff]
    %v675 = vld [vmem:[#allocation11 + $0x58] sm:$0xff]
    %v676 = vld [vmem:[#allocation11 + $0x60] sm:$0xff]
    %v677 = vld [vmem:[#allocation11 + $0x68] sm:$0xff]
    %v678 = vld [vmem:[#allocation11 + $0x70] sm:$0xff]
    %v679 = vld [vmem:[#allocation11 + $0x78] sm:$0xff]
    %680 = vmatpush.msra.mxu0 %v679
    %681 = vmatpush.msra.mxu0 %v678
    %682 = vmatpush.msra.mxu0 %v677
    %683 = vmatpush.msra.mxu0 %v676
    %684 = vmatpush.msra.mxu0 %v675
    %685 = vmatpush.msra.mxu0 %v674
    %686 = vmatpush.msra.mxu0 %v673
    %687 = vmatpush.msra.mxu0 %v672
    %688 = vmatpush.msra.mxu0 %v671
    %689 = vmatpush.msra.mxu0 %v670
    %690 = vmatpush.msra.mxu0 %v669
    %691 = vmatpush.msra.mxu0 %v668
    %692 = vmatpush.msra.mxu0 %v667
    %693 = vmatpush.msra.mxu0 %v666
    %694 = vmatpush.msra.mxu0 %v665
    %695 = vmatpush.msra.mxu0 %v664
    %696 = vmatmul.f32.gmra.mxu0 %v663
    %v697 = vpop.f32.mrf.mxu0
    %v698 = vadd.f32 0.0, %v697
    %699 = vdwg.mxu0
    %v700 = vadd.f32 %v653, %v698
    %v701 = vtanh.pop %v700
    %v702 = vsub.f32 %v395, %v701
    %v703 = vmul.f32 %v662, %v702
    %v704 = vadd.f32 %v701, %v703
    %v705 = vmax.f32 %v704, -5.0
    %v706 = vmin.f32 %v705, 5.0
    %s707 = scalar_lea.vmem [#allocation14], 8
    %708 = vst [vmem:[%s707] sm:$0xff] %v706
    %v709 = vld [vmem:[#allocation12] sm:$0xff]
    %v710 = vld [vmem:[#allocation12 + $0x8] sm:$0xff]
    %v711 = vld [vmem:[#allocation12 + $0x10] sm:$0xff]
    %v712 = vld [vmem:[#allocation12 + $0x18] sm:$0xff]
    %v713 = vld [vmem:[#allocation12 + $0x20] sm:$0xff]
    %v714 = vld [vmem:[#allocation12 + $0x28] sm:$0xff]
    %v715 = vld [vmem:[#allocation12 + $0x30] sm:$0xff]
    %v716 = vld [vmem:[#allocation12 + $0x38] sm:$0xff]
    %v717 = vld [vmem:[#allocation12 + $0x40] sm:$0xff]
    %v718 = vld [vmem:[#allocation12 + $0x48] sm:$0xff]
    %v719 = vld [vmem:[#allocation12 + $0x50] sm:$0xff]
    %v720 = vld [vmem:[#allocation12 + $0x58] sm:$0xff]
    %v721 = vld [vmem:[#allocation12 + $0x60] sm:$0xff]
    %v722 = vld [vmem:[#allocation12 + $0x68] sm:$0xff]
    %v723 = vld [vmem:[#allocation12 + $0x70] sm:$0xff]
    %v724 = vld [vmem:[#allocation12 + $0x78] sm:$0xff]
    %725 = vmatpush.msra.mxu0 %v724
    %726 = vmatpush.msra.mxu0 %v723
    %727 = vmatpush.msra.mxu0 %v722
    %728 = vmatpush.msra.mxu0 %v721
    %729 = vmatpush.msra.mxu0 %v720
    %730 = vmatpush.msra.mxu0 %v719
    %731 = vmatpush.msra.mxu0 %v718
    %732 = vmatpush.msra.mxu0 %v717
    %733 = vmatpush.msra.mxu0 %v716
    %734 = vmatpush.msra.mxu0 %v715
    %735 = vmatpush.msra.mxu0 %v714
    %736 = vmatpush.msra.mxu0 %v713
    %737 = vmatpush.msra.mxu0 %v712
    %738 = vmatpush.msra.mxu0 %v711
    %739 = vmatpush.msra.mxu0 %v710
    %740 = vmatpush.msra.mxu0 %v709
    %741 = vmatmul.f32.gmra.mxu0 %v706
    %v742 = vpop.f32.mrf.mxu0
    %v743 = vadd.f32 0.0, %v742
    %744 = vdwg.mxu0
    %s745 = scalar_lea.vmem [#allocation15], 8
    %746 = vst [vmem:[%s745] sm:$0xff] %v743
    %s747 = scalar_lea.vmem [#allocation3], 16
    %v748 = vld [vmem:[%s747] sm:$0xff]
    %v749 = vld [vmem:[#allocation8] sm:$0xff]
    %v750 = vld [vmem:[#allocation8 + $0x8] sm:$0xff]
    %v751 = vld [vmem:[#allocation8 + $0x10] sm:$0xff]
    %v752 = vld [vmem:[#allocation8 + $0x18] sm:$0xff]
    %v753 = vld [vmem:[#allocation8 + $0x20] sm:$0xff]
    %v754 = vld [vmem:[#allocation8 + $0x28] sm:$0xff]
    %v755 = vld [vmem:[#allocation8 + $0x30] sm:$0xff]
    %v756 = vld [vmem:[#allocation8 + $0x38] sm:$0xff]
    %v757 = vld [vmem:[#allocation8 + $0x40] sm:$0xff]
    %v758 = vld [vmem:[#allocation8 + $0x48] sm:$0xff]
    %v759 = vld [vmem:[#allocation8 + $0x50] sm:$0xff]
    %v760 = vld [vmem:[#allocation8 + $0x58] sm:$0xff]
    %v761 = vld [vmem:[#allocation8 + $0x60] sm:$0xff]
    %v762 = vld [vmem:[#allocation8 + $0x68] sm:$0xff]
    %v763 = vld [vmem:[#allocation8 + $0x70] sm:$0xff]
    %v764 = vld [vmem:[#allocation8 + $0x78] sm:$0xff]
    %v765 = vld [vmem:[#allocation8 + $0x80] sm:$0xff]
    %v766 = vld [vmem:[#allocation8 + $0x88] sm:$0xff]
    %v767 = vld [vmem:[#allocation8 + $0x90] sm:$0xff]
    %v768 = vld [vmem:[#allocation8 + $0x98] sm:$0xff]
    %v769 = vld [vmem:[#allocation8 + $0xa0] sm:$0xff]
    %v770 = vld [vmem:[#allocation8 + $0xa8] sm:$0xff]
    %v771 = vld [vmem:[#allocation8 + $0xb0] sm:$0xff]
    %v772 = vld [vmem:[#allocation8 + $0xb8] sm:$0xff]
    %v773 = vld [vmem:[#allocation8 + $0xc0] sm:$0xff]
    %v774 = vld [vmem:[#allocation8 + $0xc8] sm:$0xff]
    %v775 = vld [vmem:[#allocation8 + $0xd0] sm:$0xff]
    %v776 = vld [vmem:[#allocation8 + $0xd8] sm:$0xff]
    %v777 = vld [vmem:[#allocation8 + $0xe0] sm:$0xff]
    %v778 = vld [vmem:[#allocation8 + $0xe8] sm:$0xff]
    %v779 = vld [vmem:[#allocation8 + $0xf0] sm:$0xff]
    %v780 = vld [vmem:[#allocation8 + $0xf8] sm:$0xff]
    %v781 = vld [vmem:[#allocation8 + $0x100] sm:$0xff]
    %v782 = vld [vmem:[#allocation8 + $0x108] sm:$0xff]
    %v783 = vld [vmem:[#allocation8 + $0x110] sm:$0xff]
    %v784 = vld [vmem:[#allocation8 + $0x118] sm:$0xff]
    %v785 = vld [vmem:[#allocation8 + $0x120] sm:$0xff]
    %v786 = vld [vmem:[#allocation8 + $0x128] sm:$0xff]
    %v787 = vld [vmem:[#allocation8 + $0x130] sm:$0xff]
    %v788 = vld [vmem:[#allocation8 + $0x138] sm:$0xff]
    %v789 = vld [vmem:[#allocation8 + $0x140] sm:$0xff]
    %v790 = vld [vmem:[#allocation8 + $0x148] sm:$0xff]
    %v791 = vld [vmem:[#allocation8 + $0x150] sm:$0xff]
    %v792 = vld [vmem:[#allocation8 + $0x158] sm:$0xff]
    %v793 = vld [vmem:[#allocation8 + $0x160] sm:$0xff]
    %v794 = vld [vmem:[#allocation8 + $0x168] sm:$0xff]
    %v795 = vld [vmem:[#allocation8 + $0x170] sm:$0xff]
    %v796 = vld [vmem:[#allocation8 + $0x178] sm:$0xff]
    %v797 = vld [vmem:[#allocation8 + $0x180] sm:$0xff]
    %v798 = vld [vmem:[#allocation8 + $0x188] sm:$0xff]
    %v799 = vld [vmem:[#allocation8 + $0x190] sm:$0xff]
    %v800 = vld [vmem:[#allocation8 + $0x198] sm:$0xff]
    %v801 = vld [vmem:[#allocation8 + $0x1a0] sm:$0xff]
    %v802 = vld [vmem:[#allocation8 + $0x1a8] sm:$0xff]
    %v803 = vld [vmem:[#allocation8 + $0x1b0] sm:$0xff]
    %v804 = vld [vmem:[#allocation8 + $0x1b8] sm:$0xff]
    %v805 = vld [vmem:[#allocation8 + $0x1c0] sm:$0xff]
    %v806 = vld [vmem:[#allocation8 + $0x1c8] sm:$0xff]
    %v807 = vld [vmem:[#allocation8 + $0x1d0] sm:$0xff]
    %v808 = vld [vmem:[#allocation8 + $0x1d8] sm:$0xff]
    %v809 = vld [vmem:[#allocation8 + $0x1e0] sm:$0xff]
    %v810 = vld [vmem:[#allocation8 + $0x1e8] sm:$0xff]
    %v811 = vld [vmem:[#allocation8 + $0x1f0] sm:$0xff]
    %v812 = vld [vmem:[#allocation8 + $0x1f8] sm:$0xff]
    %v813 = vld [vmem:[#allocation8 + $0x200] sm:$0xff]
    %v814 = vld [vmem:[#allocation8 + $0x208] sm:$0xff]
    %v815 = vld [vmem:[#allocation8 + $0x210] sm:$0xff]
    %v816 = vld [vmem:[#allocation8 + $0x218] sm:$0xff]
    %v817 = vld [vmem:[#allocation8 + $0x220] sm:$0xff]
    %v818 = vld [vmem:[#allocation8 + $0x228] sm:$0xff]
    %v819 = vld [vmem:[#allocation8 + $0x230] sm:$0xff]
    %v820 = vld [vmem:[#allocation8 + $0x238] sm:$0xff]
    %v821 = vld [vmem:[#allocation8 + $0x240] sm:$0xff]
    %v822 = vld [vmem:[#allocation8 + $0x248] sm:$0xff]
    %v823 = vld [vmem:[#allocation8 + $0x250] sm:$0xff]
    %v824 = vld [vmem:[#allocation8 + $0x258] sm:$0xff]
    %v825 = vld [vmem:[#allocation8 + $0x260] sm:$0xff]
    %v826 = vld [vmem:[#allocation8 + $0x268] sm:$0xff]
    %v827 = vld [vmem:[#allocation8 + $0x270] sm:$0xff]
    %v828 = vld [vmem:[#allocation8 + $0x278] sm:$0xff]
    %v829 = vld [vmem:[#allocation8 + $0x280] sm:$0xff]
    %v830 = vld [vmem:[#allocation8 + $0x288] sm:$0xff]
    %v831 = vld [vmem:[#allocation8 + $0x290] sm:$0xff]
    %v832 = vld [vmem:[#allocation8 + $0x298] sm:$0xff]
    %v833 = vld [vmem:[#allocation8 + $0x2a0] sm:$0xff]
    %v834 = vld [vmem:[#allocation8 + $0x2a8] sm:$0xff]
    %v835 = vld [vmem:[#allocation8 + $0x2b0] sm:$0xff]
    %v836 = vld [vmem:[#allocation8 + $0x2b8] sm:$0xff]
    %v837 = vld [vmem:[#allocation8 + $0x2c0] sm:$0xff]
    %v838 = vld [vmem:[#allocation8 + $0x2c8] sm:$0xff]
    %v839 = vld [vmem:[#allocation8 + $0x2d0] sm:$0xff]
    %v840 = vld [vmem:[#allocation8 + $0x2d8] sm:$0xff]
    %v841 = vld [vmem:[#allocation8 + $0x2e0] sm:$0xff]
    %v842 = vld [vmem:[#allocation8 + $0x2e8] sm:$0xff]
    %v843 = vld [vmem:[#allocation8 + $0x2f0] sm:$0xff]
    %v844 = vld [vmem:[#allocation8 + $0x2f8] sm:$0xff]
    %v845 = vld [vmem:[#allocation9] sm:$0xff]
    %v846 = vld [vmem:[#allocation9 + $0x8] sm:$0xff]
    %v847 = vld [vmem:[#allocation9 + $0x10] sm:$0xff]
    %848 = vmatpush.msra.mxu0 %v794
    %849 = vmatpush.msra.mxu0 %v791
    %850 = vmatpush.msra.mxu0 %v788
    %851 = vmatpush.msra.mxu0 %v785
    %852 = vmatpush.msra.mxu0 %v782
    %853 = vmatpush.msra.mxu0 %v779
    %854 = vmatpush.msra.mxu0 %v776
    %855 = vmatpush.msra.mxu0 %v773
    %856 = vmatpush.msra.mxu0 %v770
    %857 = vmatpush.msra.mxu0 %v767
    %858 = vmatpush.msra.mxu0 %v764
    %859 = vmatpush.msra.mxu0 %v761
    %860 = vmatpush.msra.mxu0 %v758
    %861 = vmatpush.msra.mxu0 %v755
    %862 = vmatpush.msra.mxu0 %v752
    %863 = vmatpush.msra.mxu0 %v749
    %864 = vmatmul.f32.gmra.mxu0 %v748
    %v865 = vpop.f32.mrf.mxu0
    %v866 = vadd.f32 %v845, %v865
    %867 = vdwg.mxu0
    %868 = vmatpush.msra.mxu0 %v842
    %869 = vmatpush.msra.mxu0 %v839
    %870 = vmatpush.msra.mxu0 %v836
    %871 = vmatpush.msra.mxu0 %v833
    %872 = vmatpush.msra.mxu0 %v830
    %873 = vmatpush.msra.mxu0 %v827
    %874 = vmatpush.msra.mxu0 %v824
    %875 = vmatpush.msra.mxu0 %v821
    %876 = vmatpush.msra.mxu0 %v818
    %877 = vmatpush.msra.mxu0 %v815
    %878 = vmatpush.msra.mxu0 %v812
    %879 = vmatpush.msra.mxu0 %v809
    %880 = vmatpush.msra.mxu0 %v806
    %881 = vmatpush.msra.mxu0 %v803
    %882 = vmatpush.msra.mxu0 %v800
    %883 = vmatpush.msra.mxu0 %v797
    %884 = vmatmul.f32.gmra.mxu0 %v706
    %v885 = vpop.f32.mrf.mxu0
    %v886 = vadd.f32 %v866, %v885
    %887 = vdwg.mxu0
    %888 = vmatpush.msra.mxu0 %v795
    %889 = vmatpush.msra.mxu0 %v792
    %890 = vmatpush.msra.mxu0 %v789
    %891 = vmatpush.msra.mxu0 %v786
    %892 = vmatpush.msra.mxu0 %v783
    %893 = vmatpush.msra.mxu0 %v780
    %894 = vmatpush.msra.mxu0 %v777
    %895 = vmatpush.msra.mxu0 %v774
    %896 = vmatpush.msra.mxu0 %v771
    %897 = vmatpush.msra.mxu0 %v768
    %898 = vmatpush.msra.mxu0 %v765
    %899 = vmatpush.msra.mxu0 %v762
    %900 = vmatpush.msra.mxu0 %v759
    %901 = vmatpush.msra.mxu0 %v756
    %902 = vmatpush.msra.mxu0 %v753
    %903 = vmatpush.msra.mxu0 %v750
    %904 = vmatmul.f32.gmra.mxu0 %v748
    %v905 = vpop.f32.mrf.mxu0
    %v906 = vadd.f32 %v846, %v905
    %907 = vdwg.mxu0
    %908 = vmatpush.msra.mxu0 %v843
    %909 = vmatpush.msra.mxu0 %v840
    %910 = vmatpush.msra.mxu0 %v837
    %911 = vmatpush.msra.mxu0 %v834
    %912 = vmatpush.msra.mxu0 %v831
    %913 = vmatpush.msra.mxu0 %v828
    %914 = vmatpush.msra.mxu0 %v825
    %915 = vmatpush.msra.mxu0 %v822
    %916 = vmatpush.msra.mxu0 %v819
    %917 = vmatpush.msra.mxu0 %v816
    %918 = vmatpush.msra.mxu0 %v813
    %919 = vmatpush.msra.mxu0 %v810
    %920 = vmatpush.msra.mxu0 %v807
    %921 = vmatpush.msra.mxu0 %v804
    %922 = vmatpush.msra.mxu0 %v801
    %923 = vmatpush.msra.mxu0 %v798
    %924 = vmatmul.f32.gmra.mxu0 %v706
    %v925 = vpop.f32.mrf.mxu0
    %v926 = vadd.f32 %v906, %v925
    %927 = vdwg.mxu0
    %928 = vmatpush.msra.mxu0 %v796
    %929 = vmatpush.msra.mxu0 %v793
    %930 = vmatpush.msra.mxu0 %v790
    %931 = vmatpush.msra.mxu0 %v787
    %932 = vmatpush.msra.mxu0 %v784
    %933 = vmatpush.msra.mxu0 %v781
    %934 = vmatpush.msra.mxu0 %v778
    %935 = vmatpush.msra.mxu0 %v775
    %936 = vmatpush.msra.mxu0 %v772
    %937 = vmatpush.msra.mxu0 %v769
    %938 = vmatpush.msra.mxu0 %v766
    %939 = vmatpush.msra.mxu0 %v763
    %940 = vmatpush.msra.mxu0 %v760
    %941 = vmatpush.msra.mxu0 %v757
    %942 = vmatpush.msra.mxu0 %v754
    %943 = vmatpush.msra.mxu0 %v751
    %944 = vmatmul.f32.gmra.mxu0 %v748
    %v945 = vpop.f32.mrf.mxu0
    %v946 = vadd.f32 %v847, %v945
    %947 = vdwg.mxu0
    %948 = vmatpush.msra.mxu0 %v844
    %949 = vmatpush.msra.mxu0 %v841
    %950 = vmatpush.msra.mxu0 %v838
    %951 = vmatpush.msra.mxu0 %v835
    %952 = vmatpush.msra.mxu0 %v832
    %953 = vmatpush.msra.mxu0 %v829
    %954 = vmatpush.msra.mxu0 %v826
    %955 = vmatpush.msra.mxu0 %v823
    %956 = vmatpush.msra.mxu0 %v820
    %957 = vmatpush.msra.mxu0 %v817
    %958 = vmatpush.msra.mxu0 %v814
    %959 = vmatpush.msra.mxu0 %v811
    %960 = vmatpush.msra.mxu0 %v808
    %961 = vmatpush.msra.mxu0 %v805
    %962 = vmatpush.msra.mxu0 %v802
    %963 = vmatpush.msra.mxu0 %v799
    %964 = vmatmul.f32.gmra.mxu0 %v706
    %v965 = vpop.f32.mrf.mxu0
    %v966 = vadd.f32 %v946, %v965
    %967 = vdwg.mxu0
    %v968 = vmul.f32 %v886, 0.5
    %v969 = vtanh.pop %v968
    %v970 = vmul.f32 %v969, 0.5
    %v971 = vadd.f32 %v970, 0.5
    %v972 = vmul.f32 %v926, 0.5
    %v973 = vtanh.pop %v972
    %v974 = vmul.f32 %v973, 0.5
    %v975 = vadd.f32 %v974, 0.5
    %v976 = vmul.f32 %v971, %v706
    %v977 = vld [vmem:[#allocation11] sm:$0xff]
    %v978 = vld [vmem:[#allocation11 + $0x8] sm:$0xff]
    %v979 = vld [vmem:[#allocation11 + $0x10] sm:$0xff]
    %v980 = vld [vmem:[#allocation11 + $0x18] sm:$0xff]
    %v981 = vld [vmem:[#allocation11 + $0x20] sm:$0xff]
    %v982 = vld [vmem:[#allocation11 + $0x28] sm:$0xff]
    %v983 = vld [vmem:[#allocation11 + $0x30] sm:$0xff]
    %v984 = vld [vmem:[#allocation11 + $0x38] sm:$0xff]
    %v985 = vld [vmem:[#allocation11 + $0x40] sm:$0xff]
    %v986 = vld [vmem:[#allocation11 + $0x48] sm:$0xff]
    %v987 = vld [vmem:[#allocation11 + $0x50] sm:$0xff]
    %v988 = vld [vmem:[#allocation11 + $0x58] sm:$0xff]
    %v989 = vld [vmem:[#allocation11 + $0x60] sm:$0xff]
    %v990 = vld [vmem:[#allocation11 + $0x68] sm:$0xff]
    %v991 = vld [vmem:[#allocation11 + $0x70] sm:$0xff]
    %v992 = vld [vmem:[#allocation11 + $0x78] sm:$0xff]
    %993 = vmatpush.msra.mxu0 %v992
    %994 = vmatpush.msra.mxu0 %v991
    %995 = vmatpush.msra.mxu0 %v990
    %996 = vmatpush.msra.mxu0 %v989
    %997 = vmatpush.msra.mxu0 %v988
    %998 = vmatpush.msra.mxu0 %v987
    %999 = vmatpush.msra.mxu0 %v986
    %1000 = vmatpush.msra.mxu0 %v985
    %1001 = vmatpush.msra.mxu0 %v984
    %1002 = vmatpush.msra.mxu0 %v983
    %1003 = vmatpush.msra.mxu0 %v982
    %1004 = vmatpush.msra.mxu0 %v981
    %1005 = vmatpush.msra.mxu0 %v980
    %1006 = vmatpush.msra.mxu0 %v979
    %1007 = vmatpush.msra.mxu0 %v978
    %1008 = vmatpush.msra.mxu0 %v977
    %1009 = vmatmul.f32.gmra.mxu0 %v976
    %v1010 = vpop.f32.mrf.mxu0
    %v1011 = vadd.f32 0.0, %v1010
    %1012 = vdwg.mxu0
    %v1013 = vadd.f32 %v966, %v1011
    %v1014 = vtanh.pop %v1013
    %v1015 = vsub.f32 %v706, %v1014
    %v1016 = vmul.f32 %v975, %v1015
    %v1017 = vadd.f32 %v1014, %v1016
    %v1018 = vmax.f32 %v1017, -5.0
    %v1019 = vmin.f32 %v1018, 5.0
    %s1020 = scalar_lea.vmem [#allocation14], 16
    %1021 = vst [vmem:[%s1020] sm:$0xff] %v1019
    %v1022 = vld [vmem:[#allocation12] sm:$0xff]
    %v1023 = vld [vmem:[#allocation12 + $0x8] sm:$0xff]
    %v1024 = vld [vmem:[#allocation12 + $0x10] sm:$0xff]
    %v1025 = vld [vmem:[#allocation12 + $0x18] sm:$0xff]
    %v1026 = vld [vmem:[#allocation12 + $0x20] sm:$0xff]
    %v1027 = vld [vmem:[#allocation12 + $0x28] sm:$0xff]
    %v1028 = vld [vmem:[#allocation12 + $0x30] sm:$0xff]
    %v1029 = vld [vmem:[#allocation12 + $0x38] sm:$0xff]
    %v1030 = vld [vmem:[#allocation12 + $0x40] sm:$0xff]
    %v1031 = vld [vmem:[#allocation12 + $0x48] sm:$0xff]
    %v1032 = vld [vmem:[#allocation12 + $0x50] sm:$0xff]
    %v1033 = vld [vmem:[#allocation12 + $0x58] sm:$0xff]
    %v1034 = vld [vmem:[#allocation12 + $0x60] sm:$0xff]
    %v1035 = vld [vmem:[#allocation12 + $0x68] sm:$0xff]
    %v1036 = vld [vmem:[#allocation12 + $0x70] sm:$0xff]
    %v1037 = vld [vmem:[#allocation12 + $0x78] sm:$0xff]
    %1038 = vmatpush.msra.mxu0 %v1037
    %1039 = vmatpush.msra.mxu0 %v1036
    %1040 = vmatpush.msra.mxu0 %v1035
    %1041 = vmatpush.msra.mxu0 %v1034
    %1042 = vmatpush.msra.mxu0 %v1033
    %1043 = vmatpush.msra.mxu0 %v1032
    %1044 = vmatpush.msra.mxu0 %v1031
    %1045 = vmatpush.msra.mxu0 %v1030
    %1046 = vmatpush.msra.mxu0 %v1029
    %1047 = vmatpush.msra.mxu0 %v1028
    %1048 = vmatpush.msra.mxu0 %v1027
    %1049 = vmatpush.msra.mxu0 %v1026
    %1050 = vmatpush.msra.mxu0 %v1025
    %1051 = vmatpush.msra.mxu0 %v1024
    %1052 = vmatpush.msra.mxu0 %v1023
    %1053 = vmatpush.msra.mxu0 %v1022
    %1054 = vmatmul.f32.gmra.mxu0 %v1019
    %v1055 = vpop.f32.mrf.mxu0
    %v1056 = vadd.f32 0.0, %v1055
    %1057 = vdwg.mxu0
    %s1058 = scalar_lea.vmem [#allocation15], 16
    %1059 = vst [vmem:[%s1058] sm:$0xff] %v1056
    %s1060 = scalar_lea.vmem [#allocation3], 24
    %v1061 = vld [vmem:[%s1060] sm:$0xff]
    %v1062 = vld [vmem:[#allocation8] sm:$0xff]
    %v1063 = vld [vmem:[#allocation8 + $0x8] sm:$0xff]
    %v1064 = vld [vmem:[#allocation8 + $0x10] sm:$0xff]
    %v1065 = vld [vmem:[#allocation8 + $0x18] sm:$0xff]
    %v1066 = vld [vmem:[#allocation8 + $0x20] sm:$0xff]
    %v1067 = vld [vmem:[#allocation8 + $0x28] sm:$0xff]
    %v1068 = vld [vmem:[#allocation8 + $0x30] sm:$0xff]
    %v1069 = vld [vmem:[#allocation8 + $0x38] sm:$0xff]
    %v1070 = vld [vmem:[#allocation8 + $0x40] sm:$0xff]
    %v1071 = vld [vmem:[#allocation8 + $0x48] sm:$0xff]
    %v1072 = vld [vmem:[#allocation8 + $0x50] sm:$0xff]
    %v1073 = vld [vmem:[#allocation8 + $0x58] sm:$0xff]
    %v1074 = vld [vmem:[#allocation8 + $0x60] sm:$0xff]
    %v1075 = vld [vmem:[#allocation8 + $0x68] sm:$0xff]
    %v1076 = vld [vmem:[#allocation8 + $0x70] sm:$0xff]
    %v1077 = vld [vmem:[#allocation8 + $0x78] sm:$0xff]
    %v1078 = vld [vmem:[#allocation8 + $0x80] sm:$0xff]
    %v1079 = vld [vmem:[#allocation8 + $0x88] sm:$0xff]
    %v1080 = vld [vmem:[#allocation8 + $0x90] sm:$0xff]
    %v1081 = vld [vmem:[#allocation8 + $0x98] sm:$0xff]
    %v1082 = vld [vmem:[#allocation8 + $0xa0] sm:$0xff]
    %v1083 = vld [vmem:[#allocation8 + $0xa8] sm:$0xff]
    %v1084 = vld [vmem:[#allocation8 + $0xb0] sm:$0xff]
    %v1085 = vld [vmem:[#allocation8 + $0xb8] sm:$0xff]
    %v1086 = vld [vmem:[#allocation8 + $0xc0] sm:$0xff]
    %v1087 = vld [vmem:[#allocation8 + $0xc8] sm:$0xff]
    %v1088 = vld [vmem:[#allocation8 + $0xd0] sm:$0xff]
    %v1089 = vld [vmem:[#allocation8 + $0xd8] sm:$0xff]
    %v1090 = vld [vmem:[#allocation8 + $0xe0] sm:$0xff]
    %v1091 = vld [vmem:[#allocation8 + $0xe8] sm:$0xff]
    %v1092 = vld [vmem:[#allocation8 + $0xf0] sm:$0xff]
    %v1093 = vld [vmem:[#allocation8 + $0xf8] sm:$0xff]
    %v1094 = vld [vmem:[#allocation8 + $0x100] sm:$0xff]
    %v1095 = vld [vmem:[#allocation8 + $0x108] sm:$0xff]
    %v1096 = vld [vmem:[#allocation8 + $0x110] sm:$0xff]
    %v1097 = vld [vmem:[#allocation8 + $0x118] sm:$0xff]
    %v1098 = vld [vmem:[#allocation8 + $0x120] sm:$0xff]
    %v1099 = vld [vmem:[#allocation8 + $0x128] sm:$0xff]
    %v1100 = vld [vmem:[#allocation8 + $0x130] sm:$0xff]
    %v1101 = vld [vmem:[#allocation8 + $0x138] sm:$0xff]
    %v1102 = vld [vmem:[#allocation8 + $0x140] sm:$0xff]
    %v1103 = vld [vmem:[#allocation8 + $0x148] sm:$0xff]
    %v1104 = vld [vmem:[#allocation8 + $0x150] sm:$0xff]
    %v1105 = vld [vmem:[#allocation8 + $0x158] sm:$0xff]
    %v1106 = vld [vmem:[#allocation8 + $0x160] sm:$0xff]
    %v1107 = vld [vmem:[#allocation8 + $0x168] sm:$0xff]
    %v1108 = vld [vmem:[#allocation8 + $0x170] sm:$0xff]
    %v1109 = vld [vmem:[#allocation8 + $0x178] sm:$0xff]
    %v1110 = vld [vmem:[#allocation8 + $0x180] sm:$0xff]
    %v1111 = vld [vmem:[#allocation8 + $0x188] sm:$0xff]
    %v1112 = vld [vmem:[#allocation8 + $0x190] sm:$0xff]
    %v1113 = vld [vmem:[#allocation8 + $0x198] sm:$0xff]
    %v1114 = vld [vmem:[#allocation8 + $0x1a0] sm:$0xff]
    %v1115 = vld [vmem:[#allocation8 + $0x1a8] sm:$0xff]
    %v1116 = vld [vmem:[#allocation8 + $0x1b0] sm:$0xff]
    %v1117 = vld [vmem:[#allocation8 + $0x1b8] sm:$0xff]
    %v1118 = vld [vmem:[#allocation8 + $0x1c0] sm:$0xff]
    %v1119 = vld [vmem:[#allocation8 + $0x1c8] sm:$0xff]
    %v1120 = vld [vmem:[#allocation8 + $0x1d0] sm:$0xff]
    %v1121 = vld [vmem:[#allocation8 + $0x1d8] sm:$0xff]
    %v1122 = vld [vmem:[#allocation8 + $0x1e0] sm:$0xff]
    %v1123 = vld [vmem:[#allocation8 + $0x1e8] sm:$0xff]
    %v1124 = vld [vmem:[#allocation8 + $0x1f0] sm:$0xff]
    %v1125 = vld [vmem:[#allocation8 + $0x1f8] sm:$0xff]
    %v1126 = vld [vmem:[#allocation8 + $0x200] sm:$0xff]
    %v1127 = vld [vmem:[#allocation8 + $0x208] sm:$0xff]
    %v1128 = vld [vmem:[#allocation8 + $0x210] sm:$0xff]
    %v1129 = vld [vmem:[#allocation8 + $0x218] sm:$0xff]
    %v1130 = vld [vmem:[#allocation8 + $0x220] sm:$0xff]
    %v1131 = vld [vmem:[#allocation8 + $0x228] sm:$0xff]
    %v1132 = vld [vmem:[#allocation8 + $0x230] sm:$0xff]
    %v1133 = vld [vmem:[#allocation8 + $0x238] sm:$0xff]
    %v1134 = vld [vmem:[#allocation8 + $0x240] sm:$0xff]
    %v1135 = vld [vmem:[#allocation8 + $0x248] sm:$0xff]
    %v1136 = vld [vmem:[#allocation8 + $0x250] sm:$0xff]
    %v1137 = vld [vmem:[#allocation8 + $0x258] sm:$0xff]
    %v1138 = vld [vmem:[#allocation8 + $0x260] sm:$0xff]
    %v1139 = vld [vmem:[#allocation8 + $0x268] sm:$0xff]
    %v1140 = vld [vmem:[#allocation8 + $0x270] sm:$0xff]
    %v1141 = vld [vmem:[#allocation8 + $0x278] sm:$0xff]
    %v1142 = vld [vmem:[#allocation8 + $0x280] sm:$0xff]
    %v1143 = vld [vmem:[#allocation8 + $0x288] sm:$0xff]
    %v1144 = vld [vmem:[#allocation8 + $0x290] sm:$0xff]
    %v1145 = vld [vmem:[#allocation8 + $0x298] sm:$0xff]
    %v1146 = vld [vmem:[#allocation8 + $0x2a0] sm:$0xff]
    %v1147 = vld [vmem:[#allocation8 + $0x2a8] sm:$0xff]
    %v1148 = vld [vmem:[#allocation8 + $0x2b0] sm:$0xff]
    %v1149 = vld [vmem:[#allocation8 + $0x2b8] sm:$0xff]
    %v1150 = vld [vmem:[#allocation8 + $0x2c0] sm:$0xff]
    %v1151 = vld [vmem:[#allocation8 + $0x2c8] sm:$0xff]
    %v1152 = vld [vmem:[#allocation8 + $0x2d0] sm:$0xff]
    %v1153 = vld [vmem:[#allocation8 + $0x2d8] sm:$0xff]
    %v1154 = vld [vmem:[#allocation8 + $0x2e0] sm:$0xff]
    %v1155 = vld [vmem:[#allocation8 + $0x2e8] sm:$0xff]
    %v1156 = vld [vmem:[#allocation8 + $0x2f0] sm:$0xff]
    %v1157 = vld [vmem:[#allocation8 + $0x2f8] sm:$0xff]
    %v1158 = vld [vmem:[#allocation9] sm:$0xff]
    %v1159 = vld [vmem:[#allocation9 + $0x8] sm:$0xff]
    %v1160 = vld [vmem:[#allocation9 + $0x10] sm:$0xff]
    %1161 = vmatpush.msra.mxu0 %v1107
    %1162 = vmatpush.msra.mxu0 %v1104
    %1163 = vmatpush.msra.mxu0 %v1101
    %1164 = vmatpush.msra.mxu0 %v1098
    %1165 = vmatpush.msra.mxu0 %v1095
    %1166 = vmatpush.msra.mxu0 %v1092
    %1167 = vmatpush.msra.mxu0 %v1089
    %1168 = vmatpush.msra.mxu0 %v1086
    %1169 = vmatpush.msra.mxu0 %v1083
    %1170 = vmatpush.msra.mxu0 %v1080
    %1171 = vmatpush.msra.mxu0 %v1077
    %1172 = vmatpush.msra.mxu0 %v1074
    %1173 = vmatpush.msra.mxu0 %v1071
    %1174 = vmatpush.msra.mxu0 %v1068
    %1175 = vmatpush.msra.mxu0 %v1065
    %1176 = vmatpush.msra.mxu0 %v1062
    %1177 = vmatmul.f32.gmra.mxu0 %v1061
    %v1178 = vpop.f32.mrf.mxu0
    %v1179 = vadd.f32 %v1158, %v1178
    %1180 = vdwg.mxu0
    %1181 = vmatpush.msra.mxu0 %v1155
    %1182 = vmatpush.msra.mxu0 %v1152
    %1183 = vmatpush.msra.mxu0 %v1149
    %1184 = vmatpush.msra.mxu0 %v1146
    %1185 = vmatpush.msra.mxu0 %v1143
    %1186 = vmatpush.msra.mxu0 %v1140
    %1187 = vmatpush.msra.mxu0 %v1137
    %1188 = vmatpush.msra.mxu0 %v1134
    %1189 = vmatpush.msra.mxu0 %v1131
    %1190 = vmatpush.msra.mxu0 %v1128
    %1191 = vmatpush.msra.mxu0 %v1125
    %1192 = vmatpush.msra.mxu0 %v1122
    %1193 = vmatpush.msra.mxu0 %v1119
    %1194 = vmatpush.msra.mxu0 %v1116
    %1195 = vmatpush.msra.mxu0 %v1113
    %1196 = vmatpush.msra.mxu0 %v1110
    %1197 = vmatmul.f32.gmra.mxu0 %v1019
    %v1198 = vpop.f32.mrf.mxu0
    %v1199 = vadd.f32 %v1179, %v1198
    %1200 = vdwg.mxu0
    %1201 = vmatpush.msra.mxu0 %v1108
    %1202 = vmatpush.msra.mxu0 %v1105
    %1203 = vmatpush.msra.mxu0 %v1102
    %1204 = vmatpush.msra.mxu0 %v1099
    %1205 = vmatpush.msra.mxu0 %v1096
    %1206 = vmatpush.msra.mxu0 %v1093
    %1207 = vmatpush.msra.mxu0 %v1090
    %1208 = vmatpush.msra.mxu0 %v1087
    %1209 = vmatpush.msra.mxu0 %v1084
    %1210 = vmatpush.msra.mxu0 %v1081
    %1211 = vmatpush.msra.mxu0 %v1078
    %1212 = vmatpush.msra.mxu0 %v1075
    %1213 = vmatpush.msra.mxu0 %v1072
    %1214 = vmatpush.msra.mxu0 %v1069
    %1215 = vmatpush.msra.mxu0 %v1066
    %1216 = vmatpush.msra.mxu0 %v1063
    %1217 = vmatmul.f32.gmra.mxu0 %v1061
    %v1218 = vpop.f32.mrf.mxu0
    %v1219 = vadd.f32 %v1159, %v1218
    %1220 = vdwg.mxu0
    %1221 = vmatpush.msra.mxu0 %v1156
    %1222 = vmatpush.msra.mxu0 %v1153
    %1223 = vmatpush.msra.mxu0 %v1150
    %1224 = vmatpush.msra.mxu0 %v1147
    %1225 = vmatpush.msra.mxu0 %v1144
    %1226 = vmatpush.msra.mxu0 %v1141
    %1227 = vmatpush.msra.mxu0 %v1138
    %1228 = vmatpush.msra.mxu0 %v1135
    %1229 = vmatpush.msra.mxu0 %v1132
    %1230 = vmatpush.msra.mxu0 %v1129
    %1231 = vmatpush.msra.mxu0 %v1126
    %1232 = vmatpush.msra.mxu0 %v1123
    %1233 = vmatpush.msra.mxu0 %v1120
    %1234 = vmatpush.msra.mxu0 %v1117
    %1235 = vmatpush.msra.mxu0 %v1114
    %1236 = vmatpush.msra.mxu0 %v1111
    %1237 = vmatmul.f32.gmra.mxu0 %v1019
    %v1238 = vpop.f32.mrf.mxu0
    %v1239 = vadd.f32 %v1219, %v1238
    %1240 = vdwg.mxu0
    %1241 = vmatpush.msra.mxu0 %v1109
    %1242 = vmatpush.msra.mxu0 %v1106
    %1243 = vmatpush.msra.mxu0 %v1103
    %1244 = vmatpush.msra.mxu0 %v1100
    %1245 = vmatpush.msra.mxu0 %v1097
    %1246 = vmatpush.msra.mxu0 %v1094
    %1247 = vmatpush.msra.mxu0 %v1091
    %1248 = vmatpush.msra.mxu0 %v1088
    %1249 = vmatpush.msra.mxu0 %v1085
    %1250 = vmatpush.msra.mxu0 %v1082
    %1251 = vmatpush.msra.mxu0 %v1079
    %1252 = vmatpush.msra.mxu0 %v1076
    %1253 = vmatpush.msra.mxu0 %v1073
    %1254 = vmatpush.msra.mxu0 %v1070
    %1255 = vmatpush.msra.mxu0 %v1067
    %1256 = vmatpush.msra.mxu0 %v1064
    %1257 = vmatmul.f32.gmra.mxu0 %v1061
    %v1258 = vpop.f32.mrf.mxu0
    %v1259 = vadd.f32 %v1160, %v1258
    %1260 = vdwg.mxu0
    %1261 = vmatpush.msra.mxu0 %v1157
    %1262 = vmatpush.msra.mxu0 %v1154
    %1263 = vmatpush.msra.mxu0 %v1151
    %1264 = vmatpush.msra.mxu0 %v1148
    %1265 = vmatpush.msra.mxu0 %v1145
    %1266 = vmatpush.msra.mxu0 %v1142
    %1267 = vmatpush.msra.mxu0 %v1139
    %1268 = vmatpush.msra.mxu0 %v1136
    %1269 = vmatpush.msra.mxu0 %v1133
    %1270 = vmatpush.msra.mxu0 %v1130
    %1271 = vmatpush.msra.mxu0 %v1127
    %1272 = vmatpush.msra.mxu0 %v1124
    %1273 = vmatpush.msra.mxu0 %v1121
    %1274 = vmatpush.msra.mxu0 %v1118
    %1275 = vmatpush.msra.mxu0 %v1115
    %1276 = vmatpush.msra.mxu0 %v1112
    %1277 = vmatmul.f32.gmra.mxu0 %v1019
    %v1278 = vpop.f32.mrf.mxu0
    %v1279 = vadd.f32 %v1259, %v1278
    %1280 = vdwg.mxu0
    %v1281 = vmul.f32 %v1199, 0.5
    %v1282 = vtanh.pop %v1281
    %v1283 = vmul.f32 %v1282, 0.5
    %v1284 = vadd.f32 %v1283, 0.5
    %v1285 = vmul.f32 %v1239, 0.5
    %v1286 = vtanh.pop %v1285
    %v1287 = vmul.f32 %v1286, 0.5
    %v1288 = vadd.f32 %v1287, 0.5
    %v1289 = vmul.f32 %v1284, %v1019
    %v1290 = vld [vmem:[#allocation11] sm:$0xff]
    %v1291 = vld [vmem:[#allocation11 + $0x8] sm:$0xff]
    %v1292 = vld [vmem:[#allocation11 + $0x10] sm:$0xff]
    %v1293 = vld [vmem:[#allocation11 + $0x18] sm:$0xff]
    %v1294 = vld [vmem:[#allocation11 + $0x20] sm:$0xff]
    %v1295 = vld [vmem:[#allocation11 + $0x28] sm:$0xff]
    %v1296 = vld [vmem:[#allocation11 + $0x30] sm:$0xff]
    %v1297 = vld [vmem:[#allocation11 + $0x38] sm:$0xff]
    %v1298 = vld [vmem:[#allocation11 + $0x40] sm:$0xff]
    %v1299 = vld [vmem:[#allocation11 + $0x48] sm:$0xff]
    %v1300 = vld [vmem:[#allocation11 + $0x50] sm:$0xff]
    %v1301 = vld [vmem:[#allocation11 + $0x58] sm:$0xff]
    %v1302 = vld [vmem:[#allocation11 + $0x60] sm:$0xff]
    %v1303 = vld [vmem:[#allocation11 + $0x68] sm:$0xff]
    %v1304 = vld [vmem:[#allocation11 + $0x70] sm:$0xff]
    %v1305 = vld [vmem:[#allocation11 + $0x78] sm:$0xff]
    %1306 = vmatpush.msra.mxu0 %v1305
    %1307 = vmatpush.msra.mxu0 %v1304
    %1308 = vmatpush.msra.mxu0 %v1303
    %1309 = vmatpush.msra.mxu0 %v1302
    %1310 = vmatpush.msra.mxu0 %v1301
    %1311 = vmatpush.msra.mxu0 %v1300
    %1312 = vmatpush.msra.mxu0 %v1299
    %1313 = vmatpush.msra.mxu0 %v1298
    %1314 = vmatpush.msra.mxu0 %v1297
    %1315 = vmatpush.msra.mxu0 %v1296
    %1316 = vmatpush.msra.mxu0 %v1295
    %1317 = vmatpush.msra.mxu0 %v1294
    %1318 = vmatpush.msra.mxu0 %v1293
    %1319 = vmatpush.msra.mxu0 %v1292
    %1320 = vmatpush.msra.mxu0 %v1291
    %1321 = vmatpush.msra.mxu0 %v1290
    %1322 = vmatmul.f32.gmra.mxu0 %v1289
    %v1323 = vpop.f32.mrf.mxu0
    %v1324 = vadd.f32 0.0, %v1323
    %1325 = vdwg.mxu0
    %v1326 = vadd.f32 %v1279, %v1324
    %v1327 = vtanh.pop %v1326
    %v1328 = vsub.f32 %v1019, %v1327
    %v1329 = vmul.f32 %v1288, %v1328
    %v1330 = vadd.f32 %v1327, %v1329
    %v1331 = vmax.f32 %v1330, -5.0
    %v1332 = vmin.f32 %v1331, 5.0
    %s1333 = scalar_lea.vmem [#allocation14], 24
    %1334 = vst [vmem:[%s1333] sm:$0xff] %v1332
    %v1335 = vld [vmem:[#allocation12] sm:$0xff]
    %v1336 = vld [vmem:[#allocation12 + $0x8] sm:$0xff]
    %v1337 = vld [vmem:[#allocation12 + $0x10] sm:$0xff]
    %v1338 = vld [vmem:[#allocation12 + $0x18] sm:$0xff]
    %v1339 = vld [vmem:[#allocation12 + $0x20] sm:$0xff]
    %v1340 = vld [vmem:[#allocation12 + $0x28] sm:$0xff]
    %v1341 = vld [vmem:[#allocation12 + $0x30] sm:$0xff]
    %v1342 = vld [vmem:[#allocation12 + $0x38] sm:$0xff]
    %v1343 = vld [vmem:[#allocation12 + $0x40] sm:$0xff]
    %v1344 = vld [vmem:[#allocation12 + $0x48] sm:$0xff]
    %v1345 = vld [vmem:[#allocation12 + $0x50] sm:$0xff]
    %v1346 = vld [vmem:[#allocation12 + $0x58] sm:$0xff]
    %v1347 = vld [vmem:[#allocation12 + $0x60] sm:$0xff]
    %v1348 = vld [vmem:[#allocation12 + $0x68] sm:$0xff]
    %v1349 = vld [vmem:[#allocation12 + $0x70] sm:$0xff]
    %v1350 = vld [vmem:[#allocation12 + $0x78] sm:$0xff]
    %1351 = vmatpush.msra.mxu0 %v1350
    %1352 = vmatpush.msra.mxu0 %v1349
    %1353 = vmatpush.msra.mxu0 %v1348
    %1354 = vmatpush.msra.mxu0 %v1347
    %1355 = vmatpush.msra.mxu0 %v1346
    %1356 = vmatpush.msra.mxu0 %v1345
    %1357 = vmatpush.msra.mxu0 %v1344
    %1358 = vmatpush.msra.mxu0 %v1343
    %1359 = vmatpush.msra.mxu0 %v1342
    %1360 = vmatpush.msra.mxu0 %v1341
    %1361 = vmatpush.msra.mxu0 %v1340
    %1362 = vmatpush.msra.mxu0 %v1339
    %1363 = vmatpush.msra.mxu0 %v1338
    %1364 = vmatpush.msra.mxu0 %v1337
    %1365 = vmatpush.msra.mxu0 %v1336
    %1366 = vmatpush.msra.mxu0 %v1335
    %1367 = vmatmul.f32.gmra.mxu0 %v1332
    %v1368 = vpop.f32.mrf.mxu0
    %v1369 = vadd.f32 0.0, %v1368
    %1370 = vdwg.mxu0
    %s1371 = scalar_lea.vmem [#allocation15], 24
    %1372 = vst [vmem:[%s1371] sm:$0xff] %v1369
    %s1373 = scalar_lea.vmem [#allocation3], 32
    %v1374 = vld [vmem:[%s1373] sm:$0xff]
    %v1375 = vld [vmem:[#allocation8] sm:$0xff]
    %v1376 = vld [vmem:[#allocation8 + $0x8] sm:$0xff]
    %v1377 = vld [vmem:[#allocation8 + $0x10] sm:$0xff]
    %v1378 = vld [vmem:[#allocation8 + $0x18] sm:$0xff]
    %v1379 = vld [vmem:[#allocation8 + $0x20] sm:$0xff]
    %v1380 = vld [vmem:[#allocation8 + $0x28] sm:$0xff]
    %v1381 = vld [vmem:[#allocation8 + $0x30] sm:$0xff]
    %v1382 = vld [vmem:[#allocation8 + $0x38] sm:$0xff]
    %v1383 = vld [vmem:[#allocation8 + $0x40] sm:$0xff]
    %v1384 = vld [vmem:[#allocation8 + $0x48] sm:$0xff]
    %v1385 = vld [vmem:[#allocation8 + $0x50] sm:$0xff]
    %v1386 = vld [vmem:[#allocation8 + $0x58] sm:$0xff]
    %v1387 = vld [vmem:[#allocation8 + $0x60] sm:$0xff]
    %v1388 = vld [vmem:[#allocation8 + $0x68] sm:$0xff]
    %v1389 = vld [vmem:[#allocation8 + $0x70] sm:$0xff]
    %v1390 = vld [vmem:[#allocation8 + $0x78] sm:$0xff]
    %v1391 = vld [vmem:[#allocation8 + $0x80] sm:$0xff]
    %v1392 = vld [vmem:[#allocation8 + $0x88] sm:$0xff]
    %v1393 = vld [vmem:[#allocation8 + $0x90] sm:$0xff]
    %v1394 = vld [vmem:[#allocation8 + $0x98] sm:$0xff]
    %v1395 = vld [vmem:[#allocation8 + $0xa0] sm:$0xff]
    %v1396 = vld [vmem:[#allocation8 + $0xa8] sm:$0xff]
    %v1397 = vld [vmem:[#allocation8 + $0xb0] sm:$0xff]
    %v1398 = vld [vmem:[#allocation8 + $0xb8] sm:$0xff]
    %v1399 = vld [vmem:[#allocation8 + $0xc0] sm:$0xff]
    %v1400 = vld [vmem:[#allocation8 + $0xc8] sm:$0xff]
    %v1401 = vld [vmem:[#allocation8 + $0xd0] sm:$0xff]
    %v1402 = vld [vmem:[#allocation8 + $0xd8] sm:$0xff]
    %v1403 = vld [vmem:[#allocation8 + $0xe0] sm:$0xff]
    %v1404 = vld [vmem:[#allocation8 + $0xe8] sm:$0xff]
    %v1405 = vld [vmem:[#allocation8 + $0xf0] sm:$0xff]
    %v1406 = vld [vmem:[#allocation8 + $0xf8] sm:$0xff]
    %v1407 = vld [vmem:[#allocation8 + $0x100] sm:$0xff]
    %v1408 = vld [vmem:[#allocation8 + $0x108] sm:$0xff]
    %v1409 = vld [vmem:[#allocation8 + $0x110] sm:$0xff]
    %v1410 = vld [vmem:[#allocation8 + $0x118] sm:$0xff]
    %v1411 = vld [vmem:[#allocation8 + $0x120] sm:$0xff]
    %v1412 = vld [vmem:[#allocation8 + $0x128] sm:$0xff]
    %v1413 = vld [vmem:[#allocation8 + $0x130] sm:$0xff]
    %v1414 = vld [vmem:[#allocation8 + $0x138] sm:$0xff]
    %v1415 = vld [vmem:[#allocation8 + $0x140] sm:$0xff]
    %v1416 = vld [vmem:[#allocation8 + $0x148] sm:$0xff]
    %v1417 = vld [vmem:[#allocation8 + $0x150] sm:$0xff]
    %v1418 = vld [vmem:[#allocation8 + $0x158] sm:$0xff]
    %v1419 = vld [vmem:[#allocation8 + $0x160] sm:$0xff]
    %v1420 = vld [vmem:[#allocation8 + $0x168] sm:$0xff]
    %v1421 = vld [vmem:[#allocation8 + $0x170] sm:$0xff]
    %v1422 = vld [vmem:[#allocation8 + $0x178] sm:$0xff]
    %v1423 = vld [vmem:[#allocation8 + $0x180] sm:$0xff]
    %v1424 = vld [vmem:[#allocation8 + $0x188] sm:$0xff]
    %v1425 = vld [vmem:[#allocation8 + $0x190] sm:$0xff]
    %v1426 = vld [vmem:[#allocation8 + $0x198] sm:$0xff]
    %v1427 = vld [vmem:[#allocation8 + $0x1a0] sm:$0xff]
    %v1428 = vld [vmem:[#allocation8 + $0x1a8] sm:$0xff]
    %v1429 = vld [vmem:[#allocation8 + $0x1b0] sm:$0xff]
    %v1430 = vld [vmem:[#allocation8 + $0x1b8] sm:$0xff]
    %v1431 = vld [vmem:[#allocation8 + $0x1c0] sm:$0xff]
    %v1432 = vld [vmem:[#allocation8 + $0x1c8] sm:$0xff]
    %v1433 = vld [vmem:[#allocation8 + $0x1d0] sm:$0xff]
    %v1434 = vld [vmem:[#allocation8 + $0x1d8] sm:$0xff]
    %v1435 = vld [vmem:[#allocation8 + $0x1e0] sm:$0xff]
    %v1436 = vld [vmem:[#allocation8 + $0x1e8] sm:$0xff]
    %v1437 = vld [vmem:[#allocation8 + $0x1f0] sm:$0xff]
    %v1438 = vld [vmem:[#allocation8 + $0x1f8] sm:$0xff]
    %v1439 = vld [vmem:[#allocation8 + $0x200] sm:$0xff]
    %v1440 = vld [vmem:[#allocation8 + $0x208] sm:$0xff]
    %v1441 = vld [vmem:[#allocation8 + $0x210] sm:$0xff]
    %v1442 = vld [vmem:[#allocation8 + $0x218] sm:$0xff]
    %v1443 = vld [vmem:[#allocation8 + $0x220] sm:$0xff]
    %v1444 = vld [vmem:[#allocation8 + $0x228] sm:$0xff]
    %v1445 = vld [vmem:[#allocation8 + $0x230] sm:$0xff]
    %v1446 = vld [vmem:[#allocation8 + $0x238] sm:$0xff]
    %v1447 = vld [vmem:[#allocation8 + $0x240] sm:$0xff]
    %v1448 = vld [vmem:[#allocation8 + $0x248] sm:$0xff]
    %v1449 = vld [vmem:[#allocation8 + $0x250] sm:$0xff]
    %v1450 = vld [vmem:[#allocation8 + $0x258] sm:$0xff]
    %v1451 = vld [vmem:[#allocation8 + $0x260] sm:$0xff]
    %v1452 = vld [vmem:[#allocation8 + $0x268] sm:$0xff]
    %v1453 = vld [vmem:[#allocation8 + $0x270] sm:$0xff]
    %v1454 = vld [vmem:[#allocation8 + $0x278] sm:$0xff]
    %v1455 = vld [vmem:[#allocation8 + $0x280] sm:$0xff]
    %v1456 = vld [vmem:[#allocation8 + $0x288] sm:$0xff]
    %v1457 = vld [vmem:[#allocation8 + $0x290] sm:$0xff]
    %v1458 = vld [vmem:[#allocation8 + $0x298] sm:$0xff]
    %v1459 = vld [vmem:[#allocation8 + $0x2a0] sm:$0xff]
    %v1460 = vld [vmem:[#allocation8 + $0x2a8] sm:$0xff]
    %v1461 = vld [vmem:[#allocation8 + $0x2b0] sm:$0xff]
    %v1462 = vld [vmem:[#allocation8 + $0x2b8] sm:$0xff]
    %v1463 = vld [vmem:[#allocation8 + $0x2c0] sm:$0xff]
    %v1464 = vld [vmem:[#allocation8 + $0x2c8] sm:$0xff]
    %v1465 = vld [vmem:[#allocation8 + $0x2d0] sm:$0xff]
    %v1466 = vld [vmem:[#allocation8 + $0x2d8] sm:$0xff]
    %v1467 = vld [vmem:[#allocation8 + $0x2e0] sm:$0xff]
    %v1468 = vld [vmem:[#allocation8 + $0x2e8] sm:$0xff]
    %v1469 = vld [vmem:[#allocation8 + $0x2f0] sm:$0xff]
    %v1470 = vld [vmem:[#allocation8 + $0x2f8] sm:$0xff]
    %v1471 = vld [vmem:[#allocation9] sm:$0xff]
    %v1472 = vld [vmem:[#allocation9 + $0x8] sm:$0xff]
    %v1473 = vld [vmem:[#allocation9 + $0x10] sm:$0xff]
    %1474 = vmatpush.msra.mxu0 %v1420
    %1475 = vmatpush.msra.mxu0 %v1417
    %1476 = vmatpush.msra.mxu0 %v1414
    %1477 = vmatpush.msra.mxu0 %v1411
    %1478 = vmatpush.msra.mxu0 %v1408
    %1479 = vmatpush.msra.mxu0 %v1405
    %1480 = vmatpush.msra.mxu0 %v1402
    %1481 = vmatpush.msra.mxu0 %v1399
    %1482 = vmatpush.msra.mxu0 %v1396
    %1483 = vmatpush.msra.mxu0 %v1393
    %1484 = vmatpush.msra.mxu0 %v1390
    %1485 = vmatpush.msra.mxu0 %v1387
    %1486 = vmatpush.msra.mxu0 %v1384
    %1487 = vmatpush.msra.mxu0 %v1381
    %1488 = vmatpush.msra.mxu0 %v1378
    %1489 = vmatpush.msra.mxu0 %v1375
    %1490 = vmatmul.f32.gmra.mxu0 %v1374
    %v1491 = vpop.f32.mrf.mxu0
    %v1492 = vadd.f32 %v1471, %v1491
    %1493 = vdwg.mxu0
    %1494 = vmatpush.msra.mxu0 %v1468
    %1495 = vmatpush.msra.mxu0 %v1465
    %1496 = vmatpush.msra.mxu0 %v1462
    %1497 = vmatpush.msra.mxu0 %v1459
    %1498 = vmatpush.msra.mxu0 %v1456
    %1499 = vmatpush.msra.mxu0 %v1453
    %1500 = vmatpush.msra.mxu0 %v1450
    %1501 = vmatpush.msra.mxu0 %v1447
    %1502 = vmatpush.msra.mxu0 %v1444
    %1503 = vmatpush.msra.mxu0 %v1441
    %1504 = vmatpush.msra.mxu0 %v1438
    %1505 = vmatpush.msra.mxu0 %v1435
    %1506 = vmatpush.msra.mxu0 %v1432
    %1507 = vmatpush.msra.mxu0 %v1429
    %1508 = vmatpush.msra.mxu0 %v1426
    %1509 = vmatpush.msra.mxu0 %v1423
    %1510 = vmatmul.f32.gmra.mxu0 %v1332
    %v1511 = vpop.f32.mrf.mxu0
    %v1512 = vadd.f32 %v1492, %v1511
    %1513 = vdwg.mxu0
    %1514 = vmatpush.msra.mxu0 %v1421
    %1515 = vmatpush.msra.mxu0 %v1418
    %1516 = vmatpush.msra.mxu0 %v1415
    %1517 = vmatpush.msra.mxu0 %v1412
    %1518 = vmatpush.msra.mxu0 %v1409
    %1519 = vmatpush.msra.mxu0 %v1406
    %1520 = vmatpush.msra.mxu0 %v1403
    %1521 = vmatpush.msra.mxu0 %v1400
    %1522 = vmatpush.msra.mxu0 %v1397
    %1523 = vmatpush.msra.mxu0 %v1394
    %1524 = vmatpush.msra.mxu0 %v1391
    %1525 = vmatpush.msra.mxu0 %v1388
    %1526 = vmatpush.msra.mxu0 %v1385
    %1527 = vmatpush.msra.mxu0 %v1382
    %1528 = vmatpush.msra.mxu0 %v1379
    %1529 = vmatpush.msra.mxu0 %v1376
    %1530 = vmatmul.f32.gmra.mxu0 %v1374
    %v1531 = vpop.f32.mrf.mxu0
    %v1532 = vadd.f32 %v1472, %v1531
    %1533 = vdwg.mxu0
    %1534 = vmatpush.msra.mxu0 %v1469
    %1535 = vmatpush.msra.mxu0 %v1466
    %1536 = vmatpush.msra.mxu0 %v1463
    %1537 = vmatpush.msra.mxu0 %v1460
    %1538 = vmatpush.msra.mxu0 %v1457
    %1539 = vmatpush.msra.mxu0 %v1454
    %1540 = vmatpush.msra.mxu0 %v1451
    %1541 = vmatpush.msra.mxu0 %v1448
    %1542 = vmatpush.msra.mxu0 %v1445
    %1543 = vmatpush.msra.mxu0 %v1442
    %1544 = vmatpush.msra.mxu0 %v1439
    %1545 = vmatpush.msra.mxu0 %v1436
    %1546 = vmatpush.msra.mxu0 %v1433
    %1547 = vmatpush.msra.mxu0 %v1430
    %1548 = vmatpush.msra.mxu0 %v1427
    %1549 = vmatpush.msra.mxu0 %v1424
    %1550 = vmatmul.f32.gmra.mxu0 %v1332
    %v1551 = vpop.f32.mrf.mxu0
    %v1552 = vadd.f32 %v1532, %v1551
    %1553 = vdwg.mxu0
    %1554 = vmatpush.msra.mxu0 %v1422
    %1555 = vmatpush.msra.mxu0 %v1419
    %1556 = vmatpush.msra.mxu0 %v1416
    %1557 = vmatpush.msra.mxu0 %v1413
    %1558 = vmatpush.msra.mxu0 %v1410
    %1559 = vmatpush.msra.mxu0 %v1407
    %1560 = vmatpush.msra.mxu0 %v1404
    %1561 = vmatpush.msra.mxu0 %v1401
    %1562 = vmatpush.msra.mxu0 %v1398
    %1563 = vmatpush.msra.mxu0 %v1395
    %1564 = vmatpush.msra.mxu0 %v1392
    %1565 = vmatpush.msra.mxu0 %v1389
    %1566 = vmatpush.msra.mxu0 %v1386
    %1567 = vmatpush.msra.mxu0 %v1383
    %1568 = vmatpush.msra.mxu0 %v1380
    %1569 = vmatpush.msra.mxu0 %v1377
    %1570 = vmatmul.f32.gmra.mxu0 %v1374
    %v1571 = vpop.f32.mrf.mxu0
    %v1572 = vadd.f32 %v1473, %v1571
    %1573 = vdwg.mxu0
    %1574 = vmatpush.msra.mxu0 %v1470
    %1575 = vmatpush.msra.mxu0 %v1467
    %1576 = vmatpush.msra.mxu0 %v1464
    %1577 = vmatpush.msra.mxu0 %v1461
    %1578 = vmatpush.msra.mxu0 %v1458
    %1579 = vmatpush.msra.mxu0 %v1455
    %1580 = vmatpush.msra.mxu0 %v1452
    %1581 = vmatpush.msra.mxu0 %v1449
    %1582 = vmatpush.msra.mxu0 %v1446
    %1583 = vmatpush.msra.mxu0 %v1443
    %1584 = vmatpush.msra.mxu0 %v1440
    %1585 = vmatpush.msra.mxu0 %v1437
    %1586 = vmatpush.msra.mxu0 %v1434
    %1587 = vmatpush.msra.mxu0 %v1431
    %1588 = vmatpush.msra.mxu0 %v1428
    %1589 = vmatpush.msra.mxu0 %v1425
    %1590 = vmatmul.f32.gmra.mxu0 %v1332
    %v1591 = vpop.f32.mrf.mxu0
    %v1592 = vadd.f32 %v1572, %v1591
    %1593 = vdwg.mxu0
    %v1594 = vmul.f32 %v1512, 0.5
    %v1595 = vtanh.pop %v1594
    %v1596 = vmul.f32 %v1595, 0.5
    %v1597 = vadd.f32 %v1596, 0.5
    %v1598 = vmul.f32 %v1552, 0.5
    %v1599 = vtanh.pop %v1598
    %v1600 = vmul.f32 %v1599, 0.5
    %v1601 = vadd.f32 %v1600, 0.5
    %v1602 = vmul.f32 %v1597, %v1332
    %v1603 = vld [vmem:[#allocation11] sm:$0xff]
    %v1604 = vld [vmem:[#allocation11 + $0x8] sm:$0xff]
    %v1605 = vld [vmem:[#allocation11 + $0x10] sm:$0xff]
    %v1606 = vld [vmem:[#allocation11 + $0x18] sm:$0xff]
    %v1607 = vld [vmem:[#allocation11 + $0x20] sm:$0xff]
    %v1608 = vld [vmem:[#allocation11 + $0x28] sm:$0xff]
    %v1609 = vld [vmem:[#allocation11 + $0x30] sm:$0xff]
    %v1610 = vld [vmem:[#allocation11 + $0x38] sm:$0xff]
    %v1611 = vld [vmem:[#allocation11 + $0x40] sm:$0xff]
    %v1612 = vld [vmem:[#allocation11 + $0x48] sm:$0xff]
    %v1613 = vld [vmem:[#allocation11 + $0x50] sm:$0xff]
    %v1614 = vld [vmem:[#allocation11 + $0x58] sm:$0xff]
    %v1615 = vld [vmem:[#allocation11 + $0x60] sm:$0xff]
    %v1616 = vld [vmem:[#allocation11 + $0x68] sm:$0xff]
    %v1617 = vld [vmem:[#allocation11 + $0x70] sm:$0xff]
    %v1618 = vld [vmem:[#allocation11 + $0x78] sm:$0xff]
    %1619 = vmatpush.msra.mxu0 %v1618
    %1620 = vmatpush.msra.mxu0 %v1617
    %1621 = vmatpush.msra.mxu0 %v1616
    %1622 = vmatpush.msra.mxu0 %v1615
    %1623 = vmatpush.msra.mxu0 %v1614
    %1624 = vmatpush.msra.mxu0 %v1613
    %1625 = vmatpush.msra.mxu0 %v1612
    %1626 = vmatpush.msra.mxu0 %v1611
    %1627 = vmatpush.msra.mxu0 %v1610
    %1628 = vmatpush.msra.mxu0 %v1609
    %1629 = vmatpush.msra.mxu0 %v1608
    %1630 = vmatpush.msra.mxu0 %v1607
    %1631 = vmatpush.msra.mxu0 %v1606
    %1632 = vmatpush.msra.mxu0 %v1605
    %1633 = vmatpush.msra.mxu0 %v1604
    %1634 = vmatpush.msra.mxu0 %v1603
    %1635 = vmatmul.f32.gmra.mxu0 %v1602
    %v1636 = vpop.f32.mrf.mxu0
    %v1637 = vadd.f32 0.0, %v1636
    %1638 = vdwg.mxu0
    %v1639 = vadd.f32 %v1592, %v1637
    %v1640 = vtanh.pop %v1639
    %v1641 = vsub.f32 %v1332, %v1640
    %v1642 = vmul.f32 %v1601, %v1641
    %v1643 = vadd.f32 %v1640, %v1642
    %v1644 = vmax.f32 %v1643, -5.0
    %v1645 = vmin.f32 %v1644, 5.0
    %s1646 = scalar_lea.vmem [#allocation14], 32
    %1647 = vst [vmem:[%s1646] sm:$0xff] %v1645
    %v1648 = vld [vmem:[#allocation12] sm:$0xff]
    %v1649 = vld [vmem:[#allocation12 + $0x8] sm:$0xff]
    %v1650 = vld [vmem:[#allocation12 + $0x10] sm:$0xff]
    %v1651 = vld [vmem:[#allocation12 + $0x18] sm:$0xff]
    %v1652 = vld [vmem:[#allocation12 + $0x20] sm:$0xff]
    %v1653 = vld [vmem:[#allocation12 + $0x28] sm:$0xff]
    %v1654 = vld [vmem:[#allocation12 + $0x30] sm:$0xff]
    %v1655 = vld [vmem:[#allocation12 + $0x38] sm:$0xff]
    %v1656 = vld [vmem:[#allocation12 + $0x40] sm:$0xff]
    %v1657 = vld [vmem:[#allocation12 + $0x48] sm:$0xff]
    %v1658 = vld [vmem:[#allocation12 + $0x50] sm:$0xff]
    %v1659 = vld [vmem:[#allocation12 + $0x58] sm:$0xff]
    %v1660 = vld [vmem:[#allocation12 + $0x60] sm:$0xff]
    %v1661 = vld [vmem:[#allocation12 + $0x68] sm:$0xff]
    %v1662 = vld [vmem:[#allocation12 + $0x70] sm:$0xff]
    %v1663 = vld [vmem:[#allocation12 + $0x78] sm:$0xff]
    %1664 = vmatpush.msra.mxu0 %v1663
    %1665 = vmatpush.msra.mxu0 %v1662
    %1666 = vmatpush.msra.mxu0 %v1661
    %1667 = vmatpush.msra.mxu0 %v1660
    %1668 = vmatpush.msra.mxu0 %v1659
    %1669 = vmatpush.msra.mxu0 %v1658
    %1670 = vmatpush.msra.mxu0 %v1657
    %1671 = vmatpush.msra.mxu0 %v1656
    %1672 = vmatpush.msra.mxu0 %v1655
    %1673 = vmatpush.msra.mxu0 %v1654
    %1674 = vmatpush.msra.mxu0 %v1653
    %1675 = vmatpush.msra.mxu0 %v1652
    %1676 = vmatpush.msra.mxu0 %v1651
    %1677 = vmatpush.msra.mxu0 %v1650
    %1678 = vmatpush.msra.mxu0 %v1649
    %1679 = vmatpush.msra.mxu0 %v1648
    %1680 = vmatmul.f32.gmra.mxu0 %v1645
    %v1681 = vpop.f32.mrf.mxu0
    %v1682 = vadd.f32 0.0, %v1681
    %1683 = vdwg.mxu0
    %s1684 = scalar_lea.vmem [#allocation15], 32
    %1685 = vst [vmem:[%s1684] sm:$0xff] %v1682
    %s1686 = scalar_lea.vmem [#allocation3], 40
    %v1687 = vld [vmem:[%s1686] sm:$0xff]
    %v1688 = vld [vmem:[#allocation8] sm:$0xff]
    %v1689 = vld [vmem:[#allocation8 + $0x8] sm:$0xff]
    %v1690 = vld [vmem:[#allocation8 + $0x10] sm:$0xff]
    %v1691 = vld [vmem:[#allocation8 + $0x18] sm:$0xff]
    %v1692 = vld [vmem:[#allocation8 + $0x20] sm:$0xff]
    %v1693 = vld [vmem:[#allocation8 + $0x28] sm:$0xff]
    %v1694 = vld [vmem:[#allocation8 + $0x30] sm:$0xff]
    %v1695 = vld [vmem:[#allocation8 + $0x38] sm:$0xff]
    %v1696 = vld [vmem:[#allocation8 + $0x40] sm:$0xff]
    %v1697 = vld [vmem:[#allocation8 + $0x48] sm:$0xff]
    %v1698 = vld [vmem:[#allocation8 + $0x50] sm:$0xff]
    %v1699 = vld [vmem:[#allocation8 + $0x58] sm:$0xff]
    %v1700 = vld [vmem:[#allocation8 + $0x60] sm:$0xff]
    %v1701 = vld [vmem:[#allocation8 + $0x68] sm:$0xff]
    %v1702 = vld [vmem:[#allocation8 + $0x70] sm:$0xff]
    %v1703 = vld [vmem:[#allocation8 + $0x78] sm:$0xff]
    %v1704 = vld [vmem:[#allocation8 + $0x80] sm:$0xff]
    %v1705 = vld [vmem:[#allocation8 + $0x88] sm:$0xff]
    %v1706 = vld [vmem:[#allocation8 + $0x90] sm:$0xff]
    %v1707 = vld [vmem:[#allocation8 + $0x98] sm:$0xff]
    %v1708 = vld [vmem:[#allocation8 + $0xa0] sm:$0xff]
    %v1709 = vld [vmem:[#allocation8 + $0xa8] sm:$0xff]
    %v1710 = vld [vmem:[#allocation8 + $0xb0] sm:$0xff]
    %v1711 = vld [vmem:[#allocation8 + $0xb8] sm:$0xff]
    %v1712 = vld [vmem:[#allocation8 + $0xc0] sm:$0xff]
    %v1713 = vld [vmem:[#allocation8 + $0xc8] sm:$0xff]
    %v1714 = vld [vmem:[#allocation8 + $0xd0] sm:$0xff]
    %v1715 = vld [vmem:[#allocation8 + $0xd8] sm:$0xff]
    %v1716 = vld [vmem:[#allocation8 + $0xe0] sm:$0xff]
    %v1717 = vld [vmem:[#allocation8 + $0xe8] sm:$0xff]
    %v1718 = vld [vmem:[#allocation8 + $0xf0] sm:$0xff]
    %v1719 = vld [vmem:[#allocation8 + $0xf8] sm:$0xff]
    %v1720 = vld [vmem:[#allocation8 + $0x100] sm:$0xff]
    %v1721 = vld [vmem:[#allocation8 + $0x108] sm:$0xff]
    %v1722 = vld [vmem:[#allocation8 + $0x110] sm:$0xff]
    %v1723 = vld [vmem:[#allocation8 + $0x118] sm:$0xff]
    %v1724 = vld [vmem:[#allocation8 + $0x120] sm:$0xff]
    %v1725 = vld [vmem:[#allocation8 + $0x128] sm:$0xff]
    %v1726 = vld [vmem:[#allocation8 + $0x130] sm:$0xff]
    %v1727 = vld [vmem:[#allocation8 + $0x138] sm:$0xff]
    %v1728 = vld [vmem:[#allocation8 + $0x140] sm:$0xff]
    %v1729 = vld [vmem:[#allocation8 + $0x148] sm:$0xff]
    %v1730 = vld [vmem:[#allocation8 + $0x150] sm:$0xff]
    %v1731 = vld [vmem:[#allocation8 + $0x158] sm:$0xff]
    %v1732 = vld [vmem:[#allocation8 + $0x160] sm:$0xff]
    %v1733 = vld [vmem:[#allocation8 + $0x168] sm:$0xff]
    %v1734 = vld [vmem:[#allocation8 + $0x170] sm:$0xff]
    %v1735 = vld [vmem:[#allocation8 + $0x178] sm:$0xff]
    %v1736 = vld [vmem:[#allocation8 + $0x180] sm:$0xff]
    %v1737 = vld [vmem:[#allocation8 + $0x188] sm:$0xff]
    %v1738 = vld [vmem:[#allocation8 + $0x190] sm:$0xff]
    %v1739 = vld [vmem:[#allocation8 + $0x198] sm:$0xff]
    %v1740 = vld [vmem:[#allocation8 + $0x1a0] sm:$0xff]
    %v1741 = vld [vmem:[#allocation8 + $0x1a8] sm:$0xff]
    %v1742 = vld [vmem:[#allocation8 + $0x1b0] sm:$0xff]
    %v1743 = vld [vmem:[#allocation8 + $0x1b8] sm:$0xff]
    %v1744 = vld [vmem:[#allocation8 + $0x1c0] sm:$0xff]
    %v1745 = vld [vmem:[#allocation8 + $0x1c8] sm:$0xff]
    %v1746 = vld [vmem:[#allocation8 + $0x1d0] sm:$0xff]
    %v1747 = vld [vmem:[#allocation8 + $0x1d8] sm:$0xff]
    %v1748 = vld [vmem:[#allocation8 + $0x1e0] sm:$0xff]
    %v1749 = vld [vmem:[#allocation8 + $0x1e8] sm:$0xff]
    %v1750 = vld [vmem:[#allocation8 + $0x1f0] sm:$0xff]
    %v1751 = vld [vmem:[#allocation8 + $0x1f8] sm:$0xff]
    %v1752 = vld [vmem:[#allocation8 + $0x200] sm:$0xff]
    %v1753 = vld [vmem:[#allocation8 + $0x208] sm:$0xff]
    %v1754 = vld [vmem:[#allocation8 + $0x210] sm:$0xff]
    %v1755 = vld [vmem:[#allocation8 + $0x218] sm:$0xff]
    %v1756 = vld [vmem:[#allocation8 + $0x220] sm:$0xff]
    %v1757 = vld [vmem:[#allocation8 + $0x228] sm:$0xff]
    %v1758 = vld [vmem:[#allocation8 + $0x230] sm:$0xff]
    %v1759 = vld [vmem:[#allocation8 + $0x238] sm:$0xff]
    %v1760 = vld [vmem:[#allocation8 + $0x240] sm:$0xff]
    %v1761 = vld [vmem:[#allocation8 + $0x248] sm:$0xff]
    %v1762 = vld [vmem:[#allocation8 + $0x250] sm:$0xff]
    %v1763 = vld [vmem:[#allocation8 + $0x258] sm:$0xff]
    %v1764 = vld [vmem:[#allocation8 + $0x260] sm:$0xff]
    %v1765 = vld [vmem:[#allocation8 + $0x268] sm:$0xff]
    %v1766 = vld [vmem:[#allocation8 + $0x270] sm:$0xff]
    %v1767 = vld [vmem:[#allocation8 + $0x278] sm:$0xff]
    %v1768 = vld [vmem:[#allocation8 + $0x280] sm:$0xff]
    %v1769 = vld [vmem:[#allocation8 + $0x288] sm:$0xff]
    %v1770 = vld [vmem:[#allocation8 + $0x290] sm:$0xff]
    %v1771 = vld [vmem:[#allocation8 + $0x298] sm:$0xff]
    %v1772 = vld [vmem:[#allocation8 + $0x2a0] sm:$0xff]
    %v1773 = vld [vmem:[#allocation8 + $0x2a8] sm:$0xff]
    %v1774 = vld [vmem:[#allocation8 + $0x2b0] sm:$0xff]
    %v1775 = vld [vmem:[#allocation8 + $0x2b8] sm:$0xff]
    %v1776 = vld [vmem:[#allocation8 + $0x2c0] sm:$0xff]
    %v1777 = vld [vmem:[#allocation8 + $0x2c8] sm:$0xff]
    %v1778 = vld [vmem:[#allocation8 + $0x2d0] sm:$0xff]
    %v1779 = vld [vmem:[#allocation8 + $0x2d8] sm:$0xff]
    %v1780 = vld [vmem:[#allocation8 + $0x2e0] sm:$0xff]
    %v1781 = vld [vmem:[#allocation8 + $0x2e8] sm:$0xff]
    %v1782 = vld [vmem:[#allocation8 + $0x2f0] sm:$0xff]
    %v1783 = vld [vmem:[#allocation8 + $0x2f8] sm:$0xff]
    %v1784 = vld [vmem:[#allocation9] sm:$0xff]
    %v1785 = vld [vmem:[#allocation9 + $0x8] sm:$0xff]
    %v1786 = vld [vmem:[#allocation9 + $0x10] sm:$0xff]
    %1787 = vmatpush.msra.mxu0 %v1733
    %1788 = vmatpush.msra.mxu0 %v1730
    %1789 = vmatpush.msra.mxu0 %v1727
    %1790 = vmatpush.msra.mxu0 %v1724
    %1791 = vmatpush.msra.mxu0 %v1721
    %1792 = vmatpush.msra.mxu0 %v1718
    %1793 = vmatpush.msra.mxu0 %v1715
    %1794 = vmatpush.msra.mxu0 %v1712
    %1795 = vmatpush.msra.mxu0 %v1709
    %1796 = vmatpush.msra.mxu0 %v1706
    %1797 = vmatpush.msra.mxu0 %v1703
    %1798 = vmatpush.msra.mxu0 %v1700
    %1799 = vmatpush.msra.mxu0 %v1697
    %1800 = vmatpush.msra.mxu0 %v1694
    %1801 = vmatpush.msra.mxu0 %v1691
    %1802 = vmatpush.msra.mxu0 %v1688
    %1803 = vmatmul.f32.gmra.mxu0 %v1687
    %v1804 = vpop.f32.mrf.mxu0
    %v1805 = vadd.f32 %v1784, %v1804
    %1806 = vdwg.mxu0
    %1807 = vmatpush.msra.mxu0 %v1781
    %1808 = vmatpush.msra.mxu0 %v1778
    %1809 = vmatpush.msra.mxu0 %v1775
    %1810 = vmatpush.msra.mxu0 %v1772
    %1811 = vmatpush.msra.mxu0 %v1769
    %1812 = vmatpush.msra.mxu0 %v1766
    %1813 = vmatpush.msra.mxu0 %v1763
    %1814 = vmatpush.msra.mxu0 %v1760
    %1815 = vmatpush.msra.mxu0 %v1757
    %1816 = vmatpush.msra.mxu0 %v1754
    %1817 = vmatpush.msra.mxu0 %v1751
    %1818 = vmatpush.msra.mxu0 %v1748
    %1819 = vmatpush.msra.mxu0 %v1745
    %1820 = vmatpush.msra.mxu0 %v1742
    %1821 = vmatpush.msra.mxu0 %v1739
    %1822 = vmatpush.msra.mxu0 %v1736
    %1823 = vmatmul.f32.gmra.mxu0 %v1645
    %v1824 = vpop.f32.mrf.mxu0
    %v1825 = vadd.f32 %v1805, %v1824
    %1826 = vdwg.mxu0
    %1827 = vmatpush.msra.mxu0 %v1734
    %1828 = vmatpush.msra.mxu0 %v1731
    %1829 = vmatpush.msra.mxu0 %v1728
    %1830 = vmatpush.msra.mxu0 %v1725
    %1831 = vmatpush.msra.mxu0 %v1722
    %1832 = vmatpush.msra.mxu0 %v1719
    %1833 = vmatpush.msra.mxu0 %v1716
    %1834 = vmatpush.msra.mxu0 %v1713
    %1835 = vmatpush.msra.mxu0 %v1710
    %1836 = vmatpush.msra.mxu0 %v1707
    %1837 = vmatpush.msra.mxu0 %v1704
    %1838 = vmatpush.msra.mxu0 %v1701
    %1839 = vmatpush.msra.mxu0 %v1698
    %1840 = vmatpush.msra.mxu0 %v1695
    %1841 = vmatpush.msra.mxu0 %v1692
    %1842 = vmatpush.msra.mxu0 %v1689
    %1843 = vmatmul.f32.gmra.mxu0 %v1687
    %v1844 = vpop.f32.mrf.mxu0
    %v1845 = vadd.f32 %v1785, %v1844
    %1846 = vdwg.mxu0
    %1847 = vmatpush.msra.mxu0 %v1782
    %1848 = vmatpush.msra.mxu0 %v1779
    %1849 = vmatpush.msra.mxu0 %v1776
    %1850 = vmatpush.msra.mxu0 %v1773
    %1851 = vmatpush.msra.mxu0 %v1770
    %1852 = vmatpush.msra.mxu0 %v1767
    %1853 = vmatpush.msra.mxu0 %v1764
    %1854 = vmatpush.msra.mxu0 %v1761
    %1855 = vmatpush.msra.mxu0 %v1758
    %1856 = vmatpush.msra.mxu0 %v1755
    %1857 = vmatpush.msra.mxu0 %v1752
    %1858 = vmatpush.msra.mxu0 %v1749
    %1859 = vmatpush.msra.mxu0 %v1746
    %1860 = vmatpush.msra.mxu0 %v1743
    %1861 = vmatpush.msra.mxu0 %v1740
    %1862 = vmatpush.msra.mxu0 %v1737
    %1863 = vmatmul.f32.gmra.mxu0 %v1645
    %v1864 = vpop.f32.mrf.mxu0
    %v1865 = vadd.f32 %v1845, %v1864
    %1866 = vdwg.mxu0
    %1867 = vmatpush.msra.mxu0 %v1735
    %1868 = vmatpush.msra.mxu0 %v1732
    %1869 = vmatpush.msra.mxu0 %v1729
    %1870 = vmatpush.msra.mxu0 %v1726
    %1871 = vmatpush.msra.mxu0 %v1723
    %1872 = vmatpush.msra.mxu0 %v1720
    %1873 = vmatpush.msra.mxu0 %v1717
    %1874 = vmatpush.msra.mxu0 %v1714
    %1875 = vmatpush.msra.mxu0 %v1711
    %1876 = vmatpush.msra.mxu0 %v1708
    %1877 = vmatpush.msra.mxu0 %v1705
    %1878 = vmatpush.msra.mxu0 %v1702
    %1879 = vmatpush.msra.mxu0 %v1699
    %1880 = vmatpush.msra.mxu0 %v1696
    %1881 = vmatpush.msra.mxu0 %v1693
    %1882 = vmatpush.msra.mxu0 %v1690
    %1883 = vmatmul.f32.gmra.mxu0 %v1687
    %v1884 = vpop.f32.mrf.mxu0
    %v1885 = vadd.f32 %v1786, %v1884
    %1886 = vdwg.mxu0
    %1887 = vmatpush.msra.mxu0 %v1783
    %1888 = vmatpush.msra.mxu0 %v1780
    %1889 = vmatpush.msra.mxu0 %v1777
    %1890 = vmatpush.msra.mxu0 %v1774
    %1891 = vmatpush.msra.mxu0 %v1771
    %1892 = vmatpush.msra.mxu0 %v1768
    %1893 = vmatpush.msra.mxu0 %v1765
    %1894 = vmatpush.msra.mxu0 %v1762
    %1895 = vmatpush.msra.mxu0 %v1759
    %1896 = vmatpush.msra.mxu0 %v1756
    %1897 = vmatpush.msra.mxu0 %v1753
    %1898 = vmatpush.msra.mxu0 %v1750
    %1899 = vmatpush.msra.mxu0 %v1747
    %1900 = vmatpush.msra.mxu0 %v1744
    %1901 = vmatpush.msra.mxu0 %v1741
    %1902 = vmatpush.msra.mxu0 %v1738
    %1903 = vmatmul.f32.gmra.mxu0 %v1645
    %v1904 = vpop.f32.mrf.mxu0
    %v1905 = vadd.f32 %v1885, %v1904
    %1906 = vdwg.mxu0
    %v1907 = vmul.f32 %v1825, 0.5
    %v1908 = vtanh.pop %v1907
    %v1909 = vmul.f32 %v1908, 0.5
    %v1910 = vadd.f32 %v1909, 0.5
    %v1911 = vmul.f32 %v1865, 0.5
    %v1912 = vtanh.pop %v1911
    %v1913 = vmul.f32 %v1912, 0.5
    %v1914 = vadd.f32 %v1913, 0.5
    %v1915 = vmul.f32 %v1910, %v1645
    %v1916 = vld [vmem:[#allocation11] sm:$0xff]
    %v1917 = vld [vmem:[#allocation11 + $0x8] sm:$0xff]
    %v1918 = vld [vmem:[#allocation11 + $0x10] sm:$0xff]
    %v1919 = vld [vmem:[#allocation11 + $0x18] sm:$0xff]
    %v1920 = vld [vmem:[#allocation11 + $0x20] sm:$0xff]
    %v1921 = vld [vmem:[#allocation11 + $0x28] sm:$0xff]
    %v1922 = vld [vmem:[#allocation11 + $0x30] sm:$0xff]
    %v1923 = vld [vmem:[#allocation11 + $0x38] sm:$0xff]
    %v1924 = vld [vmem:[#allocation11 + $0x40] sm:$0xff]
    %v1925 = vld [vmem:[#allocation11 + $0x48] sm:$0xff]
    %v1926 = vld [vmem:[#allocation11 + $0x50] sm:$0xff]
    %v1927 = vld [vmem:[#allocation11 + $0x58] sm:$0xff]
    %v1928 = vld [vmem:[#allocation11 + $0x60] sm:$0xff]
    %v1929 = vld [vmem:[#allocation11 + $0x68] sm:$0xff]
    %v1930 = vld [vmem:[#allocation11 + $0x70] sm:$0xff]
    %v1931 = vld [vmem:[#allocation11 + $0x78] sm:$0xff]
    %1932 = vmatpush.msra.mxu0 %v1931
    %1933 = vmatpush.msra.mxu0 %v1930
    %1934 = vmatpush.msra.mxu0 %v1929
    %1935 = vmatpush.msra.mxu0 %v1928
    %1936 = vmatpush.msra.mxu0 %v1927
    %1937 = vmatpush.msra.mxu0 %v1926
    %1938 = vmatpush.msra.mxu0 %v1925
    %1939 = vmatpush.msra.mxu0 %v1924
    %1940 = vmatpush.msra.mxu0 %v1923
    %1941 = vmatpush.msra.mxu0 %v1922
    %1942 = vmatpush.msra.mxu0 %v1921
    %1943 = vmatpush.msra.mxu0 %v1920
    %1944 = vmatpush.msra.mxu0 %v1919
    %1945 = vmatpush.msra.mxu0 %v1918
    %1946 = vmatpush.msra.mxu0 %v1917
    %1947 = vmatpush.msra.mxu0 %v1916
    %1948 = vmatmul.f32.gmra.mxu0 %v1915
    %v1949 = vpop.f32.mrf.mxu0
    %v1950 = vadd.f32 0.0, %v1949
    %1951 = vdwg.mxu0
    %v1952 = vadd.f32 %v1905, %v1950
    %v1953 = vtanh.pop %v1952
    %v1954 = vsub.f32 %v1645, %v1953
    %v1955 = vmul.f32 %v1914, %v1954
    %v1956 = vadd.f32 %v1953, %v1955
    %v1957 = vmax.f32 %v1956, -5.0
    %v1958 = vmin.f32 %v1957, 5.0
    %s1959 = scalar_lea.vmem [#allocation14], 40
    %1960 = vst [vmem:[%s1959] sm:$0xff] %v1958
    %v1961 = vld [vmem:[#allocation12] sm:$0xff]
    %v1962 = vld [vmem:[#allocation12 + $0x8] sm:$0xff]
    %v1963 = vld [vmem:[#allocation12 + $0x10] sm:$0xff]
    %v1964 = vld [vmem:[#allocation12 + $0x18] sm:$0xff]
    %v1965 = vld [vmem:[#allocation12 + $0x20] sm:$0xff]
    %v1966 = vld [vmem:[#allocation12 + $0x28] sm:$0xff]
    %v1967 = vld [vmem:[#allocation12 + $0x30] sm:$0xff]
    %v1968 = vld [vmem:[#allocation12 + $0x38] sm:$0xff]
    %v1969 = vld [vmem:[#allocation12 + $0x40] sm:$0xff]
    %v1970 = vld [vmem:[#allocation12 + $0x48] sm:$0xff]
    %v1971 = vld [vmem:[#allocation12 + $0x50] sm:$0xff]
    %v1972 = vld [vmem:[#allocation12 + $0x58] sm:$0xff]
    %v1973 = vld [vmem:[#allocation12 + $0x60] sm:$0xff]
    %v1974 = vld [vmem:[#allocation12 + $0x68] sm:$0xff]
    %v1975 = vld [vmem:[#allocation12 + $0x70] sm:$0xff]
    %v1976 = vld [vmem:[#allocation12 + $0x78] sm:$0xff]
    %1977 = vmatpush.msra.mxu0 %v1976
    %1978 = vmatpush.msra.mxu0 %v1975
    %1979 = vmatpush.msra.mxu0 %v1974
    %1980 = vmatpush.msra.mxu0 %v1973
    %1981 = vmatpush.msra.mxu0 %v1972
    %1982 = vmatpush.msra.mxu0 %v1971
    %1983 = vmatpush.msra.mxu0 %v1970
    %1984 = vmatpush.msra.mxu0 %v1969
    %1985 = vmatpush.msra.mxu0 %v1968
    %1986 = vmatpush.msra.mxu0 %v1967
    %1987 = vmatpush.msra.mxu0 %v1966
    %1988 = vmatpush.msra.mxu0 %v1965
    %1989 = vmatpush.msra.mxu0 %v1964
    %1990 = vmatpush.msra.mxu0 %v1963
    %1991 = vmatpush.msra.mxu0 %v1962
    %1992 = vmatpush.msra.mxu0 %v1961
    %1993 = vmatmul.f32.gmra.mxu0 %v1958
    %v1994 = vpop.f32.mrf.mxu0
    %v1995 = vadd.f32 0.0, %v1994
    %1996 = vdwg.mxu0
    %s1997 = scalar_lea.vmem [#allocation15], 40
    %1998 = vst [vmem:[%s1997] sm:$0xff] %v1995
    %s1999 = scalar_lea.vmem [#allocation3], 48
    %v2000 = vld [vmem:[%s1999] sm:$0xff]
    %v2001 = vld [vmem:[#allocation8] sm:$0xff]
    %v2002 = vld [vmem:[#allocation8 + $0x8] sm:$0xff]
    %v2003 = vld [vmem:[#allocation8 + $0x10] sm:$0xff]
    %v2004 = vld [vmem:[#allocation8 + $0x18] sm:$0xff]
    %v2005 = vld [vmem:[#allocation8 + $0x20] sm:$0xff]
    %v2006 = vld [vmem:[#allocation8 + $0x28] sm:$0xff]
    %v2007 = vld [vmem:[#allocation8 + $0x30] sm:$0xff]
    %v2008 = vld [vmem:[#allocation8 + $0x38] sm:$0xff]
    %v2009 = vld [vmem:[#allocation8 + $0x40] sm:$0xff]
    %v2010 = vld [vmem:[#allocation8 + $0x48] sm:$0xff]
    %v2011 = vld [vmem:[#allocation8 + $0x50] sm:$0xff]
    %v2012 = vld [vmem:[#allocation8 + $0x58] sm:$0xff]
    %v2013 = vld [vmem:[#allocation8 + $0x60] sm:$0xff]
    %v2014 = vld [vmem:[#allocation8 + $0x68] sm:$0xff]
    %v2015 = vld [vmem:[#allocation8 + $0x70] sm:$0xff]
    %v2016 = vld [vmem:[#allocation8 + $0x78] sm:$0xff]
    %v2017 = vld [vmem:[#allocation8 + $0x80] sm:$0xff]
    %v2018 = vld [vmem:[#allocation8 + $0x88] sm:$0xff]
    %v2019 = vld [vmem:[#allocation8 + $0x90] sm:$0xff]
    %v2020 = vld [vmem:[#allocation8 + $0x98] sm:$0xff]
    %v2021 = vld [vmem:[#allocation8 + $0xa0] sm:$0xff]
    %v2022 = vld [vmem:[#allocation8 + $0xa8] sm:$0xff]
    %v2023 = vld [vmem:[#allocation8 + $0xb0] sm:$0xff]
    %v2024 = vld [vmem:[#allocation8 + $0xb8] sm:$0xff]
    %v2025 = vld [vmem:[#allocation8 + $0xc0] sm:$0xff]
    %v2026 = vld [vmem:[#allocation8 + $0xc8] sm:$0xff]
    %v2027 = vld [vmem:[#allocation8 + $0xd0] sm:$0xff]
    %v2028 = vld [vmem:[#allocation8 + $0xd8] sm:$0xff]
    %v2029 = vld [vmem:[#allocation8 + $0xe0] sm:$0xff]
    %v2030 = vld [vmem:[#allocation8 + $0xe8] sm:$0xff]
    %v2031 = vld [vmem:[#allocation8 + $0xf0] sm:$0xff]
    %v2032 = vld [vmem:[#allocation8 + $0xf8] sm:$0xff]
    %v2033 = vld [vmem:[#allocation8 + $0x100] sm:$0xff]
    %v2034 = vld [vmem:[#allocation8 + $0x108] sm:$0xff]
    %v2035 = vld [vmem:[#allocation8 + $0x110] sm:$0xff]
    %v2036 = vld [vmem:[#allocation8 + $0x118] sm:$0xff]
    %v2037 = vld [vmem:[#allocation8 + $0x120] sm:$0xff]
    %v2038 = vld [vmem:[#allocation8 + $0x128] sm:$0xff]
    %v2039 = vld [vmem:[#allocation8 + $0x130] sm:$0xff]
    %v2040 = vld [vmem:[#allocation8 + $0x138] sm:$0xff]
    %v2041 = vld [vmem:[#allocation8 + $0x140] sm:$0xff]
    %v2042 = vld [vmem:[#allocation8 + $0x148] sm:$0xff]
    %v2043 = vld [vmem:[#allocation8 + $0x150] sm:$0xff]
    %v2044 = vld [vmem:[#allocation8 + $0x158] sm:$0xff]
    %v2045 = vld [vmem:[#allocation8 + $0x160] sm:$0xff]
    %v2046 = vld [vmem:[#allocation8 + $0x168] sm:$0xff]
    %v2047 = vld [vmem:[#allocation8 + $0x170] sm:$0xff]
    %v2048 = vld [vmem:[#allocation8 + $0x178] sm:$0xff]
    %v2049 = vld [vmem:[#allocation8 + $0x180] sm:$0xff]
    %v2050 = vld [vmem:[#allocation8 + $0x188] sm:$0xff]
    %v2051 = vld [vmem:[#allocation8 + $0x190] sm:$0xff]
    %v2052 = vld [vmem:[#allocation8 + $0x198] sm:$0xff]
    %v2053 = vld [vmem:[#allocation8 + $0x1a0] sm:$0xff]
    %v2054 = vld [vmem:[#allocation8 + $0x1a8] sm:$0xff]
    %v2055 = vld [vmem:[#allocation8 + $0x1b0] sm:$0xff]
    %v2056 = vld [vmem:[#allocation8 + $0x1b8] sm:$0xff]
    %v2057 = vld [vmem:[#allocation8 + $0x1c0] sm:$0xff]
    %v2058 = vld [vmem:[#allocation8 + $0x1c8] sm:$0xff]
    %v2059 = vld [vmem:[#allocation8 + $0x1d0] sm:$0xff]
    %v2060 = vld [vmem:[#allocation8 + $0x1d8] sm:$0xff]
    %v2061 = vld [vmem:[#allocation8 + $0x1e0] sm:$0xff]
    %v2062 = vld [vmem:[#allocation8 + $0x1e8] sm:$0xff]
    %v2063 = vld [vmem:[#allocation8 + $0x1f0] sm:$0xff]
    %v2064 = vld [vmem:[#allocation8 + $0x1f8] sm:$0xff]
    %v2065 = vld [vmem:[#allocation8 + $0x200] sm:$0xff]
    %v2066 = vld [vmem:[#allocation8 + $0x208] sm:$0xff]
    %v2067 = vld [vmem:[#allocation8 + $0x210] sm:$0xff]
    %v2068 = vld [vmem:[#allocation8 + $0x218] sm:$0xff]
    %v2069 = vld [vmem:[#allocation8 + $0x220] sm:$0xff]
    %v2070 = vld [vmem:[#allocation8 + $0x228] sm:$0xff]
    %v2071 = vld [vmem:[#allocation8 + $0x230] sm:$0xff]
    %v2072 = vld [vmem:[#allocation8 + $0x238] sm:$0xff]
    %v2073 = vld [vmem:[#allocation8 + $0x240] sm:$0xff]
    %v2074 = vld [vmem:[#allocation8 + $0x248] sm:$0xff]
    %v2075 = vld [vmem:[#allocation8 + $0x250] sm:$0xff]
    %v2076 = vld [vmem:[#allocation8 + $0x258] sm:$0xff]
    %v2077 = vld [vmem:[#allocation8 + $0x260] sm:$0xff]
    %v2078 = vld [vmem:[#allocation8 + $0x268] sm:$0xff]
    %v2079 = vld [vmem:[#allocation8 + $0x270] sm:$0xff]
    %v2080 = vld [vmem:[#allocation8 + $0x278] sm:$0xff]
    %v2081 = vld [vmem:[#allocation8 + $0x280] sm:$0xff]
    %v2082 = vld [vmem:[#allocation8 + $0x288] sm:$0xff]
    %v2083 = vld [vmem:[#allocation8 + $0x290] sm:$0xff]
    %v2084 = vld [vmem:[#allocation8 + $0x298] sm:$0xff]
    %v2085 = vld [vmem:[#allocation8 + $0x2a0] sm:$0xff]
    %v2086 = vld [vmem:[#allocation8 + $0x2a8] sm:$0xff]
    %v2087 = vld [vmem:[#allocation8 + $0x2b0] sm:$0xff]
    %v2088 = vld [vmem:[#allocation8 + $0x2b8] sm:$0xff]
    %v2089 = vld [vmem:[#allocation8 + $0x2c0] sm:$0xff]
    %v2090 = vld [vmem:[#allocation8 + $0x2c8] sm:$0xff]
    %v2091 = vld [vmem:[#allocation8 + $0x2d0] sm:$0xff]
    %v2092 = vld [vmem:[#allocation8 + $0x2d8] sm:$0xff]
    %v2093 = vld [vmem:[#allocation8 + $0x2e0] sm:$0xff]
    %v2094 = vld [vmem:[#allocation8 + $0x2e8] sm:$0xff]
    %v2095 = vld [vmem:[#allocation8 + $0x2f0] sm:$0xff]
    %v2096 = vld [vmem:[#allocation8 + $0x2f8] sm:$0xff]
    %v2097 = vld [vmem:[#allocation9] sm:$0xff]
    %v2098 = vld [vmem:[#allocation9 + $0x8] sm:$0xff]
    %v2099 = vld [vmem:[#allocation9 + $0x10] sm:$0xff]
    %2100 = vmatpush.msra.mxu0 %v2046
    %2101 = vmatpush.msra.mxu0 %v2043
    %2102 = vmatpush.msra.mxu0 %v2040
    %2103 = vmatpush.msra.mxu0 %v2037
    %2104 = vmatpush.msra.mxu0 %v2034
    %2105 = vmatpush.msra.mxu0 %v2031
    %2106 = vmatpush.msra.mxu0 %v2028
    %2107 = vmatpush.msra.mxu0 %v2025
    %2108 = vmatpush.msra.mxu0 %v2022
    %2109 = vmatpush.msra.mxu0 %v2019
    %2110 = vmatpush.msra.mxu0 %v2016
    %2111 = vmatpush.msra.mxu0 %v2013
    %2112 = vmatpush.msra.mxu0 %v2010
    %2113 = vmatpush.msra.mxu0 %v2007
    %2114 = vmatpush.msra.mxu0 %v2004
    %2115 = vmatpush.msra.mxu0 %v2001
    %2116 = vmatmul.f32.gmra.mxu0 %v2000
    %v2117 = vpop.f32.mrf.mxu0
    %v2118 = vadd.f32 %v2097, %v2117
    %2119 = vdwg.mxu0
    %2120 = vmatpush.msra.mxu0 %v2094
    %2121 = vmatpush.msra.mxu0 %v2091
    %2122 = vmatpush.msra.mxu0 %v2088
    %2123 = vmatpush.msra.mxu0 %v2085
    %2124 = vmatpush.msra.mxu0 %v2082
    %2125 = vmatpush.msra.mxu0 %v2079
    %2126 = vmatpush.msra.mxu0 %v2076
    %2127 = vmatpush.msra.mxu0 %v2073
    %2128 = vmatpush.msra.mxu0 %v2070
    %2129 = vmatpush.msra.mxu0 %v2067
    %2130 = vmatpush.msra.mxu0 %v2064
    %2131 = vmatpush.msra.mxu0 %v2061
    %2132 = vmatpush.msra.mxu0 %v2058
    %2133 = vmatpush.msra.mxu0 %v2055
    %2134 = vmatpush.msra.mxu0 %v2052
    %2135 = vmatpush.msra.mxu0 %v2049
    %2136 = vmatmul.f32.gmra.mxu0 %v1958
    %v2137 = vpop.f32.mrf.mxu0
    %v2138 = vadd.f32 %v2118, %v2137
    %2139 = vdwg.mxu0
    %2140 = vmatpush.msra.mxu0 %v2047
    %2141 = vmatpush.msra.mxu0 %v2044
    %2142 = vmatpush.msra.mxu0 %v2041
    %2143 = vmatpush.msra.mxu0 %v2038
    %2144 = vmatpush.msra.mxu0 %v2035
    %2145 = vmatpush.msra.mxu0 %v2032
    %2146 = vmatpush.msra.mxu0 %v2029
    %2147 = vmatpush.msra.mxu0 %v2026
    %2148 = vmatpush.msra.mxu0 %v2023
    %2149 = vmatpush.msra.mxu0 %v2020
    %2150 = vmatpush.msra.mxu0 %v2017
    %2151 = vmatpush.msra.mxu0 %v2014
    %2152 = vmatpush.msra.mxu0 %v2011
    %2153 = vmatpush.msra.mxu0 %v2008
    %2154 = vmatpush.msra.mxu0 %v2005
    %2155 = vmatpush.msra.mxu0 %v2002
    %2156 = vmatmul.f32.gmra.mxu0 %v2000
    %v2157 = vpop.f32.mrf.mxu0
    %v2158 = vadd.f32 %v2098, %v2157
    %2159 = vdwg.mxu0
    %2160 = vmatpush.msra.mxu0 %v2095
    %2161 = vmatpush.msra.mxu0 %v2092
    %2162 = vmatpush.msra.mxu0 %v2089
    %2163 = vmatpush.msra.mxu0 %v2086
    %2164 = vmatpush.msra.mxu0 %v2083
    %2165 = vmatpush.msra.mxu0 %v2080
    %2166 = vmatpush.msra.mxu0 %v2077
    %2167 = vmatpush.msra.mxu0 %v2074
    %2168 = vmatpush.msra.mxu0 %v2071
    %2169 = vmatpush.msra.mxu0 %v2068
    %2170 = vmatpush.msra.mxu0 %v2065
    %2171 = vmatpush.msra.mxu0 %v2062
    %2172 = vmatpush.msra.mxu0 %v2059
    %2173 = vmatpush.msra.mxu0 %v2056
    %2174 = vmatpush.msra.mxu0 %v2053
    %2175 = vmatpush.msra.mxu0 %v2050
    %2176 = vmatmul.f32.gmra.mxu0 %v1958
    %v2177 = vpop.f32.mrf.mxu0
    %v2178 = vadd.f32 %v2158, %v2177
    %2179 = vdwg.mxu0
    %2180 = vmatpush.msra.mxu0 %v2048
    %2181 = vmatpush.msra.mxu0 %v2045
    %2182 = vmatpush.msra.mxu0 %v2042
    %2183 = vmatpush.msra.mxu0 %v2039
    %2184 = vmatpush.msra.mxu0 %v2036
    %2185 = vmatpush.msra.mxu0 %v2033
    %2186 = vmatpush.msra.mxu0 %v2030
    %2187 = vmatpush.msra.mxu0 %v2027
    %2188 = vmatpush.msra.mxu0 %v2024
    %2189 = vmatpush.msra.mxu0 %v2021
    %2190 = vmatpush.msra.mxu0 %v2018
    %2191 = vmatpush.msra.mxu0 %v2015
    %2192 = vmatpush.msra.mxu0 %v2012
    %2193 = vmatpush.msra.mxu0 %v2009
    %2194 = vmatpush.msra.mxu0 %v2006
    %2195 = vmatpush.msra.mxu0 %v2003
    %2196 = vmatmul.f32.gmra.mxu0 %v2000
    %v2197 = vpop.f32.mrf.mxu0
    %v2198 = vadd.f32 %v2099, %v2197
    %2199 = vdwg.mxu0
    %2200 = vmatpush.msra.mxu0 %v2096
    %2201 = vmatpush.msra.mxu0 %v2093
    %2202 = vmatpush.msra.mxu0 %v2090
    %2203 = vmatpush.msra.mxu0 %v2087
    %2204 = vmatpush.msra.mxu0 %v2084
    %2205 = vmatpush.msra.mxu0 %v2081
    %2206 = vmatpush.msra.mxu0 %v2078
    %2207 = vmatpush.msra.mxu0 %v2075
    %2208 = vmatpush.msra.mxu0 %v2072
    %2209 = vmatpush.msra.mxu0 %v2069
    %2210 = vmatpush.msra.mxu0 %v2066
    %2211 = vmatpush.msra.mxu0 %v2063
    %2212 = vmatpush.msra.mxu0 %v2060
    %2213 = vmatpush.msra.mxu0 %v2057
    %2214 = vmatpush.msra.mxu0 %v2054
    %2215 = vmatpush.msra.mxu0 %v2051
    %2216 = vmatmul.f32.gmra.mxu0 %v1958
    %v2217 = vpop.f32.mrf.mxu0
    %v2218 = vadd.f32 %v2198, %v2217
    %2219 = vdwg.mxu0
    %v2220 = vmul.f32 %v2138, 0.5
    %v2221 = vtanh.pop %v2220
    %v2222 = vmul.f32 %v2221, 0.5
    %v2223 = vadd.f32 %v2222, 0.5
    %v2224 = vmul.f32 %v2178, 0.5
    %v2225 = vtanh.pop %v2224
    %v2226 = vmul.f32 %v2225, 0.5
    %v2227 = vadd.f32 %v2226, 0.5
    %v2228 = vmul.f32 %v2223, %v1958
    %v2229 = vld [vmem:[#allocation11] sm:$0xff]
    %v2230 = vld [vmem:[#allocation11 + $0x8] sm:$0xff]
    %v2231 = vld [vmem:[#allocation11 + $0x10] sm:$0xff]
    %v2232 = vld [vmem:[#allocation11 + $0x18] sm:$0xff]
    %v2233 = vld [vmem:[#allocation11 + $0x20] sm:$0xff]
    %v2234 = vld [vmem:[#allocation11 + $0x28] sm:$0xff]
    %v2235 = vld [vmem:[#allocation11 + $0x30] sm:$0xff]
    %v2236 = vld [vmem:[#allocation11 + $0x38] sm:$0xff]
    %v2237 = vld [vmem:[#allocation11 + $0x40] sm:$0xff]
    %v2238 = vld [vmem:[#allocation11 + $0x48] sm:$0xff]
    %v2239 = vld [vmem:[#allocation11 + $0x50] sm:$0xff]
    %v2240 = vld [vmem:[#allocation11 + $0x58] sm:$0xff]
    %v2241 = vld [vmem:[#allocation11 + $0x60] sm:$0xff]
    %v2242 = vld [vmem:[#allocation11 + $0x68] sm:$0xff]
    %v2243 = vld [vmem:[#allocation11 + $0x70] sm:$0xff]
    %v2244 = vld [vmem:[#allocation11 + $0x78] sm:$0xff]
    %2245 = vmatpush.msra.mxu0 %v2244
    %2246 = vmatpush.msra.mxu0 %v2243
    %2247 = vmatpush.msra.mxu0 %v2242
    %2248 = vmatpush.msra.mxu0 %v2241
    %2249 = vmatpush.msra.mxu0 %v2240
    %2250 = vmatpush.msra.mxu0 %v2239
    %2251 = vmatpush.msra.mxu0 %v2238
    %2252 = vmatpush.msra.mxu0 %v2237
    %2253 = vmatpush.msra.mxu0 %v2236
    %2254 = vmatpush.msra.mxu0 %v2235
    %2255 = vmatpush.msra.mxu0 %v2234
    %2256 = vmatpush.msra.mxu0 %v2233
    %2257 = vmatpush.msra.mxu0 %v2232
    %2258 = vmatpush.msra.mxu0 %v2231
    %2259 = vmatpush.msra.mxu0 %v2230
    %2260 = vmatpush.msra.mxu0 %v2229
    %2261 = vmatmul.f32.gmra.mxu0 %v2228
    %v2262 = vpop.f32.mrf.mxu0
    %v2263 = vadd.f32 0.0, %v2262
    %2264 = vdwg.mxu0
    %v2265 = vadd.f32 %v2218, %v2263
    %v2266 = vtanh.pop %v2265
    %v2267 = vsub.f32 %v1958, %v2266
    %v2268 = vmul.f32 %v2227, %v2267
    %v2269 = vadd.f32 %v2266, %v2268
    %v2270 = vmax.f32 %v2269, -5.0
    %v2271 = vmin.f32 %v2270, 5.0
    %s2272 = scalar_lea.vmem [#allocation14], 48
    %2273 = vst [vmem:[%s2272] sm:$0xff] %v2271
    %v2274 = vld [vmem:[#allocation12] sm:$0xff]
    %v2275 = vld [vmem:[#allocation12 + $0x8] sm:$0xff]
    %v2276 = vld [vmem:[#allocation12 + $0x10] sm:$0xff]
    %v2277 = vld [vmem:[#allocation12 + $0x18] sm:$0xff]
    %v2278 = vld [vmem:[#allocation12 + $0x20] sm:$0xff]
    %v2279 = vld [vmem:[#allocation12 + $0x28] sm:$0xff]
    %v2280 = vld [vmem:[#allocation12 + $0x30] sm:$0xff]
    %v2281 = vld [vmem:[#allocation12 + $0x38] sm:$0xff]
    %v2282 = vld [vmem:[#allocation12 + $0x40] sm:$0xff]
    %v2283 = vld [vmem:[#allocation12 + $0x48] sm:$0xff]
    %v2284 = vld [vmem:[#allocation12 + $0x50] sm:$0xff]
    %v2285 = vld [vmem:[#allocation12 + $0x58] sm:$0xff]
    %v2286 = vld [vmem:[#allocation12 + $0x60] sm:$0xff]
    %v2287 = vld [vmem:[#allocation12 + $0x68] sm:$0xff]
    %v2288 = vld [vmem:[#allocation12 + $0x70] sm:$0xff]
    %v2289 = vld [vmem:[#allocation12 + $0x78] sm:$0xff]
    %2290 = vmatpush.msra.mxu0 %v2289
    %2291 = vmatpush.msra.mxu0 %v2288
    %2292 = vmatpush.msra.mxu0 %v2287
    %2293 = vmatpush.msra.mxu0 %v2286
    %2294 = vmatpush.msra.mxu0 %v2285
    %2295 = vmatpush.msra.mxu0 %v2284
    %2296 = vmatpush.msra.mxu0 %v2283
    %2297 = vmatpush.msra.mxu0 %v2282
    %2298 = vmatpush.msra.mxu0 %v2281
    %2299 = vmatpush.msra.mxu0 %v2280
    %2300 = vmatpush.msra.mxu0 %v2279
    %2301 = vmatpush.msra.mxu0 %v2278
    %2302 = vmatpush.msra.mxu0 %v2277
    %2303 = vmatpush.msra.mxu0 %v2276
    %2304 = vmatpush.msra.mxu0 %v2275
    %2305 = vmatpush.msra.mxu0 %v2274
    %2306 = vmatmul.f32.gmra.mxu0 %v2271
    %v2307 = vpop.f32.mrf.mxu0
    %v2308 = vadd.f32 0.0, %v2307
    %2309 = vdwg.mxu0
    %s2310 = scalar_lea.vmem [#allocation15], 48
    %2311 = vst [vmem:[%s2310] sm:$0xff] %v2308
    %s2312 = scalar_lea.vmem [#allocation3], 56
    %v2313 = vld [vmem:[%s2312] sm:$0xff]
    %v2314 = vld [vmem:[#allocation8] sm:$0xff]
    %v2315 = vld [vmem:[#allocation8 + $0x8] sm:$0xff]
    %v2316 = vld [vmem:[#allocation8 + $0x10] sm:$0xff]
    %v2317 = vld [vmem:[#allocation8 + $0x18] sm:$0xff]
    %v2318 = vld [vmem:[#allocation8 + $0x20] sm:$0xff]
    %v2319 = vld [vmem:[#allocation8 + $0x28] sm:$0xff]
    %v2320 = vld [vmem:[#allocation8 + $0x30] sm:$0xff]
    %v2321 = vld [vmem:[#allocation8 + $0x38] sm:$0xff]
    %v2322 = vld [vmem:[#allocation8 + $0x40] sm:$0xff]
    %v2323 = vld [vmem:[#allocation8 + $0x48] sm:$0xff]
    %v2324 = vld [vmem:[#allocation8 + $0x50] sm:$0xff]
    %v2325 = vld [vmem:[#allocation8 + $0x58] sm:$0xff]
    %v2326 = vld [vmem:[#allocation8 + $0x60] sm:$0xff]
    %v2327 = vld [vmem:[#allocation8 + $0x68] sm:$0xff]
    %v2328 = vld [vmem:[#allocation8 + $0x70] sm:$0xff]
    %v2329 = vld [vmem:[#allocation8 + $0x78] sm:$0xff]
    %v2330 = vld [vmem:[#allocation8 + $0x80] sm:$0xff]
    %v2331 = vld [vmem:[#allocation8 + $0x88] sm:$0xff]
    %v2332 = vld [vmem:[#allocation8 + $0x90] sm:$0xff]
    %v2333 = vld [vmem:[#allocation8 + $0x98] sm:$0xff]
    %v2334 = vld [vmem:[#allocation8 + $0xa0] sm:$0xff]
    %v2335 = vld [vmem:[#allocation8 + $0xa8] sm:$0xff]
    %v2336 = vld [vmem:[#allocation8 + $0xb0] sm:$0xff]
    %v2337 = vld [vmem:[#allocation8 + $0xb8] sm:$0xff]
    %v2338 = vld [vmem:[#allocation8 + $0xc0] sm:$0xff]
    %v2339 = vld [vmem:[#allocation8 + $0xc8] sm:$0xff]
    %v2340 = vld [vmem:[#allocation8 + $0xd0] sm:$0xff]
    %v2341 = vld [vmem:[#allocation8 + $0xd8] sm:$0xff]
    %v2342 = vld [vmem:[#allocation8 + $0xe0] sm:$0xff]
    %v2343 = vld [vmem:[#allocation8 + $0xe8] sm:$0xff]
    %v2344 = vld [vmem:[#allocation8 + $0xf0] sm:$0xff]
    %v2345 = vld [vmem:[#allocation8 + $0xf8] sm:$0xff]
    %v2346 = vld [vmem:[#allocation8 + $0x100] sm:$0xff]
    %v2347 = vld [vmem:[#allocation8 + $0x108] sm:$0xff]
    %v2348 = vld [vmem:[#allocation8 + $0x110] sm:$0xff]
    %v2349 = vld [vmem:[#allocation8 + $0x118] sm:$0xff]
    %v2350 = vld [vmem:[#allocation8 + $0x120] sm:$0xff]
    %v2351 = vld [vmem:[#allocation8 + $0x128] sm:$0xff]
    %v2352 = vld [vmem:[#allocation8 + $0x130] sm:$0xff]
    %v2353 = vld [vmem:[#allocation8 + $0x138] sm:$0xff]
    %v2354 = vld [vmem:[#allocation8 + $0x140] sm:$0xff]
    %v2355 = vld [vmem:[#allocation8 + $0x148] sm:$0xff]
    %v2356 = vld [vmem:[#allocation8 + $0x150] sm:$0xff]
    %v2357 = vld [vmem:[#allocation8 + $0x158] sm:$0xff]
    %v2358 = vld [vmem:[#allocation8 + $0x160] sm:$0xff]
    %v2359 = vld [vmem:[#allocation8 + $0x168] sm:$0xff]
    %v2360 = vld [vmem:[#allocation8 + $0x170] sm:$0xff]
    %v2361 = vld [vmem:[#allocation8 + $0x178] sm:$0xff]
    %v2362 = vld [vmem:[#allocation8 + $0x180] sm:$0xff]
    %v2363 = vld [vmem:[#allocation8 + $0x188] sm:$0xff]
    %v2364 = vld [vmem:[#allocation8 + $0x190] sm:$0xff]
    %v2365 = vld [vmem:[#allocation8 + $0x198] sm:$0xff]
    %v2366 = vld [vmem:[#allocation8 + $0x1a0] sm:$0xff]
    %v2367 = vld [vmem:[#allocation8 + $0x1a8] sm:$0xff]
    %v2368 = vld [vmem:[#allocation8 + $0x1b0] sm:$0xff]
    %v2369 = vld [vmem:[#allocation8 + $0x1b8] sm:$0xff]
    %v2370 = vld [vmem:[#allocation8 + $0x1c0] sm:$0xff]
    %v2371 = vld [vmem:[#allocation8 + $0x1c8] sm:$0xff]
    %v2372 = vld [vmem:[#allocation8 + $0x1d0] sm:$0xff]
    %v2373 = vld [vmem:[#allocation8 + $0x1d8] sm:$0xff]
    %v2374 = vld [vmem:[#allocation8 + $0x1e0] sm:$0xff]
    %v2375 = vld [vmem:[#allocation8 + $0x1e8] sm:$0xff]
    %v2376 = vld [vmem:[#allocation8 + $0x1f0] sm:$0xff]
    %v2377 = vld [vmem:[#allocation8 + $0x1f8] sm:$0xff]
    %v2378 = vld [vmem:[#allocation8 + $0x200] sm:$0xff]
    %v2379 = vld [vmem:[#allocation8 + $0x208] sm:$0xff]
    %v2380 = vld [vmem:[#allocation8 + $0x210] sm:$0xff]
    %v2381 = vld [vmem:[#allocation8 + $0x218] sm:$0xff]
    %v2382 = vld [vmem:[#allocation8 + $0x220] sm:$0xff]
    %v2383 = vld [vmem:[#allocation8 + $0x228] sm:$0xff]
    %v2384 = vld [vmem:[#allocation8 + $0x230] sm:$0xff]
    %v2385 = vld [vmem:[#allocation8 + $0x238] sm:$0xff]
    %v2386 = vld [vmem:[#allocation8 + $0x240] sm:$0xff]
    %v2387 = vld [vmem:[#allocation8 + $0x248] sm:$0xff]
    %v2388 = vld [vmem:[#allocation8 + $0x250] sm:$0xff]
    %v2389 = vld [vmem:[#allocation8 + $0x258] sm:$0xff]
    %v2390 = vld [vmem:[#allocation8 + $0x260] sm:$0xff]
    %v2391 = vld [vmem:[#allocation8 + $0x268] sm:$0xff]
    %v2392 = vld [vmem:[#allocation8 + $0x270] sm:$0xff]
    %v2393 = vld [vmem:[#allocation8 + $0x278] sm:$0xff]
    %v2394 = vld [vmem:[#allocation8 + $0x280] sm:$0xff]
    %v2395 = vld [vmem:[#allocation8 + $0x288] sm:$0xff]
    %v2396 = vld [vmem:[#allocation8 + $0x290] sm:$0xff]
    %v2397 = vld [vmem:[#allocation8 + $0x298] sm:$0xff]
    %v2398 = vld [vmem:[#allocation8 + $0x2a0] sm:$0xff]
    %v2399 = vld [vmem:[#allocation8 + $0x2a8] sm:$0xff]
    %v2400 = vld [vmem:[#allocation8 + $0x2b0] sm:$0xff]
    %v2401 = vld [vmem:[#allocation8 + $0x2b8] sm:$0xff]
    %v2402 = vld [vmem:[#allocation8 + $0x2c0] sm:$0xff]
    %v2403 = vld [vmem:[#allocation8 + $0x2c8] sm:$0xff]
    %v2404 = vld [vmem:[#allocation8 + $0x2d0] sm:$0xff]
    %v2405 = vld [vmem:[#allocation8 + $0x2d8] sm:$0xff]
    %v2406 = vld [vmem:[#allocation8 + $0x2e0] sm:$0xff]
    %v2407 = vld [vmem:[#allocation8 + $0x2e8] sm:$0xff]
    %v2408 = vld [vmem:[#allocation8 + $0x2f0] sm:$0xff]
    %v2409 = vld [vmem:[#allocation8 + $0x2f8] sm:$0xff]
    %v2410 = vld [vmem:[#allocation9] sm:$0xff]
    %v2411 = vld [vmem:[#allocation9 + $0x8] sm:$0xff]
    %v2412 = vld [vmem:[#allocation9 + $0x10] sm:$0xff]
    %2413 = vmatpush.msra.mxu0 %v2359
    %2414 = vmatpush.msra.mxu0 %v2356
    %2415 = vmatpush.msra.mxu0 %v2353
    %2416 = vmatpush.msra.mxu0 %v2350
    %2417 = vmatpush.msra.mxu0 %v2347
    %2418 = vmatpush.msra.mxu0 %v2344
    %2419 = vmatpush.msra.mxu0 %v2341
    %2420 = vmatpush.msra.mxu0 %v2338
    %2421 = vmatpush.msra.mxu0 %v2335
    %2422 = vmatpush.msra.mxu0 %v2332
    %2423 = vmatpush.msra.mxu0 %v2329
    %2424 = vmatpush.msra.mxu0 %v2326
    %2425 = vmatpush.msra.mxu0 %v2323
    %2426 = vmatpush.msra.mxu0 %v2320
    %2427 = vmatpush.msra.mxu0 %v2317
    %2428 = vmatpush.msra.mxu0 %v2314
    %2429 = vmatmul.f32.gmra.mxu0 %v2313
    %v2430 = vpop.f32.mrf.mxu0
    %v2431 = vadd.f32 %v2410, %v2430
    %2432 = vdwg.mxu0
    %2433 = vmatpush.msra.mxu0 %v2407
    %2434 = vmatpush.msra.mxu0 %v2404
    %2435 = vmatpush.msra.mxu0 %v2401
    %2436 = vmatpush.msra.mxu0 %v2398
    %2437 = vmatpush.msra.mxu0 %v2395
    %2438 = vmatpush.msra.mxu0 %v2392
    %2439 = vmatpush.msra.mxu0 %v2389
    %2440 = vmatpush.msra.mxu0 %v2386
    %2441 = vmatpush.msra.mxu0 %v2383
    %2442 = vmatpush.msra.mxu0 %v2380
    %2443 = vmatpush.msra.mxu0 %v2377
    %2444 = vmatpush.msra.mxu0 %v2374
    %2445 = vmatpush.msra.mxu0 %v2371
    %2446 = vmatpush.msra.mxu0 %v2368
    %2447 = vmatpush.msra.mxu0 %v2365
    %2448 = vmatpush.msra.mxu0 %v2362
    %2449 = vmatmul.f32.gmra.mxu0 %v2271
    %v2450 = vpop.f32.mrf.mxu0
    %v2451 = vadd.f32 %v2431, %v2450
    %2452 = vdwg.mxu0
    %2453 = vmatpush.msra.mxu0 %v2360
    %2454 = vmatpush.msra.mxu0 %v2357
    %2455 = vmatpush.msra.mxu0 %v2354
    %2456 = vmatpush.msra.mxu0 %v2351
    %2457 = vmatpush.msra.mxu0 %v2348
    %2458 = vmatpush.msra.mxu0 %v2345
    %2459 = vmatpush.msra.mxu0 %v2342
    %2460 = vmatpush.msra.mxu0 %v2339
    %2461 = vmatpush.msra.mxu0 %v2336
    %2462 = vmatpush.msra.mxu0 %v2333
    %2463 = vmatpush.msra.mxu0 %v2330
    %2464 = vmatpush.msra.mxu0 %v2327
    %2465 = vmatpush.msra.mxu0 %v2324
    %2466 = vmatpush.msra.mxu0 %v2321
    %2467 = vmatpush.msra.mxu0 %v2318
    %2468 = vmatpush.msra.mxu0 %v2315
    %2469 = vmatmul.f32.gmra.mxu0 %v2313
    %v2470 = vpop.f32.mrf.mxu0
    %v2471 = vadd.f32 %v2411, %v2470
    %2472 = vdwg.mxu0
    %2473 = vmatpush.msra.mxu0 %v2408
    %2474 = vmatpush.msra.mxu0 %v2405
    %2475 = vmatpush.msra.mxu0 %v2402
    %2476 = vmatpush.msra.mxu0 %v2399
    %2477 = vmatpush.msra.mxu0 %v2396
    %2478 = vmatpush.msra.mxu0 %v2393
    %2479 = vmatpush.msra.mxu0 %v2390
    %2480 = vmatpush.msra.mxu0 %v2387
    %2481 = vmatpush.msra.mxu0 %v2384
    %2482 = vmatpush.msra.mxu0 %v2381
    %2483 = vmatpush.msra.mxu0 %v2378
    %2484 = vmatpush.msra.mxu0 %v2375
    %2485 = vmatpush.msra.mxu0 %v2372
    %2486 = vmatpush.msra.mxu0 %v2369
    %2487 = vmatpush.msra.mxu0 %v2366
    %2488 = vmatpush.msra.mxu0 %v2363
    %2489 = vmatmul.f32.gmra.mxu0 %v2271
    %v2490 = vpop.f32.mrf.mxu0
    %v2491 = vadd.f32 %v2471, %v2490
    %2492 = vdwg.mxu0
    %2493 = vmatpush.msra.mxu0 %v2361
    %2494 = vmatpush.msra.mxu0 %v2358
    %2495 = vmatpush.msra.mxu0 %v2355
    %2496 = vmatpush.msra.mxu0 %v2352
    %2497 = vmatpush.msra.mxu0 %v2349
    %2498 = vmatpush.msra.mxu0 %v2346
    %2499 = vmatpush.msra.mxu0 %v2343
    %2500 = vmatpush.msra.mxu0 %v2340
    %2501 = vmatpush.msra.mxu0 %v2337
    %2502 = vmatpush.msra.mxu0 %v2334
    %2503 = vmatpush.msra.mxu0 %v2331
    %2504 = vmatpush.msra.mxu0 %v2328
    %2505 = vmatpush.msra.mxu0 %v2325
    %2506 = vmatpush.msra.mxu0 %v2322
    %2507 = vmatpush.msra.mxu0 %v2319
    %2508 = vmatpush.msra.mxu0 %v2316
    %2509 = vmatmul.f32.gmra.mxu0 %v2313
    %v2510 = vpop.f32.mrf.mxu0
    %v2511 = vadd.f32 %v2412, %v2510
    %2512 = vdwg.mxu0
    %2513 = vmatpush.msra.mxu0 %v2409
    %2514 = vmatpush.msra.mxu0 %v2406
    %2515 = vmatpush.msra.mxu0 %v2403
    %2516 = vmatpush.msra.mxu0 %v2400
    %2517 = vmatpush.msra.mxu0 %v2397
    %2518 = vmatpush.msra.mxu0 %v2394
    %2519 = vmatpush.msra.mxu0 %v2391
    %2520 = vmatpush.msra.mxu0 %v2388
    %2521 = vmatpush.msra.mxu0 %v2385
    %2522 = vmatpush.msra.mxu0 %v2382
    %2523 = vmatpush.msra.mxu0 %v2379
    %2524 = vmatpush.msra.mxu0 %v2376
    %2525 = vmatpush.msra.mxu0 %v2373
    %2526 = vmatpush.msra.mxu0 %v2370
    %2527 = vmatpush.msra.mxu0 %v2367
    %2528 = vmatpush.msra.mxu0 %v2364
    %2529 = vmatmul.f32.gmra.mxu0 %v2271
    %v2530 = vpop.f32.mrf.mxu0
    %v2531 = vadd.f32 %v2511, %v2530
    %2532 = vdwg.mxu0
    %v2533 = vmul.f32 %v2451, 0.5
    %v2534 = vtanh.pop %v2533
    %v2535 = vmul.f32 %v2534, 0.5
    %v2536 = vadd.f32 %v2535, 0.5
    %v2537 = vmul.f32 %v2491, 0.5
    %v2538 = vtanh.pop %v2537
    %v2539 = vmul.f32 %v2538, 0.5
    %v2540 = vadd.f32 %v2539, 0.5
    %v2541 = vmul.f32 %v2536, %v2271
    %v2542 = vld [vmem:[#allocation11] sm:$0xff]
    %v2543 = vld [vmem:[#allocation11 + $0x8] sm:$0xff]
    %v2544 = vld [vmem:[#allocation11 + $0x10] sm:$0xff]
    %v2545 = vld [vmem:[#allocation11 + $0x18] sm:$0xff]
    %v2546 = vld [vmem:[#allocation11 + $0x20] sm:$0xff]
    %v2547 = vld [vmem:[#allocation11 + $0x28] sm:$0xff]
    %v2548 = vld [vmem:[#allocation11 + $0x30] sm:$0xff]
    %v2549 = vld [vmem:[#allocation11 + $0x38] sm:$0xff]
    %v2550 = vld [vmem:[#allocation11 + $0x40] sm:$0xff]
    %v2551 = vld [vmem:[#allocation11 + $0x48] sm:$0xff]
    %v2552 = vld [vmem:[#allocation11 + $0x50] sm:$0xff]
    %v2553 = vld [vmem:[#allocation11 + $0x58] sm:$0xff]
    %v2554 = vld [vmem:[#allocation11 + $0x60] sm:$0xff]
    %v2555 = vld [vmem:[#allocation11 + $0x68] sm:$0xff]
    %v2556 = vld [vmem:[#allocation11 + $0x70] sm:$0xff]
    %v2557 = vld [vmem:[#allocation11 + $0x78] sm:$0xff]
    %2558 = vmatpush.msra.mxu0 %v2557
    %2559 = vmatpush.msra.mxu0 %v2556
    %2560 = vmatpush.msra.mxu0 %v2555
    %2561 = vmatpush.msra.mxu0 %v2554
    %2562 = vmatpush.msra.mxu0 %v2553
    %2563 = vmatpush.msra.mxu0 %v2552
    %2564 = vmatpush.msra.mxu0 %v2551
    %2565 = vmatpush.msra.mxu0 %v2550
    %2566 = vmatpush.msra.mxu0 %v2549
    %2567 = vmatpush.msra.mxu0 %v2548
    %2568 = vmatpush.msra.mxu0 %v2547
    %2569 = vmatpush.msra.mxu0 %v2546
    %2570 = vmatpush.msra.mxu0 %v2545
    %2571 = vmatpush.msra.mxu0 %v2544
    %2572 = vmatpush.msra.mxu0 %v2543
    %2573 = vmatpush.msra.mxu0 %v2542
    %2574 = vmatmul.f32.gmra.mxu0 %v2541
    %v2575 = vpop.f32.mrf.mxu0
    %v2576 = vadd.f32 0.0, %v2575
    %2577 = vdwg.mxu0
    %v2578 = vadd.f32 %v2531, %v2576
    %v2579 = vtanh.pop %v2578
    %v2580 = vsub.f32 %v2271, %v2579
    %v2581 = vmul.f32 %v2540, %v2580
    %v2582 = vadd.f32 %v2579, %v2581
    %v2583 = vmax.f32 %v2582, -5.0
    %v2584 = vmin.f32 %v2583, 5.0
    %s2585 = scalar_lea.vmem [#allocation14], 56
    %2586 = vst [vmem:[%s2585] sm:$0xff] %v2584
    %v2587 = vld [vmem:[#allocation12] sm:$0xff]
    %v2588 = vld [vmem:[#allocation12 + $0x8] sm:$0xff]
    %v2589 = vld [vmem:[#allocation12 + $0x10] sm:$0xff]
    %v2590 = vld [vmem:[#allocation12 + $0x18] sm:$0xff]
    %v2591 = vld [vmem:[#allocation12 + $0x20] sm:$0xff]
    %v2592 = vld [vmem:[#allocation12 + $0x28] sm:$0xff]
    %v2593 = vld [vmem:[#allocation12 + $0x30] sm:$0xff]
    %v2594 = vld [vmem:[#allocation12 + $0x38] sm:$0xff]
    %v2595 = vld [vmem:[#allocation12 + $0x40] sm:$0xff]
    %v2596 = vld [vmem:[#allocation12 + $0x48] sm:$0xff]
    %v2597 = vld [vmem:[#allocation12 + $0x50] sm:$0xff]
    %v2598 = vld [vmem:[#allocation12 + $0x58] sm:$0xff]
    %v2599 = vld [vmem:[#allocation12 + $0x60] sm:$0xff]
    %v2600 = vld [vmem:[#allocation12 + $0x68] sm:$0xff]
    %v2601 = vld [vmem:[#allocation12 + $0x70] sm:$0xff]
    %v2602 = vld [vmem:[#allocation12 + $0x78] sm:$0xff]
    %2603 = vmatpush.msra.mxu0 %v2602
    %2604 = vmatpush.msra.mxu0 %v2601
    %2605 = vmatpush.msra.mxu0 %v2600
    %2606 = vmatpush.msra.mxu0 %v2599
    %2607 = vmatpush.msra.mxu0 %v2598
    %2608 = vmatpush.msra.mxu0 %v2597
    %2609 = vmatpush.msra.mxu0 %v2596
    %2610 = vmatpush.msra.mxu0 %v2595
    %2611 = vmatpush.msra.mxu0 %v2594
    %2612 = vmatpush.msra.mxu0 %v2593
    %2613 = vmatpush.msra.mxu0 %v2592
    %2614 = vmatpush.msra.mxu0 %v2591
    %2615 = vmatpush.msra.mxu0 %v2590
    %2616 = vmatpush.msra.mxu0 %v2589
    %2617 = vmatpush.msra.mxu0 %v2588
    %2618 = vmatpush.msra.mxu0 %v2587
    %2619 = vmatmul.f32.gmra.mxu0 %v2584
    %v2620 = vpop.f32.mrf.mxu0
    %v2621 = vadd.f32 0.0, %v2620
    %2622 = vdwg.mxu0
    %s2623 = scalar_lea.vmem [#allocation15], 56
    %2624 = vst [vmem:[%s2623] sm:$0xff] %v2621
    %s2625 = scalar_lea.vmem [#allocation3], 64
    %v2626 = vld [vmem:[%s2625] sm:$0xff]
    %v2627 = vld [vmem:[#allocation8] sm:$0xff]
    %v2628 = vld [vmem:[#allocation8 + $0x8] sm:$0xff]
    %v2629 = vld [vmem:[#allocation8 + $0x10] sm:$0xff]
    %v2630 = vld [vmem:[#allocation8 + $0x18] sm:$0xff]
    %v2631 = vld [vmem:[#allocation8 + $0x20] sm:$0xff]
    %v2632 = vld [vmem:[#allocation8 + $0x28] sm:$0xff]
    %v2633 = vld [vmem:[#allocation8 + $0x30] sm:$0xff]
    %v2634 = vld [vmem:[#allocation8 + $0x38] sm:$0xff]
    %v2635 = vld [vmem:[#allocation8 + $0x40] sm:$0xff]
    %v2636 = vld [vmem:[#allocation8 + $0x48] sm:$0xff]
    %v2637 = vld [vmem:[#allocation8 + $0x50] sm:$0xff]
    %v2638 = vld [vmem:[#allocation8 + $0x58] sm:$0xff]
    %v2639 = vld [vmem:[#allocation8 + $0x60] sm:$0xff]
    %v2640 = vld [vmem:[#allocation8 + $0x68] sm:$0xff]
    %v2641 = vld [vmem:[#allocation8 + $0x70] sm:$0xff]
    %v2642 = vld [vmem:[#allocation8 + $0x78] sm:$0xff]
    %v2643 = vld [vmem:[#allocation8 + $0x80] sm:$0xff]
    %v2644 = vld [vmem:[#allocation8 + $0x88] sm:$0xff]
    %v2645 = vld [vmem:[#allocation8 + $0x90] sm:$0xff]
    %v2646 = vld [vmem:[#allocation8 + $0x98] sm:$0xff]
    %v2647 = vld [vmem:[#allocation8 + $0xa0] sm:$0xff]
    %v2648 = vld [vmem:[#allocation8 + $0xa8] sm:$0xff]
    %v2649 = vld [vmem:[#allocation8 + $0xb0] sm:$0xff]
    %v2650 = vld [vmem:[#allocation8 + $0xb8] sm:$0xff]
    %v2651 = vld [vmem:[#allocation8 + $0xc0] sm:$0xff]
    %v2652 = vld [vmem:[#allocation8 + $0xc8] sm:$0xff]
    %v2653 = vld [vmem:[#allocation8 + $0xd0] sm:$0xff]
    %v2654 = vld [vmem:[#allocation8 + $0xd8] sm:$0xff]
    %v2655 = vld [vmem:[#allocation8 + $0xe0] sm:$0xff]
    %v2656 = vld [vmem:[#allocation8 + $0xe8] sm:$0xff]
    %v2657 = vld [vmem:[#allocation8 + $0xf0] sm:$0xff]
    %v2658 = vld [vmem:[#allocation8 + $0xf8] sm:$0xff]
    %v2659 = vld [vmem:[#allocation8 + $0x100] sm:$0xff]
    %v2660 = vld [vmem:[#allocation8 + $0x108] sm:$0xff]
    %v2661 = vld [vmem:[#allocation8 + $0x110] sm:$0xff]
    %v2662 = vld [vmem:[#allocation8 + $0x118] sm:$0xff]
    %v2663 = vld [vmem:[#allocation8 + $0x120] sm:$0xff]
    %v2664 = vld [vmem:[#allocation8 + $0x128] sm:$0xff]
    %v2665 = vld [vmem:[#allocation8 + $0x130] sm:$0xff]
    %v2666 = vld [vmem:[#allocation8 + $0x138] sm:$0xff]
    %v2667 = vld [vmem:[#allocation8 + $0x140] sm:$0xff]
    %v2668 = vld [vmem:[#allocation8 + $0x148] sm:$0xff]
    %v2669 = vld [vmem:[#allocation8 + $0x150] sm:$0xff]
    %v2670 = vld [vmem:[#allocation8 + $0x158] sm:$0xff]
    %v2671 = vld [vmem:[#allocation8 + $0x160] sm:$0xff]
    %v2672 = vld [vmem:[#allocation8 + $0x168] sm:$0xff]
    %v2673 = vld [vmem:[#allocation8 + $0x170] sm:$0xff]
    %v2674 = vld [vmem:[#allocation8 + $0x178] sm:$0xff]
    %v2675 = vld [vmem:[#allocation8 + $0x180] sm:$0xff]
    %v2676 = vld [vmem:[#allocation8 + $0x188] sm:$0xff]
    %v2677 = vld [vmem:[#allocation8 + $0x190] sm:$0xff]
    %v2678 = vld [vmem:[#allocation8 + $0x198] sm:$0xff]
    %v2679 = vld [vmem:[#allocation8 + $0x1a0] sm:$0xff]
    %v2680 = vld [vmem:[#allocation8 + $0x1a8] sm:$0xff]
    %v2681 = vld [vmem:[#allocation8 + $0x1b0] sm:$0xff]
    %v2682 = vld [vmem:[#allocation8 + $0x1b8] sm:$0xff]
    %v2683 = vld [vmem:[#allocation8 + $0x1c0] sm:$0xff]
    %v2684 = vld [vmem:[#allocation8 + $0x1c8] sm:$0xff]
    %v2685 = vld [vmem:[#allocation8 + $0x1d0] sm:$0xff]
    %v2686 = vld [vmem:[#allocation8 + $0x1d8] sm:$0xff]
    %v2687 = vld [vmem:[#allocation8 + $0x1e0] sm:$0xff]
    %v2688 = vld [vmem:[#allocation8 + $0x1e8] sm:$0xff]
    %v2689 = vld [vmem:[#allocation8 + $0x1f0] sm:$0xff]
    %v2690 = vld [vmem:[#allocation8 + $0x1f8] sm:$0xff]
    %v2691 = vld [vmem:[#allocation8 + $0x200] sm:$0xff]
    %v2692 = vld [vmem:[#allocation8 + $0x208] sm:$0xff]
    %v2693 = vld [vmem:[#allocation8 + $0x210] sm:$0xff]
    %v2694 = vld [vmem:[#allocation8 + $0x218] sm:$0xff]
    %v2695 = vld [vmem:[#allocation8 + $0x220] sm:$0xff]
    %v2696 = vld [vmem:[#allocation8 + $0x228] sm:$0xff]
    %v2697 = vld [vmem:[#allocation8 + $0x230] sm:$0xff]
    %v2698 = vld [vmem:[#allocation8 + $0x238] sm:$0xff]
    %v2699 = vld [vmem:[#allocation8 + $0x240] sm:$0xff]
    %v2700 = vld [vmem:[#allocation8 + $0x248] sm:$0xff]
    %v2701 = vld [vmem:[#allocation8 + $0x250] sm:$0xff]
    %v2702 = vld [vmem:[#allocation8 + $0x258] sm:$0xff]
    %v2703 = vld [vmem:[#allocation8 + $0x260] sm:$0xff]
    %v2704 = vld [vmem:[#allocation8 + $0x268] sm:$0xff]
    %v2705 = vld [vmem:[#allocation8 + $0x270] sm:$0xff]
    %v2706 = vld [vmem:[#allocation8 + $0x278] sm:$0xff]
    %v2707 = vld [vmem:[#allocation8 + $0x280] sm:$0xff]
    %v2708 = vld [vmem:[#allocation8 + $0x288] sm:$0xff]
    %v2709 = vld [vmem:[#allocation8 + $0x290] sm:$0xff]
    %v2710 = vld [vmem:[#allocation8 + $0x298] sm:$0xff]
    %v2711 = vld [vmem:[#allocation8 + $0x2a0] sm:$0xff]
    %v2712 = vld [vmem:[#allocation8 + $0x2a8] sm:$0xff]
    %v2713 = vld [vmem:[#allocation8 + $0x2b0] sm:$0xff]
    %v2714 = vld [vmem:[#allocation8 + $0x2b8] sm:$0xff]
    %v2715 = vld [vmem:[#allocation8 + $0x2c0] sm:$0xff]
    %v2716 = vld [vmem:[#allocation8 + $0x2c8] sm:$0xff]
    %v2717 = vld [vmem:[#allocation8 + $0x2d0] sm:$0xff]
    %v2718 = vld [vmem:[#allocation8 + $0x2d8] sm:$0xff]
    %v2719 = vld [vmem:[#allocation8 + $0x2e0] sm:$0xff]
    %v2720 = vld [vmem:[#allocation8 + $0x2e8] sm:$0xff]
    %v2721 = vld [vmem:[#allocation8 + $0x2f0] sm:$0xff]
    %v2722 = vld [vmem:[#allocation8 + $0x2f8] sm:$0xff]
    %v2723 = vld [vmem:[#allocation9] sm:$0xff]
    %v2724 = vld [vmem:[#allocation9 + $0x8] sm:$0xff]
    %v2725 = vld [vmem:[#allocation9 + $0x10] sm:$0xff]
    %2726 = vmatpush.msra.mxu0 %v2672
    %2727 = vmatpush.msra.mxu0 %v2669
    %2728 = vmatpush.msra.mxu0 %v2666
    %2729 = vmatpush.msra.mxu0 %v2663
    %2730 = vmatpush.msra.mxu0 %v2660
    %2731 = vmatpush.msra.mxu0 %v2657
    %2732 = vmatpush.msra.mxu0 %v2654
    %2733 = vmatpush.msra.mxu0 %v2651
    %2734 = vmatpush.msra.mxu0 %v2648
    %2735 = vmatpush.msra.mxu0 %v2645
    %2736 = vmatpush.msra.mxu0 %v2642
    %2737 = vmatpush.msra.mxu0 %v2639
    %2738 = vmatpush.msra.mxu0 %v2636
    %2739 = vmatpush.msra.mxu0 %v2633
    %2740 = vmatpush.msra.mxu0 %v2630
    %2741 = vmatpush.msra.mxu0 %v2627
    %2742 = vmatmul.f32.gmra.mxu0 %v2626
    %v2743 = vpop.f32.mrf.mxu0
    %v2744 = vadd.f32 %v2723, %v2743
    %2745 = vdwg.mxu0
    %2746 = vmatpush.msra.mxu0 %v2720
    %2747 = vmatpush.msra.mxu0 %v2717
    %2748 = vmatpush.msra.mxu0 %v2714
    %2749 = vmatpush.msra.mxu0 %v2711
    %2750 = vmatpush.msra.mxu0 %v2708
    %2751 = vmatpush.msra.mxu0 %v2705
    %2752 = vmatpush.msra.mxu0 %v2702
    %2753 = vmatpush.msra.mxu0 %v2699
    %2754 = vmatpush.msra.mxu0 %v2696
    %2755 = vmatpush.msra.mxu0 %v2693
    %2756 = vmatpush.msra.mxu0 %v2690
    %2757 = vmatpush.msra.mxu0 %v2687
    %2758 = vmatpush.msra.mxu0 %v2684
    %2759 = vmatpush.msra.mxu0 %v2681
    %2760 = vmatpush.msra.mxu0 %v2678
    %2761 = vmatpush.msra.mxu0 %v2675
    %2762 = vmatmul.f32.gmra.mxu0 %v2584
    %v2763 = vpop.f32.mrf.mxu0
    %v2764 = vadd.f32 %v2744, %v2763
    %2765 = vdwg.mxu0
    %2766 = vmatpush.msra.mxu0 %v2673
    %2767 = vmatpush.msra.mxu0 %v2670
    %2768 = vmatpush.msra.mxu0 %v2667
    %2769 = vmatpush.msra.mxu0 %v2664
    %2770 = vmatpush.msra.mxu0 %v2661
    %2771 = vmatpush.msra.mxu0 %v2658
    %2772 = vmatpush.msra.mxu0 %v2655
    %2773 = vmatpush.msra.mxu0 %v2652
    %2774 = vmatpush.msra.mxu0 %v2649
    %2775 = vmatpush.msra.mxu0 %v2646
    %2776 = vmatpush.msra.mxu0 %v2643
    %2777 = vmatpush.msra.mxu0 %v2640
    %2778 = vmatpush.msra.mxu0 %v2637
    %2779 = vmatpush.msra.mxu0 %v2634
    %2780 = vmatpush.msra.mxu0 %v2631
    %2781 = vmatpush.msra.mxu0 %v2628
    %2782 = vmatmul.f32.gmra.mxu0 %v2626
    %v2783 = vpop.f32.mrf.mxu0
    %v2784 = vadd.f32 %v2724, %v2783
    %2785 = vdwg.mxu0
    %2786 = vmatpush.msra.mxu0 %v2721
    %2787 = vmatpush.msra.mxu0 %v2718
    %2788 = vmatpush.msra.mxu0 %v2715
    %2789 = vmatpush.msra.mxu0 %v2712
    %2790 = vmatpush.msra.mxu0 %v2709
    %2791 = vmatpush.msra.mxu0 %v2706
    %2792 = vmatpush.msra.mxu0 %v2703
    %2793 = vmatpush.msra.mxu0 %v2700
    %2794 = vmatpush.msra.mxu0 %v2697
    %2795 = vmatpush.msra.mxu0 %v2694
    %2796 = vmatpush.msra.mxu0 %v2691
    %2797 = vmatpush.msra.mxu0 %v2688
    %2798 = vmatpush.msra.mxu0 %v2685
    %2799 = vmatpush.msra.mxu0 %v2682
    %2800 = vmatpush.msra.mxu0 %v2679
    %2801 = vmatpush.msra.mxu0 %v2676
    %2802 = vmatmul.f32.gmra.mxu0 %v2584
    %v2803 = vpop.f32.mrf.mxu0
    %v2804 = vadd.f32 %v2784, %v2803
    %2805 = vdwg.mxu0
    %2806 = vmatpush.msra.mxu0 %v2674
    %2807 = vmatpush.msra.mxu0 %v2671
    %2808 = vmatpush.msra.mxu0 %v2668
    %2809 = vmatpush.msra.mxu0 %v2665
    %2810 = vmatpush.msra.mxu0 %v2662
    %2811 = vmatpush.msra.mxu0 %v2659
    %2812 = vmatpush.msra.mxu0 %v2656
    %2813 = vmatpush.msra.mxu0 %v2653
    %2814 = vmatpush.msra.mxu0 %v2650
    %2815 = vmatpush.msra.mxu0 %v2647
    %2816 = vmatpush.msra.mxu0 %v2644
    %2817 = vmatpush.msra.mxu0 %v2641
    %2818 = vmatpush.msra.mxu0 %v2638
    %2819 = vmatpush.msra.mxu0 %v2635
    %2820 = vmatpush.msra.mxu0 %v2632
    %2821 = vmatpush.msra.mxu0 %v2629
    %2822 = vmatmul.f32.gmra.mxu0 %v2626
    %v2823 = vpop.f32.mrf.mxu0
    %v2824 = vadd.f32 %v2725, %v2823
    %2825 = vdwg.mxu0
    %2826 = vmatpush.msra.mxu0 %v2722
    %2827 = vmatpush.msra.mxu0 %v2719
    %2828 = vmatpush.msra.mxu0 %v2716
    %2829 = vmatpush.msra.mxu0 %v2713
    %2830 = vmatpush.msra.mxu0 %v2710
    %2831 = vmatpush.msra.mxu0 %v2707
    %2832 = vmatpush.msra.mxu0 %v2704
    %2833 = vmatpush.msra.mxu0 %v2701
    %2834 = vmatpush.msra.mxu0 %v2698
    %2835 = vmatpush.msra.mxu0 %v2695
    %2836 = vmatpush.msra.mxu0 %v2692
    %2837 = vmatpush.msra.mxu0 %v2689
    %2838 = vmatpush.msra.mxu0 %v2686
    %2839 = vmatpush.msra.mxu0 %v2683
    %2840 = vmatpush.msra.mxu0 %v2680
    %2841 = vmatpush.msra.mxu0 %v2677
    %2842 = vmatmul.f32.gmra.mxu0 %v2584
    %v2843 = vpop.f32.mrf.mxu0
    %v2844 = vadd.f32 %v2824, %v2843
    %2845 = vdwg.mxu0
    %v2846 = vmul.f32 %v2764, 0.5
    %v2847 = vtanh.pop %v2846
    %v2848 = vmul.f32 %v2847, 0.5
    %v2849 = vadd.f32 %v2848, 0.5
    %v2850 = vmul.f32 %v2804, 0.5
    %v2851 = vtanh.pop %v2850
    %v2852 = vmul.f32 %v2851, 0.5
    %v2853 = vadd.f32 %v2852, 0.5
    %v2854 = vmul.f32 %v2849, %v2584
    %v2855 = vld [vmem:[#allocation11] sm:$0xff]
    %v2856 = vld [vmem:[#allocation11 + $0x8] sm:$0xff]
    %v2857 = vld [vmem:[#allocation11 + $0x10] sm:$0xff]
    %v2858 = vld [vmem:[#allocation11 + $0x18] sm:$0xff]
    %v2859 = vld [vmem:[#allocation11 + $0x20] sm:$0xff]
    %v2860 = vld [vmem:[#allocation11 + $0x28] sm:$0xff]
    %v2861 = vld [vmem:[#allocation11 + $0x30] sm:$0xff]
    %v2862 = vld [vmem:[#allocation11 + $0x38] sm:$0xff]
    %v2863 = vld [vmem:[#allocation11 + $0x40] sm:$0xff]
    %v2864 = vld [vmem:[#allocation11 + $0x48] sm:$0xff]
    %v2865 = vld [vmem:[#allocation11 + $0x50] sm:$0xff]
    %v2866 = vld [vmem:[#allocation11 + $0x58] sm:$0xff]
    %v2867 = vld [vmem:[#allocation11 + $0x60] sm:$0xff]
    %v2868 = vld [vmem:[#allocation11 + $0x68] sm:$0xff]
    %v2869 = vld [vmem:[#allocation11 + $0x70] sm:$0xff]
    %v2870 = vld [vmem:[#allocation11 + $0x78] sm:$0xff]
    %2871 = vmatpush.msra.mxu0 %v2870
    %2872 = vmatpush.msra.mxu0 %v2869
    %2873 = vmatpush.msra.mxu0 %v2868
    %2874 = vmatpush.msra.mxu0 %v2867
    %2875 = vmatpush.msra.mxu0 %v2866
    %2876 = vmatpush.msra.mxu0 %v2865
    %2877 = vmatpush.msra.mxu0 %v2864
    %2878 = vmatpush.msra.mxu0 %v2863
    %2879 = vmatpush.msra.mxu0 %v2862
    %2880 = vmatpush.msra.mxu0 %v2861
    %2881 = vmatpush.msra.mxu0 %v2860
    %2882 = vmatpush.msra.mxu0 %v2859
    %2883 = vmatpush.msra.mxu0 %v2858
    %2884 = vmatpush.msra.mxu0 %v2857
    %2885 = vmatpush.msra.mxu0 %v2856
    %2886 = vmatpush.msra.mxu0 %v2855
    %2887 = vmatmul.f32.gmra.mxu0 %v2854
    %v2888 = vpop.f32.mrf.mxu0
    %v2889 = vadd.f32 0.0, %v2888
    %2890 = vdwg.mxu0
    %v2891 = vadd.f32 %v2844, %v2889
    %v2892 = vtanh.pop %v2891
    %v2893 = vsub.f32 %v2584, %v2892
    %v2894 = vmul.f32 %v2853, %v2893
    %v2895 = vadd.f32 %v2892, %v2894
    %v2896 = vmax.f32 %v2895, -5.0
    %v2897 = vmin.f32 %v2896, 5.0
    %s2898 = scalar_lea.vmem [#allocation14], 64
    %2899 = vst [vmem:[%s2898] sm:$0xff] %v2897
    %v2900 = vld [vmem:[#allocation12] sm:$0xff]
    %v2901 = vld [vmem:[#allocation12 + $0x8] sm:$0xff]
    %v2902 = vld [vmem:[#allocation12 + $0x10] sm:$0xff]
    %v2903 = vld [vmem:[#allocation12 + $0x18] sm:$0xff]
    %v2904 = vld [vmem:[#allocation12 + $0x20] sm:$0xff]
    %v2905 = vld [vmem:[#allocation12 + $0x28] sm:$0xff]
    %v2906 = vld [vmem:[#allocation12 + $0x30] sm:$0xff]
    %v2907 = vld [vmem:[#allocation12 + $0x38] sm:$0xff]
    %v2908 = vld [vmem:[#allocation12 + $0x40] sm:$0xff]
    %v2909 = vld [vmem:[#allocation12 + $0x48] sm:$0xff]
    %v2910 = vld [vmem:[#allocation12 + $0x50] sm:$0xff]
    %v2911 = vld [vmem:[#allocation12 + $0x58] sm:$0xff]
    %v2912 = vld [vmem:[#allocation12 + $0x60] sm:$0xff]
    %v2913 = vld [vmem:[#allocation12 + $0x68] sm:$0xff]
    %v2914 = vld [vmem:[#allocation12 + $0x70] sm:$0xff]
    %v2915 = vld [vmem:[#allocation12 + $0x78] sm:$0xff]
    %2916 = vmatpush.msra.mxu0 %v2915
    %2917 = vmatpush.msra.mxu0 %v2914
    %2918 = vmatpush.msra.mxu0 %v2913
    %2919 = vmatpush.msra.mxu0 %v2912
    %2920 = vmatpush.msra.mxu0 %v2911
    %2921 = vmatpush.msra.mxu0 %v2910
    %2922 = vmatpush.msra.mxu0 %v2909
    %2923 = vmatpush.msra.mxu0 %v2908
    %2924 = vmatpush.msra.mxu0 %v2907
    %2925 = vmatpush.msra.mxu0 %v2906
    %2926 = vmatpush.msra.mxu0 %v2905
    %2927 = vmatpush.msra.mxu0 %v2904
    %2928 = vmatpush.msra.mxu0 %v2903
    %2929 = vmatpush.msra.mxu0 %v2902
    %2930 = vmatpush.msra.mxu0 %v2901
    %2931 = vmatpush.msra.mxu0 %v2900
    %2932 = vmatmul.f32.gmra.mxu0 %v2897
    %v2933 = vpop.f32.mrf.mxu0
    %v2934 = vadd.f32 0.0, %v2933
    %2935 = vdwg.mxu0
    %s2936 = scalar_lea.vmem [#allocation15], 64
    %2937 = vst [vmem:[%s2936] sm:$0xff] %v2934
    %s2938 = scalar_lea.vmem [#allocation3], 72
    %v2939 = vld [vmem:[%s2938] sm:$0xff]
    %v2940 = vld [vmem:[#allocation8] sm:$0xff]
    %v2941 = vld [vmem:[#allocation8 + $0x8] sm:$0xff]
    %v2942 = vld [vmem:[#allocation8 + $0x10] sm:$0xff]
    %v2943 = vld [vmem:[#allocation8 + $0x18] sm:$0xff]
    %v2944 = vld [vmem:[#allocation8 + $0x20] sm:$0xff]
    %v2945 = vld [vmem:[#allocation8 + $0x28] sm:$0xff]
    %v2946 = vld [vmem:[#allocation8 + $0x30] sm:$0xff]
    %v2947 = vld [vmem:[#allocation8 + $0x38] sm:$0xff]
    %v2948 = vld [vmem:[#allocation8 + $0x40] sm:$0xff]
    %v2949 = vld [vmem:[#allocation8 + $0x48] sm:$0xff]
    %v2950 = vld [vmem:[#allocation8 + $0x50] sm:$0xff]
    %v2951 = vld [vmem:[#allocation8 + $0x58] sm:$0xff]
    %v2952 = vld [vmem:[#allocation8 + $0x60] sm:$0xff]
    %v2953 = vld [vmem:[#allocation8 + $0x68] sm:$0xff]
    %v2954 = vld [vmem:[#allocation8 + $0x70] sm:$0xff]
    %v2955 = vld [vmem:[#allocation8 + $0x78] sm:$0xff]
    %v2956 = vld [vmem:[#allocation8 + $0x80] sm:$0xff]
    %v2957 = vld [vmem:[#allocation8 + $0x88] sm:$0xff]
    %v2958 = vld [vmem:[#allocation8 + $0x90] sm:$0xff]
    %v2959 = vld [vmem:[#allocation8 + $0x98] sm:$0xff]
    %v2960 = vld [vmem:[#allocation8 + $0xa0] sm:$0xff]
    %v2961 = vld [vmem:[#allocation8 + $0xa8] sm:$0xff]
    %v2962 = vld [vmem:[#allocation8 + $0xb0] sm:$0xff]
    %v2963 = vld [vmem:[#allocation8 + $0xb8] sm:$0xff]
    %v2964 = vld [vmem:[#allocation8 + $0xc0] sm:$0xff]
    %v2965 = vld [vmem:[#allocation8 + $0xc8] sm:$0xff]
    %v2966 = vld [vmem:[#allocation8 + $0xd0] sm:$0xff]
    %v2967 = vld [vmem:[#allocation8 + $0xd8] sm:$0xff]
    %v2968 = vld [vmem:[#allocation8 + $0xe0] sm:$0xff]
    %v2969 = vld [vmem:[#allocation8 + $0xe8] sm:$0xff]
    %v2970 = vld [vmem:[#allocation8 + $0xf0] sm:$0xff]
    %v2971 = vld [vmem:[#allocation8 + $0xf8] sm:$0xff]
    %v2972 = vld [vmem:[#allocation8 + $0x100] sm:$0xff]
    %v2973 = vld [vmem:[#allocation8 + $0x108] sm:$0xff]
    %v2974 = vld [vmem:[#allocation8 + $0x110] sm:$0xff]
    %v2975 = vld [vmem:[#allocation8 + $0x118] sm:$0xff]
    %v2976 = vld [vmem:[#allocation8 + $0x120] sm:$0xff]
    %v2977 = vld [vmem:[#allocation8 + $0x128] sm:$0xff]
    %v2978 = vld [vmem:[#allocation8 + $0x130] sm:$0xff]
    %v2979 = vld [vmem:[#allocation8 + $0x138] sm:$0xff]
    %v2980 = vld [vmem:[#allocation8 + $0x140] sm:$0xff]
    %v2981 = vld [vmem:[#allocation8 + $0x148] sm:$0xff]
    %v2982 = vld [vmem:[#allocation8 + $0x150] sm:$0xff]
    %v2983 = vld [vmem:[#allocation8 + $0x158] sm:$0xff]
    %v2984 = vld [vmem:[#allocation8 + $0x160] sm:$0xff]
    %v2985 = vld [vmem:[#allocation8 + $0x168] sm:$0xff]
    %v2986 = vld [vmem:[#allocation8 + $0x170] sm:$0xff]
    %v2987 = vld [vmem:[#allocation8 + $0x178] sm:$0xff]
    %v2988 = vld [vmem:[#allocation8 + $0x180] sm:$0xff]
    %v2989 = vld [vmem:[#allocation8 + $0x188] sm:$0xff]
    %v2990 = vld [vmem:[#allocation8 + $0x190] sm:$0xff]
    %v2991 = vld [vmem:[#allocation8 + $0x198] sm:$0xff]
    %v2992 = vld [vmem:[#allocation8 + $0x1a0] sm:$0xff]
    %v2993 = vld [vmem:[#allocation8 + $0x1a8] sm:$0xff]
    %v2994 = vld [vmem:[#allocation8 + $0x1b0] sm:$0xff]
    %v2995 = vld [vmem:[#allocation8 + $0x1b8] sm:$0xff]
    %v2996 = vld [vmem:[#allocation8 + $0x1c0] sm:$0xff]
    %v2997 = vld [vmem:[#allocation8 + $0x1c8] sm:$0xff]
    %v2998 = vld [vmem:[#allocation8 + $0x1d0] sm:$0xff]
    %v2999 = vld [vmem:[#allocation8 + $0x1d8] sm:$0xff]
    %v3000 = vld [vmem:[#allocation8 + $0x1e0] sm:$0xff]
    %v3001 = vld [vmem:[#allocation8 + $0x1e8] sm:$0xff]
    %v3002 = vld [vmem:[#allocation8 + $0x1f0] sm:$0xff]
    %v3003 = vld [vmem:[#allocation8 + $0x1f8] sm:$0xff]
    %v3004 = vld [vmem:[#allocation8 + $0x200] sm:$0xff]
    %v3005 = vld [vmem:[#allocation8 + $0x208] sm:$0xff]
    %v3006 = vld [vmem:[#allocation8 + $0x210] sm:$0xff]
    %v3007 = vld [vmem:[#allocation8 + $0x218] sm:$0xff]
    %v3008 = vld [vmem:[#allocation8 + $0x220] sm:$0xff]
    %v3009 = vld [vmem:[#allocation8 + $0x228] sm:$0xff]
    %v3010 = vld [vmem:[#allocation8 + $0x230] sm:$0xff]
    %v3011 = vld [vmem:[#allocation8 + $0x238] sm:$0xff]
    %v3012 = vld [vmem:[#allocation8 + $0x240] sm:$0xff]
    %v3013 = vld [vmem:[#allocation8 + $0x248] sm:$0xff]
    %v3014 = vld [vmem:[#allocation8 + $0x250] sm:$0xff]
    %v3015 = vld [vmem:[#allocation8 + $0x258] sm:$0xff]
    %v3016 = vld [vmem:[#allocation8 + $0x260] sm:$0xff]
    %v3017 = vld [vmem:[#allocation8 + $0x268] sm:$0xff]
    %v3018 = vld [vmem:[#allocation8 + $0x270] sm:$0xff]
    %v3019 = vld [vmem:[#allocation8 + $0x278] sm:$0xff]
    %v3020 = vld [vmem:[#allocation8 + $0x280] sm:$0xff]
    %v3021 = vld [vmem:[#allocation8 + $0x288] sm:$0xff]
    %v3022 = vld [vmem:[#allocation8 + $0x290] sm:$0xff]
    %v3023 = vld [vmem:[#allocation8 + $0x298] sm:$0xff]
    %v3024 = vld [vmem:[#allocation8 + $0x2a0] sm:$0xff]
    %v3025 = vld [vmem:[#allocation8 + $0x2a8] sm:$0xff]
    %v3026 = vld [vmem:[#allocation8 + $0x2b0] sm:$0xff]
    %v3027 = vld [vmem:[#allocation8 + $0x2b8] sm:$0xff]
    %v3028 = vld [vmem:[#allocation8 + $0x2c0] sm:$0xff]
    %v3029 = vld [vmem:[#allocation8 + $0x2c8] sm:$0xff]
    %v3030 = vld [vmem:[#allocation8 + $0x2d0] sm:$0xff]
    %v3031 = vld [vmem:[#allocation8 + $0x2d8] sm:$0xff]
    %v3032 = vld [vmem:[#allocation8 + $0x2e0] sm:$0xff]
    %v3033 = vld [vmem:[#allocation8 + $0x2e8] sm:$0xff]
    %v3034 = vld [vmem:[#allocation8 + $0x2f0] sm:$0xff]
    %v3035 = vld [vmem:[#allocation8 + $0x2f8] sm:$0xff]
    %v3036 = vld [vmem:[#allocation9] sm:$0xff]
    %v3037 = vld [vmem:[#allocation9 + $0x8] sm:$0xff]
    %v3038 = vld [vmem:[#allocation9 + $0x10] sm:$0xff]
    %3039 = vmatpush.msra.mxu0 %v2985
    %3040 = vmatpush.msra.mxu0 %v2982
    %3041 = vmatpush.msra.mxu0 %v2979
    %3042 = vmatpush.msra.mxu0 %v2976
    %3043 = vmatpush.msra.mxu0 %v2973
    %3044 = vmatpush.msra.mxu0 %v2970
    %3045 = vmatpush.msra.mxu0 %v2967
    %3046 = vmatpush.msra.mxu0 %v2964
    %3047 = vmatpush.msra.mxu0 %v2961
    %3048 = vmatpush.msra.mxu0 %v2958
    %3049 = vmatpush.msra.mxu0 %v2955
    %3050 = vmatpush.msra.mxu0 %v2952
    %3051 = vmatpush.msra.mxu0 %v2949
    %3052 = vmatpush.msra.mxu0 %v2946
    %3053 = vmatpush.msra.mxu0 %v2943
    %3054 = vmatpush.msra.mxu0 %v2940
    %3055 = vmatmul.f32.gmra.mxu0 %v2939
    %v3056 = vpop.f32.mrf.mxu0
    %v3057 = vadd.f32 %v3036, %v3056
    %3058 = vdwg.mxu0
    %3059 = vmatpush.msra.mxu0 %v3033
    %3060 = vmatpush.msra.mxu0 %v3030
    %3061 = vmatpush.msra.mxu0 %v3027
    %3062 = vmatpush.msra.mxu0 %v3024
    %3063 = vmatpush.msra.mxu0 %v3021
    %3064 = vmatpush.msra.mxu0 %v3018
    %3065 = vmatpush.msra.mxu0 %v3015
    %3066 = vmatpush.msra.mxu0 %v3012
    %3067 = vmatpush.msra.mxu0 %v3009
    %3068 = vmatpush.msra.mxu0 %v3006
    %3069 = vmatpush.msra.mxu0 %v3003
    %3070 = vmatpush.msra.mxu0 %v3000
    %3071 = vmatpush.msra.mxu0 %v2997
    %3072 = vmatpush.msra.mxu0 %v2994
    %3073 = vmatpush.msra.mxu0 %v2991
    %3074 = vmatpush.msra.mxu0 %v2988
    %3075 = vmatmul.f32.gmra.mxu0 %v2897
    %v3076 = vpop.f32.mrf.mxu0
    %v3077 = vadd.f32 %v3057, %v3076
    %3078 = vdwg.mxu0
    %3079 = vmatpush.msra.mxu0 %v2986
    %3080 = vmatpush.msra.mxu0 %v2983
    %3081 = vmatpush.msra.mxu0 %v2980
    %3082 = vmatpush.msra.mxu0 %v2977
    %3083 = vmatpush.msra.mxu0 %v2974
    %3084 = vmatpush.msra.mxu0 %v2971
    %3085 = vmatpush.msra.mxu0 %v2968
    %3086 = vmatpush.msra.mxu0 %v2965
    %3087 = vmatpush.msra.mxu0 %v2962
    %3088 = vmatpush.msra.mxu0 %v2959
    %3089 = vmatpush.msra.mxu0 %v2956
    %3090 = vmatpush.msra.mxu0 %v2953
    %3091 = vmatpush.msra.mxu0 %v2950
    %3092 = vmatpush.msra.mxu0 %v2947
    %3093 = vmatpush.msra.mxu0 %v2944
    %3094 = vmatpush.msra.mxu0 %v2941
    %3095 = vmatmul.f32.gmra.mxu0 %v2939
    %v3096 = vpop.f32.mrf.mxu0
    %v3097 = vadd.f32 %v3037, %v3096
    %3098 = vdwg.mxu0
    %3099 = vmatpush.msra.mxu0 %v3034
    %3100 = vmatpush.msra.mxu0 %v3031
    %3101 = vmatpush.msra.mxu0 %v3028
    %3102 = vmatpush.msra.mxu0 %v3025
    %3103 = vmatpush.msra.mxu0 %v3022
    %3104 = vmatpush.msra.mxu0 %v3019
    %3105 = vmatpush.msra.mxu0 %v3016
    %3106 = vmatpush.msra.mxu0 %v3013
    %3107 = vmatpush.msra.mxu0 %v3010
    %3108 = vmatpush.msra.mxu0 %v3007
    %3109 = vmatpush.msra.mxu0 %v3004
    %3110 = vmatpush.msra.mxu0 %v3001
    %3111 = vmatpush.msra.mxu0 %v2998
    %3112 = vmatpush.msra.mxu0 %v2995
    %3113 = vmatpush.msra.mxu0 %v2992
    %3114 = vmatpush.msra.mxu0 %v2989
    %3115 = vmatmul.f32.gmra.mxu0 %v2897
    %v3116 = vpop.f32.mrf.mxu0
    %v3117 = vadd.f32 %v3097, %v3116
    %3118 = vdwg.mxu0
    %3119 = vmatpush.msra.mxu0 %v2987
    %3120 = vmatpush.msra.mxu0 %v2984
    %3121 = vmatpush.msra.mxu0 %v2981
    %3122 = vmatpush.msra.mxu0 %v2978
    %3123 = vmatpush.msra.mxu0 %v2975
    %3124 = vmatpush.msra.mxu0 %v2972
    %3125 = vmatpush.msra.mxu0 %v2969
    %3126 = vmatpush.msra.mxu0 %v2966
    %3127 = vmatpush.msra.mxu0 %v2963
    %3128 = vmatpush.msra.mxu0 %v2960
    %3129 = vmatpush.msra.mxu0 %v2957
    %3130 = vmatpush.msra.mxu0 %v2954
    %3131 = vmatpush.msra.mxu0 %v2951
    %3132 = vmatpush.msra.mxu0 %v2948
    %3133 = vmatpush.msra.mxu0 %v2945
    %3134 = vmatpush.msra.mxu0 %v2942
    %3135 = vmatmul.f32.gmra.mxu0 %v2939
    %v3136 = vpop.f32.mrf.mxu0
    %v3137 = vadd.f32 %v3038, %v3136
    %3138 = vdwg.mxu0
    %3139 = vmatpush.msra.mxu0 %v3035
    %3140 = vmatpush.msra.mxu0 %v3032
    %3141 = vmatpush.msra.mxu0 %v3029
    %3142 = vmatpush.msra.mxu0 %v3026
    %3143 = vmatpush.msra.mxu0 %v3023
    %3144 = vmatpush.msra.mxu0 %v3020
    %3145 = vmatpush.msra.mxu0 %v3017
    %3146 = vmatpush.msra.mxu0 %v3014
    %3147 = vmatpush.msra.mxu0 %v3011
    %3148 = vmatpush.msra.mxu0 %v3008
    %3149 = vmatpush.msra.mxu0 %v3005
    %3150 = vmatpush.msra.mxu0 %v3002
    %3151 = vmatpush.msra.mxu0 %v2999
    %3152 = vmatpush.msra.mxu0 %v2996
    %3153 = vmatpush.msra.mxu0 %v2993
    %3154 = vmatpush.msra.mxu0 %v2990
    %3155 = vmatmul.f32.gmra.mxu0 %v2897
    %v3156 = vpop.f32.mrf.mxu0
    %v3157 = vadd.f32 %v3137, %v3156
    %3158 = vdwg.mxu0
    %v3159 = vmul.f32 %v3077, 0.5
    %v3160 = vtanh.pop %v3159
    %v3161 = vmul.f32 %v3160, 0.5
    %v3162 = vadd.f32 %v3161, 0.5
    %v3163 = vmul.f32 %v3117, 0.5
    %v3164 = vtanh.pop %v3163
    %v3165 = vmul.f32 %v3164, 0.5
    %v3166 = vadd.f32 %v3165, 0.5
    %v3167 = vmul.f32 %v3162, %v2897
    %v3168 = vld [vmem:[#allocation11] sm:$0xff]
    %v3169 = vld [vmem:[#allocation11 + $0x8] sm:$0xff]
    %v3170 = vld [vmem:[#allocation11 + $0x10] sm:$0xff]
    %v3171 = vld [vmem:[#allocation11 + $0x18] sm:$0xff]
    %v3172 = vld [vmem:[#allocation11 + $0x20] sm:$0xff]
    %v3173 = vld [vmem:[#allocation11 + $0x28] sm:$0xff]
    %v3174 = vld [vmem:[#allocation11 + $0x30] sm:$0xff]
    %v3175 = vld [vmem:[#allocation11 + $0x38] sm:$0xff]
    %v3176 = vld [vmem:[#allocation11 + $0x40] sm:$0xff]
    %v3177 = vld [vmem:[#allocation11 + $0x48] sm:$0xff]
    %v3178 = vld [vmem:[#allocation11 + $0x50] sm:$0xff]
    %v3179 = vld [vmem:[#allocation11 + $0x58] sm:$0xff]
    %v3180 = vld [vmem:[#allocation11 + $0x60] sm:$0xff]
    %v3181 = vld [vmem:[#allocation11 + $0x68] sm:$0xff]
    %v3182 = vld [vmem:[#allocation11 + $0x70] sm:$0xff]
    %v3183 = vld [vmem:[#allocation11 + $0x78] sm:$0xff]
    %3184 = vmatpush.msra.mxu0 %v3183
    %3185 = vmatpush.msra.mxu0 %v3182
    %3186 = vmatpush.msra.mxu0 %v3181
    %3187 = vmatpush.msra.mxu0 %v3180
    %3188 = vmatpush.msra.mxu0 %v3179
    %3189 = vmatpush.msra.mxu0 %v3178
    %3190 = vmatpush.msra.mxu0 %v3177
    %3191 = vmatpush.msra.mxu0 %v3176
    %3192 = vmatpush.msra.mxu0 %v3175
    %3193 = vmatpush.msra.mxu0 %v3174
    %3194 = vmatpush.msra.mxu0 %v3173
    %3195 = vmatpush.msra.mxu0 %v3172
    %3196 = vmatpush.msra.mxu0 %v3171
    %3197 = vmatpush.msra.mxu0 %v3170
    %3198 = vmatpush.msra.mxu0 %v3169
    %3199 = vmatpush.msra.mxu0 %v3168
    %3200 = vmatmul.f32.gmra.mxu0 %v3167
    %v3201 = vpop.f32.mrf.mxu0
    %v3202 = vadd.f32 0.0, %v3201
    %3203 = vdwg.mxu0
    %v3204 = vadd.f32 %v3157, %v3202
    %v3205 = vtanh.pop %v3204
    %v3206 = vsub.f32 %v2897, %v3205
    %v3207 = vmul.f32 %v3166, %v3206
    %v3208 = vadd.f32 %v3205, %v3207
    %v3209 = vmax.f32 %v3208, -5.0
    %v3210 = vmin.f32 %v3209, 5.0
    %s3211 = scalar_lea.vmem [#allocation14], 72
    %3212 = vst [vmem:[%s3211] sm:$0xff] %v3210
    %v3213 = vld [vmem:[#allocation12] sm:$0xff]
    %v3214 = vld [vmem:[#allocation12 + $0x8] sm:$0xff]
    %v3215 = vld [vmem:[#allocation12 + $0x10] sm:$0xff]
    %v3216 = vld [vmem:[#allocation12 + $0x18] sm:$0xff]
    %v3217 = vld [vmem:[#allocation12 + $0x20] sm:$0xff]
    %v3218 = vld [vmem:[#allocation12 + $0x28] sm:$0xff]
    %v3219 = vld [vmem:[#allocation12 + $0x30] sm:$0xff]
    %v3220 = vld [vmem:[#allocation12 + $0x38] sm:$0xff]
    %v3221 = vld [vmem:[#allocation12 + $0x40] sm:$0xff]
    %v3222 = vld [vmem:[#allocation12 + $0x48] sm:$0xff]
    %v3223 = vld [vmem:[#allocation12 + $0x50] sm:$0xff]
    %v3224 = vld [vmem:[#allocation12 + $0x58] sm:$0xff]
    %v3225 = vld [vmem:[#allocation12 + $0x60] sm:$0xff]
    %v3226 = vld [vmem:[#allocation12 + $0x68] sm:$0xff]
    %v3227 = vld [vmem:[#allocation12 + $0x70] sm:$0xff]
    %v3228 = vld [vmem:[#allocation12 + $0x78] sm:$0xff]
    %3229 = vmatpush.msra.mxu0 %v3228
    %3230 = vmatpush.msra.mxu0 %v3227
    %3231 = vmatpush.msra.mxu0 %v3226
    %3232 = vmatpush.msra.mxu0 %v3225
    %3233 = vmatpush.msra.mxu0 %v3224
    %3234 = vmatpush.msra.mxu0 %v3223
    %3235 = vmatpush.msra.mxu0 %v3222
    %3236 = vmatpush.msra.mxu0 %v3221
    %3237 = vmatpush.msra.mxu0 %v3220
    %3238 = vmatpush.msra.mxu0 %v3219
    %3239 = vmatpush.msra.mxu0 %v3218
    %3240 = vmatpush.msra.mxu0 %v3217
    %3241 = vmatpush.msra.mxu0 %v3216
    %3242 = vmatpush.msra.mxu0 %v3215
    %3243 = vmatpush.msra.mxu0 %v3214
    %3244 = vmatpush.msra.mxu0 %v3213
    %3245 = vmatmul.f32.gmra.mxu0 %v3210
    %v3246 = vpop.f32.mrf.mxu0
    %v3247 = vadd.f32 0.0, %v3246
    %3248 = vdwg.mxu0
    %s3249 = scalar_lea.vmem [#allocation15], 72
    %3250 = vst [vmem:[%s3249] sm:$0xff] %v3247
    %s3251 = scalar_lea.vmem [#allocation3], 80
    %v3252 = vld [vmem:[%s3251] sm:$0xff]
    %v3253 = vld [vmem:[#allocation8] sm:$0xff]
    %v3254 = vld [vmem:[#allocation8 + $0x8] sm:$0xff]
    %v3255 = vld [vmem:[#allocation8 + $0x10] sm:$0xff]
    %v3256 = vld [vmem:[#allocation8 + $0x18] sm:$0xff]
    %v3257 = vld [vmem:[#allocation8 + $0x20] sm:$0xff]
    %v3258 = vld [vmem:[#allocation8 + $0x28] sm:$0xff]
    %v3259 = vld [vmem:[#allocation8 + $0x30] sm:$0xff]
    %v3260 = vld [vmem:[#allocation8 + $0x38] sm:$0xff]
    %v3261 = vld [vmem:[#allocation8 + $0x40] sm:$0xff]
    %v3262 = vld [vmem:[#allocation8 + $0x48] sm:$0xff]
    %v3263 = vld [vmem:[#allocation8 + $0x50] sm:$0xff]
    %v3264 = vld [vmem:[#allocation8 + $0x58] sm:$0xff]
    %v3265 = vld [vmem:[#allocation8 + $0x60] sm:$0xff]
    %v3266 = vld [vmem:[#allocation8 + $0x68] sm:$0xff]
    %v3267 = vld [vmem:[#allocation8 + $0x70] sm:$0xff]
    %v3268 = vld [vmem:[#allocation8 + $0x78] sm:$0xff]
    %v3269 = vld [vmem:[#allocation8 + $0x80] sm:$0xff]
    %v3270 = vld [vmem:[#allocation8 + $0x88] sm:$0xff]
    %v3271 = vld [vmem:[#allocation8 + $0x90] sm:$0xff]
    %v3272 = vld [vmem:[#allocation8 + $0x98] sm:$0xff]
    %v3273 = vld [vmem:[#allocation8 + $0xa0] sm:$0xff]
    %v3274 = vld [vmem:[#allocation8 + $0xa8] sm:$0xff]
    %v3275 = vld [vmem:[#allocation8 + $0xb0] sm:$0xff]
    %v3276 = vld [vmem:[#allocation8 + $0xb8] sm:$0xff]
    %v3277 = vld [vmem:[#allocation8 + $0xc0] sm:$0xff]
    %v3278 = vld [vmem:[#allocation8 + $0xc8] sm:$0xff]
    %v3279 = vld [vmem:[#allocation8 + $0xd0] sm:$0xff]
    %v3280 = vld [vmem:[#allocation8 + $0xd8] sm:$0xff]
    %v3281 = vld [vmem:[#allocation8 + $0xe0] sm:$0xff]
    %v3282 = vld [vmem:[#allocation8 + $0xe8] sm:$0xff]
    %v3283 = vld [vmem:[#allocation8 + $0xf0] sm:$0xff]
    %v3284 = vld [vmem:[#allocation8 + $0xf8] sm:$0xff]
    %v3285 = vld [vmem:[#allocation8 + $0x100] sm:$0xff]
    %v3286 = vld [vmem:[#allocation8 + $0x108] sm:$0xff]
    %v3287 = vld [vmem:[#allocation8 + $0x110] sm:$0xff]
    %v3288 = vld [vmem:[#allocation8 + $0x118] sm:$0xff]
    %v3289 = vld [vmem:[#allocation8 + $0x120] sm:$0xff]
    %v3290 = vld [vmem:[#allocation8 + $0x128] sm:$0xff]
    %v3291 = vld [vmem:[#allocation8 + $0x130] sm:$0xff]
    %v3292 = vld [vmem:[#allocation8 + $0x138] sm:$0xff]
    %v3293 = vld [vmem:[#allocation8 + $0x140] sm:$0xff]
    %v3294 = vld [vmem:[#allocation8 + $0x148] sm:$0xff]
    %v3295 = vld [vmem:[#allocation8 + $0x150] sm:$0xff]
    %v3296 = vld [vmem:[#allocation8 + $0x158] sm:$0xff]
    %v3297 = vld [vmem:[#allocation8 + $0x160] sm:$0xff]
    %v3298 = vld [vmem:[#allocation8 + $0x168] sm:$0xff]
    %v3299 = vld [vmem:[#allocation8 + $0x170] sm:$0xff]
    %v3300 = vld [vmem:[#allocation8 + $0x178] sm:$0xff]
    %v3301 = vld [vmem:[#allocation8 + $0x180] sm:$0xff]
    %v3302 = vld [vmem:[#allocation8 + $0x188] sm:$0xff]
    %v3303 = vld [vmem:[#allocation8 + $0x190] sm:$0xff]
    %v3304 = vld [vmem:[#allocation8 + $0x198] sm:$0xff]
    %v3305 = vld [vmem:[#allocation8 + $0x1a0] sm:$0xff]
    %v3306 = vld [vmem:[#allocation8 + $0x1a8] sm:$0xff]
    %v3307 = vld [vmem:[#allocation8 + $0x1b0] sm:$0xff]
    %v3308 = vld [vmem:[#allocation8 + $0x1b8] sm:$0xff]
    %v3309 = vld [vmem:[#allocation8 + $0x1c0] sm:$0xff]
    %v3310 = vld [vmem:[#allocation8 + $0x1c8] sm:$0xff]
    %v3311 = vld [vmem:[#allocation8 + $0x1d0] sm:$0xff]
    %v3312 = vld [vmem:[#allocation8 + $0x1d8] sm:$0xff]
    %v3313 = vld [vmem:[#allocation8 + $0x1e0] sm:$0xff]
    %v3314 = vld [vmem:[#allocation8 + $0x1e8] sm:$0xff]
    %v3315 = vld [vmem:[#allocation8 + $0x1f0] sm:$0xff]
    %v3316 = vld [vmem:[#allocation8 + $0x1f8] sm:$0xff]
    %v3317 = vld [vmem:[#allocation8 + $0x200] sm:$0xff]
    %v3318 = vld [vmem:[#allocation8 + $0x208] sm:$0xff]
    %v3319 = vld [vmem:[#allocation8 + $0x210] sm:$0xff]
    %v3320 = vld [vmem:[#allocation8 + $0x218] sm:$0xff]
    %v3321 = vld [vmem:[#allocation8 + $0x220] sm:$0xff]
    %v3322 = vld [vmem:[#allocation8 + $0x228] sm:$0xff]
    %v3323 = vld [vmem:[#allocation8 + $0x230] sm:$0xff]
    %v3324 = vld [vmem:[#allocation8 + $0x238] sm:$0xff]
    %v3325 = vld [vmem:[#allocation8 + $0x240] sm:$0xff]
    %v3326 = vld [vmem:[#allocation8 + $0x248] sm:$0xff]
    %v3327 = vld [vmem:[#allocation8 + $0x250] sm:$0xff]
    %v3328 = vld [vmem:[#allocation8 + $0x258] sm:$0xff]
    %v3329 = vld [vmem:[#allocation8 + $0x260] sm:$0xff]
    %v3330 = vld [vmem:[#allocation8 + $0x268] sm:$0xff]
    %v3331 = vld [vmem:[#allocation8 + $0x270] sm:$0xff]
    %v3332 = vld [vmem:[#allocation8 + $0x278] sm:$0xff]
    %v3333 = vld [vmem:[#allocation8 + $0x280] sm:$0xff]
    %v3334 = vld [vmem:[#allocation8 + $0x288] sm:$0xff]
    %v3335 = vld [vmem:[#allocation8 + $0x290] sm:$0xff]
    %v3336 = vld [vmem:[#allocation8 + $0x298] sm:$0xff]
    %v3337 = vld [vmem:[#allocation8 + $0x2a0] sm:$0xff]
    %v3338 = vld [vmem:[#allocation8 + $0x2a8] sm:$0xff]
    %v3339 = vld [vmem:[#allocation8 + $0x2b0] sm:$0xff]
    %v3340 = vld [vmem:[#allocation8 + $0x2b8] sm:$0xff]
    %v3341 = vld [vmem:[#allocation8 + $0x2c0] sm:$0xff]
    %v3342 = vld [vmem:[#allocation8 + $0x2c8] sm:$0xff]
    %v3343 = vld [vmem:[#allocation8 + $0x2d0] sm:$0xff]
    %v3344 = vld [vmem:[#allocation8 + $0x2d8] sm:$0xff]
    %v3345 = vld [vmem:[#allocation8 + $0x2e0] sm:$0xff]
    %v3346 = vld [vmem:[#allocation8 + $0x2e8] sm:$0xff]
    %v3347 = vld [vmem:[#allocation8 + $0x2f0] sm:$0xff]
    %v3348 = vld [vmem:[#allocation8 + $0x2f8] sm:$0xff]
    %v3349 = vld [vmem:[#allocation9] sm:$0xff]
    %v3350 = vld [vmem:[#allocation9 + $0x8] sm:$0xff]
    %v3351 = vld [vmem:[#allocation9 + $0x10] sm:$0xff]
    %3352 = vmatpush.msra.mxu0 %v3298
    %3353 = vmatpush.msra.mxu0 %v3295
    %3354 = vmatpush.msra.mxu0 %v3292
    %3355 = vmatpush.msra.mxu0 %v3289
    %3356 = vmatpush.msra.mxu0 %v3286
    %3357 = vmatpush.msra.mxu0 %v3283
    %3358 = vmatpush.msra.mxu0 %v3280
    %3359 = vmatpush.msra.mxu0 %v3277
    %3360 = vmatpush.msra.mxu0 %v3274
    %3361 = vmatpush.msra.mxu0 %v3271
    %3362 = vmatpush.msra.mxu0 %v3268
    %3363 = vmatpush.msra.mxu0 %v3265
    %3364 = vmatpush.msra.mxu0 %v3262
    %3365 = vmatpush.msra.mxu0 %v3259
    %3366 = vmatpush.msra.mxu0 %v3256
    %3367 = vmatpush.msra.mxu0 %v3253
    %3368 = vmatmul.f32.gmra.mxu0 %v3252
    %v3369 = vpop.f32.mrf.mxu0
    %v3370 = vadd.f32 %v3349, %v3369
    %3371 = vdwg.mxu0
    %3372 = vmatpush.msra.mxu0 %v3346
    %3373 = vmatpush.msra.mxu0 %v3343
    %3374 = vmatpush.msra.mxu0 %v3340
    %3375 = vmatpush.msra.mxu0 %v3337
    %3376 = vmatpush.msra.mxu0 %v3334
    %3377 = vmatpush.msra.mxu0 %v3331
    %3378 = vmatpush.msra.mxu0 %v3328
    %3379 = vmatpush.msra.mxu0 %v3325
    %3380 = vmatpush.msra.mxu0 %v3322
    %3381 = vmatpush.msra.mxu0 %v3319
    %3382 = vmatpush.msra.mxu0 %v3316
    %3383 = vmatpush.msra.mxu0 %v3313
    %3384 = vmatpush.msra.mxu0 %v3310
    %3385 = vmatpush.msra.mxu0 %v3307
    %3386 = vmatpush.msra.mxu0 %v3304
    %3387 = vmatpush.msra.mxu0 %v3301
    %3388 = vmatmul.f32.gmra.mxu0 %v3210
    %v3389 = vpop.f32.mrf.mxu0
    %v3390 = vadd.f32 %v3370, %v3389
    %3391 = vdwg.mxu0
    %3392 = vmatpush.msra.mxu0 %v3299
    %3393 = vmatpush.msra.mxu0 %v3296
    %3394 = vmatpush.msra.mxu0 %v3293
    %3395 = vmatpush.msra.mxu0 %v3290
    %3396 = vmatpush.msra.mxu0 %v3287
    %3397 = vmatpush.msra.mxu0 %v3284
    %3398 = vmatpush.msra.mxu0 %v3281
    %3399 = vmatpush.msra.mxu0 %v3278
    %3400 = vmatpush.msra.mxu0 %v3275
    %3401 = vmatpush.msra.mxu0 %v3272
    %3402 = vmatpush.msra.mxu0 %v3269
    %3403 = vmatpush.msra.mxu0 %v3266
    %3404 = vmatpush.msra.mxu0 %v3263
    %3405 = vmatpush.msra.mxu0 %v3260
    %3406 = vmatpush.msra.mxu0 %v3257
    %3407 = vmatpush.msra.mxu0 %v3254
    %3408 = vmatmul.f32.gmra.mxu0 %v3252
    %v3409 = vpop.f32.mrf.mxu0
    %v3410 = vadd.f32 %v3350, %v3409
    %3411 = vdwg.mxu0
    %3412 = vmatpush.msra.mxu0 %v3347
    %3413 = vmatpush.msra.mxu0 %v3344
    %3414 = vmatpush.msra.mxu0 %v3341
    %3415 = vmatpush.msra.mxu0 %v3338
    %3416 = vmatpush.msra.mxu0 %v3335
    %3417 = vmatpush.msra.mxu0 %v3332
    %3418 = vmatpush.msra.mxu0 %v3329
    %3419 = vmatpush.msra.mxu0 %v3326
    %3420 = vmatpush.msra.mxu0 %v3323
    %3421 = vmatpush.msra.mxu0 %v3320
    %3422 = vmatpush.msra.mxu0 %v3317
    %3423 = vmatpush.msra.mxu0 %v3314
    %3424 = vmatpush.msra.mxu0 %v3311
    %3425 = vmatpush.msra.mxu0 %v3308
    %3426 = vmatpush.msra.mxu0 %v3305
    %3427 = vmatpush.msra.mxu0 %v3302
    %3428 = vmatmul.f32.gmra.mxu0 %v3210
    %v3429 = vpop.f32.mrf.mxu0
    %v3430 = vadd.f32 %v3410, %v3429
    %3431 = vdwg.mxu0
    %3432 = vmatpush.msra.mxu0 %v3300
    %3433 = vmatpush.msra.mxu0 %v3297
    %3434 = vmatpush.msra.mxu0 %v3294
    %3435 = vmatpush.msra.mxu0 %v3291
    %3436 = vmatpush.msra.mxu0 %v3288
    %3437 = vmatpush.msra.mxu0 %v3285
    %3438 = vmatpush.msra.mxu0 %v3282
    %3439 = vmatpush.msra.mxu0 %v3279
    %3440 = vmatpush.msra.mxu0 %v3276
    %3441 = vmatpush.msra.mxu0 %v3273
    %3442 = vmatpush.msra.mxu0 %v3270
    %3443 = vmatpush.msra.mxu0 %v3267
    %3444 = vmatpush.msra.mxu0 %v3264
    %3445 = vmatpush.msra.mxu0 %v3261
    %3446 = vmatpush.msra.mxu0 %v3258
    %3447 = vmatpush.msra.mxu0 %v3255
    %3448 = vmatmul.f32.gmra.mxu0 %v3252
    %v3449 = vpop.f32.mrf.mxu0
    %v3450 = vadd.f32 %v3351, %v3449
    %3451 = vdwg.mxu0
    %3452 = vmatpush.msra.mxu0 %v3348
    %3453 = vmatpush.msra.mxu0 %v3345
    %3454 = vmatpush.msra.mxu0 %v3342
    %3455 = vmatpush.msra.mxu0 %v3339
    %3456 = vmatpush.msra.mxu0 %v3336
    %3457 = vmatpush.msra.mxu0 %v3333
    %3458 = vmatpush.msra.mxu0 %v3330
    %3459 = vmatpush.msra.mxu0 %v3327
    %3460 = vmatpush.msra.mxu0 %v3324
    %3461 = vmatpush.msra.mxu0 %v3321
    %3462 = vmatpush.msra.mxu0 %v3318
    %3463 = vmatpush.msra.mxu0 %v3315
    %3464 = vmatpush.msra.mxu0 %v3312
    %3465 = vmatpush.msra.mxu0 %v3309
    %3466 = vmatpush.msra.mxu0 %v3306
    %3467 = vmatpush.msra.mxu0 %v3303
    %3468 = vmatmul.f32.gmra.mxu0 %v3210
    %v3469 = vpop.f32.mrf.mxu0
    %v3470 = vadd.f32 %v3450, %v3469
    %3471 = vdwg.mxu0
    %v3472 = vmul.f32 %v3390, 0.5
    %v3473 = vtanh.pop %v3472
    %v3474 = vmul.f32 %v3473, 0.5
    %v3475 = vadd.f32 %v3474, 0.5
    %v3476 = vmul.f32 %v3430, 0.5
    %v3477 = vtanh.pop %v3476
    %v3478 = vmul.f32 %v3477, 0.5
    %v3479 = vadd.f32 %v3478, 0.5
    %v3480 = vmul.f32 %v3475, %v3210
    %v3481 = vld [vmem:[#allocation11] sm:$0xff]
    %v3482 = vld [vmem:[#allocation11 + $0x8] sm:$0xff]
    %v3483 = vld [vmem:[#allocation11 + $0x10] sm:$0xff]
    %v3484 = vld [vmem:[#allocation11 + $0x18] sm:$0xff]
    %v3485 = vld [vmem:[#allocation11 + $0x20] sm:$0xff]
    %v3486 = vld [vmem:[#allocation11 + $0x28] sm:$0xff]
    %v3487 = vld [vmem:[#allocation11 + $0x30] sm:$0xff]
    %v3488 = vld [vmem:[#allocation11 + $0x38] sm:$0xff]
    %v3489 = vld [vmem:[#allocation11 + $0x40] sm:$0xff]
    %v3490 = vld [vmem:[#allocation11 + $0x48] sm:$0xff]
    %v3491 = vld [vmem:[#allocation11 + $0x50] sm:$0xff]
    %v3492 = vld [vmem:[#allocation11 + $0x58] sm:$0xff]
    %v3493 = vld [vmem:[#allocation11 + $0x60] sm:$0xff]
    %v3494 = vld [vmem:[#allocation11 + $0x68] sm:$0xff]
    %v3495 = vld [vmem:[#allocation11 + $0x70] sm:$0xff]
    %v3496 = vld [vmem:[#allocation11 + $0x78] sm:$0xff]
    %3497 = vmatpush.msra.mxu0 %v3496
    %3498 = vmatpush.msra.mxu0 %v3495
    %3499 = vmatpush.msra.mxu0 %v3494
    %3500 = vmatpush.msra.mxu0 %v3493
    %3501 = vmatpush.msra.mxu0 %v3492
    %3502 = vmatpush.msra.mxu0 %v3491
    %3503 = vmatpush.msra.mxu0 %v3490
    %3504 = vmatpush.msra.mxu0 %v3489
    %3505 = vmatpush.msra.mxu0 %v3488
    %3506 = vmatpush.msra.mxu0 %v3487
    %3507 = vmatpush.msra.mxu0 %v3486
    %3508 = vmatpush.msra.mxu0 %v3485
    %3509 = vmatpush.msra.mxu0 %v3484
    %3510 = vmatpush.msra.mxu0 %v3483
    %3511 = vmatpush.msra.mxu0 %v3482
    %3512 = vmatpush.msra.mxu0 %v3481
    %3513 = vmatmul.f32.gmra.mxu0 %v3480
    %v3514 = vpop.f32.mrf.mxu0
    %v3515 = vadd.f32 0.0, %v3514
    %3516 = vdwg.mxu0
    %v3517 = vadd.f32 %v3470, %v3515
    %v3518 = vtanh.pop %v3517
    %v3519 = vsub.f32 %v3210, %v3518
    %v3520 = vmul.f32 %v3479, %v3519
    %v3521 = vadd.f32 %v3518, %v3520
    %v3522 = vmax.f32 %v3521, -5.0
    %v3523 = vmin.f32 %v3522, 5.0
    %s3524 = scalar_lea.vmem [#allocation14], 80
    %3525 = vst [vmem:[%s3524] sm:$0xff] %v3523
    %v3526 = vld [vmem:[#allocation12] sm:$0xff]
    %v3527 = vld [vmem:[#allocation12 + $0x8] sm:$0xff]
    %v3528 = vld [vmem:[#allocation12 + $0x10] sm:$0xff]
    %v3529 = vld [vmem:[#allocation12 + $0x18] sm:$0xff]
    %v3530 = vld [vmem:[#allocation12 + $0x20] sm:$0xff]
    %v3531 = vld [vmem:[#allocation12 + $0x28] sm:$0xff]
    %v3532 = vld [vmem:[#allocation12 + $0x30] sm:$0xff]
    %v3533 = vld [vmem:[#allocation12 + $0x38] sm:$0xff]
    %v3534 = vld [vmem:[#allocation12 + $0x40] sm:$0xff]
    %v3535 = vld [vmem:[#allocation12 + $0x48] sm:$0xff]
    %v3536 = vld [vmem:[#allocation12 + $0x50] sm:$0xff]
    %v3537 = vld [vmem:[#allocation12 + $0x58] sm:$0xff]
    %v3538 = vld [vmem:[#allocation12 + $0x60] sm:$0xff]
    %v3539 = vld [vmem:[#allocation12 + $0x68] sm:$0xff]
    %v3540 = vld [vmem:[#allocation12 + $0x70] sm:$0xff]
    %v3541 = vld [vmem:[#allocation12 + $0x78] sm:$0xff]
    %3542 = vmatpush.msra.mxu0 %v3541
    %3543 = vmatpush.msra.mxu0 %v3540
    %3544 = vmatpush.msra.mxu0 %v3539
    %3545 = vmatpush.msra.mxu0 %v3538
    %3546 = vmatpush.msra.mxu0 %v3537
    %3547 = vmatpush.msra.mxu0 %v3536
    %3548 = vmatpush.msra.mxu0 %v3535
    %3549 = vmatpush.msra.mxu0 %v3534
    %3550 = vmatpush.msra.mxu0 %v3533
    %3551 = vmatpush.msra.mxu0 %v3532
    %3552 = vmatpush.msra.mxu0 %v3531
    %3553 = vmatpush.msra.mxu0 %v3530
    %3554 = vmatpush.msra.mxu0 %v3529
    %3555 = vmatpush.msra.mxu0 %v3528
    %3556 = vmatpush.msra.mxu0 %v3527
    %3557 = vmatpush.msra.mxu0 %v3526
    %3558 = vmatmul.f32.gmra.mxu0 %v3523
    %v3559 = vpop.f32.mrf.mxu0
    %v3560 = vadd.f32 0.0, %v3559
    %3561 = vdwg.mxu0
    %s3562 = scalar_lea.vmem [#allocation15], 80
    %3563 = vst [vmem:[%s3562] sm:$0xff] %v3560
    %s3564 = scalar_lea.vmem [#allocation3], 88
    %v3565 = vld [vmem:[%s3564] sm:$0xff]
    %v3566 = vld [vmem:[#allocation8] sm:$0xff]
    %v3567 = vld [vmem:[#allocation8 + $0x8] sm:$0xff]
    %v3568 = vld [vmem:[#allocation8 + $0x10] sm:$0xff]
    %v3569 = vld [vmem:[#allocation8 + $0x18] sm:$0xff]
    %v3570 = vld [vmem:[#allocation8 + $0x20] sm:$0xff]
    %v3571 = vld [vmem:[#allocation8 + $0x28] sm:$0xff]
    %v3572 = vld [vmem:[#allocation8 + $0x30] sm:$0xff]
    %v3573 = vld [vmem:[#allocation8 + $0x38] sm:$0xff]
    %v3574 = vld [vmem:[#allocation8 + $0x40] sm:$0xff]
    %v3575 = vld [vmem:[#allocation8 + $0x48] sm:$0xff]
    %v3576 = vld [vmem:[#allocation8 + $0x50] sm:$0xff]
    %v3577 = vld [vmem:[#allocation8 + $0x58] sm:$0xff]
    %v3578 = vld [vmem:[#allocation8 + $0x60] sm:$0xff]
    %v3579 = vld [vmem:[#allocation8 + $0x68] sm:$0xff]
    %v3580 = vld [vmem:[#allocation8 + $0x70] sm:$0xff]
    %v3581 = vld [vmem:[#allocation8 + $0x78] sm:$0xff]
    %v3582 = vld [vmem:[#allocation8 + $0x80] sm:$0xff]
    %v3583 = vld [vmem:[#allocation8 + $0x88] sm:$0xff]
    %v3584 = vld [vmem:[#allocation8 + $0x90] sm:$0xff]
    %v3585 = vld [vmem:[#allocation8 + $0x98] sm:$0xff]
    %v3586 = vld [vmem:[#allocation8 + $0xa0] sm:$0xff]
    %v3587 = vld [vmem:[#allocation8 + $0xa8] sm:$0xff]
    %v3588 = vld [vmem:[#allocation8 + $0xb0] sm:$0xff]
    %v3589 = vld [vmem:[#allocation8 + $0xb8] sm:$0xff]
    %v3590 = vld [vmem:[#allocation8 + $0xc0] sm:$0xff]
    %v3591 = vld [vmem:[#allocation8 + $0xc8] sm:$0xff]
    %v3592 = vld [vmem:[#allocation8 + $0xd0] sm:$0xff]
    %v3593 = vld [vmem:[#allocation8 + $0xd8] sm:$0xff]
    %v3594 = vld [vmem:[#allocation8 + $0xe0] sm:$0xff]
    %v3595 = vld [vmem:[#allocation8 + $0xe8] sm:$0xff]
    %v3596 = vld [vmem:[#allocation8 + $0xf0] sm:$0xff]
    %v3597 = vld [vmem:[#allocation8 + $0xf8] sm:$0xff]
    %v3598 = vld [vmem:[#allocation8 + $0x100] sm:$0xff]
    %v3599 = vld [vmem:[#allocation8 + $0x108] sm:$0xff]
    %v3600 = vld [vmem:[#allocation8 + $0x110] sm:$0xff]
    %v3601 = vld [vmem:[#allocation8 + $0x118] sm:$0xff]
    %v3602 = vld [vmem:[#allocation8 + $0x120] sm:$0xff]
    %v3603 = vld [vmem:[#allocation8 + $0x128] sm:$0xff]
    %v3604 = vld [vmem:[#allocation8 + $0x130] sm:$0xff]
    %v3605 = vld [vmem:[#allocation8 + $0x138] sm:$0xff]
    %v3606 = vld [vmem:[#allocation8 + $0x140] sm:$0xff]
    %v3607 = vld [vmem:[#allocation8 + $0x148] sm:$0xff]
    %v3608 = vld [vmem:[#allocation8 + $0x150] sm:$0xff]
    %v3609 = vld [vmem:[#allocation8 + $0x158] sm:$0xff]
    %v3610 = vld [vmem:[#allocation8 + $0x160] sm:$0xff]
    %v3611 = vld [vmem:[#allocation8 + $0x168] sm:$0xff]
    %v3612 = vld [vmem:[#allocation8 + $0x170] sm:$0xff]
    %v3613 = vld [vmem:[#allocation8 + $0x178] sm:$0xff]
    %v3614 = vld [vmem:[#allocation8 + $0x180] sm:$0xff]
    %v3615 = vld [vmem:[#allocation8 + $0x188] sm:$0xff]
    %v3616 = vld [vmem:[#allocation8 + $0x190] sm:$0xff]
    %v3617 = vld [vmem:[#allocation8 + $0x198] sm:$0xff]
    %v3618 = vld [vmem:[#allocation8 + $0x1a0] sm:$0xff]
    %v3619 = vld [vmem:[#allocation8 + $0x1a8] sm:$0xff]
    %v3620 = vld [vmem:[#allocation8 + $0x1b0] sm:$0xff]
    %v3621 = vld [vmem:[#allocation8 + $0x1b8] sm:$0xff]
    %v3622 = vld [vmem:[#allocation8 + $0x1c0] sm:$0xff]
    %v3623 = vld [vmem:[#allocation8 + $0x1c8] sm:$0xff]
    %v3624 = vld [vmem:[#allocation8 + $0x1d0] sm:$0xff]
    %v3625 = vld [vmem:[#allocation8 + $0x1d8] sm:$0xff]
    %v3626 = vld [vmem:[#allocation8 + $0x1e0] sm:$0xff]
    %v3627 = vld [vmem:[#allocation8 + $0x1e8] sm:$0xff]
    %v3628 = vld [vmem:[#allocation8 + $0x1f0] sm:$0xff]
    %v3629 = vld [vmem:[#allocation8 + $0x1f8] sm:$0xff]
    %v3630 = vld [vmem:[#allocation8 + $0x200] sm:$0xff]
    %v3631 = vld [vmem:[#allocation8 + $0x208] sm:$0xff]
    %v3632 = vld [vmem:[#allocation8 + $0x210] sm:$0xff]
    %v3633 = vld [vmem:[#allocation8 + $0x218] sm:$0xff]
    %v3634 = vld [vmem:[#allocation8 + $0x220] sm:$0xff]
    %v3635 = vld [vmem:[#allocation8 + $0x228] sm:$0xff]
    %v3636 = vld [vmem:[#allocation8 + $0x230] sm:$0xff]
    %v3637 = vld [vmem:[#allocation8 + $0x238] sm:$0xff]
    %v3638 = vld [vmem:[#allocation8 + $0x240] sm:$0xff]
    %v3639 = vld [vmem:[#allocation8 + $0x248] sm:$0xff]
    %v3640 = vld [vmem:[#allocation8 + $0x250] sm:$0xff]
    %v3641 = vld [vmem:[#allocation8 + $0x258] sm:$0xff]
    %v3642 = vld [vmem:[#allocation8 + $0x260] sm:$0xff]
    %v3643 = vld [vmem:[#allocation8 + $0x268] sm:$0xff]
    %v3644 = vld [vmem:[#allocation8 + $0x270] sm:$0xff]
    %v3645 = vld [vmem:[#allocation8 + $0x278] sm:$0xff]
    %v3646 = vld [vmem:[#allocation8 + $0x280] sm:$0xff]
    %v3647 = vld [vmem:[#allocation8 + $0x288] sm:$0xff]
    %v3648 = vld [vmem:[#allocation8 + $0x290] sm:$0xff]
    %v3649 = vld [vmem:[#allocation8 + $0x298] sm:$0xff]
    %v3650 = vld [vmem:[#allocation8 + $0x2a0] sm:$0xff]
    %v3651 = vld [vmem:[#allocation8 + $0x2a8] sm:$0xff]
    %v3652 = vld [vmem:[#allocation8 + $0x2b0] sm:$0xff]
    %v3653 = vld [vmem:[#allocation8 + $0x2b8] sm:$0xff]
    %v3654 = vld [vmem:[#allocation8 + $0x2c0] sm:$0xff]
    %v3655 = vld [vmem:[#allocation8 + $0x2c8] sm:$0xff]
    %v3656 = vld [vmem:[#allocation8 + $0x2d0] sm:$0xff]
    %v3657 = vld [vmem:[#allocation8 + $0x2d8] sm:$0xff]
    %v3658 = vld [vmem:[#allocation8 + $0x2e0] sm:$0xff]
    %v3659 = vld [vmem:[#allocation8 + $0x2e8] sm:$0xff]
    %v3660 = vld [vmem:[#allocation8 + $0x2f0] sm:$0xff]
    %v3661 = vld [vmem:[#allocation8 + $0x2f8] sm:$0xff]
    %v3662 = vld [vmem:[#allocation9] sm:$0xff]
    %v3663 = vld [vmem:[#allocation9 + $0x8] sm:$0xff]
    %v3664 = vld [vmem:[#allocation9 + $0x10] sm:$0xff]
    %3665 = vmatpush.msra.mxu0 %v3611
    %3666 = vmatpush.msra.mxu0 %v3608
    %3667 = vmatpush.msra.mxu0 %v3605
    %3668 = vmatpush.msra.mxu0 %v3602
    %3669 = vmatpush.msra.mxu0 %v3599
    %3670 = vmatpush.msra.mxu0 %v3596
    %3671 = vmatpush.msra.mxu0 %v3593
    %3672 = vmatpush.msra.mxu0 %v3590
    %3673 = vmatpush.msra.mxu0 %v3587
    %3674 = vmatpush.msra.mxu0 %v3584
    %3675 = vmatpush.msra.mxu0 %v3581
    %3676 = vmatpush.msra.mxu0 %v3578
    %3677 = vmatpush.msra.mxu0 %v3575
    %3678 = vmatpush.msra.mxu0 %v3572
    %3679 = vmatpush.msra.mxu0 %v3569
    %3680 = vmatpush.msra.mxu0 %v3566
    %3681 = vmatmul.f32.gmra.mxu0 %v3565
    %v3682 = vpop.f32.mrf.mxu0
    %v3683 = vadd.f32 %v3662, %v3682
    %3684 = vdwg.mxu0
    %3685 = vmatpush.msra.mxu0 %v3659
    %3686 = vmatpush.msra.mxu0 %v3656
    %3687 = vmatpush.msra.mxu0 %v3653
    %3688 = vmatpush.msra.mxu0 %v3650
    %3689 = vmatpush.msra.mxu0 %v3647
    %3690 = vmatpush.msra.mxu0 %v3644
    %3691 = vmatpush.msra.mxu0 %v3641
    %3692 = vmatpush.msra.mxu0 %v3638
    %3693 = vmatpush.msra.mxu0 %v3635
    %3694 = vmatpush.msra.mxu0 %v3632
    %3695 = vmatpush.msra.mxu0 %v3629
    %3696 = vmatpush.msra.mxu0 %v3626
    %3697 = vmatpush.msra.mxu0 %v3623
    %3698 = vmatpush.msra.mxu0 %v3620
    %3699 = vmatpush.msra.mxu0 %v3617
    %3700 = vmatpush.msra.mxu0 %v3614
    %3701 = vmatmul.f32.gmra.mxu0 %v3523
    %v3702 = vpop.f32.mrf.mxu0
    %v3703 = vadd.f32 %v3683, %v3702
    %3704 = vdwg.mxu0
    %3705 = vmatpush.msra.mxu0 %v3612
    %3706 = vmatpush.msra.mxu0 %v3609
    %3707 = vmatpush.msra.mxu0 %v3606
    %3708 = vmatpush.msra.mxu0 %v3603
    %3709 = vmatpush.msra.mxu0 %v3600
    %3710 = vmatpush.msra.mxu0 %v3597
    %3711 = vmatpush.msra.mxu0 %v3594
    %3712 = vmatpush.msra.mxu0 %v3591
    %3713 = vmatpush.msra.mxu0 %v3588
    %3714 = vmatpush.msra.mxu0 %v3585
    %3715 = vmatpush.msra.mxu0 %v3582
    %3716 = vmatpush.msra.mxu0 %v3579
    %3717 = vmatpush.msra.mxu0 %v3576
    %3718 = vmatpush.msra.mxu0 %v3573
    %3719 = vmatpush.msra.mxu0 %v3570
    %3720 = vmatpush.msra.mxu0 %v3567
    %3721 = vmatmul.f32.gmra.mxu0 %v3565
    %v3722 = vpop.f32.mrf.mxu0
    %v3723 = vadd.f32 %v3663, %v3722
    %3724 = vdwg.mxu0
    %3725 = vmatpush.msra.mxu0 %v3660
    %3726 = vmatpush.msra.mxu0 %v3657
    %3727 = vmatpush.msra.mxu0 %v3654
    %3728 = vmatpush.msra.mxu0 %v3651
    %3729 = vmatpush.msra.mxu0 %v3648
    %3730 = vmatpush.msra.mxu0 %v3645
    %3731 = vmatpush.msra.mxu0 %v3642
    %3732 = vmatpush.msra.mxu0 %v3639
    %3733 = vmatpush.msra.mxu0 %v3636
    %3734 = vmatpush.msra.mxu0 %v3633
    %3735 = vmatpush.msra.mxu0 %v3630
    %3736 = vmatpush.msra.mxu0 %v3627
    %3737 = vmatpush.msra.mxu0 %v3624
    %3738 = vmatpush.msra.mxu0 %v3621
    %3739 = vmatpush.msra.mxu0 %v3618
    %3740 = vmatpush.msra.mxu0 %v3615
    %3741 = vmatmul.f32.gmra.mxu0 %v3523
    %v3742 = vpop.f32.mrf.mxu0
    %v3743 = vadd.f32 %v3723, %v3742
    %3744 = vdwg.mxu0
    %3745 = vmatpush.msra.mxu0 %v3613
    %3746 = vmatpush.msra.mxu0 %v3610
    %3747 = vmatpush.msra.mxu0 %v3607
    %3748 = vmatpush.msra.mxu0 %v3604
    %3749 = vmatpush.msra.mxu0 %v3601
    %3750 = vmatpush.msra.mxu0 %v3598
    %3751 = vmatpush.msra.mxu0 %v3595
    %3752 = vmatpush.msra.mxu0 %v3592
    %3753 = vmatpush.msra.mxu0 %v3589
    %3754 = vmatpush.msra.mxu0 %v3586
    %3755 = vmatpush.msra.mxu0 %v3583
    %3756 = vmatpush.msra.mxu0 %v3580
    %3757 = vmatpush.msra.mxu0 %v3577
    %3758 = vmatpush.msra.mxu0 %v3574
    %3759 = vmatpush.msra.mxu0 %v3571
    %3760 = vmatpush.msra.mxu0 %v3568
    %3761 = vmatmul.f32.gmra.mxu0 %v3565
    %v3762 = vpop.f32.mrf.mxu0
    %v3763 = vadd.f32 %v3664, %v3762
    %3764 = vdwg.mxu0
    %3765 = vmatpush.msra.mxu0 %v3661
    %3766 = vmatpush.msra.mxu0 %v3658
    %3767 = vmatpush.msra.mxu0 %v3655
    %3768 = vmatpush.msra.mxu0 %v3652
    %3769 = vmatpush.msra.mxu0 %v3649
    %3770 = vmatpush.msra.mxu0 %v3646
    %3771 = vmatpush.msra.mxu0 %v3643
    %3772 = vmatpush.msra.mxu0 %v3640
    %3773 = vmatpush.msra.mxu0 %v3637
    %3774 = vmatpush.msra.mxu0 %v3634
    %3775 = vmatpush.msra.mxu0 %v3631
    %3776 = vmatpush.msra.mxu0 %v3628
    %3777 = vmatpush.msra.mxu0 %v3625
    %3778 = vmatpush.msra.mxu0 %v3622
    %3779 = vmatpush.msra.mxu0 %v3619
    %3780 = vmatpush.msra.mxu0 %v3616
    %3781 = vmatmul.f32.gmra.mxu0 %v3523
    %v3782 = vpop.f32.mrf.mxu0
    %v3783 = vadd.f32 %v3763, %v3782
    %3784 = vdwg.mxu0
    %v3785 = vmul.f32 %v3703, 0.5
    %v3786 = vtanh.pop %v3785
    %v3787 = vmul.f32 %v3786, 0.5
    %v3788 = vadd.f32 %v3787, 0.5
    %v3789 = vmul.f32 %v3743, 0.5
    %v3790 = vtanh.pop %v3789
    %v3791 = vmul.f32 %v3790, 0.5
    %v3792 = vadd.f32 %v3791, 0.5
    %v3793 = vmul.f32 %v3788, %v3523
    %v3794 = vld [vmem:[#allocation11] sm:$0xff]
    %v3795 = vld [vmem:[#allocation11 + $0x8] sm:$0xff]
    %v3796 = vld [vmem:[#allocation11 + $0x10] sm:$0xff]
    %v3797 = vld [vmem:[#allocation11 + $0x18] sm:$0xff]
    %v3798 = vld [vmem:[#allocation11 + $0x20] sm:$0xff]
    %v3799 = vld [vmem:[#allocation11 + $0x28] sm:$0xff]
    %v3800 = vld [vmem:[#allocation11 + $0x30] sm:$0xff]
    %v3801 = vld [vmem:[#allocation11 + $0x38] sm:$0xff]
    %v3802 = vld [vmem:[#allocation11 + $0x40] sm:$0xff]
    %v3803 = vld [vmem:[#allocation11 + $0x48] sm:$0xff]
    %v3804 = vld [vmem:[#allocation11 + $0x50] sm:$0xff]
    %v3805 = vld [vmem:[#allocation11 + $0x58] sm:$0xff]
    %v3806 = vld [vmem:[#allocation11 + $0x60] sm:$0xff]
    %v3807 = vld [vmem:[#allocation11 + $0x68] sm:$0xff]
    %v3808 = vld [vmem:[#allocation11 + $0x70] sm:$0xff]
    %v3809 = vld [vmem:[#allocation11 + $0x78] sm:$0xff]
    %3810 = vmatpush.msra.mxu0 %v3809
    %3811 = vmatpush.msra.mxu0 %v3808
    %3812 = vmatpush.msra.mxu0 %v3807
    %3813 = vmatpush.msra.mxu0 %v3806
    %3814 = vmatpush.msra.mxu0 %v3805
    %3815 = vmatpush.msra.mxu0 %v3804
    %3816 = vmatpush.msra.mxu0 %v3803
    %3817 = vmatpush.msra.mxu0 %v3802
    %3818 = vmatpush.msra.mxu0 %v3801
    %3819 = vmatpush.msra.mxu0 %v3800
    %3820 = vmatpush.msra.mxu0 %v3799
    %3821 = vmatpush.msra.mxu0 %v3798
    %3822 = vmatpush.msra.mxu0 %v3797
    %3823 = vmatpush.msra.mxu0 %v3796
    %3824 = vmatpush.msra.mxu0 %v3795
    %3825 = vmatpush.msra.mxu0 %v3794
    %3826 = vmatmul.f32.gmra.mxu0 %v3793
    %v3827 = vpop.f32.mrf.mxu0
    %v3828 = vadd.f32 0.0, %v3827
    %3829 = vdwg.mxu0
    %v3830 = vadd.f32 %v3783, %v3828
    %v3831 = vtanh.pop %v3830
    %v3832 = vsub.f32 %v3523, %v3831
    %v3833 = vmul.f32 %v3792, %v3832
    %v3834 = vadd.f32 %v3831, %v3833
    %v3835 = vmax.f32 %v3834, -5.0
    %v3836 = vmin.f32 %v3835, 5.0
    %s3837 = scalar_lea.vmem [#allocation14], 88
    %3838 = vst [vmem:[%s3837] sm:$0xff] %v3836
    %v3839 = vld [vmem:[#allocation12] sm:$0xff]
    %v3840 = vld [vmem:[#allocation12 + $0x8] sm:$0xff]
    %v3841 = vld [vmem:[#allocation12 + $0x10] sm:$0xff]
    %v3842 = vld [vmem:[#allocation12 + $0x18] sm:$0xff]
    %v3843 = vld [vmem:[#allocation12 + $0x20] sm:$0xff]
    %v3844 = vld [vmem:[#allocation12 + $0x28] sm:$0xff]
    %v3845 = vld [vmem:[#allocation12 + $0x30] sm:$0xff]
    %v3846 = vld [vmem:[#allocation12 + $0x38] sm:$0xff]
    %v3847 = vld [vmem:[#allocation12 + $0x40] sm:$0xff]
    %v3848 = vld [vmem:[#allocation12 + $0x48] sm:$0xff]
    %v3849 = vld [vmem:[#allocation12 + $0x50] sm:$0xff]
    %v3850 = vld [vmem:[#allocation12 + $0x58] sm:$0xff]
    %v3851 = vld [vmem:[#allocation12 + $0x60] sm:$0xff]
    %v3852 = vld [vmem:[#allocation12 + $0x68] sm:$0xff]
    %v3853 = vld [vmem:[#allocation12 + $0x70] sm:$0xff]
    %v3854 = vld [vmem:[#allocation12 + $0x78] sm:$0xff]
    %3855 = vmatpush.msra.mxu0 %v3854
    %3856 = vmatpush.msra.mxu0 %v3853
    %3857 = vmatpush.msra.mxu0 %v3852
    %3858 = vmatpush.msra.mxu0 %v3851
    %3859 = vmatpush.msra.mxu0 %v3850
    %3860 = vmatpush.msra.mxu0 %v3849
    %3861 = vmatpush.msra.mxu0 %v3848
    %3862 = vmatpush.msra.mxu0 %v3847
    %3863 = vmatpush.msra.mxu0 %v3846
    %3864 = vmatpush.msra.mxu0 %v3845
    %3865 = vmatpush.msra.mxu0 %v3844
    %3866 = vmatpush.msra.mxu0 %v3843
    %3867 = vmatpush.msra.mxu0 %v3842
    %3868 = vmatpush.msra.mxu0 %v3841
    %3869 = vmatpush.msra.mxu0 %v3840
    %3870 = vmatpush.msra.mxu0 %v3839
    %3871 = vmatmul.f32.gmra.mxu0 %v3836
    %v3872 = vpop.f32.mrf.mxu0
    %v3873 = vadd.f32 0.0, %v3872
    %3874 = vdwg.mxu0
    %s3875 = scalar_lea.vmem [#allocation15], 88
    %3876 = vst [vmem:[%s3875] sm:$0xff] %v3873
    %s3877 = scalar_lea.vmem [#allocation3], 96
    %v3878 = vld [vmem:[%s3877] sm:$0xff]
    %v3879 = vld [vmem:[#allocation8] sm:$0xff]
    %v3880 = vld [vmem:[#allocation8 + $0x8] sm:$0xff]
    %v3881 = vld [vmem:[#allocation8 + $0x10] sm:$0xff]
    %v3882 = vld [vmem:[#allocation8 + $0x18] sm:$0xff]
    %v3883 = vld [vmem:[#allocation8 + $0x20] sm:$0xff]
    %v3884 = vld [vmem:[#allocation8 + $0x28] sm:$0xff]
    %v3885 = vld [vmem:[#allocation8 + $0x30] sm:$0xff]
    %v3886 = vld [vmem:[#allocation8 + $0x38] sm:$0xff]
    %v3887 = vld [vmem:[#allocation8 + $0x40] sm:$0xff]
    %v3888 = vld [vmem:[#allocation8 + $0x48] sm:$0xff]
    %v3889 = vld [vmem:[#allocation8 + $0x50] sm:$0xff]
    %v3890 = vld [vmem:[#allocation8 + $0x58] sm:$0xff]
    %v3891 = vld [vmem:[#allocation8 + $0x60] sm:$0xff]
    %v3892 = vld [vmem:[#allocation8 + $0x68] sm:$0xff]
    %v3893 = vld [vmem:[#allocation8 + $0x70] sm:$0xff]
    %v3894 = vld [vmem:[#allocation8 + $0x78] sm:$0xff]
    %v3895 = vld [vmem:[#allocation8 + $0x80] sm:$0xff]
    %v3896 = vld [vmem:[#allocation8 + $0x88] sm:$0xff]
    %v3897 = vld [vmem:[#allocation8 + $0x90] sm:$0xff]
    %v3898 = vld [vmem:[#allocation8 + $0x98] sm:$0xff]
    %v3899 = vld [vmem:[#allocation8 + $0xa0] sm:$0xff]
    %v3900 = vld [vmem:[#allocation8 + $0xa8] sm:$0xff]
    %v3901 = vld [vmem:[#allocation8 + $0xb0] sm:$0xff]
    %v3902 = vld [vmem:[#allocation8 + $0xb8] sm:$0xff]
    %v3903 = vld [vmem:[#allocation8 + $0xc0] sm:$0xff]
    %v3904 = vld [vmem:[#allocation8 + $0xc8] sm:$0xff]
    %v3905 = vld [vmem:[#allocation8 + $0xd0] sm:$0xff]
    %v3906 = vld [vmem:[#allocation8 + $0xd8] sm:$0xff]
    %v3907 = vld [vmem:[#allocation8 + $0xe0] sm:$0xff]
    %v3908 = vld [vmem:[#allocation8 + $0xe8] sm:$0xff]
    %v3909 = vld [vmem:[#allocation8 + $0xf0] sm:$0xff]
    %v3910 = vld [vmem:[#allocation8 + $0xf8] sm:$0xff]
    %v3911 = vld [vmem:[#allocation8 + $0x100] sm:$0xff]
    %v3912 = vld [vmem:[#allocation8 + $0x108] sm:$0xff]
    %v3913 = vld [vmem:[#allocation8 + $0x110] sm:$0xff]
    %v3914 = vld [vmem:[#allocation8 + $0x118] sm:$0xff]
    %v3915 = vld [vmem:[#allocation8 + $0x120] sm:$0xff]
    %v3916 = vld [vmem:[#allocation8 + $0x128] sm:$0xff]
    %v3917 = vld [vmem:[#allocation8 + $0x130] sm:$0xff]
    %v3918 = vld [vmem:[#allocation8 + $0x138] sm:$0xff]
    %v3919 = vld [vmem:[#allocation8 + $0x140] sm:$0xff]
    %v3920 = vld [vmem:[#allocation8 + $0x148] sm:$0xff]
    %v3921 = vld [vmem:[#allocation8 + $0x150] sm:$0xff]
    %v3922 = vld [vmem:[#allocation8 + $0x158] sm:$0xff]
    %v3923 = vld [vmem:[#allocation8 + $0x160] sm:$0xff]
    %v3924 = vld [vmem:[#allocation8 + $0x168] sm:$0xff]
    %v3925 = vld [vmem:[#allocation8 + $0x170] sm:$0xff]
    %v3926 = vld [vmem:[#allocation8 + $0x178] sm:$0xff]
    %v3927 = vld [vmem:[#allocation8 + $0x180] sm:$0xff]
    %v3928 = vld [vmem:[#allocation8 + $0x188] sm:$0xff]
    %v3929 = vld [vmem:[#allocation8 + $0x190] sm:$0xff]
    %v3930 = vld [vmem:[#allocation8 + $0x198] sm:$0xff]
    %v3931 = vld [vmem:[#allocation8 + $0x1a0] sm:$0xff]
    %v3932 = vld [vmem:[#allocation8 + $0x1a8] sm:$0xff]
    %v3933 = vld [vmem:[#allocation8 + $0x1b0] sm:$0xff]
    %v3934 = vld [vmem:[#allocation8 + $0x1b8] sm:$0xff]
    %v3935 = vld [vmem:[#allocation8 + $0x1c0] sm:$0xff]
    %v3936 = vld [vmem:[#allocation8 + $0x1c8] sm:$0xff]
    %v3937 = vld [vmem:[#allocation8 + $0x1d0] sm:$0xff]
    %v3938 = vld [vmem:[#allocation8 + $0x1d8] sm:$0xff]
    %v3939 = vld [vmem:[#allocation8 + $0x1e0] sm:$0xff]
    %v3940 = vld [vmem:[#allocation8 + $0x1e8] sm:$0xff]
    %v3941 = vld [vmem:[#allocation8 + $0x1f0] sm:$0xff]
    %v3942 = vld [vmem:[#allocation8 + $0x1f8] sm:$0xff]
    %v3943 = vld [vmem:[#allocation8 + $0x200] sm:$0xff]
    %v3944 = vld [vmem:[#allocation8 + $0x208] sm:$0xff]
    %v3945 = vld [vmem:[#allocation8 + $0x210] sm:$0xff]
    %v3946 = vld [vmem:[#allocation8 + $0x218] sm:$0xff]
    %v3947 = vld [vmem:[#allocation8 + $0x220] sm:$0xff]
    %v3948 = vld [vmem:[#allocation8 + $0x228] sm:$0xff]
    %v3949 = vld [vmem:[#allocation8 + $0x230] sm:$0xff]
    %v3950 = vld [vmem:[#allocation8 + $0x238] sm:$0xff]
    %v3951 = vld [vmem:[#allocation8 + $0x240] sm:$0xff]
    %v3952 = vld [vmem:[#allocation8 + $0x248] sm:$0xff]
    %v3953 = vld [vmem:[#allocation8 + $0x250] sm:$0xff]
    %v3954 = vld [vmem:[#allocation8 + $0x258] sm:$0xff]
    %v3955 = vld [vmem:[#allocation8 + $0x260] sm:$0xff]
    %v3956 = vld [vmem:[#allocation8 + $0x268] sm:$0xff]
    %v3957 = vld [vmem:[#allocation8 + $0x270] sm:$0xff]
    %v3958 = vld [vmem:[#allocation8 + $0x278] sm:$0xff]
    %v3959 = vld [vmem:[#allocation8 + $0x280] sm:$0xff]
    %v3960 = vld [vmem:[#allocation8 + $0x288] sm:$0xff]
    %v3961 = vld [vmem:[#allocation8 + $0x290] sm:$0xff]
    %v3962 = vld [vmem:[#allocation8 + $0x298] sm:$0xff]
    %v3963 = vld [vmem:[#allocation8 + $0x2a0] sm:$0xff]
    %v3964 = vld [vmem:[#allocation8 + $0x2a8] sm:$0xff]
    %v3965 = vld [vmem:[#allocation8 + $0x2b0] sm:$0xff]
    %v3966 = vld [vmem:[#allocation8 + $0x2b8] sm:$0xff]
    %v3967 = vld [vmem:[#allocation8 + $0x2c0] sm:$0xff]
    %v3968 = vld [vmem:[#allocation8 + $0x2c8] sm:$0xff]
    %v3969 = vld [vmem:[#allocation8 + $0x2d0] sm:$0xff]
    %v3970 = vld [vmem:[#allocation8 + $0x2d8] sm:$0xff]
    %v3971 = vld [vmem:[#allocation8 + $0x2e0] sm:$0xff]
    %v3972 = vld [vmem:[#allocation8 + $0x2e8] sm:$0xff]
    %v3973 = vld [vmem:[#allocation8 + $0x2f0] sm:$0xff]
    %v3974 = vld [vmem:[#allocation8 + $0x2f8] sm:$0xff]
    %v3975 = vld [vmem:[#allocation9] sm:$0xff]
    %v3976 = vld [vmem:[#allocation9 + $0x8] sm:$0xff]
    %v3977 = vld [vmem:[#allocation9 + $0x10] sm:$0xff]
    %3978 = vmatpush.msra.mxu0 %v3924
    %3979 = vmatpush.msra.mxu0 %v3921
    %3980 = vmatpush.msra.mxu0 %v3918
    %3981 = vmatpush.msra.mxu0 %v3915
    %3982 = vmatpush.msra.mxu0 %v3912
    %3983 = vmatpush.msra.mxu0 %v3909
    %3984 = vmatpush.msra.mxu0 %v3906
    %3985 = vmatpush.msra.mxu0 %v3903
    %3986 = vmatpush.msra.mxu0 %v3900
    %3987 = vmatpush.msra.mxu0 %v3897
    %3988 = vmatpush.msra.mxu0 %v3894
    %3989 = vmatpush.msra.mxu0 %v3891
    %3990 = vmatpush.msra.mxu0 %v3888
    %3991 = vmatpush.msra.mxu0 %v3885
    %3992 = vmatpush.msra.mxu0 %v3882
    %3993 = vmatpush.msra.mxu0 %v3879
    %3994 = vmatmul.f32.gmra.mxu0 %v3878
    %v3995 = vpop.f32.mrf.mxu0
    %v3996 = vadd.f32 %v3975, %v3995
    %3997 = vdwg.mxu0
    %3998 = vmatpush.msra.mxu0 %v3972
    %3999 = vmatpush.msra.mxu0 %v3969
    %4000 = vmatpush.msra.mxu0 %v3966
    %4001 = vmatpush.msra.mxu0 %v3963
    %4002 = vmatpush.msra.mxu0 %v3960
    %4003 = vmatpush.msra.mxu0 %v3957
    %4004 = vmatpush.msra.mxu0 %v3954
    %4005 = vmatpush.msra.mxu0 %v3951
    %4006 = vmatpush.msra.mxu0 %v3948
    %4007 = vmatpush.msra.mxu0 %v3945
    %4008 = vmatpush.msra.mxu0 %v3942
    %4009 = vmatpush.msra.mxu0 %v3939
    %4010 = vmatpush.msra.mxu0 %v3936
    %4011 = vmatpush.msra.mxu0 %v3933
    %4012 = vmatpush.msra.mxu0 %v3930
    %4013 = vmatpush.msra.mxu0 %v3927
    %4014 = vmatmul.f32.gmra.mxu0 %v3836
    %v4015 = vpop.f32.mrf.mxu0
    %v4016 = vadd.f32 %v3996, %v4015
    %4017 = vdwg.mxu0
    %4018 = vmatpush.msra.mxu0 %v3925
    %4019 = vmatpush.msra.mxu0 %v3922
    %4020 = vmatpush.msra.mxu0 %v3919
    %4021 = vmatpush.msra.mxu0 %v3916
    %4022 = vmatpush.msra.mxu0 %v3913
    %4023 = vmatpush.msra.mxu0 %v3910
    %4024 = vmatpush.msra.mxu0 %v3907
    %4025 = vmatpush.msra.mxu0 %v3904
    %4026 = vmatpush.msra.mxu0 %v3901
    %4027 = vmatpush.msra.mxu0 %v3898
    %4028 = vmatpush.msra.mxu0 %v3895
    %4029 = vmatpush.msra.mxu0 %v3892
    %4030 = vmatpush.msra.mxu0 %v3889
    %4031 = vmatpush.msra.mxu0 %v3886
    %4032 = vmatpush.msra.mxu0 %v3883
    %4033 = vmatpush.msra.mxu0 %v3880
    %4034 = vmatmul.f32.gmra.mxu0 %v3878
    %v4035 = vpop.f32.mrf.mxu0
    %v4036 = vadd.f32 %v3976, %v4035
    %4037 = vdwg.mxu0
    %4038 = vmatpush.msra.mxu0 %v3973
    %4039 = vmatpush.msra.mxu0 %v3970
    %4040 = vmatpush.msra.mxu0 %v3967
    %4041 = vmatpush.msra.mxu0 %v3964
    %4042 = vmatpush.msra.mxu0 %v3961
    %4043 = vmatpush.msra.mxu0 %v3958
    %4044 = vmatpush.msra.mxu0 %v3955
    %4045 = vmatpush.msra.mxu0 %v3952
    %4046 = vmatpush.msra.mxu0 %v3949
    %4047 = vmatpush.msra.mxu0 %v3946
    %4048 = vmatpush.msra.mxu0 %v3943
    %4049 = vmatpush.msra.mxu0 %v3940
    %4050 = vmatpush.msra.mxu0 %v3937
    %4051 = vmatpush.msra.mxu0 %v3934
    %4052 = vmatpush.msra.mxu0 %v3931
    %4053 = vmatpush.msra.mxu0 %v3928
    %4054 = vmatmul.f32.gmra.mxu0 %v3836
    %v4055 = vpop.f32.mrf.mxu0
    %v4056 = vadd.f32 %v4036, %v4055
    %4057 = vdwg.mxu0
    %4058 = vmatpush.msra.mxu0 %v3926
    %4059 = vmatpush.msra.mxu0 %v3923
    %4060 = vmatpush.msra.mxu0 %v3920
    %4061 = vmatpush.msra.mxu0 %v3917
    %4062 = vmatpush.msra.mxu0 %v3914
    %4063 = vmatpush.msra.mxu0 %v3911
    %4064 = vmatpush.msra.mxu0 %v3908
    %4065 = vmatpush.msra.mxu0 %v3905
    %4066 = vmatpush.msra.mxu0 %v3902
    %4067 = vmatpush.msra.mxu0 %v3899
    %4068 = vmatpush.msra.mxu0 %v3896
    %4069 = vmatpush.msra.mxu0 %v3893
    %4070 = vmatpush.msra.mxu0 %v3890
    %4071 = vmatpush.msra.mxu0 %v3887
    %4072 = vmatpush.msra.mxu0 %v3884
    %4073 = vmatpush.msra.mxu0 %v3881
    %4074 = vmatmul.f32.gmra.mxu0 %v3878
    %v4075 = vpop.f32.mrf.mxu0
    %v4076 = vadd.f32 %v3977, %v4075
    %4077 = vdwg.mxu0
    %4078 = vmatpush.msra.mxu0 %v3974
    %4079 = vmatpush.msra.mxu0 %v3971
    %4080 = vmatpush.msra.mxu0 %v3968
    %4081 = vmatpush.msra.mxu0 %v3965
    %4082 = vmatpush.msra.mxu0 %v3962
    %4083 = vmatpush.msra.mxu0 %v3959
    %4084 = vmatpush.msra.mxu0 %v3956
    %4085 = vmatpush.msra.mxu0 %v3953
    %4086 = vmatpush.msra.mxu0 %v3950
    %4087 = vmatpush.msra.mxu0 %v3947
    %4088 = vmatpush.msra.mxu0 %v3944
    %4089 = vmatpush.msra.mxu0 %v3941
    %4090 = vmatpush.msra.mxu0 %v3938
    %4091 = vmatpush.msra.mxu0 %v3935
    %4092 = vmatpush.msra.mxu0 %v3932
    %4093 = vmatpush.msra.mxu0 %v3929
    %4094 = vmatmul.f32.gmra.mxu0 %v3836
    %v4095 = vpop.f32.mrf.mxu0
    %v4096 = vadd.f32 %v4076, %v4095
    %4097 = vdwg.mxu0
    %v4098 = vmul.f32 %v4016, 0.5
    %v4099 = vtanh.pop %v4098
    %v4100 = vmul.f32 %v4099, 0.5
    %v4101 = vadd.f32 %v4100, 0.5
    %v4102 = vmul.f32 %v4056, 0.5
    %v4103 = vtanh.pop %v4102
    %v4104 = vmul.f32 %v4103, 0.5
    %v4105 = vadd.f32 %v4104, 0.5
    %v4106 = vmul.f32 %v4101, %v3836
    %v4107 = vld [vmem:[#allocation11] sm:$0xff]
    %v4108 = vld [vmem:[#allocation11 + $0x8] sm:$0xff]
    %v4109 = vld [vmem:[#allocation11 + $0x10] sm:$0xff]
    %v4110 = vld [vmem:[#allocation11 + $0x18] sm:$0xff]
    %v4111 = vld [vmem:[#allocation11 + $0x20] sm:$0xff]
    %v4112 = vld [vmem:[#allocation11 + $0x28] sm:$0xff]
    %v4113 = vld [vmem:[#allocation11 + $0x30] sm:$0xff]
    %v4114 = vld [vmem:[#allocation11 + $0x38] sm:$0xff]
    %v4115 = vld [vmem:[#allocation11 + $0x40] sm:$0xff]
    %v4116 = vld [vmem:[#allocation11 + $0x48] sm:$0xff]
    %v4117 = vld [vmem:[#allocation11 + $0x50] sm:$0xff]
    %v4118 = vld [vmem:[#allocation11 + $0x58] sm:$0xff]
    %v4119 = vld [vmem:[#allocation11 + $0x60] sm:$0xff]
    %v4120 = vld [vmem:[#allocation11 + $0x68] sm:$0xff]
    %v4121 = vld [vmem:[#allocation11 + $0x70] sm:$0xff]
    %v4122 = vld [vmem:[#allocation11 + $0x78] sm:$0xff]
    %4123 = vmatpush.msra.mxu0 %v4122
    %4124 = vmatpush.msra.mxu0 %v4121
    %4125 = vmatpush.msra.mxu0 %v4120
    %4126 = vmatpush.msra.mxu0 %v4119
    %4127 = vmatpush.msra.mxu0 %v4118
    %4128 = vmatpush.msra.mxu0 %v4117
    %4129 = vmatpush.msra.mxu0 %v4116
    %4130 = vmatpush.msra.mxu0 %v4115
    %4131 = vmatpush.msra.mxu0 %v4114
    %4132 = vmatpush.msra.mxu0 %v4113
    %4133 = vmatpush.msra.mxu0 %v4112
    %4134 = vmatpush.msra.mxu0 %v4111
    %4135 = vmatpush.msra.mxu0 %v4110
    %4136 = vmatpush.msra.mxu0 %v4109
    %4137 = vmatpush.msra.mxu0 %v4108
    %4138 = vmatpush.msra.mxu0 %v4107
    %4139 = vmatmul.f32.gmra.mxu0 %v4106
    %v4140 = vpop.f32.mrf.mxu0
    %v4141 = vadd.f32 0.0, %v4140
    %4142 = vdwg.mxu0
    %v4143 = vadd.f32 %v4096, %v4141
    %v4144 = vtanh.pop %v4143
    %v4145 = vsub.f32 %v3836, %v4144
    %v4146 = vmul.f32 %v4105, %v4145
    %v4147 = vadd.f32 %v4144, %v4146
    %v4148 = vmax.f32 %v4147, -5.0
    %v4149 = vmin.f32 %v4148, 5.0
    %s4150 = scalar_lea.vmem [#allocation14], 96
    %4151 = vst [vmem:[%s4150] sm:$0xff] %v4149
    %v4152 = vld [vmem:[#allocation12] sm:$0xff]
    %v4153 = vld [vmem:[#allocation12 + $0x8] sm:$0xff]
    %v4154 = vld [vmem:[#allocation12 + $0x10] sm:$0xff]
    %v4155 = vld [vmem:[#allocation12 + $0x18] sm:$0xff]
    %v4156 = vld [vmem:[#allocation12 + $0x20] sm:$0xff]
    %v4157 = vld [vmem:[#allocation12 + $0x28] sm:$0xff]
    %v4158 = vld [vmem:[#allocation12 + $0x30] sm:$0xff]
    %v4159 = vld [vmem:[#allocation12 + $0x38] sm:$0xff]
    %v4160 = vld [vmem:[#allocation12 + $0x40] sm:$0xff]
    %v4161 = vld [vmem:[#allocation12 + $0x48] sm:$0xff]
    %v4162 = vld [vmem:[#allocation12 + $0x50] sm:$0xff]
    %v4163 = vld [vmem:[#allocation12 + $0x58] sm:$0xff]
    %v4164 = vld [vmem:[#allocation12 + $0x60] sm:$0xff]
    %v4165 = vld [vmem:[#allocation12 + $0x68] sm:$0xff]
    %v4166 = vld [vmem:[#allocation12 + $0x70] sm:$0xff]
    %v4167 = vld [vmem:[#allocation12 + $0x78] sm:$0xff]
    %4168 = vmatpush.msra.mxu0 %v4167
    %4169 = vmatpush.msra.mxu0 %v4166
    %4170 = vmatpush.msra.mxu0 %v4165
    %4171 = vmatpush.msra.mxu0 %v4164
    %4172 = vmatpush.msra.mxu0 %v4163
    %4173 = vmatpush.msra.mxu0 %v4162
    %4174 = vmatpush.msra.mxu0 %v4161
    %4175 = vmatpush.msra.mxu0 %v4160
    %4176 = vmatpush.msra.mxu0 %v4159
    %4177 = vmatpush.msra.mxu0 %v4158
    %4178 = vmatpush.msra.mxu0 %v4157
    %4179 = vmatpush.msra.mxu0 %v4156
    %4180 = vmatpush.msra.mxu0 %v4155
    %4181 = vmatpush.msra.mxu0 %v4154
    %4182 = vmatpush.msra.mxu0 %v4153
    %4183 = vmatpush.msra.mxu0 %v4152
    %4184 = vmatmul.f32.gmra.mxu0 %v4149
    %v4185 = vpop.f32.mrf.mxu0
    %v4186 = vadd.f32 0.0, %v4185
    %4187 = vdwg.mxu0
    %s4188 = scalar_lea.vmem [#allocation15], 96
    %4189 = vst [vmem:[%s4188] sm:$0xff] %v4186
    %s4190 = scalar_lea.vmem [#allocation3], 104
    %v4191 = vld [vmem:[%s4190] sm:$0xff]
    %v4192 = vld [vmem:[#allocation8] sm:$0xff]
    %v4193 = vld [vmem:[#allocation8 + $0x8] sm:$0xff]
    %v4194 = vld [vmem:[#allocation8 + $0x10] sm:$0xff]
    %v4195 = vld [vmem:[#allocation8 + $0x18] sm:$0xff]
    %v4196 = vld [vmem:[#allocation8 + $0x20] sm:$0xff]
    %v4197 = vld [vmem:[#allocation8 + $0x28] sm:$0xff]
    %v4198 = vld [vmem:[#allocation8 + $0x30] sm:$0xff]
    %v4199 = vld [vmem:[#allocation8 + $0x38] sm:$0xff]
    %v4200 = vld [vmem:[#allocation8 + $0x40] sm:$0xff]
    %v4201 = vld [vmem:[#allocation8 + $0x48] sm:$0xff]
    %v4202 = vld [vmem:[#allocation8 + $0x50] sm:$0xff]
    %v4203 = vld [vmem:[#allocation8 + $0x58] sm:$0xff]
    %v4204 = vld [vmem:[#allocation8 + $0x60] sm:$0xff]
    %v4205 = vld [vmem:[#allocation8 + $0x68] sm:$0xff]
    %v4206 = vld [vmem:[#allocation8 + $0x70] sm:$0xff]
    %v4207 = vld [vmem:[#allocation8 + $0x78] sm:$0xff]
    %v4208 = vld [vmem:[#allocation8 + $0x80] sm:$0xff]
    %v4209 = vld [vmem:[#allocation8 + $0x88] sm:$0xff]
    %v4210 = vld [vmem:[#allocation8 + $0x90] sm:$0xff]
    %v4211 = vld [vmem:[#allocation8 + $0x98] sm:$0xff]
    %v4212 = vld [vmem:[#allocation8 + $0xa0] sm:$0xff]
    %v4213 = vld [vmem:[#allocation8 + $0xa8] sm:$0xff]
    %v4214 = vld [vmem:[#allocation8 + $0xb0] sm:$0xff]
    %v4215 = vld [vmem:[#allocation8 + $0xb8] sm:$0xff]
    %v4216 = vld [vmem:[#allocation8 + $0xc0] sm:$0xff]
    %v4217 = vld [vmem:[#allocation8 + $0xc8] sm:$0xff]
    %v4218 = vld [vmem:[#allocation8 + $0xd0] sm:$0xff]
    %v4219 = vld [vmem:[#allocation8 + $0xd8] sm:$0xff]
    %v4220 = vld [vmem:[#allocation8 + $0xe0] sm:$0xff]
    %v4221 = vld [vmem:[#allocation8 + $0xe8] sm:$0xff]
    %v4222 = vld [vmem:[#allocation8 + $0xf0] sm:$0xff]
    %v4223 = vld [vmem:[#allocation8 + $0xf8] sm:$0xff]
    %v4224 = vld [vmem:[#allocation8 + $0x100] sm:$0xff]
    %v4225 = vld [vmem:[#allocation8 + $0x108] sm:$0xff]
    %v4226 = vld [vmem:[#allocation8 + $0x110] sm:$0xff]
    %v4227 = vld [vmem:[#allocation8 + $0x118] sm:$0xff]
    %v4228 = vld [vmem:[#allocation8 + $0x120] sm:$0xff]
    %v4229 = vld [vmem:[#allocation8 + $0x128] sm:$0xff]
    %v4230 = vld [vmem:[#allocation8 + $0x130] sm:$0xff]
    %v4231 = vld [vmem:[#allocation8 + $0x138] sm:$0xff]
    %v4232 = vld [vmem:[#allocation8 + $0x140] sm:$0xff]
    %v4233 = vld [vmem:[#allocation8 + $0x148] sm:$0xff]
    %v4234 = vld [vmem:[#allocation8 + $0x150] sm:$0xff]
    %v4235 = vld [vmem:[#allocation8 + $0x158] sm:$0xff]
    %v4236 = vld [vmem:[#allocation8 + $0x160] sm:$0xff]
    %v4237 = vld [vmem:[#allocation8 + $0x168] sm:$0xff]
    %v4238 = vld [vmem:[#allocation8 + $0x170] sm:$0xff]
    %v4239 = vld [vmem:[#allocation8 + $0x178] sm:$0xff]
    %v4240 = vld [vmem:[#allocation8 + $0x180] sm:$0xff]
    %v4241 = vld [vmem:[#allocation8 + $0x188] sm:$0xff]
    %v4242 = vld [vmem:[#allocation8 + $0x190] sm:$0xff]
    %v4243 = vld [vmem:[#allocation8 + $0x198] sm:$0xff]
    %v4244 = vld [vmem:[#allocation8 + $0x1a0] sm:$0xff]
    %v4245 = vld [vmem:[#allocation8 + $0x1a8] sm:$0xff]
    %v4246 = vld [vmem:[#allocation8 + $0x1b0] sm:$0xff]
    %v4247 = vld [vmem:[#allocation8 + $0x1b8] sm:$0xff]
    %v4248 = vld [vmem:[#allocation8 + $0x1c0] sm:$0xff]
    %v4249 = vld [vmem:[#allocation8 + $0x1c8] sm:$0xff]
    %v4250 = vld [vmem:[#allocation8 + $0x1d0] sm:$0xff]
    %v4251 = vld [vmem:[#allocation8 + $0x1d8] sm:$0xff]
    %v4252 = vld [vmem:[#allocation8 + $0x1e0] sm:$0xff]
    %v4253 = vld [vmem:[#allocation8 + $0x1e8] sm:$0xff]
    %v4254 = vld [vmem:[#allocation8 + $0x1f0] sm:$0xff]
    %v4255 = vld [vmem:[#allocation8 + $0x1f8] sm:$0xff]
    %v4256 = vld [vmem:[#allocation8 + $0x200] sm:$0xff]
    %v4257 = vld [vmem:[#allocation8 + $0x208] sm:$0xff]
    %v4258 = vld [vmem:[#allocation8 + $0x210] sm:$0xff]
    %v4259 = vld [vmem:[#allocation8 + $0x218] sm:$0xff]
    %v4260 = vld [vmem:[#allocation8 + $0x220] sm:$0xff]
    %v4261 = vld [vmem:[#allocation8 + $0x228] sm:$0xff]
    %v4262 = vld [vmem:[#allocation8 + $0x230] sm:$0xff]
    %v4263 = vld [vmem:[#allocation8 + $0x238] sm:$0xff]
    %v4264 = vld [vmem:[#allocation8 + $0x240] sm:$0xff]
    %v4265 = vld [vmem:[#allocation8 + $0x248] sm:$0xff]
    %v4266 = vld [vmem:[#allocation8 + $0x250] sm:$0xff]
    %v4267 = vld [vmem:[#allocation8 + $0x258] sm:$0xff]
    %v4268 = vld [vmem:[#allocation8 + $0x260] sm:$0xff]
    %v4269 = vld [vmem:[#allocation8 + $0x268] sm:$0xff]
    %v4270 = vld [vmem:[#allocation8 + $0x270] sm:$0xff]
    %v4271 = vld [vmem:[#allocation8 + $0x278] sm:$0xff]
    %v4272 = vld [vmem:[#allocation8 + $0x280] sm:$0xff]
    %v4273 = vld [vmem:[#allocation8 + $0x288] sm:$0xff]
    %v4274 = vld [vmem:[#allocation8 + $0x290] sm:$0xff]
    %v4275 = vld [vmem:[#allocation8 + $0x298] sm:$0xff]
    %v4276 = vld [vmem:[#allocation8 + $0x2a0] sm:$0xff]
    %v4277 = vld [vmem:[#allocation8 + $0x2a8] sm:$0xff]
    %v4278 = vld [vmem:[#allocation8 + $0x2b0] sm:$0xff]
    %v4279 = vld [vmem:[#allocation8 + $0x2b8] sm:$0xff]
    %v4280 = vld [vmem:[#allocation8 + $0x2c0] sm:$0xff]
    %v4281 = vld [vmem:[#allocation8 + $0x2c8] sm:$0xff]
    %v4282 = vld [vmem:[#allocation8 + $0x2d0] sm:$0xff]
    %v4283 = vld [vmem:[#allocation8 + $0x2d8] sm:$0xff]
    %v4284 = vld [vmem:[#allocation8 + $0x2e0] sm:$0xff]
    %v4285 = vld [vmem:[#allocation8 + $0x2e8] sm:$0xff]
    %v4286 = vld [vmem:[#allocation8 + $0x2f0] sm:$0xff]
    %v4287 = vld [vmem:[#allocation8 + $0x2f8] sm:$0xff]
    %v4288 = vld [vmem:[#allocation9] sm:$0xff]
    %v4289 = vld [vmem:[#allocation9 + $0x8] sm:$0xff]
    %v4290 = vld [vmem:[#allocation9 + $0x10] sm:$0xff]
    %4291 = vmatpush.msra.mxu0 %v4237
    %4292 = vmatpush.msra.mxu0 %v4234
    %4293 = vmatpush.msra.mxu0 %v4231
    %4294 = vmatpush.msra.mxu0 %v4228
    %4295 = vmatpush.msra.mxu0 %v4225
    %4296 = vmatpush.msra.mxu0 %v4222
    %4297 = vmatpush.msra.mxu0 %v4219
    %4298 = vmatpush.msra.mxu0 %v4216
    %4299 = vmatpush.msra.mxu0 %v4213
    %4300 = vmatpush.msra.mxu0 %v4210
    %4301 = vmatpush.msra.mxu0 %v4207
    %4302 = vmatpush.msra.mxu0 %v4204
    %4303 = vmatpush.msra.mxu0 %v4201
    %4304 = vmatpush.msra.mxu0 %v4198
    %4305 = vmatpush.msra.mxu0 %v4195
    %4306 = vmatpush.msra.mxu0 %v4192
    %4307 = vmatmul.f32.gmra.mxu0 %v4191
    %v4308 = vpop.f32.mrf.mxu0
    %v4309 = vadd.f32 %v4288, %v4308
    %4310 = vdwg.mxu0
    %4311 = vmatpush.msra.mxu0 %v4285
    %4312 = vmatpush.msra.mxu0 %v4282
    %4313 = vmatpush.msra.mxu0 %v4279
    %4314 = vmatpush.msra.mxu0 %v4276
    %4315 = vmatpush.msra.mxu0 %v4273
    %4316 = vmatpush.msra.mxu0 %v4270
    %4317 = vmatpush.msra.mxu0 %v4267
    %4318 = vmatpush.msra.mxu0 %v4264
    %4319 = vmatpush.msra.mxu0 %v4261
    %4320 = vmatpush.msra.mxu0 %v4258
    %4321 = vmatpush.msra.mxu0 %v4255
    %4322 = vmatpush.msra.mxu0 %v4252
    %4323 = vmatpush.msra.mxu0 %v4249
    %4324 = vmatpush.msra.mxu0 %v4246
    %4325 = vmatpush.msra.mxu0 %v4243
    %4326 = vmatpush.msra.mxu0 %v4240
    %4327 = vmatmul.f32.gmra.mxu0 %v4149
    %v4328 = vpop.f32.mrf.mxu0
    %v4329 = vadd.f32 %v4309, %v4328
    %4330 = vdwg.mxu0
    %4331 = vmatpush.msra.mxu0 %v4238
    %4332 = vmatpush.msra.mxu0 %v4235
    %4333 = vmatpush.msra.mxu0 %v4232
    %4334 = vmatpush.msra.mxu0 %v4229
    %4335 = vmatpush.msra.mxu0 %v4226
    %4336 = vmatpush.msra.mxu0 %v4223
    %4337 = vmatpush.msra.mxu0 %v4220
    %4338 = vmatpush.msra.mxu0 %v4217
    %4339 = vmatpush.msra.mxu0 %v4214
    %4340 = vmatpush.msra.mxu0 %v4211
    %4341 = vmatpush.msra.mxu0 %v4208
    %4342 = vmatpush.msra.mxu0 %v4205
    %4343 = vmatpush.msra.mxu0 %v4202
    %4344 = vmatpush.msra.mxu0 %v4199
    %4345 = vmatpush.msra.mxu0 %v4196
    %4346 = vmatpush.msra.mxu0 %v4193
    %4347 = vmatmul.f32.gmra.mxu0 %v4191
    %v4348 = vpop.f32.mrf.mxu0
    %v4349 = vadd.f32 %v4289, %v4348
    %4350 = vdwg.mxu0
    %4351 = vmatpush.msra.mxu0 %v4286
    %4352 = vmatpush.msra.mxu0 %v4283
    %4353 = vmatpush.msra.mxu0 %v4280
    %4354 = vmatpush.msra.mxu0 %v4277
    %4355 = vmatpush.msra.mxu0 %v4274
    %4356 = vmatpush.msra.mxu0 %v4271
    %4357 = vmatpush.msra.mxu0 %v4268
    %4358 = vmatpush.msra.mxu0 %v4265
    %4359 = vmatpush.msra.mxu0 %v4262
    %4360 = vmatpush.msra.mxu0 %v4259
    %4361 = vmatpush.msra.mxu0 %v4256
    %4362 = vmatpush.msra.mxu0 %v4253
    %4363 = vmatpush.msra.mxu0 %v4250
    %4364 = vmatpush.msra.mxu0 %v4247
    %4365 = vmatpush.msra.mxu0 %v4244
    %4366 = vmatpush.msra.mxu0 %v4241
    %4367 = vmatmul.f32.gmra.mxu0 %v4149
    %v4368 = vpop.f32.mrf.mxu0
    %v4369 = vadd.f32 %v4349, %v4368
    %4370 = vdwg.mxu0
    %4371 = vmatpush.msra.mxu0 %v4239
    %4372 = vmatpush.msra.mxu0 %v4236
    %4373 = vmatpush.msra.mxu0 %v4233
    %4374 = vmatpush.msra.mxu0 %v4230
    %4375 = vmatpush.msra.mxu0 %v4227
    %4376 = vmatpush.msra.mxu0 %v4224
    %4377 = vmatpush.msra.mxu0 %v4221
    %4378 = vmatpush.msra.mxu0 %v4218
    %4379 = vmatpush.msra.mxu0 %v4215
    %4380 = vmatpush.msra.mxu0 %v4212
    %4381 = vmatpush.msra.mxu0 %v4209
    %4382 = vmatpush.msra.mxu0 %v4206
    %4383 = vmatpush.msra.mxu0 %v4203
    %4384 = vmatpush.msra.mxu0 %v4200
    %4385 = vmatpush.msra.mxu0 %v4197
    %4386 = vmatpush.msra.mxu0 %v4194
    %4387 = vmatmul.f32.gmra.mxu0 %v4191
    %v4388 = vpop.f32.mrf.mxu0
    %v4389 = vadd.f32 %v4290, %v4388
    %4390 = vdwg.mxu0
    %4391 = vmatpush.msra.mxu0 %v4287
    %4392 = vmatpush.msra.mxu0 %v4284
    %4393 = vmatpush.msra.mxu0 %v4281
    %4394 = vmatpush.msra.mxu0 %v4278
    %4395 = vmatpush.msra.mxu0 %v4275
    %4396 = vmatpush.msra.mxu0 %v4272
    %4397 = vmatpush.msra.mxu0 %v4269
    %4398 = vmatpush.msra.mxu0 %v4266
    %4399 = vmatpush.msra.mxu0 %v4263
    %4400 = vmatpush.msra.mxu0 %v4260
    %4401 = vmatpush.msra.mxu0 %v4257
    %4402 = vmatpush.msra.mxu0 %v4254
    %4403 = vmatpush.msra.mxu0 %v4251
    %4404 = vmatpush.msra.mxu0 %v4248
    %4405 = vmatpush.msra.mxu0 %v4245
    %4406 = vmatpush.msra.mxu0 %v4242
    %4407 = vmatmul.f32.gmra.mxu0 %v4149
    %v4408 = vpop.f32.mrf.mxu0
    %v4409 = vadd.f32 %v4389, %v4408
    %4410 = vdwg.mxu0
    %v4411 = vmul.f32 %v4329, 0.5
    %v4412 = vtanh.pop %v4411
    %v4413 = vmul.f32 %v4412, 0.5
    %v4414 = vadd.f32 %v4413, 0.5
    %v4415 = vmul.f32 %v4369, 0.5
    %v4416 = vtanh.pop %v4415
    %v4417 = vmul.f32 %v4416, 0.5
    %v4418 = vadd.f32 %v4417, 0.5
    %v4419 = vmul.f32 %v4414, %v4149
    %v4420 = vld [vmem:[#allocation11] sm:$0xff]
    %v4421 = vld [vmem:[#allocation11 + $0x8] sm:$0xff]
    %v4422 = vld [vmem:[#allocation11 + $0x10] sm:$0xff]
    %v4423 = vld [vmem:[#allocation11 + $0x18] sm:$0xff]
    %v4424 = vld [vmem:[#allocation11 + $0x20] sm:$0xff]
    %v4425 = vld [vmem:[#allocation11 + $0x28] sm:$0xff]
    %v4426 = vld [vmem:[#allocation11 + $0x30] sm:$0xff]
    %v4427 = vld [vmem:[#allocation11 + $0x38] sm:$0xff]
    %v4428 = vld [vmem:[#allocation11 + $0x40] sm:$0xff]
    %v4429 = vld [vmem:[#allocation11 + $0x48] sm:$0xff]
    %v4430 = vld [vmem:[#allocation11 + $0x50] sm:$0xff]
    %v4431 = vld [vmem:[#allocation11 + $0x58] sm:$0xff]
    %v4432 = vld [vmem:[#allocation11 + $0x60] sm:$0xff]
    %v4433 = vld [vmem:[#allocation11 + $0x68] sm:$0xff]
    %v4434 = vld [vmem:[#allocation11 + $0x70] sm:$0xff]
    %v4435 = vld [vmem:[#allocation11 + $0x78] sm:$0xff]
    %4436 = vmatpush.msra.mxu0 %v4435
    %4437 = vmatpush.msra.mxu0 %v4434
    %4438 = vmatpush.msra.mxu0 %v4433
    %4439 = vmatpush.msra.mxu0 %v4432
    %4440 = vmatpush.msra.mxu0 %v4431
    %4441 = vmatpush.msra.mxu0 %v4430
    %4442 = vmatpush.msra.mxu0 %v4429
    %4443 = vmatpush.msra.mxu0 %v4428
    %4444 = vmatpush.msra.mxu0 %v4427
    %4445 = vmatpush.msra.mxu0 %v4426
    %4446 = vmatpush.msra.mxu0 %v4425
    %4447 = vmatpush.msra.mxu0 %v4424
    %4448 = vmatpush.msra.mxu0 %v4423
    %4449 = vmatpush.msra.mxu0 %v4422
    %4450 = vmatpush.msra.mxu0 %v4421
    %4451 = vmatpush.msra.mxu0 %v4420
    %4452 = vmatmul.f32.gmra.mxu0 %v4419
    %v4453 = vpop.f32.mrf.mxu0
    %v4454 = vadd.f32 0.0, %v4453
    %4455 = vdwg.mxu0
    %v4456 = vadd.f32 %v4409, %v4454
    %v4457 = vtanh.pop %v4456
    %v4458 = vsub.f32 %v4149, %v4457
    %v4459 = vmul.f32 %v4418, %v4458
    %v4460 = vadd.f32 %v4457, %v4459
    %v4461 = vmax.f32 %v4460, -5.0
    %v4462 = vmin.f32 %v4461, 5.0
    %s4463 = scalar_lea.vmem [#allocation14], 104
    %4464 = vst [vmem:[%s4463] sm:$0xff] %v4462
    %v4465 = vld [vmem:[#allocation12] sm:$0xff]
    %v4466 = vld [vmem:[#allocation12 + $0x8] sm:$0xff]
    %v4467 = vld [vmem:[#allocation12 + $0x10] sm:$0xff]
    %v4468 = vld [vmem:[#allocation12 + $0x18] sm:$0xff]
    %v4469 = vld [vmem:[#allocation12 + $0x20] sm:$0xff]
    %v4470 = vld [vmem:[#allocation12 + $0x28] sm:$0xff]
    %v4471 = vld [vmem:[#allocation12 + $0x30] sm:$0xff]
    %v4472 = vld [vmem:[#allocation12 + $0x38] sm:$0xff]
    %v4473 = vld [vmem:[#allocation12 + $0x40] sm:$0xff]
    %v4474 = vld [vmem:[#allocation12 + $0x48] sm:$0xff]
    %v4475 = vld [vmem:[#allocation12 + $0x50] sm:$0xff]
    %v4476 = vld [vmem:[#allocation12 + $0x58] sm:$0xff]
    %v4477 = vld [vmem:[#allocation12 + $0x60] sm:$0xff]
    %v4478 = vld [vmem:[#allocation12 + $0x68] sm:$0xff]
    %v4479 = vld [vmem:[#allocation12 + $0x70] sm:$0xff]
    %v4480 = vld [vmem:[#allocation12 + $0x78] sm:$0xff]
    %4481 = vmatpush.msra.mxu0 %v4480
    %4482 = vmatpush.msra.mxu0 %v4479
    %4483 = vmatpush.msra.mxu0 %v4478
    %4484 = vmatpush.msra.mxu0 %v4477
    %4485 = vmatpush.msra.mxu0 %v4476
    %4486 = vmatpush.msra.mxu0 %v4475
    %4487 = vmatpush.msra.mxu0 %v4474
    %4488 = vmatpush.msra.mxu0 %v4473
    %4489 = vmatpush.msra.mxu0 %v4472
    %4490 = vmatpush.msra.mxu0 %v4471
    %4491 = vmatpush.msra.mxu0 %v4470
    %4492 = vmatpush.msra.mxu0 %v4469
    %4493 = vmatpush.msra.mxu0 %v4468
    %4494 = vmatpush.msra.mxu0 %v4467
    %4495 = vmatpush.msra.mxu0 %v4466
    %4496 = vmatpush.msra.mxu0 %v4465
    %4497 = vmatmul.f32.gmra.mxu0 %v4462
    %v4498 = vpop.f32.mrf.mxu0
    %v4499 = vadd.f32 0.0, %v4498
    %4500 = vdwg.mxu0
    %s4501 = scalar_lea.vmem [#allocation15], 104
    %4502 = vst [vmem:[%s4501] sm:$0xff] %v4499
    %s4503 = scalar_lea.vmem [#allocation3], 112
    %v4504 = vld [vmem:[%s4503] sm:$0xff]
    %v4505 = vld [vmem:[#allocation8] sm:$0xff]
    %v4506 = vld [vmem:[#allocation8 + $0x8] sm:$0xff]
    %v4507 = vld [vmem:[#allocation8 + $0x10] sm:$0xff]
    %v4508 = vld [vmem:[#allocation8 + $0x18] sm:$0xff]
    %v4509 = vld [vmem:[#allocation8 + $0x20] sm:$0xff]
    %v4510 = vld [vmem:[#allocation8 + $0x28] sm:$0xff]
    %v4511 = vld [vmem:[#allocation8 + $0x30] sm:$0xff]
    %v4512 = vld [vmem:[#allocation8 + $0x38] sm:$0xff]
    %v4513 = vld [vmem:[#allocation8 + $0x40] sm:$0xff]
    %v4514 = vld [vmem:[#allocation8 + $0x48] sm:$0xff]
    %v4515 = vld [vmem:[#allocation8 + $0x50] sm:$0xff]
    %v4516 = vld [vmem:[#allocation8 + $0x58] sm:$0xff]
    %v4517 = vld [vmem:[#allocation8 + $0x60] sm:$0xff]
    %v4518 = vld [vmem:[#allocation8 + $0x68] sm:$0xff]
    %v4519 = vld [vmem:[#allocation8 + $0x70] sm:$0xff]
    %v4520 = vld [vmem:[#allocation8 + $0x78] sm:$0xff]
    %v4521 = vld [vmem:[#allocation8 + $0x80] sm:$0xff]
    %v4522 = vld [vmem:[#allocation8 + $0x88] sm:$0xff]
    %v4523 = vld [vmem:[#allocation8 + $0x90] sm:$0xff]
    %v4524 = vld [vmem:[#allocation8 + $0x98] sm:$0xff]
    %v4525 = vld [vmem:[#allocation8 + $0xa0] sm:$0xff]
    %v4526 = vld [vmem:[#allocation8 + $0xa8] sm:$0xff]
    %v4527 = vld [vmem:[#allocation8 + $0xb0] sm:$0xff]
    %v4528 = vld [vmem:[#allocation8 + $0xb8] sm:$0xff]
    %v4529 = vld [vmem:[#allocation8 + $0xc0] sm:$0xff]
    %v4530 = vld [vmem:[#allocation8 + $0xc8] sm:$0xff]
    %v4531 = vld [vmem:[#allocation8 + $0xd0] sm:$0xff]
    %v4532 = vld [vmem:[#allocation8 + $0xd8] sm:$0xff]
    %v4533 = vld [vmem:[#allocation8 + $0xe0] sm:$0xff]
    %v4534 = vld [vmem:[#allocation8 + $0xe8] sm:$0xff]
    %v4535 = vld [vmem:[#allocation8 + $0xf0] sm:$0xff]
    %v4536 = vld [vmem:[#allocation8 + $0xf8] sm:$0xff]
    %v4537 = vld [vmem:[#allocation8 + $0x100] sm:$0xff]
    %v4538 = vld [vmem:[#allocation8 + $0x108] sm:$0xff]
    %v4539 = vld [vmem:[#allocation8 + $0x110] sm:$0xff]
    %v4540 = vld [vmem:[#allocation8 + $0x118] sm:$0xff]
    %v4541 = vld [vmem:[#allocation8 + $0x120] sm:$0xff]
    %v4542 = vld [vmem:[#allocation8 + $0x128] sm:$0xff]
    %v4543 = vld [vmem:[#allocation8 + $0x130] sm:$0xff]
    %v4544 = vld [vmem:[#allocation8 + $0x138] sm:$0xff]
    %v4545 = vld [vmem:[#allocation8 + $0x140] sm:$0xff]
    %v4546 = vld [vmem:[#allocation8 + $0x148] sm:$0xff]
    %v4547 = vld [vmem:[#allocation8 + $0x150] sm:$0xff]
    %v4548 = vld [vmem:[#allocation8 + $0x158] sm:$0xff]
    %v4549 = vld [vmem:[#allocation8 + $0x160] sm:$0xff]
    %v4550 = vld [vmem:[#allocation8 + $0x168] sm:$0xff]
    %v4551 = vld [vmem:[#allocation8 + $0x170] sm:$0xff]
    %v4552 = vld [vmem:[#allocation8 + $0x178] sm:$0xff]
    %v4553 = vld [vmem:[#allocation8 + $0x180] sm:$0xff]
    %v4554 = vld [vmem:[#allocation8 + $0x188] sm:$0xff]
    %v4555 = vld [vmem:[#allocation8 + $0x190] sm:$0xff]
    %v4556 = vld [vmem:[#allocation8 + $0x198] sm:$0xff]
    %v4557 = vld [vmem:[#allocation8 + $0x1a0] sm:$0xff]
    %v4558 = vld [vmem:[#allocation8 + $0x1a8] sm:$0xff]
    %v4559 = vld [vmem:[#allocation8 + $0x1b0] sm:$0xff]
    %v4560 = vld [vmem:[#allocation8 + $0x1b8] sm:$0xff]
    %v4561 = vld [vmem:[#allocation8 + $0x1c0] sm:$0xff]
    %v4562 = vld [vmem:[#allocation8 + $0x1c8] sm:$0xff]
    %v4563 = vld [vmem:[#allocation8 + $0x1d0] sm:$0xff]
    %v4564 = vld [vmem:[#allocation8 + $0x1d8] sm:$0xff]
    %v4565 = vld [vmem:[#allocation8 + $0x1e0] sm:$0xff]
    %v4566 = vld [vmem:[#allocation8 + $0x1e8] sm:$0xff]
    %v4567 = vld [vmem:[#allocation8 + $0x1f0] sm:$0xff]
    %v4568 = vld [vmem:[#allocation8 + $0x1f8] sm:$0xff]
    %v4569 = vld [vmem:[#allocation8 + $0x200] sm:$0xff]
    %v4570 = vld [vmem:[#allocation8 + $0x208] sm:$0xff]
    %v4571 = vld [vmem:[#allocation8 + $0x210] sm:$0xff]
    %v4572 = vld [vmem:[#allocation8 + $0x218] sm:$0xff]
    %v4573 = vld [vmem:[#allocation8 + $0x220] sm:$0xff]
    %v4574 = vld [vmem:[#allocation8 + $0x228] sm:$0xff]
    %v4575 = vld [vmem:[#allocation8 + $0x230] sm:$0xff]
    %v4576 = vld [vmem:[#allocation8 + $0x238] sm:$0xff]
    %v4577 = vld [vmem:[#allocation8 + $0x240] sm:$0xff]
    %v4578 = vld [vmem:[#allocation8 + $0x248] sm:$0xff]
    %v4579 = vld [vmem:[#allocation8 + $0x250] sm:$0xff]
    %v4580 = vld [vmem:[#allocation8 + $0x258] sm:$0xff]
    %v4581 = vld [vmem:[#allocation8 + $0x260] sm:$0xff]
    %v4582 = vld [vmem:[#allocation8 + $0x268] sm:$0xff]
    %v4583 = vld [vmem:[#allocation8 + $0x270] sm:$0xff]
    %v4584 = vld [vmem:[#allocation8 + $0x278] sm:$0xff]
    %v4585 = vld [vmem:[#allocation8 + $0x280] sm:$0xff]
    %v4586 = vld [vmem:[#allocation8 + $0x288] sm:$0xff]
    %v4587 = vld [vmem:[#allocation8 + $0x290] sm:$0xff]
    %v4588 = vld [vmem:[#allocation8 + $0x298] sm:$0xff]
    %v4589 = vld [vmem:[#allocation8 + $0x2a0] sm:$0xff]
    %v4590 = vld [vmem:[#allocation8 + $0x2a8] sm:$0xff]
    %v4591 = vld [vmem:[#allocation8 + $0x2b0] sm:$0xff]
    %v4592 = vld [vmem:[#allocation8 + $0x2b8] sm:$0xff]
    %v4593 = vld [vmem:[#allocation8 + $0x2c0] sm:$0xff]
    %v4594 = vld [vmem:[#allocation8 + $0x2c8] sm:$0xff]
    %v4595 = vld [vmem:[#allocation8 + $0x2d0] sm:$0xff]
    %v4596 = vld [vmem:[#allocation8 + $0x2d8] sm:$0xff]
    %v4597 = vld [vmem:[#allocation8 + $0x2e0] sm:$0xff]
    %v4598 = vld [vmem:[#allocation8 + $0x2e8] sm:$0xff]
    %v4599 = vld [vmem:[#allocation8 + $0x2f0] sm:$0xff]
    %v4600 = vld [vmem:[#allocation8 + $0x2f8] sm:$0xff]
    %v4601 = vld [vmem:[#allocation9] sm:$0xff]
    %v4602 = vld [vmem:[#allocation9 + $0x8] sm:$0xff]
    %v4603 = vld [vmem:[#allocation9 + $0x10] sm:$0xff]
    %4604 = vmatpush.msra.mxu0 %v4550
    %4605 = vmatpush.msra.mxu0 %v4547
    %4606 = vmatpush.msra.mxu0 %v4544
    %4607 = vmatpush.msra.mxu0 %v4541
    %4608 = vmatpush.msra.mxu0 %v4538
    %4609 = vmatpush.msra.mxu0 %v4535
    %4610 = vmatpush.msra.mxu0 %v4532
    %4611 = vmatpush.msra.mxu0 %v4529
    %4612 = vmatpush.msra.mxu0 %v4526
    %4613 = vmatpush.msra.mxu0 %v4523
    %4614 = vmatpush.msra.mxu0 %v4520
    %4615 = vmatpush.msra.mxu0 %v4517
    %4616 = vmatpush.msra.mxu0 %v4514
    %4617 = vmatpush.msra.mxu0 %v4511
    %4618 = vmatpush.msra.mxu0 %v4508
    %4619 = vmatpush.msra.mxu0 %v4505
    %4620 = vmatmul.f32.gmra.mxu0 %v4504
    %v4621 = vpop.f32.mrf.mxu0
    %v4622 = vadd.f32 %v4601, %v4621
    %4623 = vdwg.mxu0
    %4624 = vmatpush.msra.mxu0 %v4598
    %4625 = vmatpush.msra.mxu0 %v4595
    %4626 = vmatpush.msra.mxu0 %v4592
    %4627 = vmatpush.msra.mxu0 %v4589
    %4628 = vmatpush.msra.mxu0 %v4586
    %4629 = vmatpush.msra.mxu0 %v4583
    %4630 = vmatpush.msra.mxu0 %v4580
    %4631 = vmatpush.msra.mxu0 %v4577
    %4632 = vmatpush.msra.mxu0 %v4574
    %4633 = vmatpush.msra.mxu0 %v4571
    %4634 = vmatpush.msra.mxu0 %v4568
    %4635 = vmatpush.msra.mxu0 %v4565
    %4636 = vmatpush.msra.mxu0 %v4562
    %4637 = vmatpush.msra.mxu0 %v4559
    %4638 = vmatpush.msra.mxu0 %v4556
    %4639 = vmatpush.msra.mxu0 %v4553
    %4640 = vmatmul.f32.gmra.mxu0 %v4462
    %v4641 = vpop.f32.mrf.mxu0
    %v4642 = vadd.f32 %v4622, %v4641
    %4643 = vdwg.mxu0
    %4644 = vmatpush.msra.mxu0 %v4551
    %4645 = vmatpush.msra.mxu0 %v4548
    %4646 = vmatpush.msra.mxu0 %v4545
    %4647 = vmatpush.msra.mxu0 %v4542
    %4648 = vmatpush.msra.mxu0 %v4539
    %4649 = vmatpush.msra.mxu0 %v4536
    %4650 = vmatpush.msra.mxu0 %v4533
    %4651 = vmatpush.msra.mxu0 %v4530
    %4652 = vmatpush.msra.mxu0 %v4527
    %4653 = vmatpush.msra.mxu0 %v4524
    %4654 = vmatpush.msra.mxu0 %v4521
    %4655 = vmatpush.msra.mxu0 %v4518
    %4656 = vmatpush.msra.mxu0 %v4515
    %4657 = vmatpush.msra.mxu0 %v4512
    %4658 = vmatpush.msra.mxu0 %v4509
    %4659 = vmatpush.msra.mxu0 %v4506
    %4660 = vmatmul.f32.gmra.mxu0 %v4504
    %v4661 = vpop.f32.mrf.mxu0
    %v4662 = vadd.f32 %v4602, %v4661
    %4663 = vdwg.mxu0
    %4664 = vmatpush.msra.mxu0 %v4599
    %4665 = vmatpush.msra.mxu0 %v4596
    %4666 = vmatpush.msra.mxu0 %v4593
    %4667 = vmatpush.msra.mxu0 %v4590
    %4668 = vmatpush.msra.mxu0 %v4587
    %4669 = vmatpush.msra.mxu0 %v4584
    %4670 = vmatpush.msra.mxu0 %v4581
    %4671 = vmatpush.msra.mxu0 %v4578
    %4672 = vmatpush.msra.mxu0 %v4575
    %4673 = vmatpush.msra.mxu0 %v4572
    %4674 = vmatpush.msra.mxu0 %v4569
    %4675 = vmatpush.msra.mxu0 %v4566
    %4676 = vmatpush.msra.mxu0 %v4563
    %4677 = vmatpush.msra.mxu0 %v4560
    %4678 = vmatpush.msra.mxu0 %v4557
    %4679 = vmatpush.msra.mxu0 %v4554
    %4680 = vmatmul.f32.gmra.mxu0 %v4462
    %v4681 = vpop.f32.mrf.mxu0
    %v4682 = vadd.f32 %v4662, %v4681
    %4683 = vdwg.mxu0
    %4684 = vmatpush.msra.mxu0 %v4552
    %4685 = vmatpush.msra.mxu0 %v4549
    %4686 = vmatpush.msra.mxu0 %v4546
    %4687 = vmatpush.msra.mxu0 %v4543
    %4688 = vmatpush.msra.mxu0 %v4540
    %4689 = vmatpush.msra.mxu0 %v4537
    %4690 = vmatpush.msra.mxu0 %v4534
    %4691 = vmatpush.msra.mxu0 %v4531
    %4692 = vmatpush.msra.mxu0 %v4528
    %4693 = vmatpush.msra.mxu0 %v4525
    %4694 = vmatpush.msra.mxu0 %v4522
    %4695 = vmatpush.msra.mxu0 %v4519
    %4696 = vmatpush.msra.mxu0 %v4516
    %4697 = vmatpush.msra.mxu0 %v4513
    %4698 = vmatpush.msra.mxu0 %v4510
    %4699 = vmatpush.msra.mxu0 %v4507
    %4700 = vmatmul.f32.gmra.mxu0 %v4504
    %v4701 = vpop.f32.mrf.mxu0
    %v4702 = vadd.f32 %v4603, %v4701
    %4703 = vdwg.mxu0
    %4704 = vmatpush.msra.mxu0 %v4600
    %4705 = vmatpush.msra.mxu0 %v4597
    %4706 = vmatpush.msra.mxu0 %v4594
    %4707 = vmatpush.msra.mxu0 %v4591
    %4708 = vmatpush.msra.mxu0 %v4588
    %4709 = vmatpush.msra.mxu0 %v4585
    %4710 = vmatpush.msra.mxu0 %v4582
    %4711 = vmatpush.msra.mxu0 %v4579
    %4712 = vmatpush.msra.mxu0 %v4576
    %4713 = vmatpush.msra.mxu0 %v4573
    %4714 = vmatpush.msra.mxu0 %v4570
    %4715 = vmatpush.msra.mxu0 %v4567
    %4716 = vmatpush.msra.mxu0 %v4564
    %4717 = vmatpush.msra.mxu0 %v4561
    %4718 = vmatpush.msra.mxu0 %v4558
    %4719 = vmatpush.msra.mxu0 %v4555
    %4720 = vmatmul.f32.gmra.mxu0 %v4462
    %v4721 = vpop.f32.mrf.mxu0
    %v4722 = vadd.f32 %v4702, %v4721
    %4723 = vdwg.mxu0
    %v4724 = vmul.f32 %v4642, 0.5
    %v4725 = vtanh.pop %v4724
    %v4726 = vmul.f32 %v4725, 0.5
    %v4727 = vadd.f32 %v4726, 0.5
    %v4728 = vmul.f32 %v4682, 0.5
    %v4729 = vtanh.pop %v4728
    %v4730 = vmul.f32 %v4729, 0.5
    %v4731 = vadd.f32 %v4730, 0.5
    %v4732 = vmul.f32 %v4727, %v4462
    %v4733 = vld [vmem:[#allocation11] sm:$0xff]
    %v4734 = vld [vmem:[#allocation11 + $0x8] sm:$0xff]
    %v4735 = vld [vmem:[#allocation11 + $0x10] sm:$0xff]
    %v4736 = vld [vmem:[#allocation11 + $0x18] sm:$0xff]
    %v4737 = vld [vmem:[#allocation11 + $0x20] sm:$0xff]
    %v4738 = vld [vmem:[#allocation11 + $0x28] sm:$0xff]
    %v4739 = vld [vmem:[#allocation11 + $0x30] sm:$0xff]
    %v4740 = vld [vmem:[#allocation11 + $0x38] sm:$0xff]
    %v4741 = vld [vmem:[#allocation11 + $0x40] sm:$0xff]
    %v4742 = vld [vmem:[#allocation11 + $0x48] sm:$0xff]
    %v4743 = vld [vmem:[#allocation11 + $0x50] sm:$0xff]
    %v4744 = vld [vmem:[#allocation11 + $0x58] sm:$0xff]
    %v4745 = vld [vmem:[#allocation11 + $0x60] sm:$0xff]
    %v4746 = vld [vmem:[#allocation11 + $0x68] sm:$0xff]
    %v4747 = vld [vmem:[#allocation11 + $0x70] sm:$0xff]
    %v4748 = vld [vmem:[#allocation11 + $0x78] sm:$0xff]
    %4749 = vmatpush.msra.mxu0 %v4748
    %4750 = vmatpush.msra.mxu0 %v4747
    %4751 = vmatpush.msra.mxu0 %v4746
    %4752 = vmatpush.msra.mxu0 %v4745
    %4753 = vmatpush.msra.mxu0 %v4744
    %4754 = vmatpush.msra.mxu0 %v4743
    %4755 = vmatpush.msra.mxu0 %v4742
    %4756 = vmatpush.msra.mxu0 %v4741
    %4757 = vmatpush.msra.mxu0 %v4740
    %4758 = vmatpush.msra.mxu0 %v4739
    %4759 = vmatpush.msra.mxu0 %v4738
    %4760 = vmatpush.msra.mxu0 %v4737
    %4761 = vmatpush.msra.mxu0 %v4736
    %4762 = vmatpush.msra.mxu0 %v4735
    %4763 = vmatpush.msra.mxu0 %v4734
    %4764 = vmatpush.msra.mxu0 %v4733
    %4765 = vmatmul.f32.gmra.mxu0 %v4732
    %v4766 = vpop.f32.mrf.mxu0
    %v4767 = vadd.f32 0.0, %v4766
    %4768 = vdwg.mxu0
    %v4769 = vadd.f32 %v4722, %v4767
    %v4770 = vtanh.pop %v4769
    %v4771 = vsub.f32 %v4462, %v4770
    %v4772 = vmul.f32 %v4731, %v4771
    %v4773 = vadd.f32 %v4770, %v4772
    %v4774 = vmax.f32 %v4773, -5.0
    %v4775 = vmin.f32 %v4774, 5.0
    %s4776 = scalar_lea.vmem [#allocation14], 112
    %4777 = vst [vmem:[%s4776] sm:$0xff] %v4775
    %v4778 = vld [vmem:[#allocation12] sm:$0xff]
    %v4779 = vld [vmem:[#allocation12 + $0x8] sm:$0xff]
    %v4780 = vld [vmem:[#allocation12 + $0x10] sm:$0xff]
    %v4781 = vld [vmem:[#allocation12 + $0x18] sm:$0xff]
    %v4782 = vld [vmem:[#allocation12 + $0x20] sm:$0xff]
    %v4783 = vld [vmem:[#allocation12 + $0x28] sm:$0xff]
    %v4784 = vld [vmem:[#allocation12 + $0x30] sm:$0xff]
    %v4785 = vld [vmem:[#allocation12 + $0x38] sm:$0xff]
    %v4786 = vld [vmem:[#allocation12 + $0x40] sm:$0xff]
    %v4787 = vld [vmem:[#allocation12 + $0x48] sm:$0xff]
    %v4788 = vld [vmem:[#allocation12 + $0x50] sm:$0xff]
    %v4789 = vld [vmem:[#allocation12 + $0x58] sm:$0xff]
    %v4790 = vld [vmem:[#allocation12 + $0x60] sm:$0xff]
    %v4791 = vld [vmem:[#allocation12 + $0x68] sm:$0xff]
    %v4792 = vld [vmem:[#allocation12 + $0x70] sm:$0xff]
    %v4793 = vld [vmem:[#allocation12 + $0x78] sm:$0xff]
    %4794 = vmatpush.msra.mxu0 %v4793
    %4795 = vmatpush.msra.mxu0 %v4792
    %4796 = vmatpush.msra.mxu0 %v4791
    %4797 = vmatpush.msra.mxu0 %v4790
    %4798 = vmatpush.msra.mxu0 %v4789
    %4799 = vmatpush.msra.mxu0 %v4788
    %4800 = vmatpush.msra.mxu0 %v4787
    %4801 = vmatpush.msra.mxu0 %v4786
    %4802 = vmatpush.msra.mxu0 %v4785
    %4803 = vmatpush.msra.mxu0 %v4784
    %4804 = vmatpush.msra.mxu0 %v4783
    %4805 = vmatpush.msra.mxu0 %v4782
    %4806 = vmatpush.msra.mxu0 %v4781
    %4807 = vmatpush.msra.mxu0 %v4780
    %4808 = vmatpush.msra.mxu0 %v4779
    %4809 = vmatpush.msra.mxu0 %v4778
    %4810 = vmatmul.f32.gmra.mxu0 %v4775
    %v4811 = vpop.f32.mrf.mxu0
    %v4812 = vadd.f32 0.0, %v4811
    %4813 = vdwg.mxu0
    %s4814 = scalar_lea.vmem [#allocation15], 112
    %4815 = vst [vmem:[%s4814] sm:$0xff] %v4812
    %s4816 = scalar_lea.vmem [#allocation3], 120
    %v4817 = vld [vmem:[%s4816] sm:$0xff]
    %v4818 = vld [vmem:[#allocation8] sm:$0xff]
    %v4819 = vld [vmem:[#allocation8 + $0x8] sm:$0xff]
    %v4820 = vld [vmem:[#allocation8 + $0x10] sm:$0xff]
    %v4821 = vld [vmem:[#allocation8 + $0x18] sm:$0xff]
    %v4822 = vld [vmem:[#allocation8 + $0x20] sm:$0xff]
    %v4823 = vld [vmem:[#allocation8 + $0x28] sm:$0xff]
    %v4824 = vld [vmem:[#allocation8 + $0x30] sm:$0xff]
    %v4825 = vld [vmem:[#allocation8 + $0x38] sm:$0xff]
    %v4826 = vld [vmem:[#allocation8 + $0x40] sm:$0xff]
    %v4827 = vld [vmem:[#allocation8 + $0x48] sm:$0xff]
    %v4828 = vld [vmem:[#allocation8 + $0x50] sm:$0xff]
    %v4829 = vld [vmem:[#allocation8 + $0x58] sm:$0xff]
    %v4830 = vld [vmem:[#allocation8 + $0x60] sm:$0xff]
    %v4831 = vld [vmem:[#allocation8 + $0x68] sm:$0xff]
    %v4832 = vld [vmem:[#allocation8 + $0x70] sm:$0xff]
    %v4833 = vld [vmem:[#allocation8 + $0x78] sm:$0xff]
    %v4834 = vld [vmem:[#allocation8 + $0x80] sm:$0xff]
    %v4835 = vld [vmem:[#allocation8 + $0x88] sm:$0xff]
    %v4836 = vld [vmem:[#allocation8 + $0x90] sm:$0xff]
    %v4837 = vld [vmem:[#allocation8 + $0x98] sm:$0xff]
    %v4838 = vld [vmem:[#allocation8 + $0xa0] sm:$0xff]
    %v4839 = vld [vmem:[#allocation8 + $0xa8] sm:$0xff]
    %v4840 = vld [vmem:[#allocation8 + $0xb0] sm:$0xff]
    %v4841 = vld [vmem:[#allocation8 + $0xb8] sm:$0xff]
    %v4842 = vld [vmem:[#allocation8 + $0xc0] sm:$0xff]
    %v4843 = vld [vmem:[#allocation8 + $0xc8] sm:$0xff]
    %v4844 = vld [vmem:[#allocation8 + $0xd0] sm:$0xff]
    %v4845 = vld [vmem:[#allocation8 + $0xd8] sm:$0xff]
    %v4846 = vld [vmem:[#allocation8 + $0xe0] sm:$0xff]
    %v4847 = vld [vmem:[#allocation8 + $0xe8] sm:$0xff]
    %v4848 = vld [vmem:[#allocation8 + $0xf0] sm:$0xff]
    %v4849 = vld [vmem:[#allocation8 + $0xf8] sm:$0xff]
    %v4850 = vld [vmem:[#allocation8 + $0x100] sm:$0xff]
    %v4851 = vld [vmem:[#allocation8 + $0x108] sm:$0xff]
    %v4852 = vld [vmem:[#allocation8 + $0x110] sm:$0xff]
    %v4853 = vld [vmem:[#allocation8 + $0x118] sm:$0xff]
    %v4854 = vld [vmem:[#allocation8 + $0x120] sm:$0xff]
    %v4855 = vld [vmem:[#allocation8 + $0x128] sm:$0xff]
    %v4856 = vld [vmem:[#allocation8 + $0x130] sm:$0xff]
    %v4857 = vld [vmem:[#allocation8 + $0x138] sm:$0xff]
    %v4858 = vld [vmem:[#allocation8 + $0x140] sm:$0xff]
    %v4859 = vld [vmem:[#allocation8 + $0x148] sm:$0xff]
    %v4860 = vld [vmem:[#allocation8 + $0x150] sm:$0xff]
    %v4861 = vld [vmem:[#allocation8 + $0x158] sm:$0xff]
    %v4862 = vld [vmem:[#allocation8 + $0x160] sm:$0xff]
    %v4863 = vld [vmem:[#allocation8 + $0x168] sm:$0xff]
    %v4864 = vld [vmem:[#allocation8 + $0x170] sm:$0xff]
    %v4865 = vld [vmem:[#allocation8 + $0x178] sm:$0xff]
    %v4866 = vld [vmem:[#allocation8 + $0x180] sm:$0xff]
    %v4867 = vld [vmem:[#allocation8 + $0x188] sm:$0xff]
    %v4868 = vld [vmem:[#allocation8 + $0x190] sm:$0xff]
    %v4869 = vld [vmem:[#allocation8 + $0x198] sm:$0xff]
    %v4870 = vld [vmem:[#allocation8 + $0x1a0] sm:$0xff]
    %v4871 = vld [vmem:[#allocation8 + $0x1a8] sm:$0xff]
    %v4872 = vld [vmem:[#allocation8 + $0x1b0] sm:$0xff]
    %v4873 = vld [vmem:[#allocation8 + $0x1b8] sm:$0xff]
    %v4874 = vld [vmem:[#allocation8 + $0x1c0] sm:$0xff]
    %v4875 = vld [vmem:[#allocation8 + $0x1c8] sm:$0xff]
    %v4876 = vld [vmem:[#allocation8 + $0x1d0] sm:$0xff]
    %v4877 = vld [vmem:[#allocation8 + $0x1d8] sm:$0xff]
    %v4878 = vld [vmem:[#allocation8 + $0x1e0] sm:$0xff]
    %v4879 = vld [vmem:[#allocation8 + $0x1e8] sm:$0xff]
    %v4880 = vld [vmem:[#allocation8 + $0x1f0] sm:$0xff]
    %v4881 = vld [vmem:[#allocation8 + $0x1f8] sm:$0xff]
    %v4882 = vld [vmem:[#allocation8 + $0x200] sm:$0xff]
    %v4883 = vld [vmem:[#allocation8 + $0x208] sm:$0xff]
    %v4884 = vld [vmem:[#allocation8 + $0x210] sm:$0xff]
    %v4885 = vld [vmem:[#allocation8 + $0x218] sm:$0xff]
    %v4886 = vld [vmem:[#allocation8 + $0x220] sm:$0xff]
    %v4887 = vld [vmem:[#allocation8 + $0x228] sm:$0xff]
    %v4888 = vld [vmem:[#allocation8 + $0x230] sm:$0xff]
    %v4889 = vld [vmem:[#allocation8 + $0x238] sm:$0xff]
    %v4890 = vld [vmem:[#allocation8 + $0x240] sm:$0xff]
    %v4891 = vld [vmem:[#allocation8 + $0x248] sm:$0xff]
    %v4892 = vld [vmem:[#allocation8 + $0x250] sm:$0xff]
    %v4893 = vld [vmem:[#allocation8 + $0x258] sm:$0xff]
    %v4894 = vld [vmem:[#allocation8 + $0x260] sm:$0xff]
    %v4895 = vld [vmem:[#allocation8 + $0x268] sm:$0xff]
    %v4896 = vld [vmem:[#allocation8 + $0x270] sm:$0xff]
    %v4897 = vld [vmem:[#allocation8 + $0x278] sm:$0xff]
    %v4898 = vld [vmem:[#allocation8 + $0x280] sm:$0xff]
    %v4899 = vld [vmem:[#allocation8 + $0x288] sm:$0xff]
    %v4900 = vld [vmem:[#allocation8 + $0x290] sm:$0xff]
    %v4901 = vld [vmem:[#allocation8 + $0x298] sm:$0xff]
    %v4902 = vld [vmem:[#allocation8 + $0x2a0] sm:$0xff]
    %v4903 = vld [vmem:[#allocation8 + $0x2a8] sm:$0xff]
    %v4904 = vld [vmem:[#allocation8 + $0x2b0] sm:$0xff]
    %v4905 = vld [vmem:[#allocation8 + $0x2b8] sm:$0xff]
    %v4906 = vld [vmem:[#allocation8 + $0x2c0] sm:$0xff]
    %v4907 = vld [vmem:[#allocation8 + $0x2c8] sm:$0xff]
    %v4908 = vld [vmem:[#allocation8 + $0x2d0] sm:$0xff]
    %v4909 = vld [vmem:[#allocation8 + $0x2d8] sm:$0xff]
    %v4910 = vld [vmem:[#allocation8 + $0x2e0] sm:$0xff]
    %v4911 = vld [vmem:[#allocation8 + $0x2e8] sm:$0xff]
    %v4912 = vld [vmem:[#allocation8 + $0x2f0] sm:$0xff]
    %v4913 = vld [vmem:[#allocation8 + $0x2f8] sm:$0xff]
    %v4914 = vld [vmem:[#allocation9] sm:$0xff]
    %v4915 = vld [vmem:[#allocation9 + $0x8] sm:$0xff]
    %v4916 = vld [vmem:[#allocation9 + $0x10] sm:$0xff]
    %4917 = vmatpush.msra.mxu0 %v4863
    %4918 = vmatpush.msra.mxu0 %v4860
    %4919 = vmatpush.msra.mxu0 %v4857
    %4920 = vmatpush.msra.mxu0 %v4854
    %4921 = vmatpush.msra.mxu0 %v4851
    %4922 = vmatpush.msra.mxu0 %v4848
    %4923 = vmatpush.msra.mxu0 %v4845
    %4924 = vmatpush.msra.mxu0 %v4842
    %4925 = vmatpush.msra.mxu0 %v4839
    %4926 = vmatpush.msra.mxu0 %v4836
    %4927 = vmatpush.msra.mxu0 %v4833
    %4928 = vmatpush.msra.mxu0 %v4830
    %4929 = vmatpush.msra.mxu0 %v4827
    %4930 = vmatpush.msra.mxu0 %v4824
    %4931 = vmatpush.msra.mxu0 %v4821
    %4932 = vmatpush.msra.mxu0 %v4818
    %4933 = vmatmul.f32.gmra.mxu0 %v4817
    %v4934 = vpop.f32.mrf.mxu0
    %v4935 = vadd.f32 %v4914, %v4934
    %4936 = vdwg.mxu0
    %4937 = vmatpush.msra.mxu0 %v4911
    %4938 = vmatpush.msra.mxu0 %v4908
    %4939 = vmatpush.msra.mxu0 %v4905
    %4940 = vmatpush.msra.mxu0 %v4902
    %4941 = vmatpush.msra.mxu0 %v4899
    %4942 = vmatpush.msra.mxu0 %v4896
    %4943 = vmatpush.msra.mxu0 %v4893
    %4944 = vmatpush.msra.mxu0 %v4890
    %4945 = vmatpush.msra.mxu0 %v4887
    %4946 = vmatpush.msra.mxu0 %v4884
    %4947 = vmatpush.msra.mxu0 %v4881
    %4948 = vmatpush.msra.mxu0 %v4878
    %4949 = vmatpush.msra.mxu0 %v4875
    %4950 = vmatpush.msra.mxu0 %v4872
    %4951 = vmatpush.msra.mxu0 %v4869
    %4952 = vmatpush.msra.mxu0 %v4866
    %4953 = vmatmul.f32.gmra.mxu0 %v4775
    %v4954 = vpop.f32.mrf.mxu0
    %v4955 = vadd.f32 %v4935, %v4954
    %4956 = vdwg.mxu0
    %4957 = vmatpush.msra.mxu0 %v4864
    %4958 = vmatpush.msra.mxu0 %v4861
    %4959 = vmatpush.msra.mxu0 %v4858
    %4960 = vmatpush.msra.mxu0 %v4855
    %4961 = vmatpush.msra.mxu0 %v4852
    %4962 = vmatpush.msra.mxu0 %v4849
    %4963 = vmatpush.msra.mxu0 %v4846
    %4964 = vmatpush.msra.mxu0 %v4843
    %4965 = vmatpush.msra.mxu0 %v4840
    %4966 = vmatpush.msra.mxu0 %v4837
    %4967 = vmatpush.msra.mxu0 %v4834
    %4968 = vmatpush.msra.mxu0 %v4831
    %4969 = vmatpush.msra.mxu0 %v4828
    %4970 = vmatpush.msra.mxu0 %v4825
    %4971 = vmatpush.msra.mxu0 %v4822
    %4972 = vmatpush.msra.mxu0 %v4819
    %4973 = vmatmul.f32.gmra.mxu0 %v4817
    %v4974 = vpop.f32.mrf.mxu0
    %v4975 = vadd.f32 %v4915, %v4974
    %4976 = vdwg.mxu0
    %4977 = vmatpush.msra.mxu0 %v4912
    %4978 = vmatpush.msra.mxu0 %v4909
    %4979 = vmatpush.msra.mxu0 %v4906
    %4980 = vmatpush.msra.mxu0 %v4903
    %4981 = vmatpush.msra.mxu0 %v4900
    %4982 = vmatpush.msra.mxu0 %v4897
    %4983 = vmatpush.msra.mxu0 %v4894
    %4984 = vmatpush.msra.mxu0 %v4891
    %4985 = vmatpush.msra.mxu0 %v4888
    %4986 = vmatpush.msra.mxu0 %v4885
    %4987 = vmatpush.msra.mxu0 %v4882
    %4988 = vmatpush.msra.mxu0 %v4879
    %4989 = vmatpush.msra.mxu0 %v4876
    %4990 = vmatpush.msra.mxu0 %v4873
    %4991 = vmatpush.msra.mxu0 %v4870
    %4992 = vmatpush.msra.mxu0 %v4867
    %4993 = vmatmul.f32.gmra.mxu0 %v4775
    %v4994 = vpop.f32.mrf.mxu0
    %v4995 = vadd.f32 %v4975, %v4994
    %4996 = vdwg.mxu0
    %4997 = vmatpush.msra.mxu0 %v4865
    %4998 = vmatpush.msra.mxu0 %v4862
    %4999 = vmatpush.msra.mxu0 %v4859
    %5000 = vmatpush.msra.mxu0 %v4856
    %5001 = vmatpush.msra.mxu0 %v4853
    %5002 = vmatpush.msra.mxu0 %v4850
    %5003 = vmatpush.msra.mxu0 %v4847
    %5004 = vmatpush.msra.mxu0 %v4844
    %5005 = vmatpush.msra.mxu0 %v4841
    %5006 = vmatpush.msra.mxu0 %v4838
    %5007 = vmatpush.msra.mxu0 %v4835
    %5008 = vmatpush.msra.mxu0 %v4832
    %5009 = vmatpush.msra.mxu0 %v4829
    %5010 = vmatpush.msra.mxu0 %v4826
    %5011 = vmatpush.msra.mxu0 %v4823
    %5012 = vmatpush.msra.mxu0 %v4820
    %5013 = vmatmul.f32.gmra.mxu0 %v4817
    %v5014 = vpop.f32.mrf.mxu0
    %v5015 = vadd.f32 %v4916, %v5014
    %5016 = vdwg.mxu0
    %5017 = vmatpush.msra.mxu0 %v4913
    %5018 = vmatpush.msra.mxu0 %v4910
    %5019 = vmatpush.msra.mxu0 %v4907
    %5020 = vmatpush.msra.mxu0 %v4904
    %5021 = vmatpush.msra.mxu0 %v4901
    %5022 = vmatpush.msra.mxu0 %v4898
    %5023 = vmatpush.msra.mxu0 %v4895
    %5024 = vmatpush.msra.mxu0 %v4892
    %5025 = vmatpush.msra.mxu0 %v4889
    %5026 = vmatpush.msra.mxu0 %v4886
    %5027 = vmatpush.msra.mxu0 %v4883
    %5028 = vmatpush.msra.mxu0 %v4880
    %5029 = vmatpush.msra.mxu0 %v4877
    %5030 = vmatpush.msra.mxu0 %v4874
    %5031 = vmatpush.msra.mxu0 %v4871
    %5032 = vmatpush.msra.mxu0 %v4868
    %5033 = vmatmul.f32.gmra.mxu0 %v4775
    %v5034 = vpop.f32.mrf.mxu0
    %v5035 = vadd.f32 %v5015, %v5034
    %5036 = vdwg.mxu0
    %v5037 = vmul.f32 %v4955, 0.5
    %v5038 = vtanh.pop %v5037
    %v5039 = vmul.f32 %v5038, 0.5
    %v5040 = vadd.f32 %v5039, 0.5
    %v5041 = vmul.f32 %v4995, 0.5
    %v5042 = vtanh.pop %v5041
    %v5043 = vmul.f32 %v5042, 0.5
    %v5044 = vadd.f32 %v5043, 0.5
    %v5045 = vmul.f32 %v5040, %v4775
    %v5046 = vld [vmem:[#allocation11] sm:$0xff]
    %v5047 = vld [vmem:[#allocation11 + $0x8] sm:$0xff]
    %v5048 = vld [vmem:[#allocation11 + $0x10] sm:$0xff]
    %v5049 = vld [vmem:[#allocation11 + $0x18] sm:$0xff]
    %v5050 = vld [vmem:[#allocation11 + $0x20] sm:$0xff]
    %v5051 = vld [vmem:[#allocation11 + $0x28] sm:$0xff]
    %v5052 = vld [vmem:[#allocation11 + $0x30] sm:$0xff]
    %v5053 = vld [vmem:[#allocation11 + $0x38] sm:$0xff]
    %v5054 = vld [vmem:[#allocation11 + $0x40] sm:$0xff]
    %v5055 = vld [vmem:[#allocation11 + $0x48] sm:$0xff]
    %v5056 = vld [vmem:[#allocation11 + $0x50] sm:$0xff]
    %v5057 = vld [vmem:[#allocation11 + $0x58] sm:$0xff]
    %v5058 = vld [vmem:[#allocation11 + $0x60] sm:$0xff]
    %v5059 = vld [vmem:[#allocation11 + $0x68] sm:$0xff]
    %v5060 = vld [vmem:[#allocation11 + $0x70] sm:$0xff]
    %v5061 = vld [vmem:[#allocation11 + $0x78] sm:$0xff]
    %5062 = vmatpush.msra.mxu0 %v5061
    %5063 = vmatpush.msra.mxu0 %v5060
    %5064 = vmatpush.msra.mxu0 %v5059
    %5065 = vmatpush.msra.mxu0 %v5058
    %5066 = vmatpush.msra.mxu0 %v5057
    %5067 = vmatpush.msra.mxu0 %v5056
    %5068 = vmatpush.msra.mxu0 %v5055
    %5069 = vmatpush.msra.mxu0 %v5054
    %5070 = vmatpush.msra.mxu0 %v5053
    %5071 = vmatpush.msra.mxu0 %v5052
    %5072 = vmatpush.msra.mxu0 %v5051
    %5073 = vmatpush.msra.mxu0 %v5050
    %5074 = vmatpush.msra.mxu0 %v5049
    %5075 = vmatpush.msra.mxu0 %v5048
    %5076 = vmatpush.msra.mxu0 %v5047
    %5077 = vmatpush.msra.mxu0 %v5046
    %5078 = vmatmul.f32.gmra.mxu0 %v5045
    %v5079 = vpop.f32.mrf.mxu0
    %v5080 = vadd.f32 0.0, %v5079
    %5081 = vdwg.mxu0
    %v5082 = vadd.f32 %v5035, %v5080
    %v5083 = vtanh.pop %v5082
    %v5084 = vsub.f32 %v4775, %v5083
    %v5085 = vmul.f32 %v5044, %v5084
    %v5086 = vadd.f32 %v5083, %v5085
    %v5087 = vmax.f32 %v5086, -5.0
    %v5088 = vmin.f32 %v5087, 5.0
    %s5089 = scalar_lea.vmem [#allocation14], 120
    %5090 = vst [vmem:[%s5089] sm:$0xff] %v5088
    %v5091 = vld [vmem:[#allocation12] sm:$0xff]
    %v5092 = vld [vmem:[#allocation12 + $0x8] sm:$0xff]
    %v5093 = vld [vmem:[#allocation12 + $0x10] sm:$0xff]
    %v5094 = vld [vmem:[#allocation12 + $0x18] sm:$0xff]
    %v5095 = vld [vmem:[#allocation12 + $0x20] sm:$0xff]
    %v5096 = vld [vmem:[#allocation12 + $0x28] sm:$0xff]
    %v5097 = vld [vmem:[#allocation12 + $0x30] sm:$0xff]
    %v5098 = vld [vmem:[#allocation12 + $0x38] sm:$0xff]
    %v5099 = vld [vmem:[#allocation12 + $0x40] sm:$0xff]
    %v5100 = vld [vmem:[#allocation12 + $0x48] sm:$0xff]
    %v5101 = vld [vmem:[#allocation12 + $0x50] sm:$0xff]
    %v5102 = vld [vmem:[#allocation12 + $0x58] sm:$0xff]
    %v5103 = vld [vmem:[#allocation12 + $0x60] sm:$0xff]
    %v5104 = vld [vmem:[#allocation12 + $0x68] sm:$0xff]
    %v5105 = vld [vmem:[#allocation12 + $0x70] sm:$0xff]
    %v5106 = vld [vmem:[#allocation12 + $0x78] sm:$0xff]
    %5107 = vmatpush.msra.mxu0 %v5106
    %5108 = vmatpush.msra.mxu0 %v5105
    %5109 = vmatpush.msra.mxu0 %v5104
    %5110 = vmatpush.msra.mxu0 %v5103
    %5111 = vmatpush.msra.mxu0 %v5102
    %5112 = vmatpush.msra.mxu0 %v5101
    %5113 = vmatpush.msra.mxu0 %v5100
    %5114 = vmatpush.msra.mxu0 %v5099
    %5115 = vmatpush.msra.mxu0 %v5098
    %5116 = vmatpush.msra.mxu0 %v5097
    %5117 = vmatpush.msra.mxu0 %v5096
    %5118 = vmatpush.msra.mxu0 %v5095
    %5119 = vmatpush.msra.mxu0 %v5094
    %5120 = vmatpush.msra.mxu0 %v5093
    %5121 = vmatpush.msra.mxu0 %v5092
    %5122 = vmatpush.msra.mxu0 %v5091
    %5123 = vmatmul.f32.gmra.mxu0 %v5088
    %v5124 = vpop.f32.mrf.mxu0
    %v5125 = vadd.f32 0.0, %v5124
    %5126 = vdwg.mxu0
    %s5127 = scalar_lea.vmem [#allocation15], 120
    %5128 = vst [vmem:[%s5127] sm:$0xff] %v5125
    %5129 = vst [vmem:[#allocation2] sm:$0xff] %v5088
    // Predicated region
    $region54: #{tpu_custom_call.1} parent=1 // pred_check
      _
    $region55: #{tpu_custom_call.1} parent=1 // pred_check_branch
      %5131 = sbr.rel (0) target = $region57
    $region56: #{tpu_custom_call.1} parent=1 // pred_region
      %5133 = vsyncadd [#allocation5], 0
      %s5134 = sshll.u32 [#allocation14], 4
      %s5135 = int_to_ptr.vmem [resolvable:$true] %s5134
      %s5136 = sshll.u32 %s6, 4
      %s5137 = int_to_ptr.hbm [resolvable:$true] %s5136
      %5142 = dma.vmem_to_hbm [thread:$0]  %s5135, 2048, %s5137, [#allocation5], 128, 128, 8
    $region57: #{tpu_custom_call.1} parent=1 // pred_fallthru
      _
    // Predicated region
    $region58: #{tpu_custom_call.1} parent=1 // pred_check
      _
    $region59: #{tpu_custom_call.1} parent=1 // pred_check_branch
      %5144 = sbr.rel (0) target = $region61
    $region60: #{tpu_custom_call.1} parent=1 // pred_region
      %5146 = vsyncadd [#allocation16], 0
      %s5147 = sshll.u32 [#allocation15], 4
      %s5148 = int_to_ptr.vmem [resolvable:$true] %s5147
      %s5149 = sshll.u32 %s7, 4
      %s5150 = int_to_ptr.hbm [resolvable:$true] %s5149
      %5155 = dma.vmem_to_hbm [thread:$0]  %s5148, 2048, %s5150, [#allocation16], 128, 128, 8
    $region61: #{tpu_custom_call.1} parent=1 // pred_fallthru
      _
    // Predicated region
    $region62: #{tpu_custom_call.1} parent=1 // pred_check
      _
    $region63: #{tpu_custom_call.1} parent=1 // pred_check_branch
      %5157 = sbr.rel (0) target = $region65
    $region64: #{tpu_custom_call.1} parent=1 // pred_region
      %5159 = dma.done [#allocation5], 2048
    $region65: #{tpu_custom_call.1} parent=1 // pred_fallthru
      _
    // Predicated region
    $region66: #{tpu_custom_call.1} parent=1 // pred_check
      _
    $region67: #{tpu_custom_call.1} parent=1 // pred_check_branch
      %5161 = sbr.rel (0) target = $region69
    $region68: #{tpu_custom_call.1} parent=1 // pred_region
      %5163 = dma.done [#allocation16], 2048
    $region69: #{tpu_custom_call.1} parent=1 // pred_fallthru
      _
    %5164 = vsyncpa [#allocation4], 1
    %5165 = vsyncpa [#allocation7], 1
    %5166 = vsyncpa [#allocation10], 1
    %5167 = vsyncpa [#allocation13], 1
    %5168 = vsyncpa [#allocation5], 1
    %5169 = vsyncpa [#allocation16], 1

</llo_original>
